<compile_context>
chip_gen: v5e
topology: v5e:2x2
jax: 0.10.0
libtpu: 0.0.40
codegen_flags: <defaults>
</compile_context>

<pallas_src>
import functools

import jax
import jax.numpy as jnp
from jax import lax
from jax.experimental import pallas as pl
from jax.experimental.pallas import tpu as pltpu

EPS = 1e-3                       # BatchNorm2d(eps=0.001)
VMEM_LIMIT = 32 * 1024 * 1024    # scoped VMEM claim; v7x has 64 MiB physical


def _num_cores():
    # Megacore split of the conv grid: 2 TensorCores per chip on v7x, else 1.
    try:
        kind = jax.devices()[0].device_kind.lower()
    except Exception:
        return 1
    return 2 if ("v7" in kind or "7x" in kind) else 1


NUM_CORES = _num_cores()


# ---------------------------- Pallas kernels ----------------------------

def _conv_bn_kernel(x_ref, w_ref, y_ref, sum_ref, sq_ref, acc_ref, *, shift):
    """Fused conv-as-matmul over row-shifted taps of one image's slab.

    bf16 MXU matmuls with f32 accumulation in a VMEM scratch, bf16 output,
    plus fused BatchNorm batch statistics (per-core channel sums / sums of
    squares, resident across the inner 'arbitrary' grid axis)."""
    taps = w_ref.shape[0]
    rows_out = y_ref.shape[1]

    @pl.when(pl.program_id(1) == 0)
    def _():
        sum_ref[...] = jnp.zeros_like(sum_ref)
        sq_ref[...] = jnp.zeros_like(sq_ref)

    for t in range(taps):
        a = x_ref[0, pl.ds(t * shift, rows_out), :].astype(jnp.bfloat16)
        part = jnp.dot(a, w_ref[t], preferred_element_type=jnp.float32)
        if t == 0:
            acc_ref[...] = part
        else:
            acc_ref[...] += part

    acc = acc_ref[...]
    y_ref[0] = acc.astype(y_ref.dtype)
    # (1, C) partials broadcast over the 8 sublanes of the resident stat block
    # (the XLA glue reads row 0 per core); redundant sublane adds are noise at
    # per-image tile sizes.
    sum_ref[...] += jnp.sum(acc, axis=0, keepdims=True)
    sq_ref[...] += jnp.sum(acc * acc, axis=0, keepdims=True)


def _bn_relu_kernel(y_ref, scale_ref, shift_ref, o_ref):
    # Folded-BatchNorm affine + ReLU; math in f32, storage in bf16.
    y = y_ref[...].astype(jnp.float32)
    o_ref[...] = jnp.maximum(y * scale_ref[...] + shift_ref[...],
                             0.0).astype(o_ref.dtype)


def _maxpool_kernel(ee_ref, eo_ref, oe_ref, oo_ref, o_ref, *, ho, wo):
    # 3x3/stride-2 max pool on one image.  Inputs are the 4 (H,W)-parity
    # sub-grids of the image; each of the 9 window taps is a static
    # unit-offset window on one of them (no strided / gathered reads).
    def win(ref, oy, ox):
        return ref[0, pl.ds(oy, ho), pl.ds(ox, wo), :]

    m = win(ee_ref, 0, 0)
    for ref, oy, ox in ((ee_ref, 0, 1), (ee_ref, 1, 0), (ee_ref, 1, 1),
                        (eo_ref, 0, 0), (eo_ref, 1, 0),
                        (oe_ref, 0, 0), (oe_ref, 0, 1),
                        (oo_ref, 0, 0)):
        m = jnp.maximum(m, win(ref, oy, ox))
    o_ref[0] = m


# --------------------------- Pallas wrappers ----------------------------

def _conv_bn_relu(x3, w3, gamma, beta, *, shift):
    """x3: (N, rows_in, Cin) f32/bf16 slab, w3: (taps, Cin, Cout) bf16.

    Returns the bf16 (N, rows_out, Cout) slab of Conv (bias-free) +
    BatchNorm (training batch statistics) + ReLU."""
    n, rows_in, cin = x3.shape
    taps, _, cout = w3.shape
    rows_out = rows_in - (taps - 1) * shift

    nc = NUM_CORES if n % NUM_CORES == 0 else 1
    tpc = n // nc

    kernel = functools.partial(_conv_bn_kernel, shift=shift)
    cost = pl.CostEstimate(
        flops=2 * n * rows_out * taps * cin * cout,
        transcendentals=0,
        bytes_accessed=(n * rows_in * cin * x3.dtype.itemsize
                        + taps * cin * cout * 2
                        + n * rows_out * cout * 2
                        + 2 * nc * 8 * cout * 4))

    y, psum, psq = pl.pallas_call(
        kernel,
        out_shape=(jax.ShapeDtypeStruct((n, rows_out, cout), jnp.bfloat16),
                   jax.ShapeDtypeStruct((nc * 8, cout), jnp.float32),
                   jax.ShapeDtypeStruct((nc * 8, cout), jnp.float32)),
        grid=(nc, tpc),
        in_specs=[pl.BlockSpec((1, rows_in, cin), lambda c, i: (c * tpc + i, 0, 0)),
                  pl.BlockSpec((taps, cin, cout), lambda c, i: (0, 0, 0))],
        out_specs=(pl.BlockSpec((1, rows_out, cout),
                                lambda c, i: (c * tpc + i, 0, 0)),
                   pl.BlockSpec((8, cout), lambda c, i: (c, 0)),
                   pl.BlockSpec((8, cout), lambda c, i: (c, 0))),
        scratch_shapes=[pltpu.VMEM((rows_out, cout), jnp.float32)],
        compiler_params=pltpu.CompilerParams(
            dimension_semantics=("parallel", "arbitrary"),
            vmem_limit_bytes=VMEM_LIMIT),
        cost_estimate=cost,
    )(x3, w3)

    # Combine per-core partial statistics (row 0 of each 8-sublane block) and
    # fold BatchNorm into a per-channel affine.  No padded rows exist, so the
    # divisor is exact.
    m = n * rows_out
    csum = psum.reshape(nc, 8, cout)[:, 0, :].sum(axis=0)
    csq = psq.reshape(nc, 8, cout)[:, 0, :].sum(axis=0)
    mean = csum / m
    var = jnp.maximum(csq / m - mean * mean, 0.0)
    scale = gamma * lax.rsqrt(var + EPS)
    shift_v = beta - mean * scale
    scale = scale.reshape(1, 1, cout).astype(jnp.float32)
    shift_v = shift_v.reshape(1, 1, cout).astype(jnp.float32)

    out = pl.pallas_call(
        _bn_relu_kernel,
        out_shape=jax.ShapeDtypeStruct((n, rows_out, cout), jnp.bfloat16),
        grid=(n,),
        in_specs=[pl.BlockSpec((1, rows_out, cout), lambda i: (i, 0, 0)),
                  pl.BlockSpec((1, 1, cout), lambda i: (0, 0, 0)),
                  pl.BlockSpec((1, 1, cout), lambda i: (0, 0, 0))],
        out_specs=pl.BlockSpec((1, rows_out, cout), lambda i: (i, 0, 0)),
        compiler_params=pltpu.CompilerParams(
            dimension_semantics=("parallel",),
            vmem_limit_bytes=VMEM_LIMIT),
        input_output_aliases={0: 0},   # y is dead after this call (fwd only)
    )(y, scale, shift_v)
    return out


# ------------------------------- layers ---------------------------------

def basic_conv2d(x, w, gamma, beta, *, stride=1, padding=(0, 0)):
    """Conv2d(bias=False) + BatchNorm2d(eps=1e-3, batch stats) + ReLU (NHWC)."""
    cout, cin, kh, kw = w.shape
    n, h, wd, _ = x.shape
    ph, pw = padding
    wt = jnp.transpose(w, (2, 3, 1, 0)).astype(jnp.bfloat16)  # (kh, kw, cin, cout)

    if stride == 1 and kw == 1:
        # k x 1 window (includes 1x1): taps are whole-image-row shifts of the
        # flattened (rows, C) slab -> fused in-kernel, no im2col.
        xp = jnp.pad(x, ((0, 0), (ph, ph), (0, 0), (0, 0))) if ph else x
        hp = h + 2 * ph
        x3 = xp.reshape(n, hp * wd, cin)
        y = _conv_bn_relu(x3, wt.reshape(kh, cin, cout), gamma, beta, shift=wd)
        return y.reshape(n, hp - kh + 1, wd, cout)

    if stride == 1 and kh == 1:
        # 1 x k window: run in NWHC layout so the window dim becomes the outer
        # spatial dim (whole-row shifts), then transpose back.
        xt = jnp.transpose(x, (0, 2, 1, 3))
        xtp = jnp.pad(xt, ((0, 0), (pw, pw), (0, 0), (0, 0))) if pw else xt
        wp = wd + 2 * pw
        x3 = xtp.reshape(n, wp * h, cin)
        y = _conv_bn_relu(x3, wt.reshape(kw, cin, cout), gamma, beta, shift=h)
        y = y.reshape(n, wp - kw + 1, h, cout)
        return jnp.transpose(y, (0, 2, 1, 3))

    # General path (the two 3x3/stride-2 convs): bf16 XLA im2col feeding the
    # same fused matmul + BN-stats kernel as a single-tap layer.
    # TODO(synk): fuse the stride-2 taps in-kernel (strided reads or manual
    # DMA) to drop this remaining patch materialization.
    xp = jnp.pad(x, ((0, 0), (ph, ph), (pw, pw), (0, 0))) if (ph or pw) else x
    hp, wp = h + 2 * ph, wd + 2 * pw
    ho = (hp - kh) // stride + 1
    wo = (wp - kw) // stride + 1
    cols = []
    for dy in range(kh):
        for dx in range(kw):
            sl = lax.slice(xp, (0, dy, dx, 0),
                           (n, dy + stride * (ho - 1) + 1,
                            dx + stride * (wo - 1) + 1, cin),
                           (1, stride, stride, 1))
            cols.append(sl)
    patches = jnp.concatenate(cols, axis=-1).reshape(n, ho * wo, kh * kw * cin)
    y = _conv_bn_relu(patches, wt.reshape(1, kh * kw * cin, cout),
                      gamma, beta, shift=0)
    return y.reshape(n, ho, wo, cout)


def maxpool2d_3x3_s2(x):
    """3x3 / stride-2 max-pool (NHWC).  The input is split once into its four
    (H, W) parity sub-grids in XLA (a 1x repack instead of the previous 9x tap
    stack); the kernel then reads each element exactly once."""
    n, h, w, c = x.shape
    ho, wo = (h - 3) // 2 + 1, (w - 3) // 2 + 1
    slabs = [x[:, 0::2, 0::2, :], x[:, 0::2, 1::2, :],
             x[:, 1::2, 0::2, :], x[:, 1::2, 1::2, :]]
    kernel = functools.partial(_maxpool_kernel, ho=ho, wo=wo)

    def _spec(a):
        return pl.BlockSpec((1,) + a.shape[1:], lambda i: (i, 0, 0, 0))

    return pl.pallas_call(
        kernel,
        out_shape=jax.ShapeDtypeStruct((n, ho, wo, c), x.dtype),
        grid=(n,),
        in_specs=[_spec(a) for a in slabs],
        out_specs=pl.BlockSpec((1, ho, wo, c), lambda i: (i, 0, 0, 0)),
        compiler_params=pltpu.CompilerParams(
            dimension_semantics=("parallel",),
            vmem_limit_bytes=VMEM_LIMIT),
    )(*slabs)


# ----------------------------- InceptionD -------------------------------

def init_inception_d_params(key, in_channels, k):
    scale = 2.0 ** (-k)
    c192 = int(scale * 192)
    c320 = int(scale * 320)

    def conv_bn(kk, cout, cin, kh, kw):
        k1, k2, k3 = jax.random.split(kk, 3)
        return dict(
            w=0.05 * jax.random.normal(k1, (cout, cin, kh, kw), jnp.float32),
            gamma=1.0 + 0.1 * jax.random.normal(k2, (cout,), jnp.float32),
            beta=0.1 * jax.random.normal(k3, (cout,), jnp.float32),
        )

    keys = jax.random.split(key, 6)
    return dict(
        b3_1=conv_bn(keys[0], c192, in_channels, 1, 1),
        b3_2=conv_bn(keys[1], c320, c192, 3, 3),
        b7_1=conv_bn(keys[2], c192, in_channels, 1, 1),
        b7_2=conv_bn(keys[3], c192, c192, 1, 7),
        b7_3=conv_bn(keys[4], c192, c192, 7, 1),
        b7_4=conv_bn(keys[5], c192, c192, 3, 3),
    )


def inception_d_forward(params, x_nchw):
    # TODO(synk): BatchNorm running_mean/running_var buffer updates (training
    # side effect) are not modeled; the forward output does not depend on them.
    x = jnp.transpose(x_nchw, (0, 2, 3, 1)).astype(jnp.float32)   # NCHW -> NHWC
    p = params

    b3 = basic_conv2d(x, p['b3_1']['w'], p['b3_1']['gamma'], p['b3_1']['beta'])
    b3 = basic_conv2d(b3, p['b3_2']['w'], p['b3_2']['gamma'], p['b3_2']['beta'],
                      stride=2)

    b7 = basic_conv2d(x, p['b7_1']['w'], p['b7_1']['gamma'], p['b7_1']['beta'])
    b7 = basic_conv2d(b7, p['b7_2']['w'], p['b7_2']['gamma'], p['b7_2']['beta'],
                      padding=(0, 3))
    b7 = basic_conv2d(b7, p['b7_3']['w'], p['b7_3']['gamma'], p['b7_3']['beta'],
                      padding=(3, 0))
    b7 = basic_conv2d(b7, p['b7_4']['w'], p['b7_4']['gamma'], p['b7_4']['beta'],
                      stride=2)

    bp = maxpool2d_3x3_s2(x)

    out = jnp.concatenate(
        [b3.astype(jnp.float32), b7.astype(jnp.float32), bp], axis=-1)
    return jnp.transpose(out, (0, 3, 1, 2))        # NHWC -> NCHW


if __name__ == "__main__":
    key = jax.random.PRNGKey(0)
    k_scale = 2                      # stand-in for `k = int(sys.argv[2])`
    n, c_in, h, w = 2, 4, 16, 16

    kx, kp = jax.random.split(key)
    x = jax.random.normal(kx, (n, c_in, h, w), jnp.float32)
    params = init_inception_d_params(kp, c_in, k_scale)

    fwd = jax.jit(inception_d_forward)
    out = fwd(params, x)
    jax.block_until_ready(out)

    scale = 2.0 ** (-k_scale)
    expected_c = int(scale * 320) + int(scale * 192) + c_in
    expected_hw = (h - 3) // 2 + 1
    assert out.shape == (n, expected_c, expected_hw, expected_hw), out.shape
    assert bool(jnp.all(jnp.isfinite(out)))
    print("KERNEL_OK")
</pallas_src>

<mosaic_0001>
module attributes {stable_mosaic.version = 11 : i64} {
  func.func @_conv_bn_kernel(%arg0: i32, %arg1: i32, %arg2: memref<1x256x4xf32, #tpu.memory_space<vmem>>, %arg3: memref<1x4x48xbf16, #tpu.memory_space<vmem>>, %arg4: memref<1x256x48xbf16, #tpu.memory_space<vmem>>, %arg5: memref<8x48xf32, #tpu.memory_space<vmem>>, %arg6: memref<8x48xf32, #tpu.memory_space<vmem>>, %arg7: memref<256x48xf32, #tpu.memory_space<vmem>>) attributes {dimension_semantics = [#tpu.dimension_semantics<parallel>, #tpu.dimension_semantics<arbitrary>], iteration_bounds = array<i64: 1, 2>, scalar_prefetch = 0 : i64, scratch_operands = 1 : i64, tpu.core_type = #tpu.core_type<tc>, window_params = [{transform_indices = @transform_0, window_bounds = array<i64: 1, 256, 4>}, {pipeline_mode = #tpu.pipeline_mode<synchronous>, transform_indices = @transform_1, window_bounds = array<i64: 1, 4, 48>}, {transform_indices = @transform_2, window_bounds = array<i64: 1, 256, 48>}, {transform_indices = @transform_3, window_bounds = array<i64: 8, 48>}, {transform_indices = @transform_4, window_bounds = array<i64: 8, 48>}]} {
    %c0_i32 = arith.constant 0 : i32
    %0 = arith.cmpi eq, %arg1, %c0_i32 : i32
    %1 = arith.extui %0 : i1 to i32
    %c0_i32_0 = arith.constant 0 : i32
    %2 = arith.cmpi ne, %1, %c0_i32_0 : i32
    scf.if %2 {
      %cst_23 = arith.constant 0.000000e+00 : f32
      %28 = vector.broadcast %cst_23 : f32 to vector<8x48xf32>
      %c0_24 = arith.constant 0 : index
      %c0_25 = arith.constant 0 : index
      %29 = vector.load %arg5[%c0_24, %c0_25] : memref<8x48xf32, #tpu.memory_space<vmem>>, vector<8x48xf32>
      tpu.vector_store %arg5[%c0_24, %c0_25], %28 {strides = array<i32>} : memref<8x48xf32, #tpu.memory_space<vmem>>, vector<8x48xf32>,
      %cst_26 = arith.constant 0.000000e+00 : f32
      %30 = vector.broadcast %cst_26 : f32 to vector<8x48xf32>
      %c0_27 = arith.constant 0 : index
      %c0_28 = arith.constant 0 : index
      %31 = vector.load %arg6[%c0_27, %c0_28] : memref<8x48xf32, #tpu.memory_space<vmem>>, vector<8x48xf32>
      tpu.vector_store %arg6[%c0_27, %c0_28], %30 {strides = array<i32>} : memref<8x48xf32, #tpu.memory_space<vmem>>, vector<8x48xf32>,
    } else {
    }
    %c0 = arith.constant 0 : index
    %c0_1 = arith.constant 0 : index
    %c0_2 = arith.constant 0 : index
    %3 = vector.load %arg2[%c0, %c0_1, %c0_2] : memref<1x256x4xf32, #tpu.memory_space<vmem>>, vector<1x256x4xf32>
    %4 = vector.shape_cast %3 : vector<1x256x4xf32> to vector<256x4xf32>
    %5 = arith.truncf %4 : vector<256x4xf32> to vector<256x4xbf16>
    %c0_3 = arith.constant 0 : index
    %c0_4 = arith.constant 0 : index
    %c0_5 = arith.constant 0 : index
    %6 = vector.load %arg3[%c0_3, %c0_4, %c0_5] : memref<1x4x48xbf16, #tpu.memory_space<vmem>>, vector<1x4x48xbf16>
    %7 = vector.shape_cast %6 : vector<1x4x48xbf16> to vector<4x48xbf16>
    %cst = arith.constant dense<0.000000e+00> : vector<256x48xf32>
    %8 = tpu.matmul %5, %7, %cst {dimension_numbers = #tpu.dot_dimension_numbers<[1], [0], [0], [1], [0, 0, 1, 1], [], []>} : vector<256x4xbf16>, vector<4x48xbf16>, vector<256x48xf32> -> vector<256x48xf32>
    %c0_6 = arith.constant 0 : index
    %c0_7 = arith.constant 0 : index
    %9 = vector.load %arg7[%c0_6, %c0_7] : memref<256x48xf32, #tpu.memory_space<vmem>>, vector<256x48xf32>
    tpu.vector_store %arg7[%c0_6, %c0_7], %8 {strides = array<i32>} : memref<256x48xf32, #tpu.memory_space<vmem>>, vector<256x48xf32>,
    %c0_8 = arith.constant 0 : index
    %c0_9 = arith.constant 0 : index
    %10 = vector.load %arg7[%c0_8, %c0_9] : memref<256x48xf32, #tpu.memory_space<vmem>>, vector<256x48xf32>
    %11 = arith.truncf %10 : vector<256x48xf32> to vector<256x48xbf16>
    %c0_10 = arith.constant 0 : index
    %c0_11 = arith.constant 0 : index
    %c0_12 = arith.constant 0 : index
    %12 = vector.load %arg4[%c0_10, %c0_11, %c0_12] : memref<1x256x48xbf16, #tpu.memory_space<vmem>>, vector<1x256x48xbf16>
    %13 = vector.shape_cast %12 : vector<1x256x48xbf16> to vector<256x48xbf16>
    %14 = vector.shape_cast %11 : vector<256x48xbf16> to vector<1x256x48xbf16>
    tpu.vector_store %arg4[%c0_10, %c0_11, %c0_12], %14 {strides = array<i32>} : memref<1x256x48xbf16, #tpu.memory_space<vmem>>, vector<1x256x48xbf16>,
    %c0_13 = arith.constant 0 : index
    %c0_14 = arith.constant 0 : index
    %15 = vector.load %arg5[%c0_13, %c0_14] : memref<8x48xf32, #tpu.memory_space<vmem>>, vector<8x48xf32>
    %cst_15 = arith.constant dense<0.000000e+00> : vector<48xf32>
    %16 = vector.multi_reduction <add>, %10, %cst_15 [0] : vector<256x48xf32> to vector<48xf32>
    %17 = vector.shape_cast %16 : vector<48xf32> to vector<1x48xf32>
    %18 = vector.broadcast %17 : vector<1x48xf32> to vector<8x48xf32>
    %19 = arith.addf %15, %18 : vector<8x48xf32>
    %c0_16 = arith.constant 0 : index
    %c0_17 = arith.constant 0 : index
    %20 = vector.load %arg5[%c0_16, %c0_17] : memref<8x48xf32, #tpu.memory_space<vmem>>, vector<8x48xf32>
    tpu.vector_store %arg5[%c0_16, %c0_17], %19 {strides = array<i32>} : memref<8x48xf32, #tpu.memory_space<vmem>>, vector<8x48xf32>,
    %c0_18 = arith.constant 0 : index
    %c0_19 = arith.constant 0 : index
    %21 = vector.load %arg6[%c0_18, %c0_19] : memref<8x48xf32, #tpu.memory_space<vmem>>, vector<8x48xf32>
    %22 = arith.mulf %10, %10 : vector<256x48xf32>
    %cst_20 = arith.constant dense<0.000000e+00> : vector<48xf32>
    %23 = vector.multi_reduction <add>, %22, %cst_20 [0] : vector<256x48xf32> to vector<48xf32>
    %24 = vector.shape_cast %23 : vector<48xf32> to vector<1x48xf32>
    %25 = vector.broadcast %24 : vector<1x48xf32> to vector<8x48xf32>
    %26 = arith.addf %21, %25 : vector<8x48xf32>
    %c0_21 = arith.constant 0 : index
    %c0_22 = arith.constant 0 : index
    %27 = vector.load %arg6[%c0_21, %c0_22] : memref<8x48xf32, #tpu.memory_space<vmem>>, vector<8x48xf32>
    tpu.vector_store %arg6[%c0_21, %c0_22], %26 {strides = array<i32>} : memref<8x48xf32, #tpu.memory_space<vmem>>, vector<8x48xf32>,
    return
  }
  func.func @transform_0(%arg0: i32, %arg1: i32) -> (i32, i32, i32) {
    %c2_i32 = arith.constant 2 : i32
    %0 = arith.muli %arg0, %c2_i32 : i32
    %1 = arith.addi %0, %arg1 : i32
    %c0_i32 = arith.constant 0 : i32
    %c0_i32_0 = arith.constant 0 : i32
    %c0_i32_1 = arith.constant 0 : i32
    return %1, %c0_i32, %c0_i32_0 : i32, i32, i32
  }
  func.func @transform_1(%arg0: i32, %arg1: i32) -> (i32, i32, i32) {
    %c0_i32 = arith.constant 0 : i32
    %c0_i32_0 = arith.constant 0 : i32
    %c0_i32_1 = arith.constant 0 : i32
    %c0_i32_2 = arith.constant 0 : i32
    return %c0_i32, %c0_i32_0, %c0_i32_1 : i32, i32, i32
  }
  func.func @transform_2(%arg0: i32, %arg1: i32) -> (i32, i32, i32) {
    %c2_i32 = arith.constant 2 : i32
    %0 = arith.muli %arg0, %c2_i32 : i32
    %1 = arith.addi %0, %arg1 : i32
    %c0_i32 = arith.constant 0 : i32
    %c0_i32_0 = arith.constant 0 : i32
    %c0_i32_1 = arith.constant 0 : i32
    return %1, %c0_i32, %c0_i32_0 : i32, i32, i32
  }
  func.func @transform_3(%arg0: i32, %arg1: i32) -> (i32, i32) {
    %c0_i32 = arith.constant 0 : i32
    %c0_i32_0 = arith.constant 0 : i32
    return %arg0, %c0_i32 : i32, i32
  }
  func.func @transform_4(%arg0: i32, %arg1: i32) -> (i32, i32) {
    %c0_i32 = arith.constant 0 : i32
    %c0_i32_0 = arith.constant 0 : i32
    return %arg0, %c0_i32 : i32, i32
  }
}

module attributes {stable_mosaic.version = 11 : i64} {
  func.func @_bn_relu_kernel(%arg0: i32, %arg1: memref<1x256x48xbf16, #tpu.memory_space<vmem>>, %arg2: memref<1x1x48xf32, #tpu.memory_space<vmem>>, %arg3: memref<1x1x48xf32, #tpu.memory_space<vmem>>, %arg4: memref<1x256x48xbf16, #tpu.memory_space<vmem>>) attributes {dimension_semantics = [#tpu.dimension_semantics<parallel>], iteration_bounds = array<i64: 2>, scalar_prefetch = 0 : i64, scratch_operands = 0 : i64, tpu.core_type = #tpu.core_type<tc>, window_params = [{transform_indices = @transform_0, window_bounds = array<i64: 1, 256, 48>}, {pipeline_mode = #tpu.pipeline_mode<synchronous>, transform_indices = @transform_1, window_bounds = array<i64: 1, 1, 48>}, {pipeline_mode = #tpu.pipeline_mode<synchronous>, transform_indices = @transform_2, window_bounds = array<i64: 1, 1, 48>}, {transform_indices = @transform_3, window_bounds = array<i64: 1, 256, 48>}]} {
    %c0 = arith.constant 0 : index
    %c0_0 = arith.constant 0 : index
    %c0_1 = arith.constant 0 : index
    %0 = vector.load %arg1[%c0, %c0_0, %c0_1] : memref<1x256x48xbf16, #tpu.memory_space<vmem>>, vector<1x256x48xbf16>
    %1 = arith.extf %0 : vector<1x256x48xbf16> to vector<1x256x48xf32>
    %c0_2 = arith.constant 0 : index
    %c0_3 = arith.constant 0 : index
    %c0_4 = arith.constant 0 : index
    %2 = vector.load %arg2[%c0_2, %c0_3, %c0_4] : memref<1x1x48xf32, #tpu.memory_space<vmem>>, vector<1x1x48xf32>
    %3 = vector.broadcast %2 : vector<1x1x48xf32> to vector<1x256x48xf32>
    %4 = arith.mulf %1, %3 : vector<1x256x48xf32>
    %c0_5 = arith.constant 0 : index
    %c0_6 = arith.constant 0 : index
    %c0_7 = arith.constant 0 : index
    %5 = vector.load %arg3[%c0_5, %c0_6, %c0_7] : memref<1x1x48xf32, #tpu.memory_space<vmem>>, vector<1x1x48xf32>
    %6 = vector.broadcast %5 : vector<1x1x48xf32> to vector<1x256x48xf32>
    %7 = arith.addf %4, %6 : vector<1x256x48xf32>
    %cst = arith.constant 0.000000e+00 : f32
    %8 = vector.broadcast %cst : f32 to vector<1x256x48xf32>
    %9 = arith.maximumf %7, %8 : vector<1x256x48xf32>
    %10 = arith.truncf %9 : vector<1x256x48xf32> to vector<1x256x48xbf16>
    %c0_8 = arith.constant 0 : index
    %c0_9 = arith.constant 0 : index
    %c0_10 = arith.constant 0 : index
    %11 = vector.load %arg4[%c0_8, %c0_9, %c0_10] : memref<1x256x48xbf16, #tpu.memory_space<vmem>>, vector<1x256x48xbf16>
    tpu.vector_store %arg4[%c0_8, %c0_9, %c0_10], %10 {strides = array<i32>} : memref<1x256x48xbf16, #tpu.memory_space<vmem>>, vector<1x256x48xbf16>,
    return
  }
  func.func @transform_0(%arg0: i32) -> (i32, i32, i32) {
    %c0_i32 = arith.constant 0 : i32
    %c0_i32_0 = arith.constant 0 : i32
    %c0_i32_1 = arith.constant 0 : i32
    return %arg0, %c0_i32, %c0_i32_0 : i32, i32, i32
  }
  func.func @transform_1(%arg0: i32) -> (i32, i32, i32) {
    %c0_i32 = arith.constant 0 : i32
    %c0_i32_0 = arith.constant 0 : i32
    %c0_i32_1 = arith.constant 0 : i32
    %c0_i32_2 = arith.constant 0 : i32
    return %c0_i32, %c0_i32_0, %c0_i32_1 : i32, i32, i32
  }
  func.func @transform_2(%arg0: i32) -> (i32, i32, i32) {
    %c0_i32 = arith.constant 0 : i32
    %c0_i32_0 = arith.constant 0 : i32
    %c0_i32_1 = arith.constant 0 : i32
    %c0_i32_2 = arith.constant 0 : i32
    return %c0_i32, %c0_i32_0, %c0_i32_1 : i32, i32, i32
  }
  func.func @transform_3(%arg0: i32) -> (i32, i32, i32) {
    %c0_i32 = arith.constant 0 : i32
    %c0_i32_0 = arith.constant 0 : i32
    %c0_i32_1 = arith.constant 0 : i32
    return %arg0, %c0_i32, %c0_i32_0 : i32, i32, i32
  }
}

module attributes {stable_mosaic.version = 11 : i64} {
  func.func @_conv_bn_kernel(%arg0: i32, %arg1: i32, %arg2: memref<1x49x432xbf16, #tpu.memory_space<vmem>>, %arg3: memref<1x432x80xbf16, #tpu.memory_space<vmem>>, %arg4: memref<1x49x80xbf16, #tpu.memory_space<vmem>>, %arg5: memref<8x80xf32, #tpu.memory_space<vmem>>, %arg6: memref<8x80xf32, #tpu.memory_space<vmem>>, %arg7: memref<49x80xf32, #tpu.memory_space<vmem>>) attributes {dimension_semantics = [#tpu.dimension_semantics<parallel>, #tpu.dimension_semantics<arbitrary>], iteration_bounds = array<i64: 1, 2>, scalar_prefetch = 0 : i64, scratch_operands = 1 : i64, tpu.core_type = #tpu.core_type<tc>, window_params = [{transform_indices = @transform_0, window_bounds = array<i64: 1, 49, 432>}, {pipeline_mode = #tpu.pipeline_mode<synchronous>, transform_indices = @transform_1, window_bounds = array<i64: 1, 432, 80>}, {transform_indices = @transform_2, window_bounds = array<i64: 1, 49, 80>}, {transform_indices = @transform_3, window_bounds = array<i64: 8, 80>}, {transform_indices = @transform_4, window_bounds = array<i64: 8, 80>}]} {
    %c0_i32 = arith.constant 0 : i32
    %0 = arith.cmpi eq, %arg1, %c0_i32 : i32
    %1 = arith.extui %0 : i1 to i32
    %c0_i32_0 = arith.constant 0 : i32
    %2 = arith.cmpi ne, %1, %c0_i32_0 : i32
    scf.if %2 {
      %cst_23 = arith.constant 0.000000e+00 : f32
      %27 = vector.broadcast %cst_23 : f32 to vector<8x80xf32>
      %c0_24 = arith.constant 0 : index
      %c0_25 = arith.constant 0 : index
      %28 = vector.load %arg5[%c0_24, %c0_25] : memref<8x80xf32, #tpu.memory_space<vmem>>, vector<8x80xf32>
      tpu.vector_store %arg5[%c0_24, %c0_25], %27 {strides = array<i32>} : memref<8x80xf32, #tpu.memory_space<vmem>>, vector<8x80xf32>,
      %cst_26 = arith.constant 0.000000e+00 : f32
      %29 = vector.broadcast %cst_26 : f32 to vector<8x80xf32>
      %c0_27 = arith.constant 0 : index
      %c0_28 = arith.constant 0 : index
      %30 = vector.load %arg6[%c0_27, %c0_28] : memref<8x80xf32, #tpu.memory_space<vmem>>, vector<8x80xf32>
      tpu.vector_store %arg6[%c0_27, %c0_28], %29 {strides = array<i32>} : memref<8x80xf32, #tpu.memory_space<vmem>>, vector<8x80xf32>,
    } else {
    }
    %c0 = arith.constant 0 : index
    %c0_1 = arith.constant 0 : index
    %c0_2 = arith.constant 0 : index
    %3 = vector.load %arg2[%c0, %c0_1, %c0_2] : memref<1x49x432xbf16, #tpu.memory_space<vmem>>, vector<1x49x432xbf16>
    %4 = vector.shape_cast %3 : vector<1x49x432xbf16> to vector<49x432xbf16>
    %c0_3 = arith.constant 0 : index
    %c0_4 = arith.constant 0 : index
    %c0_5 = arith.constant 0 : index
    %5 = vector.load %arg3[%c0_3, %c0_4, %c0_5] : memref<1x432x80xbf16, #tpu.memory_space<vmem>>, vector<1x432x80xbf16>
    %6 = vector.shape_cast %5 : vector<1x432x80xbf16> to vector<432x80xbf16>
    %cst = arith.constant dense<0.000000e+00> : vector<49x80xf32>
    %7 = tpu.matmul %4, %6, %cst {dimension_numbers = #tpu.dot_dimension_numbers<[1], [0], [0], [1], [0, 0, 1, 1], [], []>} : vector<49x432xbf16>, vector<432x80xbf16>, vector<49x80xf32> -> vector<49x80xf32>
    %c0_6 = arith.constant 0 : index
    %c0_7 = arith.constant 0 : index
    %8 = vector.load %arg7[%c0_6, %c0_7] : memref<49x80xf32, #tpu.memory_space<vmem>>, vector<49x80xf32>
    tpu.vector_store %arg7[%c0_6, %c0_7], %7 {strides = array<i32>} : memref<49x80xf32, #tpu.memory_space<vmem>>, vector<49x80xf32>,
    %c0_8 = arith.constant 0 : index
    %c0_9 = arith.constant 0 : index
    %9 = vector.load %arg7[%c0_8, %c0_9] : memref<49x80xf32, #tpu.memory_space<vmem>>, vector<49x80xf32>
    %10 = arith.truncf %9 : vector<49x80xf32> to vector<49x80xbf16>
    %c0_10 = arith.constant 0 : index
    %c0_11 = arith.constant 0 : index
    %c0_12 = arith.constant 0 : index
    %11 = vector.load %arg4[%c0_10, %c0_11, %c0_12] : memref<1x49x80xbf16, #tpu.memory_space<vmem>>, vector<1x49x80xbf16>
    %12 = vector.shape_cast %11 : vector<1x49x80xbf16> to vector<49x80xbf16>
    %13 = vector.shape_cast %10 : vector<49x80xbf16> to vector<1x49x80xbf16>
    tpu.vector_store %arg4[%c0_10, %c0_11, %c0_12], %13 {strides = array<i32>} : memref<1x49x80xbf16, #tpu.memory_space<vmem>>, vector<1x49x80xbf16>,
    %c0_13 = arith.constant 0 : index
    %c0_14 = arith.constant 0 : index
    %14 = vector.load %arg5[%c0_13, %c0_14] : memref<8x80xf32, #tpu.memory_space<vmem>>, vector<8x80xf32>
    %cst_15 = arith.constant dense<0.000000e+00> : vector<80xf32>
    %15 = vector.multi_reduction <add>, %9, %cst_15 [0] : vector<49x80xf32> to vector<80xf32>
    %16 = vector.shape_cast %15 : vector<80xf32> to vector<1x80xf32>
    %17 = vector.broadcast %16 : vector<1x80xf32> to vector<8x80xf32>
    %18 = arith.addf %14, %17 : vector<8x80xf32>
    %c0_16 = arith.constant 0 : index
    %c0_17 = arith.constant 0 : index
    %19 = vector.load %arg5[%c0_16, %c0_17] : memref<8x80xf32, #tpu.memory_space<vmem>>, vector<8x80xf32>
    tpu.vector_store %arg5[%c0_16, %c0_17], %18 {strides = array<i32>} : memref<8x80xf32, #tpu.memory_space<vmem>>, vector<8x80xf32>,
    %c0_18 = arith.constant 0 : index
    %c0_19 = arith.constant 0 : index
    %20 = vector.load %arg6[%c0_18, %c0_19] : memref<8x80xf32, #tpu.memory_space<vmem>>, vector<8x80xf32>
    %21 = arith.mulf %9, %9 : vector<49x80xf32>
    %cst_20 = arith.constant dense<0.000000e+00> : vector<80xf32>
    %22 = vector.multi_reduction <add>, %21, %cst_20 [0] : vector<49x80xf32> to vector<80xf32>
    %23 = vector.shape_cast %22 : vector<80xf32> to vector<1x80xf32>
    %24 = vector.broadcast %23 : vector<1x80xf32> to vector<8x80xf32>
    %25 = arith.addf %20, %24 : vector<8x80xf32>
    %c0_21 = arith.constant 0 : index
    %c0_22 = arith.constant 0 : index
    %26 = vector.load %arg6[%c0_21, %c0_22] : memref<8x80xf32, #tpu.memory_space<vmem>>, vector<8x80xf32>
    tpu.vector_store %arg6[%c0_21, %c0_22], %25 {strides = array<i32>} : memref<8x80xf32, #tpu.memory_space<vmem>>, vector<8x80xf32>,
    return
  }
  func.func @transform_0(%arg0: i32, %arg1: i32) -> (i32, i32, i32) {
    %c2_i32 = arith.constant 2 : i32
    %0 = arith.muli %arg0, %c2_i32 : i32
    %1 = arith.addi %0, %arg1 : i32
    %c0_i32 = arith.constant 0 : i32
    %c0_i32_0 = arith.constant 0 : i32
    %c0_i32_1 = arith.constant 0 : i32
    return %1, %c0_i32, %c0_i32_0 : i32, i32, i32
  }
  func.func @transform_1(%arg0: i32, %arg1: i32) -> (i32, i32, i32) {
    %c0_i32 = arith.constant 0 : i32
    %c0_i32_0 = arith.constant 0 : i32
    %c0_i32_1 = arith.constant 0 : i32
    %c0_i32_2 = arith.constant 0 : i32
    return %c0_i32, %c0_i32_0, %c0_i32_1 : i32, i32, i32
  }
  func.func @transform_2(%arg0: i32, %arg1: i32) -> (i32, i32, i32) {
    %c2_i32 = arith.constant 2 : i32
    %0 = arith.muli %arg0, %c2_i32 : i32
    %1 = arith.addi %0, %arg1 : i32
    %c0_i32 = arith.constant 0 : i32
    %c0_i32_0 = arith.constant 0 : i32
    %c0_i32_1 = arith.constant 0 : i32
    return %1, %c0_i32, %c0_i32_0 : i32, i32, i32
  }
  func.func @transform_3(%arg0: i32, %arg1: i32) -> (i32, i32) {
    %c0_i32 = arith.constant 0 : i32
    %c0_i32_0 = arith.constant 0 : i32
    return %arg0, %c0_i32 : i32, i32
  }
  func.func @transform_4(%arg0: i32, %arg1: i32) -> (i32, i32) {
    %c0_i32 = arith.constant 0 : i32
    %c0_i32_0 = arith.constant 0 : i32
    return %arg0, %c0_i32 : i32, i32
  }
}

module attributes {stable_mosaic.version = 11 : i64} {
  func.func @_bn_relu_kernel(%arg0: i32, %arg1: memref<1x49x80xbf16, #tpu.memory_space<vmem>>, %arg2: memref<1x1x80xf32, #tpu.memory_space<vmem>>, %arg3: memref<1x1x80xf32, #tpu.memory_space<vmem>>, %arg4: memref<1x49x80xbf16, #tpu.memory_space<vmem>>) attributes {dimension_semantics = [#tpu.dimension_semantics<parallel>], iteration_bounds = array<i64: 2>, scalar_prefetch = 0 : i64, scratch_operands = 0 : i64, tpu.core_type = #tpu.core_type<tc>, window_params = [{transform_indices = @transform_0, window_bounds = array<i64: 1, 49, 80>}, {pipeline_mode = #tpu.pipeline_mode<synchronous>, transform_indices = @transform_1, window_bounds = array<i64: 1, 1, 80>}, {pipeline_mode = #tpu.pipeline_mode<synchronous>, transform_indices = @transform_2, window_bounds = array<i64: 1, 1, 80>}, {transform_indices = @transform_3, window_bounds = array<i64: 1, 49, 80>}]} {
    %c0 = arith.constant 0 : index
    %c0_0 = arith.constant 0 : index
    %c0_1 = arith.constant 0 : index
    %0 = vector.load %arg1[%c0, %c0_0, %c0_1] : memref<1x49x80xbf16, #tpu.memory_space<vmem>>, vector<1x49x80xbf16>
    %1 = arith.extf %0 : vector<1x49x80xbf16> to vector<1x49x80xf32>
    %c0_2 = arith.constant 0 : index
    %c0_3 = arith.constant 0 : index
    %c0_4 = arith.constant 0 : index
    %2 = vector.load %arg2[%c0_2, %c0_3, %c0_4] : memref<1x1x80xf32, #tpu.memory_space<vmem>>, vector<1x1x80xf32>
    %3 = vector.broadcast %2 : vector<1x1x80xf32> to vector<1x49x80xf32>
    %4 = arith.mulf %1, %3 : vector<1x49x80xf32>
    %c0_5 = arith.constant 0 : index
    %c0_6 = arith.constant 0 : index
    %c0_7 = arith.constant 0 : index
    %5 = vector.load %arg3[%c0_5, %c0_6, %c0_7] : memref<1x1x80xf32, #tpu.memory_space<vmem>>, vector<1x1x80xf32>
    %6 = vector.broadcast %5 : vector<1x1x80xf32> to vector<1x49x80xf32>
    %7 = arith.addf %4, %6 : vector<1x49x80xf32>
    %cst = arith.constant 0.000000e+00 : f32
    %8 = vector.broadcast %cst : f32 to vector<1x49x80xf32>
    %9 = arith.maximumf %7, %8 : vector<1x49x80xf32>
    %10 = arith.truncf %9 : vector<1x49x80xf32> to vector<1x49x80xbf16>
    %c0_8 = arith.constant 0 : index
    %c0_9 = arith.constant 0 : index
    %c0_10 = arith.constant 0 : index
    %11 = vector.load %arg4[%c0_8, %c0_9, %c0_10] : memref<1x49x80xbf16, #tpu.memory_space<vmem>>, vector<1x49x80xbf16>
    tpu.vector_store %arg4[%c0_8, %c0_9, %c0_10], %10 {strides = array<i32>} : memref<1x49x80xbf16, #tpu.memory_space<vmem>>, vector<1x49x80xbf16>,
    return
  }
  func.func @transform_0(%arg0: i32) -> (i32, i32, i32) {
    %c0_i32 = arith.constant 0 : i32
    %c0_i32_0 = arith.constant 0 : i32
    %c0_i32_1 = arith.constant 0 : i32
    return %arg0, %c0_i32, %c0_i32_0 : i32, i32, i32
  }
  func.func @transform_1(%arg0: i32) -> (i32, i32, i32) {
    %c0_i32 = arith.constant 0 : i32
    %c0_i32_0 = arith.constant 0 : i32
    %c0_i32_1 = arith.constant 0 : i32
    %c0_i32_2 = arith.constant 0 : i32
    return %c0_i32, %c0_i32_0, %c0_i32_1 : i32, i32, i32
  }
  func.func @transform_2(%arg0: i32) -> (i32, i32, i32) {
    %c0_i32 = arith.constant 0 : i32
    %c0_i32_0 = arith.constant 0 : i32
    %c0_i32_1 = arith.constant 0 : i32
    %c0_i32_2 = arith.constant 0 : i32
    return %c0_i32, %c0_i32_0, %c0_i32_1 : i32, i32, i32
  }
  func.func @transform_3(%arg0: i32) -> (i32, i32, i32) {
    %c0_i32 = arith.constant 0 : i32
    %c0_i32_0 = arith.constant 0 : i32
    %c0_i32_1 = arith.constant 0 : i32
    return %arg0, %c0_i32, %c0_i32_0 : i32, i32, i32
  }
}

module attributes {stable_mosaic.version = 11 : i64} {
  func.func @_conv_bn_kernel(%arg0: i32, %arg1: i32, %arg2: memref<1x352x48xbf16, #tpu.memory_space<vmem>>, %arg3: memref<7x48x48xbf16, #tpu.memory_space<vmem>>, %arg4: memref<1x256x48xbf16, #tpu.memory_space<vmem>>, %arg5: memref<8x48xf32, #tpu.memory_space<vmem>>, %arg6: memref<8x48xf32, #tpu.memory_space<vmem>>, %arg7: memref<256x48xf32, #tpu.memory_space<vmem>>) attributes {dimension_semantics = [#tpu.dimension_semantics<parallel>, #tpu.dimension_semantics<arbitrary>], iteration_bounds = array<i64: 1, 2>, scalar_prefetch = 0 : i64, scratch_operands = 1 : i64, tpu.core_type = #tpu.core_type<tc>, window_params = [{transform_indices = @transform_0, window_bounds = array<i64: 1, 352, 48>}, {pipeline_mode = #tpu.pipeline_mode<synchronous>, transform_indices = @transform_1, window_bounds = array<i64: 7, 48, 48>}, {transform_indices = @transform_2, window_bounds = array<i64: 1, 256, 48>}, {transform_indices = @transform_3, window_bounds = array<i64: 8, 48>}, {transform_indices = @transform_4, window_bounds = array<i64: 8, 48>}]} {
    %c0_i32 = arith.constant 0 : i32
    %0 = arith.cmpi eq, %arg1, %c0_i32 : i32
    %1 = arith.extui %0 : i1 to i32
    %c0_i32_0 = arith.constant 0 : i32
    %2 = arith.cmpi ne, %1, %c0_i32_0 : i32
    scf.if %2 {
      %cst_77 = arith.constant 0.000000e+00 : f32
      %75 = vector.broadcast %cst_77 : f32 to vector<8x48xf32>
      %c0_78 = arith.constant 0 : index
      %c0_79 = arith.constant 0 : index
      %76 = vector.load %arg5[%c0_78, %c0_79] : memref<8x48xf32, #tpu.memory_space<vmem>>, vector<8x48xf32>
      tpu.vector_store %arg5[%c0_78, %c0_79], %75 {strides = array<i32>} : memref<8x48xf32, #tpu.memory_space<vmem>>, vector<8x48xf32>,
      %cst_80 = arith.constant 0.000000e+00 : f32
      %77 = vector.broadcast %cst_80 : f32 to vector<8x48xf32>
      %c0_81 = arith.constant 0 : index
      %c0_82 = arith.constant 0 : index
      %78 = vector.load %arg6[%c0_81, %c0_82] : memref<8x48xf32, #tpu.memory_space<vmem>>, vector<8x48xf32>
      tpu.vector_store %arg6[%c0_81, %c0_82], %77 {strides = array<i32>} : memref<8x48xf32, #tpu.memory_space<vmem>>, vector<8x48xf32>,
    } else {
    }
    %c0 = arith.constant 0 : index
    %c0_1 = arith.constant 0 : index
    %c0_2 = arith.constant 0 : index
    %3 = vector.load %arg2[%c0, %c0_1, %c0_2] : memref<1x352x48xbf16, #tpu.memory_space<vmem>>, vector<1x256x48xbf16>
    %4 = vector.shape_cast %3 : vector<1x256x48xbf16> to vector<256x48xbf16>
    %c0_3 = arith.constant 0 : index
    %c0_4 = arith.constant 0 : index
    %c0_5 = arith.constant 0 : index
    %5 = vector.load %arg3[%c0_3, %c0_4, %c0_5] : memref<7x48x48xbf16, #tpu.memory_space<vmem>>, vector<1x48x48xbf16>
    %6 = vector.shape_cast %5 : vector<1x48x48xbf16> to vector<48x48xbf16>
    %cst = arith.constant dense<0.000000e+00> : vector<256x48xf32>
    %7 = tpu.matmul %4, %6, %cst {dimension_numbers = #tpu.dot_dimension_numbers<[1], [0], [0], [1], [0, 0, 1, 1], [], []>} : vector<256x48xbf16>, vector<48x48xbf16>, vector<256x48xf32> -> vector<256x48xf32>
    %c0_6 = arith.constant 0 : index
    %c0_7 = arith.constant 0 : index
    %8 = vector.load %arg7[%c0_6, %c0_7] : memref<256x48xf32, #tpu.memory_space<vmem>>, vector<256x48xf32>
    tpu.vector_store %arg7[%c0_6, %c0_7], %7 {strides = array<i32>} : memref<256x48xf32, #tpu.memory_space<vmem>>, vector<256x48xf32>,
    %c0_8 = arith.constant 0 : index
    %c16 = arith.constant 16 : index
    %c0_9 = arith.constant 0 : index
    %9 = vector.load %arg2[%c0_8, %c16, %c0_9] : memref<1x352x48xbf16, #tpu.memory_space<vmem>>, vector<1x256x48xbf16>
    %10 = vector.shape_cast %9 : vector<1x256x48xbf16> to vector<256x48xbf16>
    %c1 = arith.constant 1 : index
    %c0_10 = arith.constant 0 : index
    %c0_11 = arith.constant 0 : index
    %11 = vector.load %arg3[%c1, %c0_10, %c0_11] : memref<7x48x48xbf16, #tpu.memory_space<vmem>>, vector<1x48x48xbf16>
    %12 = vector.shape_cast %11 : vector<1x48x48xbf16> to vector<48x48xbf16>
    %cst_12 = arith.constant dense<0.000000e+00> : vector<256x48xf32>
    %13 = tpu.matmul %10, %12, %cst_12 {dimension_numbers = #tpu.dot_dimension_numbers<[1], [0], [0], [1], [0, 0, 1, 1], [], []>} : vector<256x48xbf16>, vector<48x48xbf16>, vector<256x48xf32> -> vector<256x48xf32>
    %c0_13 = arith.constant 0 : index
    %c0_14 = arith.constant 0 : index
    %14 = vector.load %arg7[%c0_13, %c0_14] : memref<256x48xf32, #tpu.memory_space<vmem>>, vector<256x48xf32>
    %15 = arith.addf %14, %13 : vector<256x48xf32>
    %c0_15 = arith.constant 0 : index
    %c0_16 = arith.constant 0 : index
    %16 = vector.load %arg7[%c0_15, %c0_16] : memref<256x48xf32, #tpu.memory_space<vmem>>, vector<256x48xf32>
    tpu.vector_store %arg7[%c0_15, %c0_16], %15 {strides = array<i32>} : memref<256x48xf32, #tpu.memory_space<vmem>>, vector<256x48xf32>,
    %c0_17 = arith.constant 0 : index
    %c32 = arith.constant 32 : index
    %c0_18 = arith.constant 0 : index
    %17 = vector.load %arg2[%c0_17, %c32, %c0_18] : memref<1x352x48xbf16, #tpu.memory_space<vmem>>, vector<1x256x48xbf16>
    %18 = vector.shape_cast %17 : vector<1x256x48xbf16> to vector<256x48xbf16>
    %c2 = arith.constant 2 : index
    %c0_19 = arith.constant 0 : index
    %c0_20 = arith.constant 0 : index
    %19 = vector.load %arg3[%c2, %c0_19, %c0_20] : memref<7x48x48xbf16, #tpu.memory_space<vmem>>, vector<1x48x48xbf16>
    %20 = vector.shape_cast %19 : vector<1x48x48xbf16> to vector<48x48xbf16>
    %cst_21 = arith.constant dense<0.000000e+00> : vector<256x48xf32>
    %21 = tpu.matmul %18, %20, %cst_21 {dimension_numbers = #tpu.dot_dimension_numbers<[1], [0], [0], [1], [0, 0, 1, 1], [], []>} : vector<256x48xbf16>, vector<48x48xbf16>, vector<256x48xf32> -> vector<256x48xf32>
    %c0_22 = arith.constant 0 : index
    %c0_23 = arith.constant 0 : index
    %22 = vector.load %arg7[%c0_22, %c0_23] : memref<256x48xf32, #tpu.memory_space<vmem>>, vector<256x48xf32>
    %23 = arith.addf %22, %21 : vector<256x48xf32>
    %c0_24 = arith.constant 0 : index
    %c0_25 = arith.constant 0 : index
    %24 = vector.load %arg7[%c0_24, %c0_25] : memref<256x48xf32, #tpu.memory_space<vmem>>, vector<256x48xf32>
    tpu.vector_store %arg7[%c0_24, %c0_25], %23 {strides = array<i32>} : memref<256x48xf32, #tpu.memory_space<vmem>>, vector<256x48xf32>,
    %c0_26 = arith.constant 0 : index
    %c48 = arith.constant 48 : index
    %c0_27 = arith.constant 0 : index
    %25 = vector.load %arg2[%c0_26, %c48, %c0_27] : memref<1x352x48xbf16, #tpu.memory_space<vmem>>, vector<1x256x48xbf16>
    %26 = vector.shape_cast %25 : vector<1x256x48xbf16> to vector<256x48xbf16>
    %c3 = arith.constant 3 : index
    %c0_28 = arith.constant 0 : index
    %c0_29 = arith.constant 0 : index
    %27 = vector.load %arg3[%c3, %c0_28, %c0_29] : memref<7x48x48xbf16, #tpu.memory_space<vmem>>, vector<1x48x48xbf16>
    %28 = vector.shape_cast %27 : vector<1x48x48xbf16> to vector<48x48xbf16>
    %cst_30 = arith.constant dense<0.000000e+00> : vector<256x48xf32>
    %29 = tpu.matmul %26, %28, %cst_30 {dimension_numbers = #tpu.dot_dimension_numbers<[1], [0], [0], [1], [0, 0, 1, 1], [], []>} : vector<256x48xbf16>, vector<48x48xbf16>, vector<256x48xf32> -> vector<256x48xf32>
    %c0_31 = arith.constant 0 : index
    %c0_32 = arith.constant 0 : index
    %30 = vector.load %arg7[%c0_31, %c0_32] : memref<256x48xf32, #tpu.memory_space<vmem>>, vector<256x48xf32>
    %31 = arith.addf %30, %29 : vector<256x48xf32>
    %c0_33 = arith.constant 0 : index
    %c0_34 = arith.constant 0 : index
    %32 = vector.load %arg7[%c0_33, %c0_34] : memref<256x48xf32, #tpu.memory_space<vmem>>, vector<256x48xf32>
    tpu.vector_store %arg7[%c0_33, %c0_34], %31 {strides = array<i32>} : memref<256x48xf32, #tpu.memory_space<vmem>>, vector<256x48xf32>,
    %c0_35 = arith.constant 0 : index
    %c64 = arith.constant 64 : index
    %c0_36 = arith.constant 0 : index
    %33 = vector.load %arg2[%c0_35, %c64, %c0_36] : memref<1x352x48xbf16, #tpu.memory_space<vmem>>, vector<1x256x48xbf16>
    %34 = vector.shape_cast %33 : vector<1x256x48xbf16> to vector<256x48xbf16>
    %c4 = arith.constant 4 : index
    %c0_37 = arith.constant 0 : index
    %c0_38 = arith.constant 0 : index
    %35 = vector.load %arg3[%c4, %c0_37, %c0_38] : memref<7x48x48xbf16, #tpu.memory_space<vmem>>, vector<1x48x48xbf16>
    %36 = vector.shape_cast %35 : vector<1x48x48xbf16> to vector<48x48xbf16>
    %cst_39 = arith.constant dense<0.000000e+00> : vector<256x48xf32>
    %37 = tpu.matmul %34, %36, %cst_39 {dimension_numbers = #tpu.dot_dimension_numbers<[1], [0], [0], [1], [0, 0, 1, 1], [], []>} : vector<256x48xbf16>, vector<48x48xbf16>, vector<256x48xf32> -> vector<256x48xf32>
    %c0_40 = arith.constant 0 : index
    %c0_41 = arith.constant 0 : index
    %38 = vector.load %arg7[%c0_40, %c0_41] : memref<256x48xf32, #tpu.memory_space<vmem>>, vector<256x48xf32>
    %39 = arith.addf %38, %37 : vector<256x48xf32>
    %c0_42 = arith.constant 0 : index
    %c0_43 = arith.constant 0 : index
    %40 = vector.load %arg7[%c0_42, %c0_43] : memref<256x48xf32, #tpu.memory_space<vmem>>, vector<256x48xf32>
    tpu.vector_store %arg7[%c0_42, %c0_43], %39 {strides = array<i32>} : memref<256x48xf32, #tpu.memory_space<vmem>>, vector<256x48xf32>,
    %c0_44 = arith.constant 0 : index
    %c80 = arith.constant 80 : index
    %c0_45 = arith.constant 0 : index
    %41 = vector.load %arg2[%c0_44, %c80, %c0_45] : memref<1x352x48xbf16, #tpu.memory_space<vmem>>, vector<1x256x48xbf16>
    %42 = vector.shape_cast %41 : vector<1x256x48xbf16> to vector<256x48xbf16>
    %c5 = arith.constant 5 : index
    %c0_46 = arith.constant 0 : index
    %c0_47 = arith.constant 0 : index
    %43 = vector.load %arg3[%c5, %c0_46, %c0_47] : memref<7x48x48xbf16, #tpu.memory_space<vmem>>, vector<1x48x48xbf16>
    %44 = vector.shape_cast %43 : vector<1x48x48xbf16> to vector<48x48xbf16>
    %cst_48 = arith.constant dense<0.000000e+00> : vector<256x48xf32>
    %45 = tpu.matmul %42, %44, %cst_48 {dimension_numbers = #tpu.dot_dimension_numbers<[1], [0], [0], [1], [0, 0, 1, 1], [], []>} : vector<256x48xbf16>, vector<48x48xbf16>, vector<256x48xf32> -> vector<256x48xf32>
    %c0_49 = arith.constant 0 : index
    %c0_50 = arith.constant 0 : index
    %46 = vector.load %arg7[%c0_49, %c0_50] : memref<256x48xf32, #tpu.memory_space<vmem>>, vector<256x48xf32>
    %47 = arith.addf %46, %45 : vector<256x48xf32>
    %c0_51 = arith.constant 0 : index
    %c0_52 = arith.constant 0 : index
    %48 = vector.load %arg7[%c0_51, %c0_52] : memref<256x48xf32, #tpu.memory_space<vmem>>, vector<256x48xf32>
    tpu.vector_store %arg7[%c0_51, %c0_52], %47 {strides = array<i32>} : memref<256x48xf32, #tpu.memory_space<vmem>>, vector<256x48xf32>,
    %c0_53 = arith.constant 0 : index
    %c96 = arith.constant 96 : index
    %c0_54 = arith.constant 0 : index
    %49 = vector.load %arg2[%c0_53, %c96, %c0_54] : memref<1x352x48xbf16, #tpu.memory_space<vmem>>, vector<1x256x48xbf16>
    %50 = vector.shape_cast %49 : vector<1x256x48xbf16> to vector<256x48xbf16>
    %c6 = arith.constant 6 : index
    %c0_55 = arith.constant 0 : index
    %c0_56 = arith.constant 0 : index
    %51 = vector.load %arg3[%c6, %c0_55, %c0_56] : memref<7x48x48xbf16, #tpu.memory_space<vmem>>, vector<1x48x48xbf16>
    %52 = vector.shape_cast %51 : vector<1x48x48xbf16> to vector<48x48xbf16>
    %cst_57 = arith.constant dense<0.000000e+00> : vector<256x48xf32>
    %53 = tpu.matmul %50, %52, %cst_57 {dimension_numbers = #tpu.dot_dimension_numbers<[1], [0], [0], [1], [0, 0, 1, 1], [], []>} : vector<256x48xbf16>, vector<48x48xbf16>, vector<256x48xf32> -> vector<256x48xf32>
    %c0_58 = arith.constant 0 : index
    %c0_59 = arith.constant 0 : index
    %54 = vector.load %arg7[%c0_58, %c0_59] : memref<256x48xf32, #tpu.memory_space<vmem>>, vector<256x48xf32>
    %55 = arith.addf %54, %53 : vector<256x48xf32>
    %c0_60 = arith.constant 0 : index
    %c0_61 = arith.constant 0 : index
    %56 = vector.load %arg7[%c0_60, %c0_61] : memref<256x48xf32, #tpu.memory_space<vmem>>, vector<256x48xf32>
    tpu.vector_store %arg7[%c0_60, %c0_61], %55 {strides = array<i32>} : memref<256x48xf32, #tpu.memory_space<vmem>>, vector<256x48xf32>,
    %c0_62 = arith.constant 0 : index
    %c0_63 = arith.constant 0 : index
    %57 = vector.load %arg7[%c0_62, %c0_63] : memref<256x48xf32, #tpu.memory_space<vmem>>, vector<256x48xf32>
    %58 = arith.truncf %57 : vector<256x48xf32> to vector<256x48xbf16>
    %c0_64 = arith.constant 0 : index
    %c0_65 = arith.constant 0 : index
    %c0_66 = arith.constant 0 : index
    %59 = vector.load %arg4[%c0_64, %c0_65, %c0_66] : memref<1x256x48xbf16, #tpu.memory_space<vmem>>, vector<1x256x48xbf16>
    %60 = vector.shape_cast %59 : vector<1x256x48xbf16> to vector<256x48xbf16>
    %61 = vector.shape_cast %58 : vector<256x48xbf16> to vector<1x256x48xbf16>
    tpu.vector_store %arg4[%c0_64, %c0_65, %c0_66], %61 {strides = array<i32>} : memref<1x256x48xbf16, #tpu.memory_space<vmem>>, vector<1x256x48xbf16>,
    %c0_67 = arith.constant 0 : index
    %c0_68 = arith.constant 0 : index
    %62 = vector.load %arg5[%c0_67, %c0_68] : memref<8x48xf32, #tpu.memory_space<vmem>>, vector<8x48xf32>
    %cst_69 = arith.constant dense<0.000000e+00> : vector<48xf32>
    %63 = vector.multi_reduction <add>, %57, %cst_69 [0] : vector<256x48xf32> to vector<48xf32>
    %64 = vector.shape_cast %63 : vector<48xf32> to vector<1x48xf32>
    %65 = vector.broadcast %64 : vector<1x48xf32> to vector<8x48xf32>
    %66 = arith.addf %62, %65 : vector<8x48xf32>
    %c0_70 = arith.constant 0 : index
    %c0_71 = arith.constant 0 : index
    %67 = vector.load %arg5[%c0_70, %c0_71] : memref<8x48xf32, #tpu.memory_space<vmem>>, vector<8x48xf32>
    tpu.vector_store %arg5[%c0_70, %c0_71], %66 {strides = array<i32>} : memref<8x48xf32, #tpu.memory_space<vmem>>, vector<8x48xf32>,
    %c0_72 = arith.constant 0 : index
    %c0_73 = arith.constant 0 : index
    %68 = vector.load %arg6[%c0_72, %c0_73] : memref<8x48xf32, #tpu.memory_space<vmem>>, vector<8x48xf32>
    %69 = arith.mulf %57, %57 : vector<256x48xf32>
    %cst_74 = arith.constant dense<0.000000e+00> : vector<48xf32>
    %70 = vector.multi_reduction <add>, %69, %cst_74 [0] : vector<256x48xf32> to vector<48xf32>
    %71 = vector.shape_cast %70 : vector<48xf32> to vector<1x48xf32>
    %72 = vector.broadcast %71 : vector<1x48xf32> to vector<8x48xf32>
    %73 = arith.addf %68, %72 : vector<8x48xf32>
    %c0_75 = arith.constant 0 : index
    %c0_76 = arith.constant 0 : index
    %74 = vector.load %arg6[%c0_75, %c0_76] : memref<8x48xf32, #tpu.memory_space<vmem>>, vector<8x48xf32>
    tpu.vector_store %arg6[%c0_75, %c0_76], %73 {strides = array<i32>} : memref<8x48xf32, #tpu.memory_space<vmem>>, vector<8x48xf32>,
    return
  }
  func.func @transform_0(%arg0: i32, %arg1: i32) -> (i32, i32, i32) {
    %c2_i32 = arith.constant 2 : i32
    %0 = arith.muli %arg0, %c2_i32 : i32
    %1 = arith.addi %0, %arg1 : i32
    %c0_i32 = arith.constant 0 : i32
    %c0_i32_0 = arith.constant 0 : i32
    %c0_i32_1 = arith.constant 0 : i32
    return %1, %c0_i32, %c0_i32_0 : i32, i32, i32
  }
  func.func @transform_1(%arg0: i32, %arg1: i32) -> (i32, i32, i32) {
    %c0_i32 = arith.constant 0 : i32
    %c0_i32_0 = arith.constant 0 : i32
    %c0_i32_1 = arith.constant 0 : i32
    %c0_i32_2 = arith.constant 0 : i32
    return %c0_i32, %c0_i32_0, %c0_i32_1 : i32, i32, i32
  }
  func.func @transform_2(%arg0: i32, %arg1: i32) -> (i32, i32, i32) {
    %c2_i32 = arith.constant 2 : i32
    %0 = arith.muli %arg0, %c2_i32 : i32
    %1 = arith.addi %0, %arg1 : i32
    %c0_i32 = arith.constant 0 : i32
    %c0_i32_0 = arith.constant 0 : i32
    %c0_i32_1 = arith.constant 0 : i32
    return %1, %c0_i32, %c0_i32_0 : i32, i32, i32
  }
  func.func @transform_3(%arg0: i32, %arg1: i32) -> (i32, i32) {
    %c0_i32 = arith.constant 0 : i32
    %c0_i32_0 = arith.constant 0 : i32
    return %arg0, %c0_i32 : i32, i32
  }
  func.func @transform_4(%arg0: i32, %arg1: i32) -> (i32, i32) {
    %c0_i32 = arith.constant 0 : i32
    %c0_i32_0 = arith.constant 0 : i32
    return %arg0, %c0_i32 : i32, i32
  }
}

module attributes {stable_mosaic.version = 11 : i64} {
  func.func @_conv_bn_kernel(%arg0: i32, %arg1: i32, %arg2: memref<1x49x432xbf16, #tpu.memory_space<vmem>>, %arg3: memref<1x432x48xbf16, #tpu.memory_space<vmem>>, %arg4: memref<1x49x48xbf16, #tpu.memory_space<vmem>>, %arg5: memref<8x48xf32, #tpu.memory_space<vmem>>, %arg6: memref<8x48xf32, #tpu.memory_space<vmem>>, %arg7: memref<49x48xf32, #tpu.memory_space<vmem>>) attributes {dimension_semantics = [#tpu.dimension_semantics<parallel>, #tpu.dimension_semantics<arbitrary>], iteration_bounds = array<i64: 1, 2>, scalar_prefetch = 0 : i64, scratch_operands = 1 : i64, tpu.core_type = #tpu.core_type<tc>, window_params = [{transform_indices = @transform_0, window_bounds = array<i64: 1, 49, 432>}, {pipeline_mode = #tpu.pipeline_mode<synchronous>, transform_indices = @transform_1, window_bounds = array<i64: 1, 432, 48>}, {transform_indices = @transform_2, window_bounds = array<i64: 1, 49, 48>}, {transform_indices = @transform_3, window_bounds = array<i64: 8, 48>}, {transform_indices = @transform_4, window_bounds = array<i64: 8, 48>}]} {
    %c0_i32 = arith.constant 0 : i32
    %0 = arith.cmpi eq, %arg1, %c0_i32 : i32
    %1 = arith.extui %0 : i1 to i32
    %c0_i32_0 = arith.constant 0 : i32
    %2 = arith.cmpi ne, %1, %c0_i32_0 : i32
    scf.if %2 {
      %cst_23 = arith.constant 0.000000e+00 : f32
      %27 = vector.broadcast %cst_23 : f32 to vector<8x48xf32>
      %c0_24 = arith.constant 0 : index
      %c0_25 = arith.constant 0 : index
      %28 = vector.load %arg5[%c0_24, %c0_25] : memref<8x48xf32, #tpu.memory_space<vmem>>, vector<8x48xf32>
      tpu.vector_store %arg5[%c0_24, %c0_25], %27 {strides = array<i32>} : memref<8x48xf32, #tpu.memory_space<vmem>>, vector<8x48xf32>,
      %cst_26 = arith.constant 0.000000e+00 : f32
      %29 = vector.broadcast %cst_26 : f32 to vector<8x48xf32>
      %c0_27 = arith.constant 0 : index
      %c0_28 = arith.constant 0 : index
      %30 = vector.load %arg6[%c0_27, %c0_28] : memref<8x48xf32, #tpu.memory_space<vmem>>, vector<8x48xf32>
      tpu.vector_store %arg6[%c0_27, %c0_28], %29 {strides = array<i32>} : memref<8x48xf32, #tpu.memory_space<vmem>>, vector<8x48xf32>,
    } else {
    }
    %c0 = arith.constant 0 : index
    %c0_1 = arith.constant 0 : index
    %c0_2 = arith.constant 0 : index
    %3 = vector.load %arg2[%c0, %c0_1, %c0_2] : memref<1x49x432xbf16, #tpu.memory_space<vmem>>, vector<1x49x432xbf16>
    %4 = vector.shape_cast %3 : vector<1x49x432xbf16> to vector<49x432xbf16>
    %c0_3 = arith.constant 0 : index
    %c0_4 = arith.constant 0 : index
    %c0_5 = arith.constant 0 : index
    %5 = vector.load %arg3[%c0_3, %c0_4, %c0_5] : memref<1x432x48xbf16, #tpu.memory_space<vmem>>, vector<1x432x48xbf16>
    %6 = vector.shape_cast %5 : vector<1x432x48xbf16> to vector<432x48xbf16>
    %cst = arith.constant dense<0.000000e+00> : vector<49x48xf32>
    %7 = tpu.matmul %4, %6, %cst {dimension_numbers = #tpu.dot_dimension_numbers<[1], [0], [0], [1], [0, 0, 1, 1], [], []>} : vector<49x432xbf16>, vector<432x48xbf16>, vector<49x48xf32> -> vector<49x48xf32>
    %c0_6 = arith.constant 0 : index
    %c0_7 = arith.constant 0 : index
    %8 = vector.load %arg7[%c0_6, %c0_7] : memref<49x48xf32, #tpu.memory_space<vmem>>, vector<49x48xf32>
    tpu.vector_store %arg7[%c0_6, %c0_7], %7 {strides = array<i32>} : memref<49x48xf32, #tpu.memory_space<vmem>>, vector<49x48xf32>,
    %c0_8 = arith.constant 0 : index
    %c0_9 = arith.constant 0 : index
    %9 = vector.load %arg7[%c0_8, %c0_9] : memref<49x48xf32, #tpu.memory_space<vmem>>, vector<49x48xf32>
    %10 = arith.truncf %9 : vector<49x48xf32> to vector<49x48xbf16>
    %c0_10 = arith.constant 0 : index
    %c0_11 = arith.constant 0 : index
    %c0_12 = arith.constant 0 : index
    %11 = vector.load %arg4[%c0_10, %c0_11, %c0_12] : memref<1x49x48xbf16, #tpu.memory_space<vmem>>, vector<1x49x48xbf16>
    %12 = vector.shape_cast %11 : vector<1x49x48xbf16> to vector<49x48xbf16>
    %13 = vector.shape_cast %10 : vector<49x48xbf16> to vector<1x49x48xbf16>
    tpu.vector_store %arg4[%c0_10, %c0_11, %c0_12], %13 {strides = array<i32>} : memref<1x49x48xbf16, #tpu.memory_space<vmem>>, vector<1x49x48xbf16>,
    %c0_13 = arith.constant 0 : index
    %c0_14 = arith.constant 0 : index
    %14 = vector.load %arg5[%c0_13, %c0_14] : memref<8x48xf32, #tpu.memory_space<vmem>>, vector<8x48xf32>
    %cst_15 = arith.constant dense<0.000000e+00> : vector<48xf32>
    %15 = vector.multi_reduction <add>, %9, %cst_15 [0] : vector<49x48xf32> to vector<48xf32>
    %16 = vector.shape_cast %15 : vector<48xf32> to vector<1x48xf32>
    %17 = vector.broadcast %16 : vector<1x48xf32> to vector<8x48xf32>
    %18 = arith.addf %14, %17 : vector<8x48xf32>
    %c0_16 = arith.constant 0 : index
    %c0_17 = arith.constant 0 : index
    %19 = vector.load %arg5[%c0_16, %c0_17] : memref<8x48xf32, #tpu.memory_space<vmem>>, vector<8x48xf32>
    tpu.vector_store %arg5[%c0_16, %c0_17], %18 {strides = array<i32>} : memref<8x48xf32, #tpu.memory_space<vmem>>, vector<8x48xf32>,
    %c0_18 = arith.constant 0 : index
    %c0_19 = arith.constant 0 : index
    %20 = vector.load %arg6[%c0_18, %c0_19] : memref<8x48xf32, #tpu.memory_space<vmem>>, vector<8x48xf32>
    %21 = arith.mulf %9, %9 : vector<49x48xf32>
    %cst_20 = arith.constant dense<0.000000e+00> : vector<48xf32>
    %22 = vector.multi_reduction <add>, %21, %cst_20 [0] : vector<49x48xf32> to vector<48xf32>
    %23 = vector.shape_cast %22 : vector<48xf32> to vector<1x48xf32>
    %24 = vector.broadcast %23 : vector<1x48xf32> to vector<8x48xf32>
    %25 = arith.addf %20, %24 : vector<8x48xf32>
    %c0_21 = arith.constant 0 : index
    %c0_22 = arith.constant 0 : index
    %26 = vector.load %arg6[%c0_21, %c0_22] : memref<8x48xf32, #tpu.memory_space<vmem>>, vector<8x48xf32>
    tpu.vector_store %arg6[%c0_21, %c0_22], %25 {strides = array<i32>} : memref<8x48xf32, #tpu.memory_space<vmem>>, vector<8x48xf32>,
    return
  }
  func.func @transform_0(%arg0: i32, %arg1: i32) -> (i32, i32, i32) {
    %c2_i32 = arith.constant 2 : i32
    %0 = arith.muli %arg0, %c2_i32 : i32
    %1 = arith.addi %0, %arg1 : i32
    %c0_i32 = arith.constant 0 : i32
    %c0_i32_0 = arith.constant 0 : i32
    %c0_i32_1 = arith.constant 0 : i32
    return %1, %c0_i32, %c0_i32_0 : i32, i32, i32
  }
  func.func @transform_1(%arg0: i32, %arg1: i32) -> (i32, i32, i32) {
    %c0_i32 = arith.constant 0 : i32
    %c0_i32_0 = arith.constant 0 : i32
    %c0_i32_1 = arith.constant 0 : i32
    %c0_i32_2 = arith.constant 0 : i32
    return %c0_i32, %c0_i32_0, %c0_i32_1 : i32, i32, i32
  }
  func.func @transform_2(%arg0: i32, %arg1: i32) -> (i32, i32, i32) {
    %c2_i32 = arith.constant 2 : i32
    %0 = arith.muli %arg0, %c2_i32 : i32
    %1 = arith.addi %0, %arg1 : i32
    %c0_i32 = arith.constant 0 : i32
    %c0_i32_0 = arith.constant 0 : i32
    %c0_i32_1 = arith.constant 0 : i32
    return %1, %c0_i32, %c0_i32_0 : i32, i32, i32
  }
  func.func @transform_3(%arg0: i32, %arg1: i32) -> (i32, i32) {
    %c0_i32 = arith.constant 0 : i32
    %c0_i32_0 = arith.constant 0 : i32
    return %arg0, %c0_i32 : i32, i32
  }
  func.func @transform_4(%arg0: i32, %arg1: i32) -> (i32, i32) {
    %c0_i32 = arith.constant 0 : i32
    %c0_i32_0 = arith.constant 0 : i32
    return %arg0, %c0_i32 : i32, i32
  }
}

module attributes {stable_mosaic.version = 11 : i64} {
  func.func @_bn_relu_kernel(%arg0: i32, %arg1: memref<1x49x48xbf16, #tpu.memory_space<vmem>>, %arg2: memref<1x1x48xf32, #tpu.memory_space<vmem>>, %arg3: memref<1x1x48xf32, #tpu.memory_space<vmem>>, %arg4: memref<1x49x48xbf16, #tpu.memory_space<vmem>>) attributes {dimension_semantics = [#tpu.dimension_semantics<parallel>], iteration_bounds = array<i64: 2>, scalar_prefetch = 0 : i64, scratch_operands = 0 : i64, tpu.core_type = #tpu.core_type<tc>, window_params = [{transform_indices = @transform_0, window_bounds = array<i64: 1, 49, 48>}, {pipeline_mode = #tpu.pipeline_mode<synchronous>, transform_indices = @transform_1, window_bounds = array<i64: 1, 1, 48>}, {pipeline_mode = #tpu.pipeline_mode<synchronous>, transform_indices = @transform_2, window_bounds = array<i64: 1, 1, 48>}, {transform_indices = @transform_3, window_bounds = array<i64: 1, 49, 48>}]} {
    %c0 = arith.constant 0 : index
    %c0_0 = arith.constant 0 : index
    %c0_1 = arith.constant 0 : index
    %0 = vector.load %arg1[%c0, %c0_0, %c0_1] : memref<1x49x48xbf16, #tpu.memory_space<vmem>>, vector<1x49x48xbf16>
    %1 = arith.extf %0 : vector<1x49x48xbf16> to vector<1x49x48xf32>
    %c0_2 = arith.constant 0 : index
    %c0_3 = arith.constant 0 : index
    %c0_4 = arith.constant 0 : index
    %2 = vector.load %arg2[%c0_2, %c0_3, %c0_4] : memref<1x1x48xf32, #tpu.memory_space<vmem>>, vector<1x1x48xf32>
    %3 = vector.broadcast %2 : vector<1x1x48xf32> to vector<1x49x48xf32>
    %4 = arith.mulf %1, %3 : vector<1x49x48xf32>
    %c0_5 = arith.constant 0 : index
    %c0_6 = arith.constant 0 : index
    %c0_7 = arith.constant 0 : index
    %5 = vector.load %arg3[%c0_5, %c0_6, %c0_7] : memref<1x1x48xf32, #tpu.memory_space<vmem>>, vector<1x1x48xf32>
    %6 = vector.broadcast %5 : vector<1x1x48xf32> to vector<1x49x48xf32>
    %7 = arith.addf %4, %6 : vector<1x49x48xf32>
    %cst = arith.constant 0.000000e+00 : f32
    %8 = vector.broadcast %cst : f32 to vector<1x49x48xf32>
    %9 = arith.maximumf %7, %8 : vector<1x49x48xf32>
    %10 = arith.truncf %9 : vector<1x49x48xf32> to vector<1x49x48xbf16>
    %c0_8 = arith.constant 0 : index
    %c0_9 = arith.constant 0 : index
    %c0_10 = arith.constant 0 : index
    %11 = vector.load %arg4[%c0_8, %c0_9, %c0_10] : memref<1x49x48xbf16, #tpu.memory_space<vmem>>, vector<1x49x48xbf16>
    tpu.vector_store %arg4[%c0_8, %c0_9, %c0_10], %10 {strides = array<i32>} : memref<1x49x48xbf16, #tpu.memory_space<vmem>>, vector<1x49x48xbf16>,
    return
  }
  func.func @transform_0(%arg0: i32) -> (i32, i32, i32) {
    %c0_i32 = arith.constant 0 : i32
    %c0_i32_0 = arith.constant 0 : i32
    %c0_i32_1 = arith.constant 0 : i32
    return %arg0, %c0_i32, %c0_i32_0 : i32, i32, i32
  }
  func.func @transform_1(%arg0: i32) -> (i32, i32, i32) {
    %c0_i32 = arith.constant 0 : i32
    %c0_i32_0 = arith.constant 0 : i32
    %c0_i32_1 = arith.constant 0 : i32
    %c0_i32_2 = arith.constant 0 : i32
    return %c0_i32, %c0_i32_0, %c0_i32_1 : i32, i32, i32
  }
  func.func @transform_2(%arg0: i32) -> (i32, i32, i32) {
    %c0_i32 = arith.constant 0 : i32
    %c0_i32_0 = arith.constant 0 : i32
    %c0_i32_1 = arith.constant 0 : i32
    %c0_i32_2 = arith.constant 0 : i32
    return %c0_i32, %c0_i32_0, %c0_i32_1 : i32, i32, i32
  }
  func.func @transform_3(%arg0: i32) -> (i32, i32, i32) {
    %c0_i32 = arith.constant 0 : i32
    %c0_i32_0 = arith.constant 0 : i32
    %c0_i32_1 = arith.constant 0 : i32
    return %arg0, %c0_i32, %c0_i32_0 : i32, i32, i32
  }
}

module attributes {stable_mosaic.version = 11 : i64} {
  func.func @_maxpool_kernel(%arg0: i32, %arg1: memref<1x8x8x4xf32, #tpu.memory_space<vmem>>, %arg2: memref<1x8x8x4xf32, #tpu.memory_space<vmem>>, %arg3: memref<1x8x8x4xf32, #tpu.memory_space<vmem>>, %arg4: memref<1x8x8x4xf32, #tpu.memory_space<vmem>>, %arg5: memref<1x7x7x4xf32, #tpu.memory_space<vmem>>) attributes {dimension_semantics = [#tpu.dimension_semantics<parallel>], iteration_bounds = array<i64: 2>, scalar_prefetch = 0 : i64, scratch_operands = 0 : i64, tpu.core_type = #tpu.core_type<tc>, window_params = [{transform_indices = @transform_0, window_bounds = array<i64: 1, 8, 8, 4>}, {transform_indices = @transform_1, window_bounds = array<i64: 1, 8, 8, 4>}, {transform_indices = @transform_2, window_bounds = array<i64: 1, 8, 8, 4>}, {transform_indices = @transform_3, window_bounds = array<i64: 1, 8, 8, 4>}, {transform_indices = @transform_4, window_bounds = array<i64: 1, 7, 7, 4>}]} {
    %c0 = arith.constant 0 : index
    %c0_0 = arith.constant 0 : index
    %c0_1 = arith.constant 0 : index
    %c0_2 = arith.constant 0 : index
    %0 = vector.load %arg1[%c0, %c0_0, %c0_1, %c0_2] : memref<1x8x8x4xf32, #tpu.memory_space<vmem>>, vector<1x7x7x4xf32>
    %1 = vector.shape_cast %0 : vector<1x7x7x4xf32> to vector<7x7x4xf32>
    %c0_3 = arith.constant 0 : index
    %c0_4 = arith.constant 0 : index
    %c1 = arith.constant 1 : index
    %c0_5 = arith.constant 0 : index
    %2 = vector.load %arg1[%c0_3, %c0_4, %c1, %c0_5] : memref<1x8x8x4xf32, #tpu.memory_space<vmem>>, vector<1x7x7x4xf32>
    %3 = vector.shape_cast %2 : vector<1x7x7x4xf32> to vector<7x7x4xf32>
    %4 = arith.maximumf %1, %3 : vector<7x7x4xf32>
    %c0_6 = arith.constant 0 : index
    %c1_7 = arith.constant 1 : index
    %c0_8 = arith.constant 0 : index
    %c0_9 = arith.constant 0 : index
    %5 = vector.load %arg1[%c0_6, %c1_7, %c0_8, %c0_9] : memref<1x8x8x4xf32, #tpu.memory_space<vmem>>, vector<1x7x7x4xf32>
    %6 = vector.shape_cast %5 : vector<1x7x7x4xf32> to vector<7x7x4xf32>
    %7 = arith.maximumf %4, %6 : vector<7x7x4xf32>
    %c0_10 = arith.constant 0 : index
    %c1_11 = arith.constant 1 : index
    %c1_12 = arith.constant 1 : index
    %c0_13 = arith.constant 0 : index
    %8 = vector.load %arg1[%c0_10, %c1_11, %c1_12, %c0_13] : memref<1x8x8x4xf32, #tpu.memory_space<vmem>>, vector<1x7x7x4xf32>
    %9 = vector.shape_cast %8 : vector<1x7x7x4xf32> to vector<7x7x4xf32>
    %10 = arith.maximumf %7, %9 : vector<7x7x4xf32>
    %c0_14 = arith.constant 0 : index
    %c0_15 = arith.constant 0 : index
    %c0_16 = arith.constant 0 : index
    %c0_17 = arith.constant 0 : index
    %11 = vector.load %arg2[%c0_14, %c0_15, %c0_16, %c0_17] : memref<1x8x8x4xf32, #tpu.memory_space<vmem>>, vector<1x7x7x4xf32>
    %12 = vector.shape_cast %11 : vector<1x7x7x4xf32> to vector<7x7x4xf32>
    %13 = arith.maximumf %10, %12 : vector<7x7x4xf32>
    %c0_18 = arith.constant 0 : index
    %c1_19 = arith.constant 1 : index
    %c0_20 = arith.constant 0 : index
    %c0_21 = arith.constant 0 : index
    %14 = vector.load %arg2[%c0_18, %c1_19, %c0_20, %c0_21] : memref<1x8x8x4xf32, #tpu.memory_space<vmem>>, vector<1x7x7x4xf32>
    %15 = vector.shape_cast %14 : vector<1x7x7x4xf32> to vector<7x7x4xf32>
    %16 = arith.maximumf %13, %15 : vector<7x7x4xf32>
    %c0_22 = arith.constant 0 : index
    %c0_23 = arith.constant 0 : index
    %c0_24 = arith.constant 0 : index
    %c0_25 = arith.constant 0 : index
    %17 = vector.load %arg3[%c0_22, %c0_23, %c0_24, %c0_25] : memref<1x8x8x4xf32, #tpu.memory_space<vmem>>, vector<1x7x7x4xf32>
    %18 = vector.shape_cast %17 : vector<1x7x7x4xf32> to vector<7x7x4xf32>
    %19 = arith.maximumf %16, %18 : vector<7x7x4xf32>
    %c0_26 = arith.constant 0 : index
    %c0_27 = arith.constant 0 : index
    %c1_28 = arith.constant 1 : index
    %c0_29 = arith.constant 0 : index
    %20 = vector.load %arg3[%c0_26, %c0_27, %c1_28, %c0_29] : memref<1x8x8x4xf32, #tpu.memory_space<vmem>>, vector<1x7x7x4xf32>
    %21 = vector.shape_cast %20 : vector<1x7x7x4xf32> to vector<7x7x4xf32>
    %22 = arith.maximumf %19, %21 : vector<7x7x4xf32>
    %c0_30 = arith.constant 0 : index
    %c0_31 = arith.constant 0 : index
    %c0_32 = arith.constant 0 : index
    %c0_33 = arith.constant 0 : index
    %23 = vector.load %arg4[%c0_30, %c0_31, %c0_32, %c0_33] : memref<1x8x8x4xf32, #tpu.memory_space<vmem>>, vector<1x7x7x4xf32>
    %24 = vector.shape_cast %23 : vector<1x7x7x4xf32> to vector<7x7x4xf32>
    %25 = arith.maximumf %22, %24 : vector<7x7x4xf32>
    %c0_34 = arith.constant 0 : index
    %c0_35 = arith.constant 0 : index
    %c0_36 = arith.constant 0 : index
    %c0_37 = arith.constant 0 : index
    %26 = vector.load %arg5[%c0_34, %c0_35, %c0_36, %c0_37] : memref<1x7x7x4xf32, #tpu.memory_space<vmem>>, vector<1x7x7x4xf32>
    %27 = vector.shape_cast %26 : vector<1x7x7x4xf32> to vector<7x7x4xf32>
    %28 = vector.shape_cast %25 : vector<7x7x4xf32> to vector<1x7x7x4xf32>
    tpu.vector_store %arg5[%c0_34, %c0_35, %c0_36, %c0_37], %28 {strides = array<i32>} : memref<1x7x7x4xf32, #tpu.memory_space<vmem>>, vector<1x7x7x4xf32>,
    return
  }
  func.func @transform_0(%arg0: i32) -> (i32, i32, i32, i32) {
    %c0_i32 = arith.constant 0 : i32
    %c0_i32_0 = arith.constant 0 : i32
    %c0_i32_1 = arith.constant 0 : i32
    %c0_i32_2 = arith.constant 0 : i32
    return %arg0, %c0_i32, %c0_i32_0, %c0_i32_1 : i32, i32, i32, i32
  }
  func.func @transform_1(%arg0: i32) -> (i32, i32, i32, i32) {
    %c0_i32 = arith.constant 0 : i32
    %c0_i32_0 = arith.constant 0 : i32
    %c0_i32_1 = arith.constant 0 : i32
    %c0_i32_2 = arith.constant 0 : i32
    return %arg0, %c0_i32, %c0_i32_0, %c0_i32_1 : i32, i32, i32, i32
  }
  func.func @transform_2(%arg0: i32) -> (i32, i32, i32, i32) {
    %c0_i32 = arith.constant 0 : i32
    %c0_i32_0 = arith.constant 0 : i32
    %c0_i32_1 = arith.constant 0 : i32
    %c0_i32_2 = arith.constant 0 : i32
    return %arg0, %c0_i32, %c0_i32_0, %c0_i32_1 : i32, i32, i32, i32
  }
  func.func @transform_3(%arg0: i32) -> (i32, i32, i32, i32) {
    %c0_i32 = arith.constant 0 : i32
    %c0_i32_0 = arith.constant 0 : i32
    %c0_i32_1 = arith.constant 0 : i32
    %c0_i32_2 = arith.constant 0 : i32
    return %arg0, %c0_i32, %c0_i32_0, %c0_i32_1 : i32, i32, i32, i32
  }
  func.func @transform_4(%arg0: i32) -> (i32, i32, i32, i32) {
    %c0_i32 = arith.constant 0 : i32
    %c0_i32_0 = arith.constant 0 : i32
    %c0_i32_1 = arith.constant 0 : i32
    %c0_i32_2 = arith.constant 0 : i32
    return %arg0, %c0_i32, %c0_i32_0, %c0_i32_1 : i32, i32, i32, i32
  }
}

</mosaic_0001>

<llo_original>
// kernel: inception_d_forward.14
$region0: #{inception_d_forward.14}
  #allocation0 [shape = 'u32[]', space=smem, size = 0x4, offset = 0x4, fixed_abs, tag = 'smem constant byte address 0x4 - core index']
  #allocation1 [shape = 'u32[72,128]{1,0:T(1,128)}', space=vmem, size = 0x9000, scoped, tag = 'internal scratch']
  %s0 = inlined_call_operand.vmem [shape: bf16[2,256,48], index: 0, kind: input, shape index: {}, may-alias: {0,3}]
  %s1 = inlined_call_operand.vmem [shape: f32[1,1,48], index: 1, kind: input, shape index: {}]
  %s2 = inlined_call_operand.vmem [shape: f32[1,1,48], index: 2, kind: input, shape index: {}]
  %s3 = inlined_call_operand.vmem [shape: bf16[2,256,48], index: 3, kind: output, shape index: {}, may-alias: {0,3}]
  %s4 = sld [smem:[#allocation0]]
  $region45: #{inception_d_forward.14} parent=0
    _
  %s6 = ssub.s32 1, %s4
  %s7 = scalar_select 0, %s6, %s4
  loop: start=0, step=1, limit=4
  $region2: #{inception_d_forward.14} parent=0 // loop_pre_header
    _
  $region3: #{inception_d_forward.14} parent=0 // loop_header
    %s9 = sphi 0, %s13
    %p10 = scmp.ge.s32.totalorder %s9, 4
    %s19 = sphi 0, %s21
    %s22 = sphi 0, %s19
    %s23 = sphi 0, %s22
    %s39 = sphi 0, %s23
    %s43 = sphi 0, %s43
    %s45 = sphi 0, %s43
    %s46 = sphi 0, %s45
    %s60 = sphi 0, %s46
    %s64 = sphi 0, %s64
    %s66 = sphi 0, %s64
    %s67 = sphi 0, %s66
    %s81 = sphi 0, %s67
    %s87 = sphi 0, %s89
    %s90 = sphi 0, %s87
    %s91 = sphi 0, %s90
    %s107 = sphi 0, %s91
  $region4: #{inception_d_forward.14} parent=0 // loop_header_branch
    %12 = sbr.rel (%p10) target = $region8
  $region5: #{inception_d_forward.14} parent=0 // loop_body
    %s14 = ssub.s32 %s9, 1
    %s15 = ssub.s32 %s9, 2
    %s16 = sadd.s32 %s9, 1
    %s17 = ssub.s32 %s9, %s16
    %p18 = scmp.eq.s32.totalorder %s17, 0
    %s20 = sadd.s32 %s19, 1
    %s21 = scalar_select %p18, %s19, %s20
    %p24 = pneg %p18
    %p25 = scmp.eq.s32.totalorder %s9, 1
    %p26 = por %p24, %p25
    %p27 = scmp.ne.s32.totalorder %s19, %s22
    %p28 = scmp.eq.s32.totalorder %s9, 0
    %p29 = por %p27, %p28
    %p30 = scmp.ne.s32.totalorder %s19, %s22
    %p31 = scmp.eq.s32.totalorder %s14, 1
    %p32 = por %p30, %p31
    %p33 = scmp.ne.s32.totalorder %s22, %s23
    %p34 = scmp.eq.s32.totalorder %s14, 0
    %p35 = por %p33, %p34
    %p36 = scmp.ne.s32.totalorder %s22, %s23
    %p37 = scmp.eq.s32.totalorder %s15, 1
    %p38 = por %p36, %p37
    %p40 = scmp.ne.s32.totalorder %s23, %s39
    %p41 = scmp.eq.s32.totalorder %s15, 0
    %p42 = por %p40, %p41
    %s44 = sadd.s32 %s43, 1
    %p47 = scmp.eq.s32.totalorder %s9, 1
    %p48 = scmp.ne.s32.totalorder %s43, %s45
    %p49 = scmp.eq.s32.totalorder %s9, 0
    %p50 = por %p48, %p49
    %p51 = scmp.ne.s32.totalorder %s43, %s45
    %p52 = scmp.eq.s32.totalorder %s14, 1
    %p53 = por %p51, %p52
    %p54 = scmp.ne.s32.totalorder %s45, %s46
    %p55 = scmp.eq.s32.totalorder %s14, 0
    %p56 = por %p54, %p55
    %p57 = scmp.ne.s32.totalorder %s45, %s46
    %p58 = scmp.eq.s32.totalorder %s15, 1
    %p59 = por %p57, %p58
    %p61 = scmp.ne.s32.totalorder %s46, %s60
    %p62 = scmp.eq.s32.totalorder %s15, 0
    %p63 = por %p61, %p62
    %s65 = sadd.s32 %s64, 1
    %p68 = scmp.eq.s32.totalorder %s9, 1
    %p69 = scmp.ne.s32.totalorder %s64, %s66
    %p70 = scmp.eq.s32.totalorder %s9, 0
    %p71 = por %p69, %p70
    %p72 = scmp.ne.s32.totalorder %s64, %s66
    %p73 = scmp.eq.s32.totalorder %s14, 1
    %p74 = por %p72, %p73
    %p75 = scmp.ne.s32.totalorder %s66, %s67
    %p76 = scmp.eq.s32.totalorder %s14, 0
    %p77 = por %p75, %p76
    %p78 = scmp.ne.s32.totalorder %s66, %s67
    %p79 = scmp.eq.s32.totalorder %s15, 1
    %p80 = por %p78, %p79
    %p82 = scmp.ne.s32.totalorder %s67, %s81
    %p83 = scmp.eq.s32.totalorder %s15, 0
    %p84 = por %p82, %p83
    %s85 = ssub.s32 %s9, %s16
    %p86 = scmp.eq.s32.totalorder %s85, 0
    %s88 = sadd.s32 %s87, 1
    %s89 = scalar_select %p86, %s87, %s88
    %p92 = pneg %p86
    %p93 = scmp.eq.s32.totalorder %s9, 1
    %p94 = por %p92, %p93
    %p95 = scmp.ne.s32.totalorder %s87, %s90
    %p96 = scmp.eq.s32.totalorder %s9, 0
    %p97 = por %p95, %p96
    %p98 = scmp.ne.s32.totalorder %s87, %s90
    %p99 = scmp.eq.s32.totalorder %s14, 1
    %p100 = por %p98, %p99
    %p101 = scmp.ne.s32.totalorder %s90, %s91
    %p102 = scmp.eq.s32.totalorder %s14, 0
    %p103 = por %p101, %p102
    %p104 = scmp.ne.s32.totalorder %s90, %s91
    %p105 = scmp.eq.s32.totalorder %s15, 1
    %p106 = por %p104, %p105
    %p108 = scmp.ne.s32.totalorder %s91, %s107
    %p109 = scmp.eq.s32.totalorder %s15, 0
    %p110 = por %p108, %p109
    %p111 = scmp.le.s32.totalorder 1, %s9
    %p112 = scmp.lt.s32.totalorder %s9, 3
    %p113 = pnand %p111, %p112
    %p114 = pneg %p113
    // Predicated region
    $region9: #{inception_d_forward.14} parent=5 // pred_check
      _
    $region10: #{inception_d_forward.14} parent=5 // pred_check_branch
      %116 = sbr.rel (%p113) target = $region12
    $region11: #{inception_d_forward.14} parent=5 // pred_region
      %s117 = ssub.s32 %s9, 1
      // Predicated region
      $region13: #{inception_d_forward.14} parent=11 // pred_check
        %p118 = pneg %p56
      $region14: #{inception_d_forward.14} parent=11 // pred_check_branch
        %120 = sbr.rel (%p118) target = $region16
      $region15: #{inception_d_forward.14} parent=11 // pred_region
        _
      $region16: #{inception_d_forward.14} parent=11 // pred_fallthru
        _
      // Predicated region
      $region17: #{inception_d_forward.14} parent=11 // pred_check
        %p121 = pneg %p77
      $region18: #{inception_d_forward.14} parent=11 // pred_check_branch
        %123 = sbr.rel (%p121) target = $region20
      $region19: #{inception_d_forward.14} parent=11 // pred_region
        _
      $region20: #{inception_d_forward.14} parent=11 // pred_fallthru
        _
    $region12: #{inception_d_forward.14} parent=5 // pred_fallthru
      _
    %p124 = scmp.lt.s32.totalorder %s9, 2
    // Predicated region
    $region21: #{inception_d_forward.14} parent=5 // pred_check
      %p125 = pneg %p124
    $region22: #{inception_d_forward.14} parent=5 // pred_check_branch
      %127 = sbr.rel (%p125) target = $region24
    $region23: #{inception_d_forward.14} parent=5 // pred_region
      // Predicated region
      $region25: #{inception_d_forward.14} parent=23 // pred_check
        %p128 = pneg %p29
      $region26: #{inception_d_forward.14} parent=23 // pred_check_branch
        %130 = sbr.rel (%p128) target = $region28
      $region27: #{inception_d_forward.14} parent=23 // pred_region
        %p131 = scmp.lt.s32.totalorder %s9, 1
        %s132 = scalar_select %p131, %s9, 1
        %s133 = smul.addr %s132, 32
        %s134 = smul.addr %s133, 4
        %s135 = scalar_lea.vmem %s0, %s134
      $region28: #{inception_d_forward.14} parent=23 // pred_fallthru
        _
    $region24: #{inception_d_forward.14} parent=5 // pred_fallthru
      _
    %p136 = scmp.le.s32.totalorder 1, %s9
    %p137 = scmp.lt.s32.totalorder %s9, 3
    %p138 = pnand %p136, %p137
    %p139 = pneg %p138
    // Predicated region
    $region29: #{inception_d_forward.14} parent=5 // pred_check
      _
    $region30: #{inception_d_forward.14} parent=5 // pred_check_branch
      %141 = sbr.rel (%p138) target = $region32
    $region31: #{inception_d_forward.14} parent=5 // pred_region
      %s142 = ssub.s32 %s9, 1
      %p143 = scmp.lt.s32.totalorder %s14, 1
      %s144 = scalar_select %p143, %s14, 1
      %s145 = smul.addr %s144, 32
      %s146 = smul.addr %s145, 4
      %s147 = scalar_lea.vmem %s0, %s146
      %p148 = pneg %p35
      %p149 = pneg %p32
      %p150 = pneg %p56
      %p151 = pneg %p53
      %p152 = pneg %p77
      %p153 = pneg %p74
      %p154 = pneg %p103
      %p155 = pneg %p100
      %p156 = scmp.lt.s32.totalorder %s14, 1
      %s157 = scalar_select %p156, %s14, 1
      %s158 = smul.addr %s157, 32
      %s159 = smul.addr %s158, 4
      %s160 = scalar_lea.vmem %s3, %s159
      %p161 = scmp.lt.s32.totalorder %s14, 1
      %s162 = scalar_select %p161, %s14, 1
      %s163 = smul.addr %s162, 32
      %s164 = smul.addr %s163, 4
      %s165 = scalar_lea.vmem %s0, %s164
      %p166 = scmp.lt.s32.totalorder %s14, 1
      %s167 = scalar_select %p166, %s14, 1
      %s168 = smul.addr %s167, 32
      %s169 = smul.addr %s168, 4
      %s170 = scalar_lea.vmem %s3, %s169
      %v171 = vld [vmem:[%s165] sm:$0xf]
      %v172 = vld [vmem:[%s165 + $0x4] sm:$0xf]
      %v173 = vld [vmem:[%s165 + $0x8] sm:$0xf]
      %v174 = vld [vmem:[%s165 + $0xc] sm:$0xf]
      %v175 = vld [vmem:[%s165 + $0x10] sm:$0xf]
      %v176 = vld [vmem:[%s165 + $0x14] sm:$0xf]
      %v177 = vld [vmem:[%s165 + $0x18] sm:$0xf]
      %v178 = vld [vmem:[%s165 + $0x1c] sm:$0xf]
      %v179 = vld [vmem:[%s165 + $0x20] sm:$0xf]
      %v180 = vld [vmem:[%s165 + $0x24] sm:$0xf]
      %v181 = vld [vmem:[%s165 + $0x28] sm:$0xf]
      %v182 = vld [vmem:[%s165 + $0x2c] sm:$0xf]
      %v183 = vld [vmem:[%s165 + $0x30] sm:$0xf]
      %v184 = vld [vmem:[%s165 + $0x34] sm:$0xf]
      %v185 = vld [vmem:[%s165 + $0x38] sm:$0xf]
      %v186 = vld [vmem:[%s165 + $0x3c] sm:$0xf]
      %v187 = vld [vmem:[%s165 + $0x40] sm:$0xf]
      %v188 = vld [vmem:[%s165 + $0x44] sm:$0xf]
      %v189 = vld [vmem:[%s165 + $0x48] sm:$0xf]
      %v190 = vld [vmem:[%s165 + $0x4c] sm:$0xf]
      %v191 = vld [vmem:[%s165 + $0x50] sm:$0xf]
      %v192 = vld [vmem:[%s165 + $0x54] sm:$0xf]
      %v193 = vld [vmem:[%s165 + $0x58] sm:$0xf]
      %v194 = vld [vmem:[%s165 + $0x5c] sm:$0xf]
      %v195 = vld [vmem:[%s165 + $0x60] sm:$0xf]
      %v196 = vld [vmem:[%s165 + $0x64] sm:$0xf]
      %v197 = vld [vmem:[%s165 + $0x68] sm:$0xf]
      %v198 = vld [vmem:[%s165 + $0x6c] sm:$0xf]
      %v199 = vld [vmem:[%s165 + $0x70] sm:$0xf]
      %v200 = vld [vmem:[%s165 + $0x74] sm:$0xf]
      %v201 = vld [vmem:[%s165 + $0x78] sm:$0xf]
      %v202 = vld [vmem:[%s165 + $0x7c] sm:$0xf]
      %v203 = vunpack.c.l.bf16 %v171
      %v204 = vunpack.c.l.bf16 %v172
      %v205 = vunpack.c.l.bf16 %v173
      %v206 = vunpack.c.l.bf16 %v174
      %v207 = vunpack.c.l.bf16 %v175
      %v208 = vunpack.c.l.bf16 %v176
      %v209 = vunpack.c.l.bf16 %v177
      %v210 = vunpack.c.l.bf16 %v178
      %v211 = vunpack.c.l.bf16 %v179
      %v212 = vunpack.c.l.bf16 %v180
      %v213 = vunpack.c.l.bf16 %v181
      %v214 = vunpack.c.l.bf16 %v182
      %v215 = vunpack.c.l.bf16 %v183
      %v216 = vunpack.c.l.bf16 %v184
      %v217 = vunpack.c.l.bf16 %v185
      %v218 = vunpack.c.l.bf16 %v186
      %v219 = vunpack.c.l.bf16 %v187
      %v220 = vunpack.c.l.bf16 %v188
      %v221 = vunpack.c.l.bf16 %v189
      %v222 = vunpack.c.l.bf16 %v190
      %v223 = vunpack.c.l.bf16 %v191
      %v224 = vunpack.c.l.bf16 %v192
      %v225 = vunpack.c.l.bf16 %v193
      %v226 = vunpack.c.l.bf16 %v194
      %v227 = vunpack.c.l.bf16 %v195
      %v228 = vunpack.c.l.bf16 %v196
      %v229 = vunpack.c.l.bf16 %v197
      %v230 = vunpack.c.l.bf16 %v198
      %v231 = vunpack.c.l.bf16 %v199
      %v232 = vunpack.c.l.bf16 %v200
      %v233 = vunpack.c.l.bf16 %v201
      %v234 = vunpack.c.l.bf16 %v202
      %v235 = vld [vmem:[%s1] sm:$0x1]
      %v237 = vperm.slane %v235, 0
      %v239 = vmul.f32 %v203, %v237
      %v240 = vmul.f32 %v204, %v237
      %v241 = vmul.f32 %v205, %v237
      %v242 = vmul.f32 %v206, %v237
      %v243 = vmul.f32 %v207, %v237
      %v244 = vmul.f32 %v208, %v237
      %v245 = vmul.f32 %v209, %v237
      %v246 = vmul.f32 %v210, %v237
      %v247 = vmul.f32 %v211, %v237
      %v248 = vmul.f32 %v212, %v237
      %v249 = vmul.f32 %v213, %v237
      %v250 = vmul.f32 %v214, %v237
      %v251 = vmul.f32 %v215, %v237
      %v252 = vmul.f32 %v216, %v237
      %v253 = vmul.f32 %v217, %v237
      %v254 = vmul.f32 %v218, %v237
      %v255 = vmul.f32 %v219, %v237
      %v256 = vmul.f32 %v220, %v237
      %v257 = vmul.f32 %v221, %v237
      %v258 = vmul.f32 %v222, %v237
      %v259 = vmul.f32 %v223, %v237
      %v260 = vmul.f32 %v224, %v237
      %v261 = vmul.f32 %v225, %v237
      %v262 = vmul.f32 %v226, %v237
      %v263 = vmul.f32 %v227, %v237
      %v264 = vmul.f32 %v228, %v237
      %v265 = vmul.f32 %v229, %v237
      %v266 = vmul.f32 %v230, %v237
      %v267 = vmul.f32 %v231, %v237
      %v268 = vmul.f32 %v232, %v237
      %v269 = vmul.f32 %v233, %v237
      %v270 = vmul.f32 %v234, %v237
      %v271 = vld [vmem:[%s2] sm:$0x1]
      %v273 = vperm.slane %v271, 0
      %v275 = vadd.f32 %v239, %v273
      %v276 = vadd.f32 %v240, %v273
      %v277 = vadd.f32 %v241, %v273
      %v278 = vadd.f32 %v242, %v273
      %v279 = vadd.f32 %v243, %v273
      %v280 = vadd.f32 %v244, %v273
      %v281 = vadd.f32 %v245, %v273
      %v282 = vadd.f32 %v246, %v273
      %v283 = vadd.f32 %v247, %v273
      %v284 = vadd.f32 %v248, %v273
      %v285 = vadd.f32 %v249, %v273
      %v286 = vadd.f32 %v250, %v273
      %v287 = vadd.f32 %v251, %v273
      %v288 = vadd.f32 %v252, %v273
      %v289 = vadd.f32 %v253, %v273
      %v290 = vadd.f32 %v254, %v273
      %v291 = vadd.f32 %v255, %v273
      %v292 = vadd.f32 %v256, %v273
      %v293 = vadd.f32 %v257, %v273
      %v294 = vadd.f32 %v258, %v273
      %v295 = vadd.f32 %v259, %v273
      %v296 = vadd.f32 %v260, %v273
      %v297 = vadd.f32 %v261, %v273
      %v298 = vadd.f32 %v262, %v273
      %v299 = vadd.f32 %v263, %v273
      %v300 = vadd.f32 %v264, %v273
      %v301 = vadd.f32 %v265, %v273
      %v302 = vadd.f32 %v266, %v273
      %v303 = vadd.f32 %v267, %v273
      %v304 = vadd.f32 %v268, %v273
      %v305 = vadd.f32 %v269, %v273
      %v306 = vadd.f32 %v270, %v273
      %v307 = vmax.f32 %v275, 0.0
      %v308 = vmax.f32 %v276, 0.0
      %v309 = vmax.f32 %v277, 0.0
      %v310 = vmax.f32 %v278, 0.0
      %v311 = vmax.f32 %v279, 0.0
      %v312 = vmax.f32 %v280, 0.0
      %v313 = vmax.f32 %v281, 0.0
      %v314 = vmax.f32 %v282, 0.0
      %v315 = vmax.f32 %v283, 0.0
      %v316 = vmax.f32 %v284, 0.0
      %v317 = vmax.f32 %v285, 0.0
      %v318 = vmax.f32 %v286, 0.0
      %v319 = vmax.f32 %v287, 0.0
      %v320 = vmax.f32 %v288, 0.0
      %v321 = vmax.f32 %v289, 0.0
      %v322 = vmax.f32 %v290, 0.0
      %v323 = vmax.f32 %v291, 0.0
      %v324 = vmax.f32 %v292, 0.0
      %v325 = vmax.f32 %v293, 0.0
      %v326 = vmax.f32 %v294, 0.0
      %v327 = vmax.f32 %v295, 0.0
      %v328 = vmax.f32 %v296, 0.0
      %v329 = vmax.f32 %v297, 0.0
      %v330 = vmax.f32 %v298, 0.0
      %v331 = vmax.f32 %v299, 0.0
      %v332 = vmax.f32 %v300, 0.0
      %v333 = vmax.f32 %v301, 0.0
      %v334 = vmax.f32 %v302, 0.0
      %v335 = vmax.f32 %v303, 0.0
      %v336 = vmax.f32 %v304, 0.0
      %v337 = vmax.f32 %v305, 0.0
      %v338 = vmax.f32 %v306, 0.0
      %v339 = vpack.c.bf16 %v307, %v307
      %v340 = vpack.c.bf16 %v308, %v308
      %v341 = vpack.c.bf16 %v309, %v309
      %v342 = vpack.c.bf16 %v310, %v310
      %v343 = vpack.c.bf16 %v311, %v311
      %v344 = vpack.c.bf16 %v312, %v312
      %v345 = vpack.c.bf16 %v313, %v313
      %v346 = vpack.c.bf16 %v314, %v314
      %v347 = vpack.c.bf16 %v315, %v315
      %v348 = vpack.c.bf16 %v316, %v316
      %v349 = vpack.c.bf16 %v317, %v317
      %v350 = vpack.c.bf16 %v318, %v318
      %v351 = vpack.c.bf16 %v319, %v319
      %v352 = vpack.c.bf16 %v320, %v320
      %v353 = vpack.c.bf16 %v321, %v321
      %v354 = vpack.c.bf16 %v322, %v322
      %v355 = vpack.c.bf16 %v323, %v323
      %v356 = vpack.c.bf16 %v324, %v324
      %v357 = vpack.c.bf16 %v325, %v325
      %v358 = vpack.c.bf16 %v326, %v326
      %v359 = vpack.c.bf16 %v327, %v327
      %v360 = vpack.c.bf16 %v328, %v328
      %v361 = vpack.c.bf16 %v329, %v329
      %v362 = vpack.c.bf16 %v330, %v330
      %v363 = vpack.c.bf16 %v331, %v331
      %v364 = vpack.c.bf16 %v332, %v332
      %v365 = vpack.c.bf16 %v333, %v333
      %v366 = vpack.c.bf16 %v334, %v334
      %v367 = vpack.c.bf16 %v335, %v335
      %v368 = vpack.c.bf16 %v336, %v336
      %v369 = vpack.c.bf16 %v337, %v337
      %v370 = vpack.c.bf16 %v338, %v338
      %vm371 = vcmask 388096
      %372 = vst.msk [vmem:[%s170] sm:$0xf] %vm371, %v339
      %373 = vst.msk [vmem:[%s170 + $0x4] sm:$0xf] %vm371, %v340
      %374 = vst.msk [vmem:[%s170 + $0x8] sm:$0xf] %vm371, %v341
      %375 = vst.msk [vmem:[%s170 + $0xc] sm:$0xf] %vm371, %v342
      %376 = vst.msk [vmem:[%s170 + $0x10] sm:$0xf] %vm371, %v343
      %377 = vst.msk [vmem:[%s170 + $0x14] sm:$0xf] %vm371, %v344
      %378 = vst.msk [vmem:[%s170 + $0x18] sm:$0xf] %vm371, %v345
      %379 = vst.msk [vmem:[%s170 + $0x1c] sm:$0xf] %vm371, %v346
      %380 = vst.msk [vmem:[%s170 + $0x20] sm:$0xf] %vm371, %v347
      %381 = vst.msk [vmem:[%s170 + $0x24] sm:$0xf] %vm371, %v348
      %382 = vst.msk [vmem:[%s170 + $0x28] sm:$0xf] %vm371, %v349
      %383 = vst.msk [vmem:[%s170 + $0x2c] sm:$0xf] %vm371, %v350
      %384 = vst.msk [vmem:[%s170 + $0x30] sm:$0xf] %vm371, %v351
      %385 = vst.msk [vmem:[%s170 + $0x34] sm:$0xf] %vm371, %v352
      %386 = vst.msk [vmem:[%s170 + $0x38] sm:$0xf] %vm371, %v353
      %387 = vst.msk [vmem:[%s170 + $0x3c] sm:$0xf] %vm371, %v354
      %388 = vst.msk [vmem:[%s170 + $0x40] sm:$0xf] %vm371, %v355
      %389 = vst.msk [vmem:[%s170 + $0x44] sm:$0xf] %vm371, %v356
      %390 = vst.msk [vmem:[%s170 + $0x48] sm:$0xf] %vm371, %v357
      %391 = vst.msk [vmem:[%s170 + $0x4c] sm:$0xf] %vm371, %v358
      %392 = vst.msk [vmem:[%s170 + $0x50] sm:$0xf] %vm371, %v359
      %393 = vst.msk [vmem:[%s170 + $0x54] sm:$0xf] %vm371, %v360
      %394 = vst.msk [vmem:[%s170 + $0x58] sm:$0xf] %vm371, %v361
      %395 = vst.msk [vmem:[%s170 + $0x5c] sm:$0xf] %vm371, %v362
      %396 = vst.msk [vmem:[%s170 + $0x60] sm:$0xf] %vm371, %v363
      %397 = vst.msk [vmem:[%s170 + $0x64] sm:$0xf] %vm371, %v364
      %398 = vst.msk [vmem:[%s170 + $0x68] sm:$0xf] %vm371, %v365
      %399 = vst.msk [vmem:[%s170 + $0x6c] sm:$0xf] %vm371, %v366
      %400 = vst.msk [vmem:[%s170 + $0x70] sm:$0xf] %vm371, %v367
      %401 = vst.msk [vmem:[%s170 + $0x74] sm:$0xf] %vm371, %v368
      %402 = vst.msk [vmem:[%s170 + $0x78] sm:$0xf] %vm371, %v369
      %403 = vst.msk [vmem:[%s170 + $0x7c] sm:$0xf] %vm371, %v370
      %p404 = scmp.lt.s32.totalorder %s14, 1
      %s405 = scalar_select %p404, %s14, 1
      %s406 = smul.addr %s405, 32
      %s407 = smul.addr %s406, 4
      %s408 = scalar_lea.vmem %s3, %s407
      // Predicated region
      $region33: #{inception_d_forward.14} parent=31 // pred_check
        %p409 = pneg %p100
      $region34: #{inception_d_forward.14} parent=31 // pred_check_branch
        %411 = sbr.rel (%p409) target = $region36
      $region35: #{inception_d_forward.14} parent=31 // pred_region
        _
      $region36: #{inception_d_forward.14} parent=31 // pred_fallthru
        _
    $region32: #{inception_d_forward.14} parent=5 // pred_fallthru
      _
    %p412 = scmp.le.s32.totalorder 2, %s9
    // Predicated region
    $region37: #{inception_d_forward.14} parent=5 // pred_check
      %p413 = pneg %p412
    $region38: #{inception_d_forward.14} parent=5 // pred_check_branch
      %415 = sbr.rel (%p413) target = $region40
    $region39: #{inception_d_forward.14} parent=5 // pred_region
      %s416 = ssub.s32 %s9, 2
      // Predicated region
      $region41: #{inception_d_forward.14} parent=39 // pred_check
        %p417 = pneg %p106
      $region42: #{inception_d_forward.14} parent=39 // pred_check_branch
        %419 = sbr.rel (%p417) target = $region44
      $region43: #{inception_d_forward.14} parent=39 // pred_region
        %p420 = scmp.lt.s32.totalorder %s15, 1
        %s421 = scalar_select %p420, %s15, 1
        %s422 = smul.addr %s421, 32
        %s423 = smul.addr %s422, 4
        %s424 = scalar_lea.vmem %s3, %s423
      $region44: #{inception_d_forward.14} parent=39 // pred_fallthru
        _
    $region40: #{inception_d_forward.14} parent=5 // pred_fallthru
      _
  $region6: #{inception_d_forward.14} parent=0 // loop_footer
    %s13 = sadd.s32 1, %s9
  $region7: #{inception_d_forward.14} parent=0 // loop_footer_branch
    %8 = sbr.rel target = $region3
  $region8: #{inception_d_forward.14} parent=0 // loop_exit
    _

// kernel: inception_d_forward.13
$region0: #{inception_d_forward.13}
  #allocation0 [shape = 'u32[]', space=smem, size = 0x4, offset = 0x4, fixed_abs, tag = 'smem constant byte address 0x4 - core index']
  #allocation1 [shape = 'u32[72,128]{1,0:T(1,128)}', space=vmem, size = 0x9000, scoped, tag = 'internal scratch']
  #allocation2 [shape = 'f32[256,48]{1,0:T(8,128)}', space=vmem, size = 0x20000, scoped, tag = 'scratch operand']
  %s0 = inlined_call_operand.vmem [shape: f32[2,256,4], index: 0, kind: input, shape index: {}]
  %s1 = inlined_call_operand.vmem [shape: bf16[1,4,48], index: 1, kind: input, shape index: {}]
  %s2 = inlined_call_operand.vmem [shape: bf16[2,256,48], index: 2, kind: output, shape index: {0}]
  %s3 = inlined_call_operand.vmem [shape: f32[8,48], index: 3, kind: output, shape index: {1}]
  %s4 = inlined_call_operand.vmem [shape: f32[8,48], index: 4, kind: output, shape index: {2}]
  %5 = xla_tuple %s2, %s3, %s4
  %s6 = sld [smem:[#allocation0]]
  $region61: #{inception_d_forward.13} parent=0
    _
  %s8 = ssub.s32 1, %s6
  %s9 = scalar_select 0, %s8, %s6
  loop: start=0, step=1, limit=4
  $region2: #{inception_d_forward.13} parent=0 // loop_pre_header
    _
  $region3: #{inception_d_forward.13} parent=0 // loop_header
    %s11 = sphi 0, %s15
    %p12 = scmp.ge.s32.totalorder %s11, 4
    %s18 = sphi 0, %s30
    %s19 = sphi 0, %s26
    %s20 = sphi 0, %s18
    %s21 = sphi 0, %s19
    %s22 = sphi 0, %s20
    %s23 = sphi 0, %s21
    %s37 = sphi 0, %s39
    %s40 = sphi 0, %s37
    %s41 = sphi 0, %s40
    %s57 = sphi 0, %s41
    %s61 = sphi 0, %s61
    %s63 = sphi 0, %s61
    %s64 = sphi 0, %s63
    %s78 = sphi 0, %s64
    %s88 = sphi 0, %s90
    %s91 = sphi 0, %s88
    %s92 = sphi 0, %s91
    %s108 = sphi 0, %s92
    %s114 = sphi 0, %s116
    %s117 = sphi 0, %s114
    %s118 = sphi 0, %s117
    %s134 = sphi 0, %s118
    %s140 = sphi 0, %s142
    %s143 = sphi 0, %s140
    %s144 = sphi 0, %s143
    %s160 = sphi 0, %s144
  $region4: #{inception_d_forward.13} parent=0 // loop_header_branch
    %14 = sbr.rel (%p12) target = $region8
  $region5: #{inception_d_forward.13} parent=0 // loop_body
    %s16 = ssub.s32 %s11, 1
    %s17 = ssub.s32 %s11, 2
    %s24 = sadd.s32 1, %s19
    %p25 = scmp.ge.s32.totalorder %s24, 2
    %s26 = scalar_select %p25, 0, %s24
    %s27 = sadd.s32 1, %s18
    %s28 = scalar_select %p25, %s27, %s18
    %p29 = scmp.ge.s32.totalorder %s28, 1
    %s30 = scalar_select %p29, 0, %s28
    %s31 = smul.u32 %s18, 2
    %s32 = sadd.s32 %s31, %s19
    %s33 = smul.u32 %s30, 2
    %s34 = sadd.s32 %s33, %s26
    %s35 = ssub.s32 %s32, %s34
    %p36 = scmp.eq.s32.totalorder %s35, 0
    %s38 = sadd.s32 %s37, 1
    %s39 = scalar_select %p36, %s37, %s38
    %p42 = pneg %p36
    %p43 = scmp.eq.s32.totalorder %s11, 1
    %p44 = por %p42, %p43
    %p45 = scmp.ne.s32.totalorder %s37, %s40
    %p46 = scmp.eq.s32.totalorder %s11, 0
    %p47 = por %p45, %p46
    %p48 = scmp.ne.s32.totalorder %s37, %s40
    %p49 = scmp.eq.s32.totalorder %s16, 1
    %p50 = por %p48, %p49
    %p51 = scmp.ne.s32.totalorder %s40, %s41
    %p52 = scmp.eq.s32.totalorder %s16, 0
    %p53 = por %p51, %p52
    %p54 = scmp.ne.s32.totalorder %s40, %s41
    %p55 = scmp.eq.s32.totalorder %s17, 1
    %p56 = por %p54, %p55
    %p58 = scmp.ne.s32.totalorder %s41, %s57
    %p59 = scmp.eq.s32.totalorder %s17, 0
    %p60 = por %p58, %p59
    %s62 = sadd.s32 %s61, 1
    %p65 = scmp.eq.s32.totalorder %s11, 1
    %p66 = scmp.ne.s32.totalorder %s61, %s63
    %p67 = scmp.eq.s32.totalorder %s11, 0
    %p68 = por %p66, %p67
    %p69 = scmp.ne.s32.totalorder %s61, %s63
    %p70 = scmp.eq.s32.totalorder %s16, 1
    %p71 = por %p69, %p70
    %p72 = scmp.ne.s32.totalorder %s63, %s64
    %p73 = scmp.eq.s32.totalorder %s16, 0
    %p74 = por %p72, %p73
    %p75 = scmp.ne.s32.totalorder %s63, %s64
    %p76 = scmp.eq.s32.totalorder %s17, 1
    %p77 = por %p75, %p76
    %p79 = scmp.ne.s32.totalorder %s64, %s78
    %p80 = scmp.eq.s32.totalorder %s17, 0
    %p81 = por %p79, %p80
    %s82 = smul.u32 %s18, 2
    %s83 = sadd.s32 %s82, %s19
    %s84 = smul.u32 %s30, 2
    %s85 = sadd.s32 %s84, %s26
    %s86 = ssub.s32 %s83, %s85
    %p87 = scmp.eq.s32.totalorder %s86, 0
    %s89 = sadd.s32 %s88, 1
    %s90 = scalar_select %p87, %s88, %s89
    %p93 = pneg %p87
    %p94 = scmp.eq.s32.totalorder %s11, 1
    %p95 = por %p93, %p94
    %p96 = scmp.ne.s32.totalorder %s88, %s91
    %p97 = scmp.eq.s32.totalorder %s11, 0
    %p98 = por %p96, %p97
    %p99 = scmp.ne.s32.totalorder %s88, %s91
    %p100 = scmp.eq.s32.totalorder %s16, 1
    %p101 = por %p99, %p100
    %p102 = scmp.ne.s32.totalorder %s91, %s92
    %p103 = scmp.eq.s32.totalorder %s16, 0
    %p104 = por %p102, %p103
    %p105 = scmp.ne.s32.totalorder %s91, %s92
    %p106 = scmp.eq.s32.totalorder %s17, 1
    %p107 = por %p105, %p106
    %p109 = scmp.ne.s32.totalorder %s92, %s108
    %p110 = scmp.eq.s32.totalorder %s17, 0
    %p111 = por %p109, %p110
    %s112 = ssub.s32 %s18, %s30
    %p113 = scmp.eq.s32.totalorder %s112, 0
    %s115 = sadd.s32 %s114, 1
    %s116 = scalar_select %p113, %s114, %s115
    %p119 = pneg %p113
    %p120 = scmp.eq.s32.totalorder %s11, 1
    %p121 = por %p119, %p120
    %p122 = scmp.ne.s32.totalorder %s114, %s117
    %p123 = scmp.eq.s32.totalorder %s11, 0
    %p124 = por %p122, %p123
    %p125 = scmp.ne.s32.totalorder %s114, %s117
    %p126 = scmp.eq.s32.totalorder %s16, 1
    %p127 = por %p125, %p126
    %p128 = scmp.ne.s32.totalorder %s117, %s118
    %p129 = scmp.eq.s32.totalorder %s16, 0
    %p130 = por %p128, %p129
    %p131 = scmp.ne.s32.totalorder %s117, %s118
    %p132 = scmp.eq.s32.totalorder %s17, 1
    %p133 = por %p131, %p132
    %p135 = scmp.ne.s32.totalorder %s118, %s134
    %p136 = scmp.eq.s32.totalorder %s17, 0
    %p137 = por %p135, %p136
    %s138 = ssub.s32 %s18, %s30
    %p139 = scmp.eq.s32.totalorder %s138, 0
    %s141 = sadd.s32 %s140, 1
    %s142 = scalar_select %p139, %s140, %s141
    %p145 = pneg %p139
    %p146 = scmp.eq.s32.totalorder %s11, 1
    %p147 = por %p145, %p146
    %p148 = scmp.ne.s32.totalorder %s140, %s143
    %p149 = scmp.eq.s32.totalorder %s11, 0
    %p150 = por %p148, %p149
    %p151 = scmp.ne.s32.totalorder %s140, %s143
    %p152 = scmp.eq.s32.totalorder %s16, 1
    %p153 = por %p151, %p152
    %p154 = scmp.ne.s32.totalorder %s143, %s144
    %p155 = scmp.eq.s32.totalorder %s16, 0
    %p156 = por %p154, %p155
    %p157 = scmp.ne.s32.totalorder %s143, %s144
    %p158 = scmp.eq.s32.totalorder %s17, 1
    %p159 = por %p157, %p158
    %p161 = scmp.ne.s32.totalorder %s144, %s160
    %p162 = scmp.eq.s32.totalorder %s17, 0
    %p163 = por %p161, %p162
    %p164 = scmp.le.s32.totalorder 1, %s11
    %p165 = scmp.lt.s32.totalorder %s11, 3
    %p166 = pnand %p164, %p165
    %p167 = pneg %p166
    // Predicated region
    $region9: #{inception_d_forward.13} parent=5 // pred_check
      _
    $region10: #{inception_d_forward.13} parent=5 // pred_check_branch
      %169 = sbr.rel (%p166) target = $region12
    $region11: #{inception_d_forward.13} parent=5 // pred_region
      %s170 = ssub.s32 %s11, 1
      // Predicated region
      $region13: #{inception_d_forward.13} parent=11 // pred_check
        %p171 = pneg %p74
      $region14: #{inception_d_forward.13} parent=11 // pred_check_branch
        %173 = sbr.rel (%p171) target = $region16
      $region15: #{inception_d_forward.13} parent=11 // pred_region
        _
      $region16: #{inception_d_forward.13} parent=11 // pred_fallthru
        _
    $region12: #{inception_d_forward.13} parent=5 // pred_fallthru
      _
    %p174 = scmp.lt.s32.totalorder %s11, 2
    // Predicated region
    $region17: #{inception_d_forward.13} parent=5 // pred_check
      %p175 = pneg %p174
    $region18: #{inception_d_forward.13} parent=5 // pred_check_branch
      %177 = sbr.rel (%p175) target = $region20
    $region19: #{inception_d_forward.13} parent=5 // pred_region
      // Predicated region
      $region21: #{inception_d_forward.13} parent=19 // pred_check
        %p178 = pneg %p47
      $region22: #{inception_d_forward.13} parent=19 // pred_check_branch
        %180 = sbr.rel (%p178) target = $region24
      $region23: #{inception_d_forward.13} parent=19 // pred_region
        %s181 = smul.u32 %s18, 2
        %s182 = sadd.s32 %s181, %s19
        %p183 = scmp.lt.s32.totalorder %s182, 1
        %s184 = scalar_select %p183, %s182, 1
        %s185 = smul.addr %s184, 32
        %s186 = smul.addr %s185, 8
        %s187 = scalar_lea.vmem %s0, %s186
        %s188 = smul.u32 %s18, 2
        %s189 = sadd.s32 %s188, %s19
      $region24: #{inception_d_forward.13} parent=19 // pred_fallthru
        _
    $region20: #{inception_d_forward.13} parent=5 // pred_fallthru
      _
    %p190 = scmp.le.s32.totalorder 1, %s11
    %p191 = scmp.lt.s32.totalorder %s11, 3
    %p192 = pnand %p190, %p191
    %p193 = pneg %p192
    // Predicated region
    $region25: #{inception_d_forward.13} parent=5 // pred_check
      _
    $region26: #{inception_d_forward.13} parent=5 // pred_check_branch
      %195 = sbr.rel (%p192) target = $region28
    $region27: #{inception_d_forward.13} parent=5 // pred_region
      %s196 = ssub.s32 %s11, 1
      %s197 = smul.u32 %s20, 2
      %s198 = sadd.s32 %s197, %s21
      %p199 = scmp.lt.s32.totalorder %s198, 1
      %s200 = scalar_select %p199, %s198, 1
      %s201 = smul.addr %s200, 32
      %s202 = smul.addr %s201, 8
      %s203 = scalar_lea.vmem %s0, %s202
      %p204 = pneg %p53
      %p205 = pneg %p50
      %p206 = pneg %p74
      %p207 = pneg %p71
      %p208 = pneg %p104
      %p209 = pneg %p101
      %s210 = smul.u32 %s20, 2
      %s211 = sadd.s32 %s210, %s21
      %p212 = scmp.lt.s32.totalorder %s211, 1
      %s213 = scalar_select %p212, %s211, 1
      %s214 = smul.addr %s213, 32
      %s215 = smul.addr %s214, 4
      %s216 = scalar_lea.vmem %s2, %s215
      %p217 = pneg %p130
      %p218 = pneg %p127
      %p219 = scmp.lt.s32.totalorder %s20, 0
      %s220 = scalar_select %p219, %s20, 0
      %s221 = smul.addr %s220, 8
      %s222 = scalar_lea.vmem %s3, %s221
      %p223 = pneg %p156
      %p224 = pneg %p153
      %p225 = scmp.lt.s32.totalorder %s20, 0
      %s226 = scalar_select %p225, %s20, 0
      %s227 = smul.addr %s226, 8
      %s228 = scalar_lea.vmem %s4, %s227
      %s229 = smul.u32 %s20, 2
      %s230 = sadd.s32 %s229, %s21
      %p231 = scmp.lt.s32.totalorder %s230, 1
      %s232 = scalar_select %p231, %s230, 1
      %s233 = smul.addr %s232, 32
      %s234 = smul.addr %s233, 8
      %s235 = scalar_lea.vmem %s0, %s234
      %s236 = smul.u32 %s20, 2
      %s237 = sadd.s32 %s236, %s21
      %s238 = smul.u32 %s20, 2
      %s239 = sadd.s32 %s238, %s21
      %p240 = scmp.lt.s32.totalorder %s239, 1
      %s241 = scalar_select %p240, %s239, 1
      %s242 = smul.addr %s241, 32
      %s243 = smul.addr %s242, 4
      %s244 = scalar_lea.vmem %s2, %s243
      %s245 = smul.u32 %s20, 2
      %s246 = sadd.s32 %s245, %s21
      %p247 = scmp.lt.s32.totalorder %s20, 0
      %s248 = scalar_select %p247, %s20, 0
      %s249 = smul.addr %s248, 8
      %s250 = scalar_lea.vmem %s3, %s249
      %p251 = scmp.lt.s32.totalorder %s20, 0
      %s252 = scalar_select %p251, %s20, 0
      %s253 = smul.addr %s252, 8
      %s254 = scalar_lea.vmem %s4, %s253
      %p256 = scmp.eq.s32.totalorder %s21, 0
      // Predicated region
      $region29: #{inception_d_forward.13} parent=27 // pred_check
        %p257 = pneg %p256
      $region30: #{inception_d_forward.13} parent=27 // pred_check_branch
        %259 = sbr.rel (%p257) target = $region32
      $region31: #{inception_d_forward.13} parent=27 // pred_region
        %vm260 = vcmask 392192
        %261 = vst.msk [vmem:[%s250] sm:$0xff] %vm260, 0.0
        %262 = vst.msk [vmem:[%s254] sm:$0xff] %vm260, 0.0
      $region32: #{inception_d_forward.13} parent=27 // pred_fallthru
        _
      %v263 = vld [vmem:[%s235] sm:$0xff]
      %v264 = vld [vmem:[%s235 + $0x8] sm:$0xff]
      %v265 = vld [vmem:[%s235 + $0x10] sm:$0xff]
      %v266 = vld [vmem:[%s235 + $0x18] sm:$0xff]
      %v267 = vld [vmem:[%s235 + $0x20] sm:$0xff]
      %v268 = vld [vmem:[%s235 + $0x28] sm:$0xff]
      %v269 = vld [vmem:[%s235 + $0x30] sm:$0xff]
      %v270 = vld [vmem:[%s235 + $0x38] sm:$0xff]
      %v271 = vld [vmem:[%s235 + $0x40] sm:$0xff]
      %v272 = vld [vmem:[%s235 + $0x48] sm:$0xff]
      %v273 = vld [vmem:[%s235 + $0x50] sm:$0xff]
      %v274 = vld [vmem:[%s235 + $0x58] sm:$0xff]
      %v275 = vld [vmem:[%s235 + $0x60] sm:$0xff]
      %v276 = vld [vmem:[%s235 + $0x68] sm:$0xff]
      %v277 = vld [vmem:[%s235 + $0x70] sm:$0xff]
      %v278 = vld [vmem:[%s235 + $0x78] sm:$0xff]
      %v279 = vld [vmem:[%s235 + $0x80] sm:$0xff]
      %v280 = vld [vmem:[%s235 + $0x88] sm:$0xff]
      %v281 = vld [vmem:[%s235 + $0x90] sm:$0xff]
      %v282 = vld [vmem:[%s235 + $0x98] sm:$0xff]
      %v283 = vld [vmem:[%s235 + $0xa0] sm:$0xff]
      %v284 = vld [vmem:[%s235 + $0xa8] sm:$0xff]
      %v285 = vld [vmem:[%s235 + $0xb0] sm:$0xff]
      %v286 = vld [vmem:[%s235 + $0xb8] sm:$0xff]
      %v287 = vld [vmem:[%s235 + $0xc0] sm:$0xff]
      %v288 = vld [vmem:[%s235 + $0xc8] sm:$0xff]
      %v289 = vld [vmem:[%s235 + $0xd0] sm:$0xff]
      %v290 = vld [vmem:[%s235 + $0xd8] sm:$0xff]
      %v291 = vld [vmem:[%s235 + $0xe0] sm:$0xff]
      %v292 = vld [vmem:[%s235 + $0xe8] sm:$0xff]
      %v293 = vld [vmem:[%s235 + $0xf0] sm:$0xff]
      %v294 = vld [vmem:[%s235 + $0xf8] sm:$0xff]
      %v295 = vpack.c.bf16 %v264, %v263
      %v296 = vpack.c.bf16 %v266, %v265
      %v297 = vpack.c.bf16 %v268, %v267
      %v298 = vpack.c.bf16 %v270, %v269
      %v299 = vpack.c.bf16 %v272, %v271
      %v300 = vpack.c.bf16 %v274, %v273
      %v301 = vpack.c.bf16 %v276, %v275
      %v302 = vpack.c.bf16 %v278, %v277
      %v303 = vpack.c.bf16 %v280, %v279
      %v304 = vpack.c.bf16 %v282, %v281
      %v305 = vpack.c.bf16 %v284, %v283
      %v306 = vpack.c.bf16 %v286, %v285
      %v307 = vpack.c.bf16 %v288, %v287
      %v308 = vpack.c.bf16 %v290, %v289
      %v309 = vpack.c.bf16 %v292, %v291
      %v310 = vpack.c.bf16 %v294, %v293
      %v311 = vld [vmem:[%s1] sm:$0x3]
      %vm312 = vcmask 31744
      %v314 = vsel %vm312, %v295, 0
      %v317 = vsel %vm312, %v296, 0
      %v320 = vsel %vm312, %v297, 0
      %v323 = vsel %vm312, %v298, 0
      %v326 = vsel %vm312, %v299, 0
      %v329 = vsel %vm312, %v300, 0
      %v332 = vsel %vm312, %v301, 0
      %v335 = vsel %vm312, %v302, 0
      %v338 = vsel %vm312, %v303, 0
      %v341 = vsel %vm312, %v304, 0
      %v344 = vsel %vm312, %v305, 0
      %v347 = vsel %vm312, %v306, 0
      %v350 = vsel %vm312, %v307, 0
      %v353 = vsel %vm312, %v308, 0
      %v356 = vsel %vm312, %v309, 0
      %v359 = vsel %vm312, %v310, 0
      %vm361 = vcmask 1041408
      %v363 = vsel %vm361, %v311, 0
      %365 = vmatpush.bf16.msra.mxu0 0
      %366 = vmatpush.bf16.msra.mxu0 0
      %367 = vmatpush.bf16.msra.mxu0 0
      %368 = vmatpush.bf16.msra.mxu0 0
      %369 = vmatpush.bf16.msra.mxu0 0
      %370 = vmatpush.bf16.msra.mxu0 0
      %371 = vmatpush.bf16.msra.mxu0 0
      %372 = vmatpush.bf16.msra.mxu0 %v363
      %373 = vmatmul.bf16.gmra.mxu0 %v314
      %v374 = vpop.f32.mrf.mxu0
      %v375 = vadd.f32 0.0, %v374
      %v376 = vpop.f32.mrf.mxu0
      %v377 = vadd.f32 0.0, %v376
      %378 = vmatmul.bf16.gmra.mxu0 %v317
      %v379 = vpop.f32.mrf.mxu0
      %v380 = vadd.f32 0.0, %v379
      %v381 = vpop.f32.mrf.mxu0
      %v382 = vadd.f32 0.0, %v381
      %383 = vmatmul.bf16.gmra.mxu0 %v320
      %v384 = vpop.f32.mrf.mxu0
      %v385 = vadd.f32 0.0, %v384
      %v386 = vpop.f32.mrf.mxu0
      %v387 = vadd.f32 0.0, %v386
      %388 = vmatmul.bf16.gmra.mxu0 %v323
      %v389 = vpop.f32.mrf.mxu0
      %v390 = vadd.f32 0.0, %v389
      %v391 = vpop.f32.mrf.mxu0
      %v392 = vadd.f32 0.0, %v391
      %393 = vmatmul.bf16.gmra.mxu0 %v326
      %v394 = vpop.f32.mrf.mxu0
      %v395 = vadd.f32 0.0, %v394
      %v396 = vpop.f32.mrf.mxu0
      %v397 = vadd.f32 0.0, %v396
      %398 = vmatmul.bf16.gmra.mxu0 %v329
      %v399 = vpop.f32.mrf.mxu0
      %v400 = vadd.f32 0.0, %v399
      %v401 = vpop.f32.mrf.mxu0
      %v402 = vadd.f32 0.0, %v401
      %403 = vmatmul.bf16.gmra.mxu0 %v332
      %v404 = vpop.f32.mrf.mxu0
      %v405 = vadd.f32 0.0, %v404
      %v406 = vpop.f32.mrf.mxu0
      %v407 = vadd.f32 0.0, %v406
      %408 = vmatmul.bf16.gmra.mxu0 %v335
      %v409 = vpop.f32.mrf.mxu0
      %v410 = vadd.f32 0.0, %v409
      %v411 = vpop.f32.mrf.mxu0
      %v412 = vadd.f32 0.0, %v411
      %413 = vmatmul.bf16.gmra.mxu0 %v338
      %v414 = vpop.f32.mrf.mxu0
      %v415 = vadd.f32 0.0, %v414
      %v416 = vpop.f32.mrf.mxu0
      %v417 = vadd.f32 0.0, %v416
      %418 = vmatmul.bf16.gmra.mxu0 %v341
      %v419 = vpop.f32.mrf.mxu0
      %v420 = vadd.f32 0.0, %v419
      %v421 = vpop.f32.mrf.mxu0
      %v422 = vadd.f32 0.0, %v421
      %423 = vmatmul.bf16.gmra.mxu0 %v344
      %v424 = vpop.f32.mrf.mxu0
      %v425 = vadd.f32 0.0, %v424
      %v426 = vpop.f32.mrf.mxu0
      %v427 = vadd.f32 0.0, %v426
      %428 = vmatmul.bf16.gmra.mxu0 %v347
      %v429 = vpop.f32.mrf.mxu0
      %v430 = vadd.f32 0.0, %v429
      %v431 = vpop.f32.mrf.mxu0
      %v432 = vadd.f32 0.0, %v431
      %433 = vmatmul.bf16.gmra.mxu0 %v350
      %v434 = vpop.f32.mrf.mxu0
      %v435 = vadd.f32 0.0, %v434
      %v436 = vpop.f32.mrf.mxu0
      %v437 = vadd.f32 0.0, %v436
      %438 = vmatmul.bf16.gmra.mxu0 %v353
      %v439 = vpop.f32.mrf.mxu0
      %v440 = vadd.f32 0.0, %v439
      %v441 = vpop.f32.mrf.mxu0
      %v442 = vadd.f32 0.0, %v441
      %443 = vmatmul.bf16.gmra.mxu0 %v356
      %v444 = vpop.f32.mrf.mxu0
      %v445 = vadd.f32 0.0, %v444
      %v446 = vpop.f32.mrf.mxu0
      %v447 = vadd.f32 0.0, %v446
      %448 = vmatmul.bf16.gmra.mxu0 %v359
      %v449 = vpop.f32.mrf.mxu0
      %v450 = vadd.f32 0.0, %v449
      %v451 = vpop.f32.mrf.mxu0
      %v452 = vadd.f32 0.0, %v451
      %453 = vdwg.mxu0
      %vm454 = vcmask 392192
      %455 = vst.msk [vmem:[#allocation2] sm:$0xff] %vm454, %v375
      %456 = vst.msk [vmem:[#allocation2 + $0x8] sm:$0xff] %vm454, %v377
      %457 = vst.msk [vmem:[#allocation2 + $0x10] sm:$0xff] %vm454, %v380
      %458 = vst.msk [vmem:[#allocation2 + $0x18] sm:$0xff] %vm454, %v382
      %459 = vst.msk [vmem:[#allocation2 + $0x20] sm:$0xff] %vm454, %v385
      %460 = vst.msk [vmem:[#allocation2 + $0x28] sm:$0xff] %vm454, %v387
      %461 = vst.msk [vmem:[#allocation2 + $0x30] sm:$0xff] %vm454, %v390
      %462 = vst.msk [vmem:[#allocation2 + $0x38] sm:$0xff] %vm454, %v392
      %463 = vst.msk [vmem:[#allocation2 + $0x40] sm:$0xff] %vm454, %v395
      %464 = vst.msk [vmem:[#allocation2 + $0x48] sm:$0xff] %vm454, %v397
      %465 = vst.msk [vmem:[#allocation2 + $0x50] sm:$0xff] %vm454, %v400
      %466 = vst.msk [vmem:[#allocation2 + $0x58] sm:$0xff] %vm454, %v402
      %467 = vst.msk [vmem:[#allocation2 + $0x60] sm:$0xff] %vm454, %v405
      %468 = vst.msk [vmem:[#allocation2 + $0x68] sm:$0xff] %vm454, %v407
      %469 = vst.msk [vmem:[#allocation2 + $0x70] sm:$0xff] %vm454, %v410
      %470 = vst.msk [vmem:[#allocation2 + $0x78] sm:$0xff] %vm454, %v412
      %471 = vst.msk [vmem:[#allocation2 + $0x80] sm:$0xff] %vm454, %v415
      %472 = vst.msk [vmem:[#allocation2 + $0x88] sm:$0xff] %vm454, %v417
      %473 = vst.msk [vmem:[#allocation2 + $0x90] sm:$0xff] %vm454, %v420
      %474 = vst.msk [vmem:[#allocation2 + $0x98] sm:$0xff] %vm454, %v422
      %475 = vst.msk [vmem:[#allocation2 + $0xa0] sm:$0xff] %vm454, %v425
      %476 = vst.msk [vmem:[#allocation2 + $0xa8] sm:$0xff] %vm454, %v427
      %477 = vst.msk [vmem:[#allocation2 + $0xb0] sm:$0xff] %vm454, %v430
      %478 = vst.msk [vmem:[#allocation2 + $0xb8] sm:$0xff] %vm454, %v432
      %479 = vst.msk [vmem:[#allocation2 + $0xc0] sm:$0xff] %vm454, %v435
      %480 = vst.msk [vmem:[#allocation2 + $0xc8] sm:$0xff] %vm454, %v437
      %481 = vst.msk [vmem:[#allocation2 + $0xd0] sm:$0xff] %vm454, %v440
      %482 = vst.msk [vmem:[#allocation2 + $0xd8] sm:$0xff] %vm454, %v442
      %483 = vst.msk [vmem:[#allocation2 + $0xe0] sm:$0xff] %vm454, %v445
      %484 = vst.msk [vmem:[#allocation2 + $0xe8] sm:$0xff] %vm454, %v447
      %485 = vst.msk [vmem:[#allocation2 + $0xf0] sm:$0xff] %vm454, %v450
      %486 = vst.msk [vmem:[#allocation2 + $0xf8] sm:$0xff] %vm454, %v452
      %v487 = vld [vmem:[#allocation2] sm:$0xff]
      %v488 = vld [vmem:[#allocation2 + $0x8] sm:$0xff]
      %v489 = vld [vmem:[#allocation2 + $0x10] sm:$0xff]
      %v490 = vld [vmem:[#allocation2 + $0x18] sm:$0xff]
      %v491 = vld [vmem:[#allocation2 + $0x20] sm:$0xff]
      %v492 = vld [vmem:[#allocation2 + $0x28] sm:$0xff]
      %v493 = vld [vmem:[#allocation2 + $0x30] sm:$0xff]
      %v494 = vld [vmem:[#allocation2 + $0x38] sm:$0xff]
      %v495 = vld [vmem:[#allocation2 + $0x40] sm:$0xff]
      %v496 = vld [vmem:[#allocation2 + $0x48] sm:$0xff]
      %v497 = vld [vmem:[#allocation2 + $0x50] sm:$0xff]
      %v498 = vld [vmem:[#allocation2 + $0x58] sm:$0xff]
      %v499 = vld [vmem:[#allocation2 + $0x60] sm:$0xff]
      %v500 = vld [vmem:[#allocation2 + $0x68] sm:$0xff]
      %v501 = vld [vmem:[#allocation2 + $0x70] sm:$0xff]
      %v502 = vld [vmem:[#allocation2 + $0x78] sm:$0xff]
      %v503 = vld [vmem:[#allocation2 + $0x80] sm:$0xff]
      %v504 = vld [vmem:[#allocation2 + $0x88] sm:$0xff]
      %v505 = vld [vmem:[#allocation2 + $0x90] sm:$0xff]
      %v506 = vld [vmem:[#allocation2 + $0x98] sm:$0xff]
      %v507 = vld [vmem:[#allocation2 + $0xa0] sm:$0xff]
      %v508 = vld [vmem:[#allocation2 + $0xa8] sm:$0xff]
      %v509 = vld [vmem:[#allocation2 + $0xb0] sm:$0xff]
      %v510 = vld [vmem:[#allocation2 + $0xb8] sm:$0xff]
      %v511 = vld [vmem:[#allocation2 + $0xc0] sm:$0xff]
      %v512 = vld [vmem:[#allocation2 + $0xc8] sm:$0xff]
      %v513 = vld [vmem:[#allocation2 + $0xd0] sm:$0xff]
      %v514 = vld [vmem:[#allocation2 + $0xd8] sm:$0xff]
      %v515 = vld [vmem:[#allocation2 + $0xe0] sm:$0xff]
      %v516 = vld [vmem:[#allocation2 + $0xe8] sm:$0xff]
      %v517 = vld [vmem:[#allocation2 + $0xf0] sm:$0xff]
      %v518 = vld [vmem:[#allocation2 + $0xf8] sm:$0xff]
      %v519 = vpack.c.bf16 %v487, %v487
      %v520 = vpack.c.bf16 %v488, %v488
      %v521 = vpack.c.bf16 %v489, %v489
      %v522 = vpack.c.bf16 %v490, %v490
      %v523 = vpack.c.bf16 %v491, %v491
      %v524 = vpack.c.bf16 %v492, %v492
      %v525 = vpack.c.bf16 %v493, %v493
      %v526 = vpack.c.bf16 %v494, %v494
      %v527 = vpack.c.bf16 %v495, %v495
      %v528 = vpack.c.bf16 %v496, %v496
      %v529 = vpack.c.bf16 %v497, %v497
      %v530 = vpack.c.bf16 %v498, %v498
      %v531 = vpack.c.bf16 %v499, %v499
      %v532 = vpack.c.bf16 %v500, %v500
      %v533 = vpack.c.bf16 %v501, %v501
      %v534 = vpack.c.bf16 %v502, %v502
      %v535 = vpack.c.bf16 %v503, %v503
      %v536 = vpack.c.bf16 %v504, %v504
      %v537 = vpack.c.bf16 %v505, %v505
      %v538 = vpack.c.bf16 %v506, %v506
      %v539 = vpack.c.bf16 %v507, %v507
      %v540 = vpack.c.bf16 %v508, %v508
      %v541 = vpack.c.bf16 %v509, %v509
      %v542 = vpack.c.bf16 %v510, %v510
      %v543 = vpack.c.bf16 %v511, %v511
      %v544 = vpack.c.bf16 %v512, %v512
      %v545 = vpack.c.bf16 %v513, %v513
      %v546 = vpack.c.bf16 %v514, %v514
      %v547 = vpack.c.bf16 %v515, %v515
      %v548 = vpack.c.bf16 %v516, %v516
      %v549 = vpack.c.bf16 %v517, %v517
      %v550 = vpack.c.bf16 %v518, %v518
      %vm551 = vcmask 388096
      %552 = vst.msk [vmem:[%s244] sm:$0xf] %vm551, %v519
      %553 = vst.msk [vmem:[%s244 + $0x4] sm:$0xf] %vm551, %v520
      %554 = vst.msk [vmem:[%s244 + $0x8] sm:$0xf] %vm551, %v521
      %555 = vst.msk [vmem:[%s244 + $0xc] sm:$0xf] %vm551, %v522
      %556 = vst.msk [vmem:[%s244 + $0x10] sm:$0xf] %vm551, %v523
      %557 = vst.msk [vmem:[%s244 + $0x14] sm:$0xf] %vm551, %v524
      %558 = vst.msk [vmem:[%s244 + $0x18] sm:$0xf] %vm551, %v525
      %559 = vst.msk [vmem:[%s244 + $0x1c] sm:$0xf] %vm551, %v526
      %560 = vst.msk [vmem:[%s244 + $0x20] sm:$0xf] %vm551, %v527
      %561 = vst.msk [vmem:[%s244 + $0x24] sm:$0xf] %vm551, %v528
      %562 = vst.msk [vmem:[%s244 + $0x28] sm:$0xf] %vm551, %v529
      %563 = vst.msk [vmem:[%s244 + $0x2c] sm:$0xf] %vm551, %v530
      %564 = vst.msk [vmem:[%s244 + $0x30] sm:$0xf] %vm551, %v531
      %565 = vst.msk [vmem:[%s244 + $0x34] sm:$0xf] %vm551, %v532
      %566 = vst.msk [vmem:[%s244 + $0x38] sm:$0xf] %vm551, %v533
      %567 = vst.msk [vmem:[%s244 + $0x3c] sm:$0xf] %vm551, %v534
      %568 = vst.msk [vmem:[%s244 + $0x40] sm:$0xf] %vm551, %v535
      %569 = vst.msk [vmem:[%s244 + $0x44] sm:$0xf] %vm551, %v536
      %570 = vst.msk [vmem:[%s244 + $0x48] sm:$0xf] %vm551, %v537
      %571 = vst.msk [vmem:[%s244 + $0x4c] sm:$0xf] %vm551, %v538
      %572 = vst.msk [vmem:[%s244 + $0x50] sm:$0xf] %vm551, %v539
      %573 = vst.msk [vmem:[%s244 + $0x54] sm:$0xf] %vm551, %v540
      %574 = vst.msk [vmem:[%s244 + $0x58] sm:$0xf] %vm551, %v541
      %575 = vst.msk [vmem:[%s244 + $0x5c] sm:$0xf] %vm551, %v542
      %576 = vst.msk [vmem:[%s244 + $0x60] sm:$0xf] %vm551, %v543
      %577 = vst.msk [vmem:[%s244 + $0x64] sm:$0xf] %vm551, %v544
      %578 = vst.msk [vmem:[%s244 + $0x68] sm:$0xf] %vm551, %v545
      %579 = vst.msk [vmem:[%s244 + $0x6c] sm:$0xf] %vm551, %v546
      %580 = vst.msk [vmem:[%s244 + $0x70] sm:$0xf] %vm551, %v547
      %581 = vst.msk [vmem:[%s244 + $0x74] sm:$0xf] %vm551, %v548
      %582 = vst.msk [vmem:[%s244 + $0x78] sm:$0xf] %vm551, %v549
      %583 = vst.msk [vmem:[%s244 + $0x7c] sm:$0xf] %vm551, %v550
      %v584 = vld [vmem:[%s250] sm:$0xff]
      %v585 = vsel %vm454, %v487, 0.0
      %v586 = vsel %vm454, %v488, 0.0
      %v587 = vadd.f32 %v585, %v586
      %v588 = vsel %vm454, %v489, 0.0
      %v589 = vadd.f32 %v587, %v588
      %v590 = vsel %vm454, %v490, 0.0
      %v591 = vadd.f32 %v589, %v590
      %v592 = vsel %vm454, %v491, 0.0
      %v593 = vadd.f32 %v591, %v592
      %v594 = vsel %vm454, %v492, 0.0
      %v595 = vadd.f32 %v593, %v594
      %v596 = vsel %vm454, %v493, 0.0
      %v597 = vadd.f32 %v595, %v596
      %v598 = vsel %vm454, %v494, 0.0
      %v599 = vadd.f32 %v597, %v598
      %v600 = vsel %vm454, %v495, 0.0
      %v601 = vadd.f32 %v599, %v600
      %v602 = vsel %vm454, %v496, 0.0
      %v603 = vadd.f32 %v601, %v602
      %v604 = vsel %vm454, %v497, 0.0
      %v605 = vadd.f32 %v603, %v604
      %v606 = vsel %vm454, %v498, 0.0
      %v607 = vadd.f32 %v605, %v606
      %v608 = vsel %vm454, %v499, 0.0
      %v609 = vadd.f32 %v607, %v608
      %v610 = vsel %vm454, %v500, 0.0
      %v611 = vadd.f32 %v609, %v610
      %v612 = vsel %vm454, %v501, 0.0
      %v613 = vadd.f32 %v611, %v612
      %v614 = vsel %vm454, %v502, 0.0
      %v615 = vadd.f32 %v613, %v614
      %v616 = vsel %vm454, %v503, 0.0
      %v617 = vadd.f32 %v615, %v616
      %v618 = vsel %vm454, %v504, 0.0
      %v619 = vadd.f32 %v617, %v618
      %v620 = vsel %vm454, %v505, 0.0
      %v621 = vadd.f32 %v619, %v620
      %v622 = vsel %vm454, %v506, 0.0
      %v623 = vadd.f32 %v621, %v622
      %v624 = vsel %vm454, %v507, 0.0
      %v625 = vadd.f32 %v623, %v624
      %v626 = vsel %vm454, %v508, 0.0
      %v627 = vadd.f32 %v625, %v626
      %v628 = vsel %vm454, %v509, 0.0
      %v629 = vadd.f32 %v627, %v628
      %v630 = vsel %vm454, %v510, 0.0
      %v631 = vadd.f32 %v629, %v630
      %v632 = vsel %vm454, %v511, 0.0
      %v633 = vadd.f32 %v631, %v632
      %v634 = vsel %vm454, %v512, 0.0
      %v635 = vadd.f32 %v633, %v634
      %v636 = vsel %vm454, %v513, 0.0
      %v637 = vadd.f32 %v635, %v636
      %v638 = vsel %vm454, %v514, 0.0
      %v639 = vadd.f32 %v637, %v638
      %v640 = vsel %vm454, %v515, 0.0
      %v641 = vadd.f32 %v639, %v640
      %v642 = vsel %vm454, %v516, 0.0
      %v643 = vadd.f32 %v641, %v642
      %v644 = vsel %vm454, %v517, 0.0
      %v645 = vadd.f32 %v643, %v644
      %v646 = vsel %vm454, %v518, 0.0
      %v647 = vadd.f32 %v645, %v646
      %v648 = vrot.slane %v647, 4
      %v649 = vadd.f32 %v647, %v648
      %v650 = vrot.slane %v649, 2
      %v651 = vadd.f32 %v649, %v650
      %v652 = vrot.slane %v651, 1
      %v653 = vadd.f32 %v651, %v652
      %v654 = vadd.f32 %v584, %v653
      %655 = vst.msk [vmem:[%s250] sm:$0xff] %vm454, %v654
      %v656 = vld [vmem:[%s254] sm:$0xff]
      %v657 = vmul.f32 %v487, %v487
      %v658 = vmul.f32 %v488, %v488
      %v659 = vmul.f32 %v489, %v489
      %v660 = vmul.f32 %v490, %v490
      %v661 = vmul.f32 %v491, %v491
      %v662 = vmul.f32 %v492, %v492
      %v663 = vmul.f32 %v493, %v493
      %v664 = vmul.f32 %v494, %v494
      %v665 = vmul.f32 %v495, %v495
      %v666 = vmul.f32 %v496, %v496
      %v667 = vmul.f32 %v497, %v497
      %v668 = vmul.f32 %v498, %v498
      %v669 = vmul.f32 %v499, %v499
      %v670 = vmul.f32 %v500, %v500
      %v671 = vmul.f32 %v501, %v501
      %v672 = vmul.f32 %v502, %v502
      %v673 = vmul.f32 %v503, %v503
      %v674 = vmul.f32 %v504, %v504
      %v675 = vmul.f32 %v505, %v505
      %v676 = vmul.f32 %v506, %v506
      %v677 = vmul.f32 %v507, %v507
      %v678 = vmul.f32 %v508, %v508
      %v679 = vmul.f32 %v509, %v509
      %v680 = vmul.f32 %v510, %v510
      %v681 = vmul.f32 %v511, %v511
      %v682 = vmul.f32 %v512, %v512
      %v683 = vmul.f32 %v513, %v513
      %v684 = vmul.f32 %v514, %v514
      %v685 = vmul.f32 %v515, %v515
      %v686 = vmul.f32 %v516, %v516
      %v687 = vmul.f32 %v517, %v517
      %v688 = vmul.f32 %v518, %v518
      %v689 = vsel %vm454, %v657, 0.0
      %v690 = vsel %vm454, %v658, 0.0
      %v691 = vadd.f32 %v689, %v690
      %v692 = vsel %vm454, %v659, 0.0
      %v693 = vadd.f32 %v691, %v692
      %v694 = vsel %vm454, %v660, 0.0
      %v695 = vadd.f32 %v693, %v694
      %v696 = vsel %vm454, %v661, 0.0
      %v697 = vadd.f32 %v695, %v696
      %v698 = vsel %vm454, %v662, 0.0
      %v699 = vadd.f32 %v697, %v698
      %v700 = vsel %vm454, %v663, 0.0
      %v701 = vadd.f32 %v699, %v700
      %v702 = vsel %vm454, %v664, 0.0
      %v703 = vadd.f32 %v701, %v702
      %v704 = vsel %vm454, %v665, 0.0
      %v705 = vadd.f32 %v703, %v704
      %v706 = vsel %vm454, %v666, 0.0
      %v707 = vadd.f32 %v705, %v706
      %v708 = vsel %vm454, %v667, 0.0
      %v709 = vadd.f32 %v707, %v708
      %v710 = vsel %vm454, %v668, 0.0
      %v711 = vadd.f32 %v709, %v710
      %v712 = vsel %vm454, %v669, 0.0
      %v713 = vadd.f32 %v711, %v712
      %v714 = vsel %vm454, %v670, 0.0
      %v715 = vadd.f32 %v713, %v714
      %v716 = vsel %vm454, %v671, 0.0
      %v717 = vadd.f32 %v715, %v716
      %v718 = vsel %vm454, %v672, 0.0
      %v719 = vadd.f32 %v717, %v718
      %v720 = vsel %vm454, %v673, 0.0
      %v721 = vadd.f32 %v719, %v720
      %v722 = vsel %vm454, %v674, 0.0
      %v723 = vadd.f32 %v721, %v722
      %v724 = vsel %vm454, %v675, 0.0
      %v725 = vadd.f32 %v723, %v724
      %v726 = vsel %vm454, %v676, 0.0
      %v727 = vadd.f32 %v725, %v726
      %v728 = vsel %vm454, %v677, 0.0
      %v729 = vadd.f32 %v727, %v728
      %v730 = vsel %vm454, %v678, 0.0
      %v731 = vadd.f32 %v729, %v730
      %v732 = vsel %vm454, %v679, 0.0
      %v733 = vadd.f32 %v731, %v732
      %v734 = vsel %vm454, %v680, 0.0
      %v735 = vadd.f32 %v733, %v734
      %v736 = vsel %vm454, %v681, 0.0
      %v737 = vadd.f32 %v735, %v736
      %v738 = vsel %vm454, %v682, 0.0
      %v739 = vadd.f32 %v737, %v738
      %v740 = vsel %vm454, %v683, 0.0
      %v741 = vadd.f32 %v739, %v740
      %v742 = vsel %vm454, %v684, 0.0
      %v743 = vadd.f32 %v741, %v742
      %v744 = vsel %vm454, %v685, 0.0
      %v745 = vadd.f32 %v743, %v744
      %v746 = vsel %vm454, %v686, 0.0
      %v747 = vadd.f32 %v745, %v746
      %v748 = vsel %vm454, %v687, 0.0
      %v749 = vadd.f32 %v747, %v748
      %v750 = vsel %vm454, %v688, 0.0
      %v751 = vadd.f32 %v749, %v750
      %v752 = vrot.slane %v751, 4
      %v753 = vadd.f32 %v751, %v752
      %v754 = vrot.slane %v753, 2
      %v755 = vadd.f32 %v753, %v754
      %v756 = vrot.slane %v755, 1
      %v757 = vadd.f32 %v755, %v756
      %v758 = vadd.f32 %v656, %v757
      %759 = vst.msk [vmem:[%s254] sm:$0xff] %vm454, %v758
      %s760 = smul.u32 %s20, 2
      %s761 = sadd.s32 %s760, %s21
      %p762 = scmp.lt.s32.totalorder %s761, 1
      %s763 = scalar_select %p762, %s761, 1
      %s764 = smul.addr %s763, 32
      %s765 = smul.addr %s764, 4
      %s766 = scalar_lea.vmem %s2, %s765
      %p767 = scmp.lt.s32.totalorder %s20, 0
      %s768 = scalar_select %p767, %s20, 0
      %s769 = smul.addr %s768, 8
      %s770 = scalar_lea.vmem %s3, %s769
      %p771 = scmp.lt.s32.totalorder %s20, 0
      %s772 = scalar_select %p771, %s20, 0
      %s773 = smul.addr %s772, 8
      %s774 = scalar_lea.vmem %s4, %s773
      // Predicated region
      $region33: #{inception_d_forward.13} parent=27 // pred_check
        %p775 = pneg %p101
      $region34: #{inception_d_forward.13} parent=27 // pred_check_branch
        %777 = sbr.rel (%p775) target = $region36
      $region35: #{inception_d_forward.13} parent=27 // pred_region
        %s778 = smul.u32 %s20, 2
        %s779 = sadd.s32 %s778, %s21
      $region36: #{inception_d_forward.13} parent=27 // pred_fallthru
        _
      // Predicated region
      $region37: #{inception_d_forward.13} parent=27 // pred_check
        %p780 = pneg %p127
      $region38: #{inception_d_forward.13} parent=27 // pred_check_branch
        %782 = sbr.rel (%p780) target = $region40
      $region39: #{inception_d_forward.13} parent=27 // pred_region
        _
      $region40: #{inception_d_forward.13} parent=27 // pred_fallthru
        _
      // Predicated region
      $region41: #{inception_d_forward.13} parent=27 // pred_check
        %p783 = pneg %p153
      $region42: #{inception_d_forward.13} parent=27 // pred_check_branch
        %785 = sbr.rel (%p783) target = $region44
      $region43: #{inception_d_forward.13} parent=27 // pred_region
        _
      $region44: #{inception_d_forward.13} parent=27 // pred_fallthru
        _
      // Predicated region
      $region45: #{inception_d_forward.13} parent=27 // pred_check
        %p786 = pneg %p127
      $region46: #{inception_d_forward.13} parent=27 // pred_check_branch
        %788 = sbr.rel (%p786) target = $region48
      $region47: #{inception_d_forward.13} parent=27 // pred_region
        %p789 = scmp.lt.s32.totalorder %s20, 0
        %s790 = scalar_select %p789, %s20, 0
        %s791 = smul.addr %s790, 8
        %s792 = scalar_lea.vmem %s3, %s791
      $region48: #{inception_d_forward.13} parent=27 // pred_fallthru
        _
      // Predicated region
      $region49: #{inception_d_forward.13} parent=27 // pred_check
        %p793 = pneg %p153
      $region50: #{inception_d_forward.13} parent=27 // pred_check_branch
        %795 = sbr.rel (%p793) target = $region52
      $region51: #{inception_d_forward.13} parent=27 // pred_region
        %p796 = scmp.lt.s32.totalorder %s20, 0
        %s797 = scalar_select %p796, %s20, 0
        %s798 = smul.addr %s797, 8
        %s799 = scalar_lea.vmem %s4, %s798
      $region52: #{inception_d_forward.13} parent=27 // pred_fallthru
        _
    $region28: #{inception_d_forward.13} parent=5 // pred_fallthru
      _
    %p800 = scmp.le.s32.totalorder 2, %s11
    // Predicated region
    $region53: #{inception_d_forward.13} parent=5 // pred_check
      %p801 = pneg %p800
    $region54: #{inception_d_forward.13} parent=5 // pred_check_branch
      %803 = sbr.rel (%p801) target = $region56
    $region55: #{inception_d_forward.13} parent=5 // pred_region
      %s804 = ssub.s32 %s11, 2
      // Predicated region
      $region57: #{inception_d_forward.13} parent=55 // pred_check
        %p805 = pneg %p107
      $region58: #{inception_d_forward.13} parent=55 // pred_check_branch
        %807 = sbr.rel (%p805) target = $region60
      $region59: #{inception_d_forward.13} parent=55 // pred_region
        %s808 = smul.u32 %s22, 2
        %s809 = sadd.s32 %s808, %s23
        %p810 = scmp.lt.s32.totalorder %s809, 1
        %s811 = scalar_select %p810, %s809, 1
        %s812 = smul.addr %s811, 32
        %s813 = smul.addr %s812, 4
        %s814 = scalar_lea.vmem %s2, %s813
      $region60: #{inception_d_forward.13} parent=55 // pred_fallthru
        _
    $region56: #{inception_d_forward.13} parent=5 // pred_fallthru
      _
  $region6: #{inception_d_forward.13} parent=0 // loop_footer
    %s15 = sadd.s32 1, %s11
  $region7: #{inception_d_forward.13} parent=0 // loop_footer_branch
    %10 = sbr.rel target = $region3
  $region8: #{inception_d_forward.13} parent=0 // loop_exit
    _

// kernel: inception_d_forward.16
$region0: #{inception_d_forward.16}
  #allocation0 [shape = 'u32[]', space=smem, size = 0x4, offset = 0x4, fixed_abs, tag = 'smem constant byte address 0x4 - core index']
  #allocation1 [shape = 'u32[72,128]{1,0:T(1,128)}', space=vmem, size = 0x9000, scoped, tag = 'internal scratch']
  %s0 = inlined_call_operand.vmem [shape: bf16[2,49,80], index: 0, kind: input, shape index: {}, may-alias: {0,3}]
  %s1 = inlined_call_operand.vmem [shape: f32[1,1,80], index: 1, kind: input, shape index: {}]
  %s2 = inlined_call_operand.vmem [shape: f32[1,1,80], index: 2, kind: input, shape index: {}]
  %s3 = inlined_call_operand.vmem [shape: bf16[2,49,80], index: 3, kind: output, shape index: {}, may-alias: {0,3}]
  %s4 = sld [smem:[#allocation0]]
  $region45: #{inception_d_forward.16} parent=0
    _
  %s6 = ssub.s32 1, %s4
  %s7 = scalar_select 0, %s6, %s4
  loop: start=0, step=1, limit=4
  $region2: #{inception_d_forward.16} parent=0 // loop_pre_header
    _
  $region3: #{inception_d_forward.16} parent=0 // loop_header
    %s9 = sphi 0, %s13
    %p10 = scmp.ge.s32.totalorder %s9, 4
    %s19 = sphi 0, %s21
    %s22 = sphi 0, %s19
    %s23 = sphi 0, %s22
    %s39 = sphi 0, %s23
    %s43 = sphi 0, %s43
    %s45 = sphi 0, %s43
    %s46 = sphi 0, %s45
    %s60 = sphi 0, %s46
    %s64 = sphi 0, %s64
    %s66 = sphi 0, %s64
    %s67 = sphi 0, %s66
    %s81 = sphi 0, %s67
    %s87 = sphi 0, %s89
    %s90 = sphi 0, %s87
    %s91 = sphi 0, %s90
    %s107 = sphi 0, %s91
  $region4: #{inception_d_forward.16} parent=0 // loop_header_branch
    %12 = sbr.rel (%p10) target = $region8
  $region5: #{inception_d_forward.16} parent=0 // loop_body
    %s14 = ssub.s32 %s9, 1
    %s15 = ssub.s32 %s9, 2
    %s16 = sadd.s32 %s9, 1
    %s17 = ssub.s32 %s9, %s16
    %p18 = scmp.eq.s32.totalorder %s17, 0
    %s20 = sadd.s32 %s19, 1
    %s21 = scalar_select %p18, %s19, %s20
    %p24 = pneg %p18
    %p25 = scmp.eq.s32.totalorder %s9, 1
    %p26 = por %p24, %p25
    %p27 = scmp.ne.s32.totalorder %s19, %s22
    %p28 = scmp.eq.s32.totalorder %s9, 0
    %p29 = por %p27, %p28
    %p30 = scmp.ne.s32.totalorder %s19, %s22
    %p31 = scmp.eq.s32.totalorder %s14, 1
    %p32 = por %p30, %p31
    %p33 = scmp.ne.s32.totalorder %s22, %s23
    %p34 = scmp.eq.s32.totalorder %s14, 0
    %p35 = por %p33, %p34
    %p36 = scmp.ne.s32.totalorder %s22, %s23
    %p37 = scmp.eq.s32.totalorder %s15, 1
    %p38 = por %p36, %p37
    %p40 = scmp.ne.s32.totalorder %s23, %s39
    %p41 = scmp.eq.s32.totalorder %s15, 0
    %p42 = por %p40, %p41
    %s44 = sadd.s32 %s43, 1
    %p47 = scmp.eq.s32.totalorder %s9, 1
    %p48 = scmp.ne.s32.totalorder %s43, %s45
    %p49 = scmp.eq.s32.totalorder %s9, 0
    %p50 = por %p48, %p49
    %p51 = scmp.ne.s32.totalorder %s43, %s45
    %p52 = scmp.eq.s32.totalorder %s14, 1
    %p53 = por %p51, %p52
    %p54 = scmp.ne.s32.totalorder %s45, %s46
    %p55 = scmp.eq.s32.totalorder %s14, 0
    %p56 = por %p54, %p55
    %p57 = scmp.ne.s32.totalorder %s45, %s46
    %p58 = scmp.eq.s32.totalorder %s15, 1
    %p59 = por %p57, %p58
    %p61 = scmp.ne.s32.totalorder %s46, %s60
    %p62 = scmp.eq.s32.totalorder %s15, 0
    %p63 = por %p61, %p62
    %s65 = sadd.s32 %s64, 1
    %p68 = scmp.eq.s32.totalorder %s9, 1
    %p69 = scmp.ne.s32.totalorder %s64, %s66
    %p70 = scmp.eq.s32.totalorder %s9, 0
    %p71 = por %p69, %p70
    %p72 = scmp.ne.s32.totalorder %s64, %s66
    %p73 = scmp.eq.s32.totalorder %s14, 1
    %p74 = por %p72, %p73
    %p75 = scmp.ne.s32.totalorder %s66, %s67
    %p76 = scmp.eq.s32.totalorder %s14, 0
    %p77 = por %p75, %p76
    %p78 = scmp.ne.s32.totalorder %s66, %s67
    %p79 = scmp.eq.s32.totalorder %s15, 1
    %p80 = por %p78, %p79
    %p82 = scmp.ne.s32.totalorder %s67, %s81
    %p83 = scmp.eq.s32.totalorder %s15, 0
    %p84 = por %p82, %p83
    %s85 = ssub.s32 %s9, %s16
    %p86 = scmp.eq.s32.totalorder %s85, 0
    %s88 = sadd.s32 %s87, 1
    %s89 = scalar_select %p86, %s87, %s88
    %p92 = pneg %p86
    %p93 = scmp.eq.s32.totalorder %s9, 1
    %p94 = por %p92, %p93
    %p95 = scmp.ne.s32.totalorder %s87, %s90
    %p96 = scmp.eq.s32.totalorder %s9, 0
    %p97 = por %p95, %p96
    %p98 = scmp.ne.s32.totalorder %s87, %s90
    %p99 = scmp.eq.s32.totalorder %s14, 1
    %p100 = por %p98, %p99
    %p101 = scmp.ne.s32.totalorder %s90, %s91
    %p102 = scmp.eq.s32.totalorder %s14, 0
    %p103 = por %p101, %p102
    %p104 = scmp.ne.s32.totalorder %s90, %s91
    %p105 = scmp.eq.s32.totalorder %s15, 1
    %p106 = por %p104, %p105
    %p108 = scmp.ne.s32.totalorder %s91, %s107
    %p109 = scmp.eq.s32.totalorder %s15, 0
    %p110 = por %p108, %p109
    %p111 = scmp.le.s32.totalorder 1, %s9
    %p112 = scmp.lt.s32.totalorder %s9, 3
    %p113 = pnand %p111, %p112
    %p114 = pneg %p113
    // Predicated region
    $region9: #{inception_d_forward.16} parent=5 // pred_check
      _
    $region10: #{inception_d_forward.16} parent=5 // pred_check_branch
      %116 = sbr.rel (%p113) target = $region12
    $region11: #{inception_d_forward.16} parent=5 // pred_region
      %s117 = ssub.s32 %s9, 1
      // Predicated region
      $region13: #{inception_d_forward.16} parent=11 // pred_check
        %p118 = pneg %p56
      $region14: #{inception_d_forward.16} parent=11 // pred_check_branch
        %120 = sbr.rel (%p118) target = $region16
      $region15: #{inception_d_forward.16} parent=11 // pred_region
        _
      $region16: #{inception_d_forward.16} parent=11 // pred_fallthru
        _
      // Predicated region
      $region17: #{inception_d_forward.16} parent=11 // pred_check
        %p121 = pneg %p77
      $region18: #{inception_d_forward.16} parent=11 // pred_check_branch
        %123 = sbr.rel (%p121) target = $region20
      $region19: #{inception_d_forward.16} parent=11 // pred_region
        _
      $region20: #{inception_d_forward.16} parent=11 // pred_fallthru
        _
    $region12: #{inception_d_forward.16} parent=5 // pred_fallthru
      _
    %p124 = scmp.lt.s32.totalorder %s9, 2
    // Predicated region
    $region21: #{inception_d_forward.16} parent=5 // pred_check
      %p125 = pneg %p124
    $region22: #{inception_d_forward.16} parent=5 // pred_check_branch
      %127 = sbr.rel (%p125) target = $region24
    $region23: #{inception_d_forward.16} parent=5 // pred_region
      // Predicated region
      $region25: #{inception_d_forward.16} parent=23 // pred_check
        %p128 = pneg %p29
      $region26: #{inception_d_forward.16} parent=23 // pred_check_branch
        %130 = sbr.rel (%p128) target = $region28
      $region27: #{inception_d_forward.16} parent=23 // pred_region
        %p131 = scmp.lt.s32.totalorder %s9, 1
        %s132 = scalar_select %p131, %s9, 1
        %s133 = smul.addr %s132, 7
        %s134 = smul.addr %s133, 4
        %s135 = scalar_lea.vmem %s0, %s134
      $region28: #{inception_d_forward.16} parent=23 // pred_fallthru
        _
    $region24: #{inception_d_forward.16} parent=5 // pred_fallthru
      _
    %p136 = scmp.le.s32.totalorder 1, %s9
    %p137 = scmp.lt.s32.totalorder %s9, 3
    %p138 = pnand %p136, %p137
    %p139 = pneg %p138
    // Predicated region
    $region29: #{inception_d_forward.16} parent=5 // pred_check
      _
    $region30: #{inception_d_forward.16} parent=5 // pred_check_branch
      %141 = sbr.rel (%p138) target = $region32
    $region31: #{inception_d_forward.16} parent=5 // pred_region
      %s142 = ssub.s32 %s9, 1
      %p143 = scmp.lt.s32.totalorder %s14, 1
      %s144 = scalar_select %p143, %s14, 1
      %s145 = smul.addr %s144, 7
      %s146 = smul.addr %s145, 4
      %s147 = scalar_lea.vmem %s0, %s146
      %p148 = pneg %p35
      %p149 = pneg %p32
      %p150 = pneg %p56
      %p151 = pneg %p53
      %p152 = pneg %p77
      %p153 = pneg %p74
      %p154 = pneg %p103
      %p155 = pneg %p100
      %p156 = scmp.lt.s32.totalorder %s14, 1
      %s157 = scalar_select %p156, %s14, 1
      %s158 = smul.addr %s157, 7
      %s159 = smul.addr %s158, 4
      %s160 = scalar_lea.vmem %s3, %s159
      %p161 = scmp.lt.s32.totalorder %s14, 1
      %s162 = scalar_select %p161, %s14, 1
      %s163 = smul.addr %s162, 7
      %s164 = smul.addr %s163, 4
      %s165 = scalar_lea.vmem %s0, %s164
      %p166 = scmp.lt.s32.totalorder %s14, 1
      %s167 = scalar_select %p166, %s14, 1
      %s168 = smul.addr %s167, 7
      %s169 = smul.addr %s168, 4
      %s170 = scalar_lea.vmem %s3, %s169
      %v171 = vld [vmem:[%s165] sm:$0xf]
      %v172 = vld [vmem:[%s165 + $0x4] sm:$0xf]
      %v173 = vld [vmem:[%s165 + $0x8] sm:$0xf]
      %v174 = vld [vmem:[%s165 + $0xc] sm:$0xf]
      %v175 = vld [vmem:[%s165 + $0x10] sm:$0xf]
      %v176 = vld [vmem:[%s165 + $0x14] sm:$0xf]
      %v177 = vld [vmem:[%s165 + $0x18] sm:$0x1]
      %v178 = vunpack.c.l.bf16 %v171
      %v179 = vunpack.c.l.bf16 %v172
      %v180 = vunpack.c.l.bf16 %v173
      %v181 = vunpack.c.l.bf16 %v174
      %v182 = vunpack.c.l.bf16 %v175
      %v183 = vunpack.c.l.bf16 %v176
      %v184 = vunpack.c.l.bf16 %v177
      %v185 = vld [vmem:[%s1] sm:$0x1]
      %v187 = vperm.slane %v185, 0
      %v189 = vmul.f32 %v178, %v187
      %v190 = vmul.f32 %v179, %v187
      %v191 = vmul.f32 %v180, %v187
      %v192 = vmul.f32 %v181, %v187
      %v193 = vmul.f32 %v182, %v187
      %v194 = vmul.f32 %v183, %v187
      %v195 = vmul.f32 %v184, %v187
      %v196 = vld [vmem:[%s2] sm:$0x1]
      %v198 = vperm.slane %v196, 0
      %v200 = vadd.f32 %v189, %v198
      %v201 = vadd.f32 %v190, %v198
      %v202 = vadd.f32 %v191, %v198
      %v203 = vadd.f32 %v192, %v198
      %v204 = vadd.f32 %v193, %v198
      %v205 = vadd.f32 %v194, %v198
      %v206 = vadd.f32 %v195, %v198
      %v207 = vmax.f32 %v200, 0.0
      %v208 = vmax.f32 %v201, 0.0
      %v209 = vmax.f32 %v202, 0.0
      %v210 = vmax.f32 %v203, 0.0
      %v211 = vmax.f32 %v204, 0.0
      %v212 = vmax.f32 %v205, 0.0
      %v213 = vmax.f32 %v206, 0.0
      %v214 = vpack.c.bf16 %v207, %v207
      %v215 = vpack.c.bf16 %v208, %v208
      %v216 = vpack.c.bf16 %v209, %v209
      %v217 = vpack.c.bf16 %v210, %v210
      %v218 = vpack.c.bf16 %v211, %v211
      %v219 = vpack.c.bf16 %v212, %v212
      %v220 = vpack.c.bf16 %v213, %v213
      %vm221 = vcmask 650240
      %222 = vst.msk [vmem:[%s170] sm:$0xf] %vm221, %v214
      %223 = vst.msk [vmem:[%s170 + $0x4] sm:$0xf] %vm221, %v215
      %224 = vst.msk [vmem:[%s170 + $0x8] sm:$0xf] %vm221, %v216
      %225 = vst.msk [vmem:[%s170 + $0xc] sm:$0xf] %vm221, %v217
      %226 = vst.msk [vmem:[%s170 + $0x10] sm:$0xf] %vm221, %v218
      %227 = vst.msk [vmem:[%s170 + $0x14] sm:$0xf] %vm221, %v219
      %vm228 = vcmask 647168
      %vm229 = vsmask.f32 256
      %vm230 = vmand %vm228, %vm229
      %v231 = vld [vmem:[%s170 + $0x18] sm:$0x1]
      %v232 = vsel %vm230, %v220, %v231
      %233 = vst [vmem:[%s170 + $0x18] sm:$0x1] %v232
      %p234 = scmp.lt.s32.totalorder %s14, 1
      %s235 = scalar_select %p234, %s14, 1
      %s236 = smul.addr %s235, 7
      %s237 = smul.addr %s236, 4
      %s238 = scalar_lea.vmem %s3, %s237
      // Predicated region
      $region33: #{inception_d_forward.16} parent=31 // pred_check
        %p239 = pneg %p100
      $region34: #{inception_d_forward.16} parent=31 // pred_check_branch
        %241 = sbr.rel (%p239) target = $region36
      $region35: #{inception_d_forward.16} parent=31 // pred_region
        _
      $region36: #{inception_d_forward.16} parent=31 // pred_fallthru
        _
    $region32: #{inception_d_forward.16} parent=5 // pred_fallthru
      _
    %p242 = scmp.le.s32.totalorder 2, %s9
    // Predicated region
    $region37: #{inception_d_forward.16} parent=5 // pred_check
      %p243 = pneg %p242
    $region38: #{inception_d_forward.16} parent=5 // pred_check_branch
      %245 = sbr.rel (%p243) target = $region40
    $region39: #{inception_d_forward.16} parent=5 // pred_region
      %s246 = ssub.s32 %s9, 2
      // Predicated region
      $region41: #{inception_d_forward.16} parent=39 // pred_check
        %p247 = pneg %p106
      $region42: #{inception_d_forward.16} parent=39 // pred_check_branch
        %249 = sbr.rel (%p247) target = $region44
      $region43: #{inception_d_forward.16} parent=39 // pred_region
        %p250 = scmp.lt.s32.totalorder %s15, 1
        %s251 = scalar_select %p250, %s15, 1
        %s252 = smul.addr %s251, 7
        %s253 = smul.addr %s252, 4
        %s254 = scalar_lea.vmem %s3, %s253
      $region44: #{inception_d_forward.16} parent=39 // pred_fallthru
        _
    $region40: #{inception_d_forward.16} parent=5 // pred_fallthru
      _
  $region6: #{inception_d_forward.16} parent=0 // loop_footer
    %s13 = sadd.s32 1, %s9
  $region7: #{inception_d_forward.16} parent=0 // loop_footer_branch
    %8 = sbr.rel target = $region3
  $region8: #{inception_d_forward.16} parent=0 // loop_exit
    _

// kernel: inception_d_forward.15
$region0: #{inception_d_forward.15}
  #allocation0 [shape = 'u32[]', space=smem, size = 0x4, offset = 0x4, fixed_abs, tag = 'smem constant byte address 0x4 - core index']
  #allocation1 [shape = 'u32[72,128]{1,0:T(1,128)}', space=vmem, size = 0x9000, scoped, tag = 'internal scratch']
  #allocation2 [shape = 'f32[49,80]{1,0:T(8,128)}', space=vmem, size = 0x7000, scoped, tag = 'scratch operand']
  %s0 = inlined_call_operand.vmem [shape: bf16[2,49,432], index: 0, kind: input, shape index: {}]
  %s1 = inlined_call_operand.vmem [shape: bf16[1,432,80], index: 1, kind: input, shape index: {}]
  %s2 = inlined_call_operand.vmem [shape: bf16[2,49,80], index: 2, kind: output, shape index: {0}]
  %s3 = inlined_call_operand.vmem [shape: f32[8,80], index: 3, kind: output, shape index: {1}]
  %s4 = inlined_call_operand.vmem [shape: f32[8,80], index: 4, kind: output, shape index: {2}]
  %5 = xla_tuple %s2, %s3, %s4
  %s6 = sld [smem:[#allocation0]]
  $region61: #{inception_d_forward.15} parent=0
    _
  %s8 = ssub.s32 1, %s6
  %s9 = scalar_select 0, %s8, %s6
  loop: start=0, step=1, limit=4
  $region2: #{inception_d_forward.15} parent=0 // loop_pre_header
    _
  $region3: #{inception_d_forward.15} parent=0 // loop_header
    %s11 = sphi 0, %s15
    %p12 = scmp.ge.s32.totalorder %s11, 4
    %s18 = sphi 0, %s30
    %s19 = sphi 0, %s26
    %s20 = sphi 0, %s18
    %s21 = sphi 0, %s19
    %s22 = sphi 0, %s20
    %s23 = sphi 0, %s21
    %s37 = sphi 0, %s39
    %s40 = sphi 0, %s37
    %s41 = sphi 0, %s40
    %s57 = sphi 0, %s41
    %s61 = sphi 0, %s61
    %s63 = sphi 0, %s61
    %s64 = sphi 0, %s63
    %s78 = sphi 0, %s64
    %s88 = sphi 0, %s90
    %s91 = sphi 0, %s88
    %s92 = sphi 0, %s91
    %s108 = sphi 0, %s92
    %s114 = sphi 0, %s116
    %s117 = sphi 0, %s114
    %s118 = sphi 0, %s117
    %s134 = sphi 0, %s118
    %s140 = sphi 0, %s142
    %s143 = sphi 0, %s140
    %s144 = sphi 0, %s143
    %s160 = sphi 0, %s144
  $region4: #{inception_d_forward.15} parent=0 // loop_header_branch
    %14 = sbr.rel (%p12) target = $region8
  $region5: #{inception_d_forward.15} parent=0 // loop_body
    %s16 = ssub.s32 %s11, 1
    %s17 = ssub.s32 %s11, 2
    %s24 = sadd.s32 1, %s19
    %p25 = scmp.ge.s32.totalorder %s24, 2
    %s26 = scalar_select %p25, 0, %s24
    %s27 = sadd.s32 1, %s18
    %s28 = scalar_select %p25, %s27, %s18
    %p29 = scmp.ge.s32.totalorder %s28, 1
    %s30 = scalar_select %p29, 0, %s28
    %s31 = smul.u32 %s18, 2
    %s32 = sadd.s32 %s31, %s19
    %s33 = smul.u32 %s30, 2
    %s34 = sadd.s32 %s33, %s26
    %s35 = ssub.s32 %s32, %s34
    %p36 = scmp.eq.s32.totalorder %s35, 0
    %s38 = sadd.s32 %s37, 1
    %s39 = scalar_select %p36, %s37, %s38
    %p42 = pneg %p36
    %p43 = scmp.eq.s32.totalorder %s11, 1
    %p44 = por %p42, %p43
    %p45 = scmp.ne.s32.totalorder %s37, %s40
    %p46 = scmp.eq.s32.totalorder %s11, 0
    %p47 = por %p45, %p46
    %p48 = scmp.ne.s32.totalorder %s37, %s40
    %p49 = scmp.eq.s32.totalorder %s16, 1
    %p50 = por %p48, %p49
    %p51 = scmp.ne.s32.totalorder %s40, %s41
    %p52 = scmp.eq.s32.totalorder %s16, 0
    %p53 = por %p51, %p52
    %p54 = scmp.ne.s32.totalorder %s40, %s41
    %p55 = scmp.eq.s32.totalorder %s17, 1
    %p56 = por %p54, %p55
    %p58 = scmp.ne.s32.totalorder %s41, %s57
    %p59 = scmp.eq.s32.totalorder %s17, 0
    %p60 = por %p58, %p59
    %s62 = sadd.s32 %s61, 1
    %p65 = scmp.eq.s32.totalorder %s11, 1
    %p66 = scmp.ne.s32.totalorder %s61, %s63
    %p67 = scmp.eq.s32.totalorder %s11, 0
    %p68 = por %p66, %p67
    %p69 = scmp.ne.s32.totalorder %s61, %s63
    %p70 = scmp.eq.s32.totalorder %s16, 1
    %p71 = por %p69, %p70
    %p72 = scmp.ne.s32.totalorder %s63, %s64
    %p73 = scmp.eq.s32.totalorder %s16, 0
    %p74 = por %p72, %p73
    %p75 = scmp.ne.s32.totalorder %s63, %s64
    %p76 = scmp.eq.s32.totalorder %s17, 1
    %p77 = por %p75, %p76
    %p79 = scmp.ne.s32.totalorder %s64, %s78
    %p80 = scmp.eq.s32.totalorder %s17, 0
    %p81 = por %p79, %p80
    %s82 = smul.u32 %s18, 2
    %s83 = sadd.s32 %s82, %s19
    %s84 = smul.u32 %s30, 2
    %s85 = sadd.s32 %s84, %s26
    %s86 = ssub.s32 %s83, %s85
    %p87 = scmp.eq.s32.totalorder %s86, 0
    %s89 = sadd.s32 %s88, 1
    %s90 = scalar_select %p87, %s88, %s89
    %p93 = pneg %p87
    %p94 = scmp.eq.s32.totalorder %s11, 1
    %p95 = por %p93, %p94
    %p96 = scmp.ne.s32.totalorder %s88, %s91
    %p97 = scmp.eq.s32.totalorder %s11, 0
    %p98 = por %p96, %p97
    %p99 = scmp.ne.s32.totalorder %s88, %s91
    %p100 = scmp.eq.s32.totalorder %s16, 1
    %p101 = por %p99, %p100
    %p102 = scmp.ne.s32.totalorder %s91, %s92
    %p103 = scmp.eq.s32.totalorder %s16, 0
    %p104 = por %p102, %p103
    %p105 = scmp.ne.s32.totalorder %s91, %s92
    %p106 = scmp.eq.s32.totalorder %s17, 1
    %p107 = por %p105, %p106
    %p109 = scmp.ne.s32.totalorder %s92, %s108
    %p110 = scmp.eq.s32.totalorder %s17, 0
    %p111 = por %p109, %p110
    %s112 = ssub.s32 %s18, %s30
    %p113 = scmp.eq.s32.totalorder %s112, 0
    %s115 = sadd.s32 %s114, 1
    %s116 = scalar_select %p113, %s114, %s115
    %p119 = pneg %p113
    %p120 = scmp.eq.s32.totalorder %s11, 1
    %p121 = por %p119, %p120
    %p122 = scmp.ne.s32.totalorder %s114, %s117
    %p123 = scmp.eq.s32.totalorder %s11, 0
    %p124 = por %p122, %p123
    %p125 = scmp.ne.s32.totalorder %s114, %s117
    %p126 = scmp.eq.s32.totalorder %s16, 1
    %p127 = por %p125, %p126
    %p128 = scmp.ne.s32.totalorder %s117, %s118
    %p129 = scmp.eq.s32.totalorder %s16, 0
    %p130 = por %p128, %p129
    %p131 = scmp.ne.s32.totalorder %s117, %s118
    %p132 = scmp.eq.s32.totalorder %s17, 1
    %p133 = por %p131, %p132
    %p135 = scmp.ne.s32.totalorder %s118, %s134
    %p136 = scmp.eq.s32.totalorder %s17, 0
    %p137 = por %p135, %p136
    %s138 = ssub.s32 %s18, %s30
    %p139 = scmp.eq.s32.totalorder %s138, 0
    %s141 = sadd.s32 %s140, 1
    %s142 = scalar_select %p139, %s140, %s141
    %p145 = pneg %p139
    %p146 = scmp.eq.s32.totalorder %s11, 1
    %p147 = por %p145, %p146
    %p148 = scmp.ne.s32.totalorder %s140, %s143
    %p149 = scmp.eq.s32.totalorder %s11, 0
    %p150 = por %p148, %p149
    %p151 = scmp.ne.s32.totalorder %s140, %s143
    %p152 = scmp.eq.s32.totalorder %s16, 1
    %p153 = por %p151, %p152
    %p154 = scmp.ne.s32.totalorder %s143, %s144
    %p155 = scmp.eq.s32.totalorder %s16, 0
    %p156 = por %p154, %p155
    %p157 = scmp.ne.s32.totalorder %s143, %s144
    %p158 = scmp.eq.s32.totalorder %s17, 1
    %p159 = por %p157, %p158
    %p161 = scmp.ne.s32.totalorder %s144, %s160
    %p162 = scmp.eq.s32.totalorder %s17, 0
    %p163 = por %p161, %p162
    %p164 = scmp.le.s32.totalorder 1, %s11
    %p165 = scmp.lt.s32.totalorder %s11, 3
    %p166 = pnand %p164, %p165
    %p167 = pneg %p166
    // Predicated region
    $region9: #{inception_d_forward.15} parent=5 // pred_check
      _
    $region10: #{inception_d_forward.15} parent=5 // pred_check_branch
      %169 = sbr.rel (%p166) target = $region12
    $region11: #{inception_d_forward.15} parent=5 // pred_region
      %s170 = ssub.s32 %s11, 1
      // Predicated region
      $region13: #{inception_d_forward.15} parent=11 // pred_check
        %p171 = pneg %p74
      $region14: #{inception_d_forward.15} parent=11 // pred_check_branch
        %173 = sbr.rel (%p171) target = $region16
      $region15: #{inception_d_forward.15} parent=11 // pred_region
        _
      $region16: #{inception_d_forward.15} parent=11 // pred_fallthru
        _
    $region12: #{inception_d_forward.15} parent=5 // pred_fallthru
      _
    %p174 = scmp.lt.s32.totalorder %s11, 2
    // Predicated region
    $region17: #{inception_d_forward.15} parent=5 // pred_check
      %p175 = pneg %p174
    $region18: #{inception_d_forward.15} parent=5 // pred_check_branch
      %177 = sbr.rel (%p175) target = $region20
    $region19: #{inception_d_forward.15} parent=5 // pred_region
      // Predicated region
      $region21: #{inception_d_forward.15} parent=19 // pred_check
        %p178 = pneg %p47
      $region22: #{inception_d_forward.15} parent=19 // pred_check_branch
        %180 = sbr.rel (%p178) target = $region24
      $region23: #{inception_d_forward.15} parent=19 // pred_region
        %s181 = smul.u32 %s18, 2
        %s182 = sadd.s32 %s181, %s19
        %p183 = scmp.lt.s32.totalorder %s182, 1
        %s184 = scalar_select %p183, %s182, 1
        %s185 = smul.addr %s184, 28
        %s186 = smul.addr %s185, 4
        %s187 = scalar_lea.vmem %s0, %s186
        %s188 = smul.u32 %s18, 2
        %s189 = sadd.s32 %s188, %s19
      $region24: #{inception_d_forward.15} parent=19 // pred_fallthru
        _
    $region20: #{inception_d_forward.15} parent=5 // pred_fallthru
      _
    %p190 = scmp.le.s32.totalorder 1, %s11
    %p191 = scmp.lt.s32.totalorder %s11, 3
    %p192 = pnand %p190, %p191
    %p193 = pneg %p192
    // Predicated region
    $region25: #{inception_d_forward.15} parent=5 // pred_check
      _
    $region26: #{inception_d_forward.15} parent=5 // pred_check_branch
      %195 = sbr.rel (%p192) target = $region28
    $region27: #{inception_d_forward.15} parent=5 // pred_region
      %s196 = ssub.s32 %s11, 1
      %s197 = smul.u32 %s20, 2
      %s198 = sadd.s32 %s197, %s21
      %p199 = scmp.lt.s32.totalorder %s198, 1
      %s200 = scalar_select %p199, %s198, 1
      %s201 = smul.addr %s200, 28
      %s202 = smul.addr %s201, 4
      %s203 = scalar_lea.vmem %s0, %s202
      %p204 = pneg %p53
      %p205 = pneg %p50
      %p206 = pneg %p74
      %p207 = pneg %p71
      %p208 = pneg %p104
      %p209 = pneg %p101
      %s210 = smul.u32 %s20, 2
      %s211 = sadd.s32 %s210, %s21
      %p212 = scmp.lt.s32.totalorder %s211, 1
      %s213 = scalar_select %p212, %s211, 1
      %s214 = smul.addr %s213, 7
      %s215 = smul.addr %s214, 4
      %s216 = scalar_lea.vmem %s2, %s215
      %p217 = pneg %p130
      %p218 = pneg %p127
      %p219 = scmp.lt.s32.totalorder %s20, 0
      %s220 = scalar_select %p219, %s20, 0
      %s221 = smul.addr %s220, 8
      %s222 = scalar_lea.vmem %s3, %s221
      %p223 = pneg %p156
      %p224 = pneg %p153
      %p225 = scmp.lt.s32.totalorder %s20, 0
      %s226 = scalar_select %p225, %s20, 0
      %s227 = smul.addr %s226, 8
      %s228 = scalar_lea.vmem %s4, %s227
      %s229 = smul.u32 %s20, 2
      %s230 = sadd.s32 %s229, %s21
      %p231 = scmp.lt.s32.totalorder %s230, 1
      %s232 = scalar_select %p231, %s230, 1
      %s233 = smul.addr %s232, 28
      %s234 = smul.addr %s233, 4
      %s235 = scalar_lea.vmem %s0, %s234
      %s236 = smul.u32 %s20, 2
      %s237 = sadd.s32 %s236, %s21
      %s238 = smul.u32 %s20, 2
      %s239 = sadd.s32 %s238, %s21
      %p240 = scmp.lt.s32.totalorder %s239, 1
      %s241 = scalar_select %p240, %s239, 1
      %s242 = smul.addr %s241, 7
      %s243 = smul.addr %s242, 4
      %s244 = scalar_lea.vmem %s2, %s243
      %s245 = smul.u32 %s20, 2
      %s246 = sadd.s32 %s245, %s21
      %p247 = scmp.lt.s32.totalorder %s20, 0
      %s248 = scalar_select %p247, %s20, 0
      %s249 = smul.addr %s248, 8
      %s250 = scalar_lea.vmem %s3, %s249
      %p251 = scmp.lt.s32.totalorder %s20, 0
      %s252 = scalar_select %p251, %s20, 0
      %s253 = smul.addr %s252, 8
      %s254 = scalar_lea.vmem %s4, %s253
      %p256 = scmp.eq.s32.totalorder %s21, 0
      // Predicated region
      $region29: #{inception_d_forward.15} parent=27 // pred_check
        %p257 = pneg %p256
      $region30: #{inception_d_forward.15} parent=27 // pred_check_branch
        %259 = sbr.rel (%p257) target = $region32
      $region31: #{inception_d_forward.15} parent=27 // pred_region
        %vm260 = vcmask 654336
        %261 = vst.msk [vmem:[%s250] sm:$0xff] %vm260, 0.0
        %262 = vst.msk [vmem:[%s254] sm:$0xff] %vm260, 0.0
      $region32: #{inception_d_forward.15} parent=27 // pred_fallthru
        _
      %v263 = vld [vmem:[%s235] sm:$0xff]
      %v264 = vld [vmem:[%s235 + $0x8] sm:$0xff]
      %v265 = vld [vmem:[%s235 + $0x10] sm:$0xff]
      %v266 = vld [vmem:[%s235 + $0x18] sm:$0xff]
      %v267 = vld [vmem:[%s235 + $0x20] sm:$0xff]
      %v268 = vld [vmem:[%s235 + $0x28] sm:$0xff]
      %v269 = vld [vmem:[%s235 + $0x30] sm:$0xff]
      %v270 = vld [vmem:[%s235 + $0x38] sm:$0xff]
      %v271 = vld [vmem:[%s235 + $0x40] sm:$0xff]
      %v272 = vld [vmem:[%s235 + $0x48] sm:$0xff]
      %v273 = vld [vmem:[%s235 + $0x50] sm:$0xff]
      %v274 = vld [vmem:[%s235 + $0x58] sm:$0xff]
      %v275 = vld [vmem:[%s235 + $0x60] sm:$0x11]
      %v276 = vld [vmem:[%s235 + $0x68] sm:$0x11]
      %v277 = vld [vmem:[%s1] sm:$0xf]
      %v278 = vld [vmem:[%s1 + $0x4] sm:$0xf]
      %v279 = vld [vmem:[%s1 + $0x8] sm:$0xf]
      %v280 = vld [vmem:[%s1 + $0xc] sm:$0xf]
      %v281 = vld [vmem:[%s1 + $0x10] sm:$0xf]
      %v282 = vld [vmem:[%s1 + $0x14] sm:$0xf]
      %v283 = vld [vmem:[%s1 + $0x18] sm:$0xf]
      %v284 = vld [vmem:[%s1 + $0x1c] sm:$0xf]
      %v285 = vld [vmem:[%s1 + $0x20] sm:$0xf]
      %v286 = vld [vmem:[%s1 + $0x24] sm:$0xf]
      %v287 = vld [vmem:[%s1 + $0x28] sm:$0xf]
      %v288 = vld [vmem:[%s1 + $0x2c] sm:$0xf]
      %v289 = vld [vmem:[%s1 + $0x30] sm:$0xf]
      %v290 = vld [vmem:[%s1 + $0x34] sm:$0xf]
      %v291 = vld [vmem:[%s1 + $0x38] sm:$0xf]
      %v292 = vld [vmem:[%s1 + $0x3c] sm:$0xf]
      %v293 = vld [vmem:[%s1 + $0x40] sm:$0xf]
      %v294 = vld [vmem:[%s1 + $0x44] sm:$0xf]
      %v295 = vld [vmem:[%s1 + $0x48] sm:$0xf]
      %v296 = vld [vmem:[%s1 + $0x4c] sm:$0xf]
      %v297 = vld [vmem:[%s1 + $0x50] sm:$0xf]
      %v298 = vld [vmem:[%s1 + $0x54] sm:$0xf]
      %v299 = vld [vmem:[%s1 + $0x58] sm:$0xf]
      %v300 = vld [vmem:[%s1 + $0x5c] sm:$0xf]
      %v301 = vld [vmem:[%s1 + $0x60] sm:$0xf]
      %v302 = vld [vmem:[%s1 + $0x64] sm:$0xf]
      %v303 = vld [vmem:[%s1 + $0x68] sm:$0xf]
      %v304 = vld [vmem:[%s1 + $0x6c] sm:$0xf]
      %v305 = vld [vmem:[%s1 + $0x70] sm:$0xf]
      %v306 = vld [vmem:[%s1 + $0x74] sm:$0xf]
      %v307 = vld [vmem:[%s1 + $0x78] sm:$0xf]
      %v308 = vld [vmem:[%s1 + $0x7c] sm:$0xf]
      %v309 = vld [vmem:[%s1 + $0x80] sm:$0xf]
      %v310 = vld [vmem:[%s1 + $0x84] sm:$0xf]
      %v311 = vld [vmem:[%s1 + $0x88] sm:$0xf]
      %v312 = vld [vmem:[%s1 + $0x8c] sm:$0xf]
      %v313 = vld [vmem:[%s1 + $0x90] sm:$0xf]
      %v314 = vld [vmem:[%s1 + $0x94] sm:$0xf]
      %v315 = vld [vmem:[%s1 + $0x98] sm:$0xf]
      %v316 = vld [vmem:[%s1 + $0x9c] sm:$0xf]
      %v317 = vld [vmem:[%s1 + $0xa0] sm:$0xf]
      %v318 = vld [vmem:[%s1 + $0xa4] sm:$0xf]
      %v319 = vld [vmem:[%s1 + $0xa8] sm:$0xf]
      %v320 = vld [vmem:[%s1 + $0xac] sm:$0xf]
      %v321 = vld [vmem:[%s1 + $0xb0] sm:$0xf]
      %v322 = vld [vmem:[%s1 + $0xb4] sm:$0xf]
      %v323 = vld [vmem:[%s1 + $0xb8] sm:$0xf]
      %v324 = vld [vmem:[%s1 + $0xbc] sm:$0xf]
      %v325 = vld [vmem:[%s1 + $0xc0] sm:$0xf]
      %v326 = vld [vmem:[%s1 + $0xc4] sm:$0xf]
      %v327 = vld [vmem:[%s1 + $0xc8] sm:$0xf]
      %v328 = vld [vmem:[%s1 + $0xcc] sm:$0xf]
      %v329 = vld [vmem:[%s1 + $0xd0] sm:$0xf]
      %v330 = vld [vmem:[%s1 + $0xd4] sm:$0xf]
      %v345 = vunpack.c.l.b16 %v263
      %v346 = vunpack.c.h.b16 %v263
      %v347 = vunpack.c.l.b16 %v264
      %v348 = vunpack.c.h.b16 %v264
      %v349 = vunpack.c.l.b16 %v265
      %v350 = vunpack.c.h.b16 %v265
      %v351 = vunpack.c.l.b16 %v266
      %v352 = vunpack.c.h.b16 %v266
      %v353 = vunpack.c.l.b16 %v267
      %v354 = vunpack.c.h.b16 %v267
      %v355 = vunpack.c.l.b16 %v268
      %v356 = vunpack.c.h.b16 %v268
      %v357 = vunpack.c.l.b16 %v269
      %v358 = vunpack.c.h.b16 %v269
      %v359 = vunpack.c.l.b16 %v270
      %v360 = vunpack.c.h.b16 %v270
      %v361 = vunpack.c.l.b16 %v271
      %v362 = vunpack.c.h.b16 %v271
      %v363 = vunpack.c.l.b16 %v272
      %v364 = vunpack.c.h.b16 %v272
      %v365 = vunpack.c.l.b16 %v273
      %v366 = vunpack.c.h.b16 %v273
      %v367 = vunpack.c.l.b16 %v274
      %v368 = vunpack.c.h.b16 %v274
      %v369 = vunpack.c.l.b16 %v275
      %v370 = vunpack.c.h.b16 %v275
      %v371 = vunpack.c.l.b16 %v276
      %v372 = vunpack.c.h.b16 %v276
      %v373 = vpack.c.b16 %v349, %v345
      %v374 = vpack.c.b16 %v350, %v346
      %v375 = vpack.c.b16 %v351, %v347
      %v376 = vpack.c.b16 %v352, %v348
      %v377 = vpack.c.b16 %v357, %v353
      %v378 = vpack.c.b16 %v358, %v354
      %v379 = vpack.c.b16 %v359, %v355
      %v380 = vpack.c.b16 %v360, %v356
      %v381 = vpack.c.b16 %v365, %v361
      %v382 = vpack.c.b16 %v366, %v362
      %v383 = vpack.c.b16 %v367, %v363
      %v384 = vpack.c.b16 %v368, %v364
      %v385 = vpack.c.b16 %v369, %v369
      %v386 = vpack.c.b16 %v370, %v370
      %v387 = vpack.c.b16 %v371, %v371
      %v388 = vpack.c.b16 %v372, %v372
      %v455 = vunpack.c.l.b16 %v277
      %v456 = vunpack.c.l.b16 %v278
      %v457 = vunpack.c.l.b16 %v279
      %v458 = vunpack.c.l.b16 %v280
      %v459 = vunpack.c.l.b16 %v281
      %v460 = vunpack.c.l.b16 %v282
      %v461 = vunpack.c.l.b16 %v283
      %v462 = vunpack.c.l.b16 %v284
      %v463 = vunpack.c.l.b16 %v285
      %v464 = vunpack.c.l.b16 %v286
      %v465 = vunpack.c.l.b16 %v287
      %v466 = vunpack.c.l.b16 %v288
      %v467 = vunpack.c.l.b16 %v289
      %v468 = vunpack.c.l.b16 %v290
      %v469 = vunpack.c.l.b16 %v291
      %v470 = vunpack.c.l.b16 %v292
      %v471 = vunpack.c.l.b16 %v293
      %v472 = vunpack.c.l.b16 %v294
      %v473 = vunpack.c.l.b16 %v295
      %v474 = vunpack.c.l.b16 %v296
      %v475 = vunpack.c.l.b16 %v297
      %v476 = vunpack.c.l.b16 %v298
      %v477 = vunpack.c.l.b16 %v299
      %v478 = vunpack.c.l.b16 %v300
      %v479 = vunpack.c.l.b16 %v301
      %v480 = vunpack.c.l.b16 %v302
      %v481 = vunpack.c.l.b16 %v303
      %v482 = vunpack.c.l.b16 %v304
      %v483 = vunpack.c.l.b16 %v305
      %v484 = vunpack.c.l.b16 %v306
      %v485 = vunpack.c.l.b16 %v307
      %v486 = vunpack.c.l.b16 %v308
      %v487 = vunpack.c.l.b16 %v309
      %v488 = vunpack.c.l.b16 %v310
      %v489 = vunpack.c.l.b16 %v311
      %v490 = vunpack.c.l.b16 %v312
      %v491 = vunpack.c.l.b16 %v313
      %v492 = vunpack.c.l.b16 %v314
      %v493 = vunpack.c.l.b16 %v315
      %v494 = vunpack.c.l.b16 %v316
      %v495 = vunpack.c.l.b16 %v317
      %v496 = vunpack.c.l.b16 %v318
      %v497 = vunpack.c.l.b16 %v319
      %v498 = vunpack.c.l.b16 %v320
      %v499 = vunpack.c.l.b16 %v321
      %v500 = vunpack.c.l.b16 %v322
      %v501 = vunpack.c.l.b16 %v323
      %v502 = vunpack.c.l.b16 %v324
      %v503 = vunpack.c.l.b16 %v325
      %v504 = vunpack.c.l.b16 %v326
      %v505 = vunpack.c.l.b16 %v327
      %v506 = vunpack.c.l.b16 %v328
      %v507 = vunpack.c.l.b16 %v329
      %v508 = vunpack.c.l.b16 %v330
      %v509 = vpack.c.b16 %v456, %v455
      %v510 = vpack.c.b16 %v458, %v457
      %v511 = vpack.c.b16 %v460, %v459
      %v512 = vpack.c.b16 %v462, %v461
      %v513 = vpack.c.b16 %v464, %v463
      %v514 = vpack.c.b16 %v466, %v465
      %v515 = vpack.c.b16 %v468, %v467
      %v516 = vpack.c.b16 %v470, %v469
      %v517 = vpack.c.b16 %v472, %v471
      %v518 = vpack.c.b16 %v474, %v473
      %v519 = vpack.c.b16 %v476, %v475
      %v520 = vpack.c.b16 %v478, %v477
      %v521 = vpack.c.b16 %v480, %v479
      %v522 = vpack.c.b16 %v482, %v481
      %v523 = vpack.c.b16 %v484, %v483
      %v524 = vpack.c.b16 %v486, %v485
      %v525 = vpack.c.b16 %v488, %v487
      %v526 = vpack.c.b16 %v490, %v489
      %v527 = vpack.c.b16 %v492, %v491
      %v528 = vpack.c.b16 %v494, %v493
      %v529 = vpack.c.b16 %v496, %v495
      %v530 = vpack.c.b16 %v498, %v497
      %v531 = vpack.c.b16 %v500, %v499
      %v532 = vpack.c.b16 %v502, %v501
      %v533 = vpack.c.b16 %v504, %v503
      %v534 = vpack.c.b16 %v506, %v505
      %v535 = vpack.c.b16 %v508, %v507
      %vm563 = vcmask 392192
      %v565 = vsel %vm563, %v376, 0
      %v568 = vsel %vm563, %v380, 0
      %v571 = vsel %vm563, %v384, 0
      %v574 = vsel %vm563, %v388, 0
      %576 = vmatpush.bf16.msra.mxu0 %v516
      %577 = vmatpush.bf16.msra.mxu0 %v515
      %578 = vmatpush.bf16.msra.mxu0 %v514
      %579 = vmatpush.bf16.msra.mxu0 %v513
      %580 = vmatpush.bf16.msra.mxu0 %v512
      %581 = vmatpush.bf16.msra.mxu0 %v511
      %582 = vmatpush.bf16.msra.mxu0 %v510
      %583 = vmatpush.bf16.msra.mxu0 %v509
      %584 = vmatmul.bf16.gmra.mxu0 %v373
      %v585 = vpop.f32.mrf.mxu0
      %v586 = vadd.f32 0.0, %v585
      %v587 = vpop.f32.mrf.mxu0
      %v588 = vadd.f32 0.0, %v587
      %589 = vmatmul.bf16.gmra.mxu0 %v377
      %v590 = vpop.f32.mrf.mxu0
      %v591 = vadd.f32 0.0, %v590
      %v592 = vpop.f32.mrf.mxu0
      %v593 = vadd.f32 0.0, %v592
      %594 = vmatmul.bf16.gmra.mxu0 %v381
      %v595 = vpop.f32.mrf.mxu0
      %v596 = vadd.f32 0.0, %v595
      %v597 = vpop.f32.mrf.mxu0
      %v598 = vadd.f32 0.0, %v597
      %599 = vmatmul.bf16.gmra.mxu0 %v385
      %v600 = vpop.f32.mrf.mxu0
      %v601 = vadd.f32 0.0, %v600
      %v602 = vpop.f32.mrf.mxu0
      %603 = vdwg.mxu0
      %604 = vmatpush.bf16.msra.mxu0 %v524
      %605 = vmatpush.bf16.msra.mxu0 %v523
      %606 = vmatpush.bf16.msra.mxu0 %v522
      %607 = vmatpush.bf16.msra.mxu0 %v521
      %608 = vmatpush.bf16.msra.mxu0 %v520
      %609 = vmatpush.bf16.msra.mxu0 %v519
      %610 = vmatpush.bf16.msra.mxu0 %v518
      %611 = vmatpush.bf16.msra.mxu0 %v517
      %612 = vmatmul.bf16.gmra.mxu0 %v374
      %v613 = vpop.f32.mrf.mxu0
      %v614 = vadd.f32 %v586, %v613
      %v615 = vpop.f32.mrf.mxu0
      %v616 = vadd.f32 %v588, %v615
      %617 = vmatmul.bf16.gmra.mxu0 %v378
      %v618 = vpop.f32.mrf.mxu0
      %v619 = vadd.f32 %v591, %v618
      %v620 = vpop.f32.mrf.mxu0
      %v621 = vadd.f32 %v593, %v620
      %622 = vmatmul.bf16.gmra.mxu0 %v382
      %v623 = vpop.f32.mrf.mxu0
      %v624 = vadd.f32 %v596, %v623
      %v625 = vpop.f32.mrf.mxu0
      %v626 = vadd.f32 %v598, %v625
      %627 = vmatmul.bf16.gmra.mxu0 %v386
      %v628 = vpop.f32.mrf.mxu0
      %v629 = vadd.f32 %v601, %v628
      %v630 = vpop.f32.mrf.mxu0
      %631 = vdwg.mxu0
      %632 = vmatpush.bf16.msra.mxu0 %v532
      %633 = vmatpush.bf16.msra.mxu0 %v531
      %634 = vmatpush.bf16.msra.mxu0 %v530
      %635 = vmatpush.bf16.msra.mxu0 %v529
      %636 = vmatpush.bf16.msra.mxu0 %v528
      %637 = vmatpush.bf16.msra.mxu0 %v527
      %638 = vmatpush.bf16.msra.mxu0 %v526
      %639 = vmatpush.bf16.msra.mxu0 %v525
      %640 = vmatmul.bf16.gmra.mxu0 %v375
      %v641 = vpop.f32.mrf.mxu0
      %v642 = vadd.f32 %v614, %v641
      %v643 = vpop.f32.mrf.mxu0
      %v644 = vadd.f32 %v616, %v643
      %645 = vmatmul.bf16.gmra.mxu0 %v379
      %v646 = vpop.f32.mrf.mxu0
      %v647 = vadd.f32 %v619, %v646
      %v648 = vpop.f32.mrf.mxu0
      %v649 = vadd.f32 %v621, %v648
      %650 = vmatmul.bf16.gmra.mxu0 %v383
      %v651 = vpop.f32.mrf.mxu0
      %v652 = vadd.f32 %v624, %v651
      %v653 = vpop.f32.mrf.mxu0
      %v654 = vadd.f32 %v626, %v653
      %655 = vmatmul.bf16.gmra.mxu0 %v387
      %v656 = vpop.f32.mrf.mxu0
      %v657 = vadd.f32 %v629, %v656
      %v658 = vpop.f32.mrf.mxu0
      %659 = vdwg.mxu0
      %660 = vmatpush.bf16.msra.mxu0 0
      %661 = vmatpush.bf16.msra.mxu0 0
      %662 = vmatpush.bf16.msra.mxu0 0
      %663 = vmatpush.bf16.msra.mxu0 0
      %664 = vmatpush.bf16.msra.mxu0 0
      %665 = vmatpush.bf16.msra.mxu0 %v535
      %666 = vmatpush.bf16.msra.mxu0 %v534
      %667 = vmatpush.bf16.msra.mxu0 %v533
      %668 = vmatmul.bf16.gmra.mxu0 %v565
      %v669 = vpop.f32.mrf.mxu0
      %v670 = vadd.f32 %v642, %v669
      %v671 = vpop.f32.mrf.mxu0
      %v672 = vadd.f32 %v644, %v671
      %673 = vmatmul.bf16.gmra.mxu0 %v568
      %v674 = vpop.f32.mrf.mxu0
      %v675 = vadd.f32 %v647, %v674
      %v676 = vpop.f32.mrf.mxu0
      %v677 = vadd.f32 %v649, %v676
      %678 = vmatmul.bf16.gmra.mxu0 %v571
      %v679 = vpop.f32.mrf.mxu0
      %v680 = vadd.f32 %v652, %v679
      %v681 = vpop.f32.mrf.mxu0
      %v682 = vadd.f32 %v654, %v681
      %683 = vmatmul.bf16.gmra.mxu0 %v574
      %v684 = vpop.f32.mrf.mxu0
      %v685 = vadd.f32 %v657, %v684
      %v686 = vpop.f32.mrf.mxu0
      %687 = vdwg.mxu0
      %vm688 = vcmask 654336
      %689 = vst.msk [vmem:[#allocation2] sm:$0xff] %vm688, %v670
      %690 = vst.msk [vmem:[#allocation2 + $0x8] sm:$0xff] %vm688, %v672
      %691 = vst.msk [vmem:[#allocation2 + $0x10] sm:$0xff] %vm688, %v675
      %692 = vst.msk [vmem:[#allocation2 + $0x18] sm:$0xff] %vm688, %v677
      %693 = vst.msk [vmem:[#allocation2 + $0x20] sm:$0xff] %vm688, %v680
      %694 = vst.msk [vmem:[#allocation2 + $0x28] sm:$0xff] %vm688, %v682
      %vm695 = vcmask 647168
      %696 = vst.msk [vmem:[#allocation2 + $0x30] sm:$0x1] %vm695, %v685
      %v697 = vld [vmem:[#allocation2] sm:$0xff]
      %v698 = vld [vmem:[#allocation2 + $0x8] sm:$0xff]
      %v699 = vld [vmem:[#allocation2 + $0x10] sm:$0xff]
      %v700 = vld [vmem:[#allocation2 + $0x18] sm:$0xff]
      %v701 = vld [vmem:[#allocation2 + $0x20] sm:$0xff]
      %v702 = vld [vmem:[#allocation2 + $0x28] sm:$0xff]
      %v703 = vld [vmem:[#allocation2 + $0x30] sm:$0x1]
      %v704 = vpack.c.bf16 %v697, %v697
      %v705 = vpack.c.bf16 %v698, %v698
      %v706 = vpack.c.bf16 %v699, %v699
      %v707 = vpack.c.bf16 %v700, %v700
      %v708 = vpack.c.bf16 %v701, %v701
      %v709 = vpack.c.bf16 %v702, %v702
      %v710 = vpack.c.bf16 %v703, %v703
      %vm711 = vcmask 650240
      %712 = vst.msk [vmem:[%s244] sm:$0xf] %vm711, %v704
      %713 = vst.msk [vmem:[%s244 + $0x4] sm:$0xf] %vm711, %v705
      %714 = vst.msk [vmem:[%s244 + $0x8] sm:$0xf] %vm711, %v706
      %715 = vst.msk [vmem:[%s244 + $0xc] sm:$0xf] %vm711, %v707
      %716 = vst.msk [vmem:[%s244 + $0x10] sm:$0xf] %vm711, %v708
      %717 = vst.msk [vmem:[%s244 + $0x14] sm:$0xf] %vm711, %v709
      %vm718 = vcmask 647168
      %vm719 = vsmask.f32 256
      %vm720 = vmand %vm718, %vm719
      %v721 = vld [vmem:[%s244 + $0x18] sm:$0x1]
      %v722 = vsel %vm720, %v710, %v721
      %723 = vst [vmem:[%s244 + $0x18] sm:$0x1] %v722
      %v724 = vld [vmem:[%s250] sm:$0xff]
      %v725 = vsel %vm688, %v697, 0.0
      %v726 = vsel %vm688, %v698, 0.0
      %v727 = vadd.f32 %v725, %v726
      %v728 = vsel %vm688, %v699, 0.0
      %v729 = vadd.f32 %v727, %v728
      %v730 = vsel %vm688, %v700, 0.0
      %v731 = vadd.f32 %v729, %v730
      %v732 = vsel %vm688, %v701, 0.0
      %v733 = vadd.f32 %v731, %v732
      %v734 = vsel %vm688, %v702, 0.0
      %v735 = vadd.f32 %v733, %v734
      %v736 = vsel %vm695, %v703, 0.0
      %v737 = vadd.f32 %v735, %v736
      %v738 = vrot.slane %v737, 4
      %v739 = vadd.f32 %v737, %v738
      %v740 = vrot.slane %v739, 2
      %v741 = vadd.f32 %v739, %v740
      %v742 = vrot.slane %v741, 1
      %v743 = vadd.f32 %v741, %v742
      %v744 = vadd.f32 %v724, %v743
      %745 = vst.msk [vmem:[%s250] sm:$0xff] %vm688, %v744
      %v746 = vld [vmem:[%s254] sm:$0xff]
      %v747 = vmul.f32 %v697, %v697
      %v748 = vmul.f32 %v698, %v698
      %v749 = vmul.f32 %v699, %v699
      %v750 = vmul.f32 %v700, %v700
      %v751 = vmul.f32 %v701, %v701
      %v752 = vmul.f32 %v702, %v702
      %v753 = vmul.f32 %v703, %v703
      %v754 = vsel %vm688, %v747, 0.0
      %v755 = vsel %vm688, %v748, 0.0
      %v756 = vadd.f32 %v754, %v755
      %v757 = vsel %vm688, %v749, 0.0
      %v758 = vadd.f32 %v756, %v757
      %v759 = vsel %vm688, %v750, 0.0
      %v760 = vadd.f32 %v758, %v759
      %v761 = vsel %vm688, %v751, 0.0
      %v762 = vadd.f32 %v760, %v761
      %v763 = vsel %vm688, %v752, 0.0
      %v764 = vadd.f32 %v762, %v763
      %v765 = vsel %vm695, %v753, 0.0
      %v766 = vadd.f32 %v764, %v765
      %v767 = vrot.slane %v766, 4
      %v768 = vadd.f32 %v766, %v767
      %v769 = vrot.slane %v768, 2
      %v770 = vadd.f32 %v768, %v769
      %v771 = vrot.slane %v770, 1
      %v772 = vadd.f32 %v770, %v771
      %v773 = vadd.f32 %v746, %v772
      %774 = vst.msk [vmem:[%s254] sm:$0xff] %vm688, %v773
      %s775 = smul.u32 %s20, 2
      %s776 = sadd.s32 %s775, %s21
      %p777 = scmp.lt.s32.totalorder %s776, 1
      %s778 = scalar_select %p777, %s776, 1
      %s779 = smul.addr %s778, 7
      %s780 = smul.addr %s779, 4
      %s781 = scalar_lea.vmem %s2, %s780
      %p782 = scmp.lt.s32.totalorder %s20, 0
      %s783 = scalar_select %p782, %s20, 0
      %s784 = smul.addr %s783, 8
      %s785 = scalar_lea.vmem %s3, %s784
      %p786 = scmp.lt.s32.totalorder %s20, 0
      %s787 = scalar_select %p786, %s20, 0
      %s788 = smul.addr %s787, 8
      %s789 = scalar_lea.vmem %s4, %s788
      // Predicated region
      $region33: #{inception_d_forward.15} parent=27 // pred_check
        %p790 = pneg %p101
      $region34: #{inception_d_forward.15} parent=27 // pred_check_branch
        %792 = sbr.rel (%p790) target = $region36
      $region35: #{inception_d_forward.15} parent=27 // pred_region
        %s793 = smul.u32 %s20, 2
        %s794 = sadd.s32 %s793, %s21
      $region36: #{inception_d_forward.15} parent=27 // pred_fallthru
        _
      // Predicated region
      $region37: #{inception_d_forward.15} parent=27 // pred_check
        %p795 = pneg %p127
      $region38: #{inception_d_forward.15} parent=27 // pred_check_branch
        %797 = sbr.rel (%p795) target = $region40
      $region39: #{inception_d_forward.15} parent=27 // pred_region
        _
      $region40: #{inception_d_forward.15} parent=27 // pred_fallthru
        _
      // Predicated region
      $region41: #{inception_d_forward.15} parent=27 // pred_check
        %p798 = pneg %p153
      $region42: #{inception_d_forward.15} parent=27 // pred_check_branch
        %800 = sbr.rel (%p798) target = $region44
      $region43: #{inception_d_forward.15} parent=27 // pred_region
        _
      $region44: #{inception_d_forward.15} parent=27 // pred_fallthru
        _
      // Predicated region
      $region45: #{inception_d_forward.15} parent=27 // pred_check
        %p801 = pneg %p127
      $region46: #{inception_d_forward.15} parent=27 // pred_check_branch
        %803 = sbr.rel (%p801) target = $region48
      $region47: #{inception_d_forward.15} parent=27 // pred_region
        %p804 = scmp.lt.s32.totalorder %s20, 0
        %s805 = scalar_select %p804, %s20, 0
        %s806 = smul.addr %s805, 8
        %s807 = scalar_lea.vmem %s3, %s806
      $region48: #{inception_d_forward.15} parent=27 // pred_fallthru
        _
      // Predicated region
      $region49: #{inception_d_forward.15} parent=27 // pred_check
        %p808 = pneg %p153
      $region50: #{inception_d_forward.15} parent=27 // pred_check_branch
        %810 = sbr.rel (%p808) target = $region52
      $region51: #{inception_d_forward.15} parent=27 // pred_region
        %p811 = scmp.lt.s32.totalorder %s20, 0
        %s812 = scalar_select %p811, %s20, 0
        %s813 = smul.addr %s812, 8
        %s814 = scalar_lea.vmem %s4, %s813
      $region52: #{inception_d_forward.15} parent=27 // pred_fallthru
        _
    $region28: #{inception_d_forward.15} parent=5 // pred_fallthru
      _
    %p815 = scmp.le.s32.totalorder 2, %s11
    // Predicated region
    $region53: #{inception_d_forward.15} parent=5 // pred_check
      %p816 = pneg %p815
    $region54: #{inception_d_forward.15} parent=5 // pred_check_branch
      %818 = sbr.rel (%p816) target = $region56
    $region55: #{inception_d_forward.15} parent=5 // pred_region
      %s819 = ssub.s32 %s11, 2
      // Predicated region
      $region57: #{inception_d_forward.15} parent=55 // pred_check
        %p820 = pneg %p107
      $region58: #{inception_d_forward.15} parent=55 // pred_check_branch
        %822 = sbr.rel (%p820) target = $region60
      $region59: #{inception_d_forward.15} parent=55 // pred_region
        %s823 = smul.u32 %s22, 2
        %s824 = sadd.s32 %s823, %s23
        %p825 = scmp.lt.s32.totalorder %s824, 1
        %s826 = scalar_select %p825, %s824, 1
        %s827 = smul.addr %s826, 7
        %s828 = smul.addr %s827, 4
        %s829 = scalar_lea.vmem %s2, %s828
      $region60: #{inception_d_forward.15} parent=55 // pred_fallthru
        _
    $region56: #{inception_d_forward.15} parent=5 // pred_fallthru
      _
  $region6: #{inception_d_forward.15} parent=0 // loop_footer
    %s15 = sadd.s32 1, %s11
  $region7: #{inception_d_forward.15} parent=0 // loop_footer_branch
    %10 = sbr.rel target = $region3
  $region8: #{inception_d_forward.15} parent=0 // loop_exit
    _

// kernel: inception_d_forward.23
$region0: #{inception_d_forward.23}
  #allocation0 [shape = 'u32[]', space=smem, size = 0x4, offset = 0x4, fixed_abs, tag = 'smem constant byte address 0x4 - core index']
  #allocation1 [shape = 'u32[72,128]{1,0:T(1,128)}', space=vmem, size = 0x9000, scoped, tag = 'internal scratch']
  #allocation2 [shape = 'f32[49,48]{1,0:T(8,128)}', space=vmem, size = 0x7000, scoped, tag = 'scratch operand']
  %s0 = inlined_call_operand.vmem [shape: bf16[2,49,432], index: 0, kind: input, shape index: {}]
  %s1 = inlined_call_operand.vmem [shape: bf16[1,432,48], index: 1, kind: input, shape index: {}]
  %s2 = inlined_call_operand.vmem [shape: bf16[2,49,48], index: 2, kind: output, shape index: {0}]
  %s3 = inlined_call_operand.vmem [shape: f32[8,48], index: 3, kind: output, shape index: {1}]
  %s4 = inlined_call_operand.vmem [shape: f32[8,48], index: 4, kind: output, shape index: {2}]
  %5 = xla_tuple %s2, %s3, %s4
  %s6 = sld [smem:[#allocation0]]
  $region61: #{inception_d_forward.23} parent=0
    _
  %s8 = ssub.s32 1, %s6
  %s9 = scalar_select 0, %s8, %s6
  loop: start=0, step=1, limit=4
  $region2: #{inception_d_forward.23} parent=0 // loop_pre_header
    _
  $region3: #{inception_d_forward.23} parent=0 // loop_header
    %s11 = sphi 0, %s15
    %p12 = scmp.ge.s32.totalorder %s11, 4
    %s18 = sphi 0, %s30
    %s19 = sphi 0, %s26
    %s20 = sphi 0, %s18
    %s21 = sphi 0, %s19
    %s22 = sphi 0, %s20
    %s23 = sphi 0, %s21
    %s37 = sphi 0, %s39
    %s40 = sphi 0, %s37
    %s41 = sphi 0, %s40
    %s57 = sphi 0, %s41
    %s61 = sphi 0, %s61
    %s63 = sphi 0, %s61
    %s64 = sphi 0, %s63
    %s78 = sphi 0, %s64
    %s88 = sphi 0, %s90
    %s91 = sphi 0, %s88
    %s92 = sphi 0, %s91
    %s108 = sphi 0, %s92
    %s114 = sphi 0, %s116
    %s117 = sphi 0, %s114
    %s118 = sphi 0, %s117
    %s134 = sphi 0, %s118
    %s140 = sphi 0, %s142
    %s143 = sphi 0, %s140
    %s144 = sphi 0, %s143
    %s160 = sphi 0, %s144
  $region4: #{inception_d_forward.23} parent=0 // loop_header_branch
    %14 = sbr.rel (%p12) target = $region8
  $region5: #{inception_d_forward.23} parent=0 // loop_body
    %s16 = ssub.s32 %s11, 1
    %s17 = ssub.s32 %s11, 2
    %s24 = sadd.s32 1, %s19
    %p25 = scmp.ge.s32.totalorder %s24, 2
    %s26 = scalar_select %p25, 0, %s24
    %s27 = sadd.s32 1, %s18
    %s28 = scalar_select %p25, %s27, %s18
    %p29 = scmp.ge.s32.totalorder %s28, 1
    %s30 = scalar_select %p29, 0, %s28
    %s31 = smul.u32 %s18, 2
    %s32 = sadd.s32 %s31, %s19
    %s33 = smul.u32 %s30, 2
    %s34 = sadd.s32 %s33, %s26
    %s35 = ssub.s32 %s32, %s34
    %p36 = scmp.eq.s32.totalorder %s35, 0
    %s38 = sadd.s32 %s37, 1
    %s39 = scalar_select %p36, %s37, %s38
    %p42 = pneg %p36
    %p43 = scmp.eq.s32.totalorder %s11, 1
    %p44 = por %p42, %p43
    %p45 = scmp.ne.s32.totalorder %s37, %s40
    %p46 = scmp.eq.s32.totalorder %s11, 0
    %p47 = por %p45, %p46
    %p48 = scmp.ne.s32.totalorder %s37, %s40
    %p49 = scmp.eq.s32.totalorder %s16, 1
    %p50 = por %p48, %p49
    %p51 = scmp.ne.s32.totalorder %s40, %s41
    %p52 = scmp.eq.s32.totalorder %s16, 0
    %p53 = por %p51, %p52
    %p54 = scmp.ne.s32.totalorder %s40, %s41
    %p55 = scmp.eq.s32.totalorder %s17, 1
    %p56 = por %p54, %p55
    %p58 = scmp.ne.s32.totalorder %s41, %s57
    %p59 = scmp.eq.s32.totalorder %s17, 0
    %p60 = por %p58, %p59
    %s62 = sadd.s32 %s61, 1
    %p65 = scmp.eq.s32.totalorder %s11, 1
    %p66 = scmp.ne.s32.totalorder %s61, %s63
    %p67 = scmp.eq.s32.totalorder %s11, 0
    %p68 = por %p66, %p67
    %p69 = scmp.ne.s32.totalorder %s61, %s63
    %p70 = scmp.eq.s32.totalorder %s16, 1
    %p71 = por %p69, %p70
    %p72 = scmp.ne.s32.totalorder %s63, %s64
    %p73 = scmp.eq.s32.totalorder %s16, 0
    %p74 = por %p72, %p73
    %p75 = scmp.ne.s32.totalorder %s63, %s64
    %p76 = scmp.eq.s32.totalorder %s17, 1
    %p77 = por %p75, %p76
    %p79 = scmp.ne.s32.totalorder %s64, %s78
    %p80 = scmp.eq.s32.totalorder %s17, 0
    %p81 = por %p79, %p80
    %s82 = smul.u32 %s18, 2
    %s83 = sadd.s32 %s82, %s19
    %s84 = smul.u32 %s30, 2
    %s85 = sadd.s32 %s84, %s26
    %s86 = ssub.s32 %s83, %s85
    %p87 = scmp.eq.s32.totalorder %s86, 0
    %s89 = sadd.s32 %s88, 1
    %s90 = scalar_select %p87, %s88, %s89
    %p93 = pneg %p87
    %p94 = scmp.eq.s32.totalorder %s11, 1
    %p95 = por %p93, %p94
    %p96 = scmp.ne.s32.totalorder %s88, %s91
    %p97 = scmp.eq.s32.totalorder %s11, 0
    %p98 = por %p96, %p97
    %p99 = scmp.ne.s32.totalorder %s88, %s91
    %p100 = scmp.eq.s32.totalorder %s16, 1
    %p101 = por %p99, %p100
    %p102 = scmp.ne.s32.totalorder %s91, %s92
    %p103 = scmp.eq.s32.totalorder %s16, 0
    %p104 = por %p102, %p103
    %p105 = scmp.ne.s32.totalorder %s91, %s92
    %p106 = scmp.eq.s32.totalorder %s17, 1
    %p107 = por %p105, %p106
    %p109 = scmp.ne.s32.totalorder %s92, %s108
    %p110 = scmp.eq.s32.totalorder %s17, 0
    %p111 = por %p109, %p110
    %s112 = ssub.s32 %s18, %s30
    %p113 = scmp.eq.s32.totalorder %s112, 0
    %s115 = sadd.s32 %s114, 1
    %s116 = scalar_select %p113, %s114, %s115
    %p119 = pneg %p113
    %p120 = scmp.eq.s32.totalorder %s11, 1
    %p121 = por %p119, %p120
    %p122 = scmp.ne.s32.totalorder %s114, %s117
    %p123 = scmp.eq.s32.totalorder %s11, 0
    %p124 = por %p122, %p123
    %p125 = scmp.ne.s32.totalorder %s114, %s117
    %p126 = scmp.eq.s32.totalorder %s16, 1
    %p127 = por %p125, %p126
    %p128 = scmp.ne.s32.totalorder %s117, %s118
    %p129 = scmp.eq.s32.totalorder %s16, 0
    %p130 = por %p128, %p129
    %p131 = scmp.ne.s32.totalorder %s117, %s118
    %p132 = scmp.eq.s32.totalorder %s17, 1
    %p133 = por %p131, %p132
    %p135 = scmp.ne.s32.totalorder %s118, %s134
    %p136 = scmp.eq.s32.totalorder %s17, 0
    %p137 = por %p135, %p136
    %s138 = ssub.s32 %s18, %s30
    %p139 = scmp.eq.s32.totalorder %s138, 0
    %s141 = sadd.s32 %s140, 1
    %s142 = scalar_select %p139, %s140, %s141
    %p145 = pneg %p139
    %p146 = scmp.eq.s32.totalorder %s11, 1
    %p147 = por %p145, %p146
    %p148 = scmp.ne.s32.totalorder %s140, %s143
    %p149 = scmp.eq.s32.totalorder %s11, 0
    %p150 = por %p148, %p149
    %p151 = scmp.ne.s32.totalorder %s140, %s143
    %p152 = scmp.eq.s32.totalorder %s16, 1
    %p153 = por %p151, %p152
    %p154 = scmp.ne.s32.totalorder %s143, %s144
    %p155 = scmp.eq.s32.totalorder %s16, 0
    %p156 = por %p154, %p155
    %p157 = scmp.ne.s32.totalorder %s143, %s144
    %p158 = scmp.eq.s32.totalorder %s17, 1
    %p159 = por %p157, %p158
    %p161 = scmp.ne.s32.totalorder %s144, %s160
    %p162 = scmp.eq.s32.totalorder %s17, 0
    %p163 = por %p161, %p162
    %p164 = scmp.le.s32.totalorder 1, %s11
    %p165 = scmp.lt.s32.totalorder %s11, 3
    %p166 = pnand %p164, %p165
    %p167 = pneg %p166
    // Predicated region
    $region9: #{inception_d_forward.23} parent=5 // pred_check
      _
    $region10: #{inception_d_forward.23} parent=5 // pred_check_branch
      %169 = sbr.rel (%p166) target = $region12
    $region11: #{inception_d_forward.23} parent=5 // pred_region
      %s170 = ssub.s32 %s11, 1
      // Predicated region
      $region13: #{inception_d_forward.23} parent=11 // pred_check
        %p171 = pneg %p74
      $region14: #{inception_d_forward.23} parent=11 // pred_check_branch
        %173 = sbr.rel (%p171) target = $region16
      $region15: #{inception_d_forward.23} parent=11 // pred_region
        _
      $region16: #{inception_d_forward.23} parent=11 // pred_fallthru
        _
    $region12: #{inception_d_forward.23} parent=5 // pred_fallthru
      _
    %p174 = scmp.lt.s32.totalorder %s11, 2
    // Predicated region
    $region17: #{inception_d_forward.23} parent=5 // pred_check
      %p175 = pneg %p174
    $region18: #{inception_d_forward.23} parent=5 // pred_check_branch
      %177 = sbr.rel (%p175) target = $region20
    $region19: #{inception_d_forward.23} parent=5 // pred_region
      // Predicated region
      $region21: #{inception_d_forward.23} parent=19 // pred_check
        %p178 = pneg %p47
      $region22: #{inception_d_forward.23} parent=19 // pred_check_branch
        %180 = sbr.rel (%p178) target = $region24
      $region23: #{inception_d_forward.23} parent=19 // pred_region
        %s181 = smul.u32 %s18, 2
        %s182 = sadd.s32 %s181, %s19
        %p183 = scmp.lt.s32.totalorder %s182, 1
        %s184 = scalar_select %p183, %s182, 1
        %s185 = smul.addr %s184, 28
        %s186 = smul.addr %s185, 4
        %s187 = scalar_lea.vmem %s0, %s186
        %s188 = smul.u32 %s18, 2
        %s189 = sadd.s32 %s188, %s19
      $region24: #{inception_d_forward.23} parent=19 // pred_fallthru
        _
    $region20: #{inception_d_forward.23} parent=5 // pred_fallthru
      _
    %p190 = scmp.le.s32.totalorder 1, %s11
    %p191 = scmp.lt.s32.totalorder %s11, 3
    %p192 = pnand %p190, %p191
    %p193 = pneg %p192
    // Predicated region
    $region25: #{inception_d_forward.23} parent=5 // pred_check
      _
    $region26: #{inception_d_forward.23} parent=5 // pred_check_branch
      %195 = sbr.rel (%p192) target = $region28
    $region27: #{inception_d_forward.23} parent=5 // pred_region
      %s196 = ssub.s32 %s11, 1
      %s197 = smul.u32 %s20, 2
      %s198 = sadd.s32 %s197, %s21
      %p199 = scmp.lt.s32.totalorder %s198, 1
      %s200 = scalar_select %p199, %s198, 1
      %s201 = smul.addr %s200, 28
      %s202 = smul.addr %s201, 4
      %s203 = scalar_lea.vmem %s0, %s202
      %p204 = pneg %p53
      %p205 = pneg %p50
      %p206 = pneg %p74
      %p207 = pneg %p71
      %p208 = pneg %p104
      %p209 = pneg %p101
      %s210 = smul.u32 %s20, 2
      %s211 = sadd.s32 %s210, %s21
      %p212 = scmp.lt.s32.totalorder %s211, 1
      %s213 = scalar_select %p212, %s211, 1
      %s214 = smul.addr %s213, 7
      %s215 = smul.addr %s214, 4
      %s216 = scalar_lea.vmem %s2, %s215
      %p217 = pneg %p130
      %p218 = pneg %p127
      %p219 = scmp.lt.s32.totalorder %s20, 0
      %s220 = scalar_select %p219, %s20, 0
      %s221 = smul.addr %s220, 8
      %s222 = scalar_lea.vmem %s3, %s221
      %p223 = pneg %p156
      %p224 = pneg %p153
      %p225 = scmp.lt.s32.totalorder %s20, 0
      %s226 = scalar_select %p225, %s20, 0
      %s227 = smul.addr %s226, 8
      %s228 = scalar_lea.vmem %s4, %s227
      %s229 = smul.u32 %s20, 2
      %s230 = sadd.s32 %s229, %s21
      %p231 = scmp.lt.s32.totalorder %s230, 1
      %s232 = scalar_select %p231, %s230, 1
      %s233 = smul.addr %s232, 28
      %s234 = smul.addr %s233, 4
      %s235 = scalar_lea.vmem %s0, %s234
      %s236 = smul.u32 %s20, 2
      %s237 = sadd.s32 %s236, %s21
      %s238 = smul.u32 %s20, 2
      %s239 = sadd.s32 %s238, %s21
      %p240 = scmp.lt.s32.totalorder %s239, 1
      %s241 = scalar_select %p240, %s239, 1
      %s242 = smul.addr %s241, 7
      %s243 = smul.addr %s242, 4
      %s244 = scalar_lea.vmem %s2, %s243
      %s245 = smul.u32 %s20, 2
      %s246 = sadd.s32 %s245, %s21
      %p247 = scmp.lt.s32.totalorder %s20, 0
      %s248 = scalar_select %p247, %s20, 0
      %s249 = smul.addr %s248, 8
      %s250 = scalar_lea.vmem %s3, %s249
      %p251 = scmp.lt.s32.totalorder %s20, 0
      %s252 = scalar_select %p251, %s20, 0
      %s253 = smul.addr %s252, 8
      %s254 = scalar_lea.vmem %s4, %s253
      %p256 = scmp.eq.s32.totalorder %s21, 0
      // Predicated region
      $region29: #{inception_d_forward.23} parent=27 // pred_check
        %p257 = pneg %p256
      $region30: #{inception_d_forward.23} parent=27 // pred_check_branch
        %259 = sbr.rel (%p257) target = $region32
      $region31: #{inception_d_forward.23} parent=27 // pred_region
        %vm260 = vcmask 392192
        %261 = vst.msk [vmem:[%s250] sm:$0xff] %vm260, 0.0
        %262 = vst.msk [vmem:[%s254] sm:$0xff] %vm260, 0.0
      $region32: #{inception_d_forward.23} parent=27 // pred_fallthru
        _
      %v263 = vld [vmem:[%s235] sm:$0xff]
      %v264 = vld [vmem:[%s235 + $0x8] sm:$0xff]
      %v265 = vld [vmem:[%s235 + $0x10] sm:$0xff]
      %v266 = vld [vmem:[%s235 + $0x18] sm:$0xff]
      %v267 = vld [vmem:[%s235 + $0x20] sm:$0xff]
      %v268 = vld [vmem:[%s235 + $0x28] sm:$0xff]
      %v269 = vld [vmem:[%s235 + $0x30] sm:$0xff]
      %v270 = vld [vmem:[%s235 + $0x38] sm:$0xff]
      %v271 = vld [vmem:[%s235 + $0x40] sm:$0xff]
      %v272 = vld [vmem:[%s235 + $0x48] sm:$0xff]
      %v273 = vld [vmem:[%s235 + $0x50] sm:$0xff]
      %v274 = vld [vmem:[%s235 + $0x58] sm:$0xff]
      %v275 = vld [vmem:[%s235 + $0x60] sm:$0x11]
      %v276 = vld [vmem:[%s235 + $0x68] sm:$0x11]
      %v277 = vld [vmem:[%s1] sm:$0xf]
      %v278 = vld [vmem:[%s1 + $0x4] sm:$0xf]
      %v279 = vld [vmem:[%s1 + $0x8] sm:$0xf]
      %v280 = vld [vmem:[%s1 + $0xc] sm:$0xf]
      %v281 = vld [vmem:[%s1 + $0x10] sm:$0xf]
      %v282 = vld [vmem:[%s1 + $0x14] sm:$0xf]
      %v283 = vld [vmem:[%s1 + $0x18] sm:$0xf]
      %v284 = vld [vmem:[%s1 + $0x1c] sm:$0xf]
      %v285 = vld [vmem:[%s1 + $0x20] sm:$0xf]
      %v286 = vld [vmem:[%s1 + $0x24] sm:$0xf]
      %v287 = vld [vmem:[%s1 + $0x28] sm:$0xf]
      %v288 = vld [vmem:[%s1 + $0x2c] sm:$0xf]
      %v289 = vld [vmem:[%s1 + $0x30] sm:$0xf]
      %v290 = vld [vmem:[%s1 + $0x34] sm:$0xf]
      %v291 = vld [vmem:[%s1 + $0x38] sm:$0xf]
      %v292 = vld [vmem:[%s1 + $0x3c] sm:$0xf]
      %v293 = vld [vmem:[%s1 + $0x40] sm:$0xf]
      %v294 = vld [vmem:[%s1 + $0x44] sm:$0xf]
      %v295 = vld [vmem:[%s1 + $0x48] sm:$0xf]
      %v296 = vld [vmem:[%s1 + $0x4c] sm:$0xf]
      %v297 = vld [vmem:[%s1 + $0x50] sm:$0xf]
      %v298 = vld [vmem:[%s1 + $0x54] sm:$0xf]
      %v299 = vld [vmem:[%s1 + $0x58] sm:$0xf]
      %v300 = vld [vmem:[%s1 + $0x5c] sm:$0xf]
      %v301 = vld [vmem:[%s1 + $0x60] sm:$0xf]
      %v302 = vld [vmem:[%s1 + $0x64] sm:$0xf]
      %v303 = vld [vmem:[%s1 + $0x68] sm:$0xf]
      %v304 = vld [vmem:[%s1 + $0x6c] sm:$0xf]
      %v305 = vld [vmem:[%s1 + $0x70] sm:$0xf]
      %v306 = vld [vmem:[%s1 + $0x74] sm:$0xf]
      %v307 = vld [vmem:[%s1 + $0x78] sm:$0xf]
      %v308 = vld [vmem:[%s1 + $0x7c] sm:$0xf]
      %v309 = vld [vmem:[%s1 + $0x80] sm:$0xf]
      %v310 = vld [vmem:[%s1 + $0x84] sm:$0xf]
      %v311 = vld [vmem:[%s1 + $0x88] sm:$0xf]
      %v312 = vld [vmem:[%s1 + $0x8c] sm:$0xf]
      %v313 = vld [vmem:[%s1 + $0x90] sm:$0xf]
      %v314 = vld [vmem:[%s1 + $0x94] sm:$0xf]
      %v315 = vld [vmem:[%s1 + $0x98] sm:$0xf]
      %v316 = vld [vmem:[%s1 + $0x9c] sm:$0xf]
      %v317 = vld [vmem:[%s1 + $0xa0] sm:$0xf]
      %v318 = vld [vmem:[%s1 + $0xa4] sm:$0xf]
      %v319 = vld [vmem:[%s1 + $0xa8] sm:$0xf]
      %v320 = vld [vmem:[%s1 + $0xac] sm:$0xf]
      %v321 = vld [vmem:[%s1 + $0xb0] sm:$0xf]
      %v322 = vld [vmem:[%s1 + $0xb4] sm:$0xf]
      %v323 = vld [vmem:[%s1 + $0xb8] sm:$0xf]
      %v324 = vld [vmem:[%s1 + $0xbc] sm:$0xf]
      %v325 = vld [vmem:[%s1 + $0xc0] sm:$0xf]
      %v326 = vld [vmem:[%s1 + $0xc4] sm:$0xf]
      %v327 = vld [vmem:[%s1 + $0xc8] sm:$0xf]
      %v328 = vld [vmem:[%s1 + $0xcc] sm:$0xf]
      %v329 = vld [vmem:[%s1 + $0xd0] sm:$0xf]
      %v330 = vld [vmem:[%s1 + $0xd4] sm:$0xf]
      %v345 = vunpack.c.l.b16 %v263
      %v346 = vunpack.c.h.b16 %v263
      %v347 = vunpack.c.l.b16 %v264
      %v348 = vunpack.c.h.b16 %v264
      %v349 = vunpack.c.l.b16 %v265
      %v350 = vunpack.c.h.b16 %v265
      %v351 = vunpack.c.l.b16 %v266
      %v352 = vunpack.c.h.b16 %v266
      %v353 = vunpack.c.l.b16 %v267
      %v354 = vunpack.c.h.b16 %v267
      %v355 = vunpack.c.l.b16 %v268
      %v356 = vunpack.c.h.b16 %v268
      %v357 = vunpack.c.l.b16 %v269
      %v358 = vunpack.c.h.b16 %v269
      %v359 = vunpack.c.l.b16 %v270
      %v360 = vunpack.c.h.b16 %v270
      %v361 = vunpack.c.l.b16 %v271
      %v362 = vunpack.c.h.b16 %v271
      %v363 = vunpack.c.l.b16 %v272
      %v364 = vunpack.c.h.b16 %v272
      %v365 = vunpack.c.l.b16 %v273
      %v366 = vunpack.c.h.b16 %v273
      %v367 = vunpack.c.l.b16 %v274
      %v368 = vunpack.c.h.b16 %v274
      %v369 = vunpack.c.l.b16 %v275
      %v370 = vunpack.c.h.b16 %v275
      %v371 = vunpack.c.l.b16 %v276
      %v372 = vunpack.c.h.b16 %v276
      %v373 = vpack.c.b16 %v349, %v345
      %v374 = vpack.c.b16 %v350, %v346
      %v375 = vpack.c.b16 %v351, %v347
      %v376 = vpack.c.b16 %v352, %v348
      %v377 = vpack.c.b16 %v357, %v353
      %v378 = vpack.c.b16 %v358, %v354
      %v379 = vpack.c.b16 %v359, %v355
      %v380 = vpack.c.b16 %v360, %v356
      %v381 = vpack.c.b16 %v365, %v361
      %v382 = vpack.c.b16 %v366, %v362
      %v383 = vpack.c.b16 %v367, %v363
      %v384 = vpack.c.b16 %v368, %v364
      %v385 = vpack.c.b16 %v369, %v369
      %v386 = vpack.c.b16 %v370, %v370
      %v387 = vpack.c.b16 %v371, %v371
      %v388 = vpack.c.b16 %v372, %v372
      %v455 = vunpack.c.l.b16 %v277
      %v456 = vunpack.c.l.b16 %v278
      %v457 = vunpack.c.l.b16 %v279
      %v458 = vunpack.c.l.b16 %v280
      %v459 = vunpack.c.l.b16 %v281
      %v460 = vunpack.c.l.b16 %v282
      %v461 = vunpack.c.l.b16 %v283
      %v462 = vunpack.c.l.b16 %v284
      %v463 = vunpack.c.l.b16 %v285
      %v464 = vunpack.c.l.b16 %v286
      %v465 = vunpack.c.l.b16 %v287
      %v466 = vunpack.c.l.b16 %v288
      %v467 = vunpack.c.l.b16 %v289
      %v468 = vunpack.c.l.b16 %v290
      %v469 = vunpack.c.l.b16 %v291
      %v470 = vunpack.c.l.b16 %v292
      %v471 = vunpack.c.l.b16 %v293
      %v472 = vunpack.c.l.b16 %v294
      %v473 = vunpack.c.l.b16 %v295
      %v474 = vunpack.c.l.b16 %v296
      %v475 = vunpack.c.l.b16 %v297
      %v476 = vunpack.c.l.b16 %v298
      %v477 = vunpack.c.l.b16 %v299
      %v478 = vunpack.c.l.b16 %v300
      %v479 = vunpack.c.l.b16 %v301
      %v480 = vunpack.c.l.b16 %v302
      %v481 = vunpack.c.l.b16 %v303
      %v482 = vunpack.c.l.b16 %v304
      %v483 = vunpack.c.l.b16 %v305
      %v484 = vunpack.c.l.b16 %v306
      %v485 = vunpack.c.l.b16 %v307
      %v486 = vunpack.c.l.b16 %v308
      %v487 = vunpack.c.l.b16 %v309
      %v488 = vunpack.c.l.b16 %v310
      %v489 = vunpack.c.l.b16 %v311
      %v490 = vunpack.c.l.b16 %v312
      %v491 = vunpack.c.l.b16 %v313
      %v492 = vunpack.c.l.b16 %v314
      %v493 = vunpack.c.l.b16 %v315
      %v494 = vunpack.c.l.b16 %v316
      %v495 = vunpack.c.l.b16 %v317
      %v496 = vunpack.c.l.b16 %v318
      %v497 = vunpack.c.l.b16 %v319
      %v498 = vunpack.c.l.b16 %v320
      %v499 = vunpack.c.l.b16 %v321
      %v500 = vunpack.c.l.b16 %v322
      %v501 = vunpack.c.l.b16 %v323
      %v502 = vunpack.c.l.b16 %v324
      %v503 = vunpack.c.l.b16 %v325
      %v504 = vunpack.c.l.b16 %v326
      %v505 = vunpack.c.l.b16 %v327
      %v506 = vunpack.c.l.b16 %v328
      %v507 = vunpack.c.l.b16 %v329
      %v508 = vunpack.c.l.b16 %v330
      %v509 = vpack.c.b16 %v456, %v455
      %v510 = vpack.c.b16 %v458, %v457
      %v511 = vpack.c.b16 %v460, %v459
      %v512 = vpack.c.b16 %v462, %v461
      %v513 = vpack.c.b16 %v464, %v463
      %v514 = vpack.c.b16 %v466, %v465
      %v515 = vpack.c.b16 %v468, %v467
      %v516 = vpack.c.b16 %v470, %v469
      %v517 = vpack.c.b16 %v472, %v471
      %v518 = vpack.c.b16 %v474, %v473
      %v519 = vpack.c.b16 %v476, %v475
      %v520 = vpack.c.b16 %v478, %v477
      %v521 = vpack.c.b16 %v480, %v479
      %v522 = vpack.c.b16 %v482, %v481
      %v523 = vpack.c.b16 %v484, %v483
      %v524 = vpack.c.b16 %v486, %v485
      %v525 = vpack.c.b16 %v488, %v487
      %v526 = vpack.c.b16 %v490, %v489
      %v527 = vpack.c.b16 %v492, %v491
      %v528 = vpack.c.b16 %v494, %v493
      %v529 = vpack.c.b16 %v496, %v495
      %v530 = vpack.c.b16 %v498, %v497
      %v531 = vpack.c.b16 %v500, %v499
      %v532 = vpack.c.b16 %v502, %v501
      %v533 = vpack.c.b16 %v504, %v503
      %v534 = vpack.c.b16 %v506, %v505
      %v535 = vpack.c.b16 %v508, %v507
      %vm563 = vcmask 392192
      %v565 = vsel %vm563, %v376, 0
      %v568 = vsel %vm563, %v380, 0
      %v571 = vsel %vm563, %v384, 0
      %v574 = vsel %vm563, %v388, 0
      %576 = vmatpush.bf16.msra.mxu0 %v516
      %577 = vmatpush.bf16.msra.mxu0 %v515
      %578 = vmatpush.bf16.msra.mxu0 %v514
      %579 = vmatpush.bf16.msra.mxu0 %v513
      %580 = vmatpush.bf16.msra.mxu0 %v512
      %581 = vmatpush.bf16.msra.mxu0 %v511
      %582 = vmatpush.bf16.msra.mxu0 %v510
      %583 = vmatpush.bf16.msra.mxu0 %v509
      %584 = vmatmul.bf16.gmra.mxu0 %v373
      %v585 = vpop.f32.mrf.mxu0
      %v586 = vadd.f32 0.0, %v585
      %v587 = vpop.f32.mrf.mxu0
      %v588 = vadd.f32 0.0, %v587
      %589 = vmatmul.bf16.gmra.mxu0 %v377
      %v590 = vpop.f32.mrf.mxu0
      %v591 = vadd.f32 0.0, %v590
      %v592 = vpop.f32.mrf.mxu0
      %v593 = vadd.f32 0.0, %v592
      %594 = vmatmul.bf16.gmra.mxu0 %v381
      %v595 = vpop.f32.mrf.mxu0
      %v596 = vadd.f32 0.0, %v595
      %v597 = vpop.f32.mrf.mxu0
      %v598 = vadd.f32 0.0, %v597
      %599 = vmatmul.bf16.gmra.mxu0 %v385
      %v600 = vpop.f32.mrf.mxu0
      %v601 = vadd.f32 0.0, %v600
      %v602 = vpop.f32.mrf.mxu0
      %603 = vdwg.mxu0
      %604 = vmatpush.bf16.msra.mxu0 %v524
      %605 = vmatpush.bf16.msra.mxu0 %v523
      %606 = vmatpush.bf16.msra.mxu0 %v522
      %607 = vmatpush.bf16.msra.mxu0 %v521
      %608 = vmatpush.bf16.msra.mxu0 %v520
      %609 = vmatpush.bf16.msra.mxu0 %v519
      %610 = vmatpush.bf16.msra.mxu0 %v518
      %611 = vmatpush.bf16.msra.mxu0 %v517
      %612 = vmatmul.bf16.gmra.mxu0 %v374
      %v613 = vpop.f32.mrf.mxu0
      %v614 = vadd.f32 %v586, %v613
      %v615 = vpop.f32.mrf.mxu0
      %v616 = vadd.f32 %v588, %v615
      %617 = vmatmul.bf16.gmra.mxu0 %v378
      %v618 = vpop.f32.mrf.mxu0
      %v619 = vadd.f32 %v591, %v618
      %v620 = vpop.f32.mrf.mxu0
      %v621 = vadd.f32 %v593, %v620
      %622 = vmatmul.bf16.gmra.mxu0 %v382
      %v623 = vpop.f32.mrf.mxu0
      %v624 = vadd.f32 %v596, %v623
      %v625 = vpop.f32.mrf.mxu0
      %v626 = vadd.f32 %v598, %v625
      %627 = vmatmul.bf16.gmra.mxu0 %v386
      %v628 = vpop.f32.mrf.mxu0
      %v629 = vadd.f32 %v601, %v628
      %v630 = vpop.f32.mrf.mxu0
      %631 = vdwg.mxu0
      %632 = vmatpush.bf16.msra.mxu0 %v532
      %633 = vmatpush.bf16.msra.mxu0 %v531
      %634 = vmatpush.bf16.msra.mxu0 %v530
      %635 = vmatpush.bf16.msra.mxu0 %v529
      %636 = vmatpush.bf16.msra.mxu0 %v528
      %637 = vmatpush.bf16.msra.mxu0 %v527
      %638 = vmatpush.bf16.msra.mxu0 %v526
      %639 = vmatpush.bf16.msra.mxu0 %v525
      %640 = vmatmul.bf16.gmra.mxu0 %v375
      %v641 = vpop.f32.mrf.mxu0
      %v642 = vadd.f32 %v614, %v641
      %v643 = vpop.f32.mrf.mxu0
      %v644 = vadd.f32 %v616, %v643
      %645 = vmatmul.bf16.gmra.mxu0 %v379
      %v646 = vpop.f32.mrf.mxu0
      %v647 = vadd.f32 %v619, %v646
      %v648 = vpop.f32.mrf.mxu0
      %v649 = vadd.f32 %v621, %v648
      %650 = vmatmul.bf16.gmra.mxu0 %v383
      %v651 = vpop.f32.mrf.mxu0
      %v652 = vadd.f32 %v624, %v651
      %v653 = vpop.f32.mrf.mxu0
      %v654 = vadd.f32 %v626, %v653
      %655 = vmatmul.bf16.gmra.mxu0 %v387
      %v656 = vpop.f32.mrf.mxu0
      %v657 = vadd.f32 %v629, %v656
      %v658 = vpop.f32.mrf.mxu0
      %659 = vdwg.mxu0
      %660 = vmatpush.bf16.msra.mxu0 0
      %661 = vmatpush.bf16.msra.mxu0 0
      %662 = vmatpush.bf16.msra.mxu0 0
      %663 = vmatpush.bf16.msra.mxu0 0
      %664 = vmatpush.bf16.msra.mxu0 0
      %665 = vmatpush.bf16.msra.mxu0 %v535
      %666 = vmatpush.bf16.msra.mxu0 %v534
      %667 = vmatpush.bf16.msra.mxu0 %v533
      %668 = vmatmul.bf16.gmra.mxu0 %v565
      %v669 = vpop.f32.mrf.mxu0
      %v670 = vadd.f32 %v642, %v669
      %v671 = vpop.f32.mrf.mxu0
      %v672 = vadd.f32 %v644, %v671
      %673 = vmatmul.bf16.gmra.mxu0 %v568
      %v674 = vpop.f32.mrf.mxu0
      %v675 = vadd.f32 %v647, %v674
      %v676 = vpop.f32.mrf.mxu0
      %v677 = vadd.f32 %v649, %v676
      %678 = vmatmul.bf16.gmra.mxu0 %v571
      %v679 = vpop.f32.mrf.mxu0
      %v680 = vadd.f32 %v652, %v679
      %v681 = vpop.f32.mrf.mxu0
      %v682 = vadd.f32 %v654, %v681
      %683 = vmatmul.bf16.gmra.mxu0 %v574
      %v684 = vpop.f32.mrf.mxu0
      %v685 = vadd.f32 %v657, %v684
      %v686 = vpop.f32.mrf.mxu0
      %687 = vdwg.mxu0
      %688 = vst.msk [vmem:[#allocation2] sm:$0xff] %vm563, %v670
      %689 = vst.msk [vmem:[#allocation2 + $0x8] sm:$0xff] %vm563, %v672
      %690 = vst.msk [vmem:[#allocation2 + $0x10] sm:$0xff] %vm563, %v675
      %691 = vst.msk [vmem:[#allocation2 + $0x18] sm:$0xff] %vm563, %v677
      %692 = vst.msk [vmem:[#allocation2 + $0x20] sm:$0xff] %vm563, %v680
      %693 = vst.msk [vmem:[#allocation2 + $0x28] sm:$0xff] %vm563, %v682
      %vm694 = vcmask 385024
      %695 = vst.msk [vmem:[#allocation2 + $0x30] sm:$0x1] %vm694, %v685
      %v696 = vld [vmem:[#allocation2] sm:$0xff]
      %v697 = vld [vmem:[#allocation2 + $0x8] sm:$0xff]
      %v698 = vld [vmem:[#allocation2 + $0x10] sm:$0xff]
      %v699 = vld [vmem:[#allocation2 + $0x18] sm:$0xff]
      %v700 = vld [vmem:[#allocation2 + $0x20] sm:$0xff]
      %v701 = vld [vmem:[#allocation2 + $0x28] sm:$0xff]
      %v702 = vld [vmem:[#allocation2 + $0x30] sm:$0x1]
      %v703 = vpack.c.bf16 %v696, %v696
      %v704 = vpack.c.bf16 %v697, %v697
      %v705 = vpack.c.bf16 %v698, %v698
      %v706 = vpack.c.bf16 %v699, %v699
      %v707 = vpack.c.bf16 %v700, %v700
      %v708 = vpack.c.bf16 %v701, %v701
      %v709 = vpack.c.bf16 %v702, %v702
      %vm710 = vcmask 388096
      %711 = vst.msk [vmem:[%s244] sm:$0xf] %vm710, %v703
      %712 = vst.msk [vmem:[%s244 + $0x4] sm:$0xf] %vm710, %v704
      %713 = vst.msk [vmem:[%s244 + $0x8] sm:$0xf] %vm710, %v705
      %714 = vst.msk [vmem:[%s244 + $0xc] sm:$0xf] %vm710, %v706
      %715 = vst.msk [vmem:[%s244 + $0x10] sm:$0xf] %vm710, %v707
      %716 = vst.msk [vmem:[%s244 + $0x14] sm:$0xf] %vm710, %v708
      %vm717 = vcmask 385024
      %vm718 = vsmask.f32 256
      %vm719 = vmand %vm717, %vm718
      %v720 = vld [vmem:[%s244 + $0x18] sm:$0x1]
      %v721 = vsel %vm719, %v709, %v720
      %722 = vst [vmem:[%s244 + $0x18] sm:$0x1] %v721
      %v723 = vld [vmem:[%s250] sm:$0xff]
      %v724 = vsel %vm563, %v696, 0.0
      %v725 = vsel %vm563, %v697, 0.0
      %v726 = vadd.f32 %v724, %v725
      %v727 = vsel %vm563, %v698, 0.0
      %v728 = vadd.f32 %v726, %v727
      %v729 = vsel %vm563, %v699, 0.0
      %v730 = vadd.f32 %v728, %v729
      %v731 = vsel %vm563, %v700, 0.0
      %v732 = vadd.f32 %v730, %v731
      %v733 = vsel %vm563, %v701, 0.0
      %v734 = vadd.f32 %v732, %v733
      %v735 = vsel %vm694, %v702, 0.0
      %v736 = vadd.f32 %v734, %v735
      %v737 = vrot.slane %v736, 4
      %v738 = vadd.f32 %v736, %v737
      %v739 = vrot.slane %v738, 2
      %v740 = vadd.f32 %v738, %v739
      %v741 = vrot.slane %v740, 1
      %v742 = vadd.f32 %v740, %v741
      %v743 = vadd.f32 %v723, %v742
      %744 = vst.msk [vmem:[%s250] sm:$0xff] %vm563, %v743
      %v745 = vld [vmem:[%s254] sm:$0xff]
      %v746 = vmul.f32 %v696, %v696
      %v747 = vmul.f32 %v697, %v697
      %v748 = vmul.f32 %v698, %v698
      %v749 = vmul.f32 %v699, %v699
      %v750 = vmul.f32 %v700, %v700
      %v751 = vmul.f32 %v701, %v701
      %v752 = vmul.f32 %v702, %v702
      %v753 = vsel %vm563, %v746, 0.0
      %v754 = vsel %vm563, %v747, 0.0
      %v755 = vadd.f32 %v753, %v754
      %v756 = vsel %vm563, %v748, 0.0
      %v757 = vadd.f32 %v755, %v756
      %v758 = vsel %vm563, %v749, 0.0
      %v759 = vadd.f32 %v757, %v758
      %v760 = vsel %vm563, %v750, 0.0
      %v761 = vadd.f32 %v759, %v760
      %v762 = vsel %vm563, %v751, 0.0
      %v763 = vadd.f32 %v761, %v762
      %v764 = vsel %vm694, %v752, 0.0
      %v765 = vadd.f32 %v763, %v764
      %v766 = vrot.slane %v765, 4
      %v767 = vadd.f32 %v765, %v766
      %v768 = vrot.slane %v767, 2
      %v769 = vadd.f32 %v767, %v768
      %v770 = vrot.slane %v769, 1
      %v771 = vadd.f32 %v769, %v770
      %v772 = vadd.f32 %v745, %v771
      %773 = vst.msk [vmem:[%s254] sm:$0xff] %vm563, %v772
      %s774 = smul.u32 %s20, 2
      %s775 = sadd.s32 %s774, %s21
      %p776 = scmp.lt.s32.totalorder %s775, 1
      %s777 = scalar_select %p776, %s775, 1
      %s778 = smul.addr %s777, 7
      %s779 = smul.addr %s778, 4
      %s780 = scalar_lea.vmem %s2, %s779
      %p781 = scmp.lt.s32.totalorder %s20, 0
      %s782 = scalar_select %p781, %s20, 0
      %s783 = smul.addr %s782, 8
      %s784 = scalar_lea.vmem %s3, %s783
      %p785 = scmp.lt.s32.totalorder %s20, 0
      %s786 = scalar_select %p785, %s20, 0
      %s787 = smul.addr %s786, 8
      %s788 = scalar_lea.vmem %s4, %s787
      // Predicated region
      $region33: #{inception_d_forward.23} parent=27 // pred_check
        %p789 = pneg %p101
      $region34: #{inception_d_forward.23} parent=27 // pred_check_branch
        %791 = sbr.rel (%p789) target = $region36
      $region35: #{inception_d_forward.23} parent=27 // pred_region
        %s792 = smul.u32 %s20, 2
        %s793 = sadd.s32 %s792, %s21
      $region36: #{inception_d_forward.23} parent=27 // pred_fallthru
        _
      // Predicated region
      $region37: #{inception_d_forward.23} parent=27 // pred_check
        %p794 = pneg %p127
      $region38: #{inception_d_forward.23} parent=27 // pred_check_branch
        %796 = sbr.rel (%p794) target = $region40
      $region39: #{inception_d_forward.23} parent=27 // pred_region
        _
      $region40: #{inception_d_forward.23} parent=27 // pred_fallthru
        _
      // Predicated region
      $region41: #{inception_d_forward.23} parent=27 // pred_check
        %p797 = pneg %p153
      $region42: #{inception_d_forward.23} parent=27 // pred_check_branch
        %799 = sbr.rel (%p797) target = $region44
      $region43: #{inception_d_forward.23} parent=27 // pred_region
        _
      $region44: #{inception_d_forward.23} parent=27 // pred_fallthru
        _
      // Predicated region
      $region45: #{inception_d_forward.23} parent=27 // pred_check
        %p800 = pneg %p127
      $region46: #{inception_d_forward.23} parent=27 // pred_check_branch
        %802 = sbr.rel (%p800) target = $region48
      $region47: #{inception_d_forward.23} parent=27 // pred_region
        %p803 = scmp.lt.s32.totalorder %s20, 0
        %s804 = scalar_select %p803, %s20, 0
        %s805 = smul.addr %s804, 8
        %s806 = scalar_lea.vmem %s3, %s805
      $region48: #{inception_d_forward.23} parent=27 // pred_fallthru
        _
      // Predicated region
      $region49: #{inception_d_forward.23} parent=27 // pred_check
        %p807 = pneg %p153
      $region50: #{inception_d_forward.23} parent=27 // pred_check_branch
        %809 = sbr.rel (%p807) target = $region52
      $region51: #{inception_d_forward.23} parent=27 // pred_region
        %p810 = scmp.lt.s32.totalorder %s20, 0
        %s811 = scalar_select %p810, %s20, 0
        %s812 = smul.addr %s811, 8
        %s813 = scalar_lea.vmem %s4, %s812
      $region52: #{inception_d_forward.23} parent=27 // pred_fallthru
        _
    $region28: #{inception_d_forward.23} parent=5 // pred_fallthru
      _
    %p814 = scmp.le.s32.totalorder 2, %s11
    // Predicated region
    $region53: #{inception_d_forward.23} parent=5 // pred_check
      %p815 = pneg %p814
    $region54: #{inception_d_forward.23} parent=5 // pred_check_branch
      %817 = sbr.rel (%p815) target = $region56
    $region55: #{inception_d_forward.23} parent=5 // pred_region
      %s818 = ssub.s32 %s11, 2
      // Predicated region
      $region57: #{inception_d_forward.23} parent=55 // pred_check
        %p819 = pneg %p107
      $region58: #{inception_d_forward.23} parent=55 // pred_check_branch
        %821 = sbr.rel (%p819) target = $region60
      $region59: #{inception_d_forward.23} parent=55 // pred_region
        %s822 = smul.u32 %s22, 2
        %s823 = sadd.s32 %s822, %s23
        %p824 = scmp.lt.s32.totalorder %s823, 1
        %s825 = scalar_select %p824, %s823, 1
        %s826 = smul.addr %s825, 7
        %s827 = smul.addr %s826, 4
        %s828 = scalar_lea.vmem %s2, %s827
      $region60: #{inception_d_forward.23} parent=55 // pred_fallthru
        _
    $region56: #{inception_d_forward.23} parent=5 // pred_fallthru
      _
  $region6: #{inception_d_forward.23} parent=0 // loop_footer
    %s15 = sadd.s32 1, %s11
  $region7: #{inception_d_forward.23} parent=0 // loop_footer_branch
    %10 = sbr.rel target = $region3
  $region8: #{inception_d_forward.23} parent=0 // loop_exit
    _

// kernel: inception_d_forward.24
$region0: #{inception_d_forward.24}
  #allocation0 [shape = 'u32[]', space=smem, size = 0x4, offset = 0x4, fixed_abs, tag = 'smem constant byte address 0x4 - core index']
  #allocation1 [shape = 'u32[72,128]{1,0:T(1,128)}', space=vmem, size = 0x9000, scoped, tag = 'internal scratch']
  %s0 = inlined_call_operand.vmem [shape: bf16[2,49,48], index: 0, kind: input, shape index: {}, may-alias: {0,3}]
  %s1 = inlined_call_operand.vmem [shape: f32[1,1,48], index: 1, kind: input, shape index: {}]
  %s2 = inlined_call_operand.vmem [shape: f32[1,1,48], index: 2, kind: input, shape index: {}]
  %s3 = inlined_call_operand.vmem [shape: bf16[2,49,48], index: 3, kind: output, shape index: {}, may-alias: {0,3}]
  %s4 = sld [smem:[#allocation0]]
  $region45: #{inception_d_forward.24} parent=0
    _
  %s6 = ssub.s32 1, %s4
  %s7 = scalar_select 0, %s6, %s4
  loop: start=0, step=1, limit=4
  $region2: #{inception_d_forward.24} parent=0 // loop_pre_header
    _
  $region3: #{inception_d_forward.24} parent=0 // loop_header
    %s9 = sphi 0, %s13
    %p10 = scmp.ge.s32.totalorder %s9, 4
    %s19 = sphi 0, %s21
    %s22 = sphi 0, %s19
    %s23 = sphi 0, %s22
    %s39 = sphi 0, %s23
    %s43 = sphi 0, %s43
    %s45 = sphi 0, %s43
    %s46 = sphi 0, %s45
    %s60 = sphi 0, %s46
    %s64 = sphi 0, %s64
    %s66 = sphi 0, %s64
    %s67 = sphi 0, %s66
    %s81 = sphi 0, %s67
    %s87 = sphi 0, %s89
    %s90 = sphi 0, %s87
    %s91 = sphi 0, %s90
    %s107 = sphi 0, %s91
  $region4: #{inception_d_forward.24} parent=0 // loop_header_branch
    %12 = sbr.rel (%p10) target = $region8
  $region5: #{inception_d_forward.24} parent=0 // loop_body
    %s14 = ssub.s32 %s9, 1
    %s15 = ssub.s32 %s9, 2
    %s16 = sadd.s32 %s9, 1
    %s17 = ssub.s32 %s9, %s16
    %p18 = scmp.eq.s32.totalorder %s17, 0
    %s20 = sadd.s32 %s19, 1
    %s21 = scalar_select %p18, %s19, %s20
    %p24 = pneg %p18
    %p25 = scmp.eq.s32.totalorder %s9, 1
    %p26 = por %p24, %p25
    %p27 = scmp.ne.s32.totalorder %s19, %s22
    %p28 = scmp.eq.s32.totalorder %s9, 0
    %p29 = por %p27, %p28
    %p30 = scmp.ne.s32.totalorder %s19, %s22
    %p31 = scmp.eq.s32.totalorder %s14, 1
    %p32 = por %p30, %p31
    %p33 = scmp.ne.s32.totalorder %s22, %s23
    %p34 = scmp.eq.s32.totalorder %s14, 0
    %p35 = por %p33, %p34
    %p36 = scmp.ne.s32.totalorder %s22, %s23
    %p37 = scmp.eq.s32.totalorder %s15, 1
    %p38 = por %p36, %p37
    %p40 = scmp.ne.s32.totalorder %s23, %s39
    %p41 = scmp.eq.s32.totalorder %s15, 0
    %p42 = por %p40, %p41
    %s44 = sadd.s32 %s43, 1
    %p47 = scmp.eq.s32.totalorder %s9, 1
    %p48 = scmp.ne.s32.totalorder %s43, %s45
    %p49 = scmp.eq.s32.totalorder %s9, 0
    %p50 = por %p48, %p49
    %p51 = scmp.ne.s32.totalorder %s43, %s45
    %p52 = scmp.eq.s32.totalorder %s14, 1
    %p53 = por %p51, %p52
    %p54 = scmp.ne.s32.totalorder %s45, %s46
    %p55 = scmp.eq.s32.totalorder %s14, 0
    %p56 = por %p54, %p55
    %p57 = scmp.ne.s32.totalorder %s45, %s46
    %p58 = scmp.eq.s32.totalorder %s15, 1
    %p59 = por %p57, %p58
    %p61 = scmp.ne.s32.totalorder %s46, %s60
    %p62 = scmp.eq.s32.totalorder %s15, 0
    %p63 = por %p61, %p62
    %s65 = sadd.s32 %s64, 1
    %p68 = scmp.eq.s32.totalorder %s9, 1
    %p69 = scmp.ne.s32.totalorder %s64, %s66
    %p70 = scmp.eq.s32.totalorder %s9, 0
    %p71 = por %p69, %p70
    %p72 = scmp.ne.s32.totalorder %s64, %s66
    %p73 = scmp.eq.s32.totalorder %s14, 1
    %p74 = por %p72, %p73
    %p75 = scmp.ne.s32.totalorder %s66, %s67
    %p76 = scmp.eq.s32.totalorder %s14, 0
    %p77 = por %p75, %p76
    %p78 = scmp.ne.s32.totalorder %s66, %s67
    %p79 = scmp.eq.s32.totalorder %s15, 1
    %p80 = por %p78, %p79
    %p82 = scmp.ne.s32.totalorder %s67, %s81
    %p83 = scmp.eq.s32.totalorder %s15, 0
    %p84 = por %p82, %p83
    %s85 = ssub.s32 %s9, %s16
    %p86 = scmp.eq.s32.totalorder %s85, 0
    %s88 = sadd.s32 %s87, 1
    %s89 = scalar_select %p86, %s87, %s88
    %p92 = pneg %p86
    %p93 = scmp.eq.s32.totalorder %s9, 1
    %p94 = por %p92, %p93
    %p95 = scmp.ne.s32.totalorder %s87, %s90
    %p96 = scmp.eq.s32.totalorder %s9, 0
    %p97 = por %p95, %p96
    %p98 = scmp.ne.s32.totalorder %s87, %s90
    %p99 = scmp.eq.s32.totalorder %s14, 1
    %p100 = por %p98, %p99
    %p101 = scmp.ne.s32.totalorder %s90, %s91
    %p102 = scmp.eq.s32.totalorder %s14, 0
    %p103 = por %p101, %p102
    %p104 = scmp.ne.s32.totalorder %s90, %s91
    %p105 = scmp.eq.s32.totalorder %s15, 1
    %p106 = por %p104, %p105
    %p108 = scmp.ne.s32.totalorder %s91, %s107
    %p109 = scmp.eq.s32.totalorder %s15, 0
    %p110 = por %p108, %p109
    %p111 = scmp.le.s32.totalorder 1, %s9
    %p112 = scmp.lt.s32.totalorder %s9, 3
    %p113 = pnand %p111, %p112
    %p114 = pneg %p113
    // Predicated region
    $region9: #{inception_d_forward.24} parent=5 // pred_check
      _
    $region10: #{inception_d_forward.24} parent=5 // pred_check_branch
      %116 = sbr.rel (%p113) target = $region12
    $region11: #{inception_d_forward.24} parent=5 // pred_region
      %s117 = ssub.s32 %s9, 1
      // Predicated region
      $region13: #{inception_d_forward.24} parent=11 // pred_check
        %p118 = pneg %p56
      $region14: #{inception_d_forward.24} parent=11 // pred_check_branch
        %120 = sbr.rel (%p118) target = $region16
      $region15: #{inception_d_forward.24} parent=11 // pred_region
        _
      $region16: #{inception_d_forward.24} parent=11 // pred_fallthru
        _
      // Predicated region
      $region17: #{inception_d_forward.24} parent=11 // pred_check
        %p121 = pneg %p77
      $region18: #{inception_d_forward.24} parent=11 // pred_check_branch
        %123 = sbr.rel (%p121) target = $region20
      $region19: #{inception_d_forward.24} parent=11 // pred_region
        _
      $region20: #{inception_d_forward.24} parent=11 // pred_fallthru
        _
    $region12: #{inception_d_forward.24} parent=5 // pred_fallthru
      _
    %p124 = scmp.lt.s32.totalorder %s9, 2
    // Predicated region
    $region21: #{inception_d_forward.24} parent=5 // pred_check
      %p125 = pneg %p124
    $region22: #{inception_d_forward.24} parent=5 // pred_check_branch
      %127 = sbr.rel (%p125) target = $region24
    $region23: #{inception_d_forward.24} parent=5 // pred_region
      // Predicated region
      $region25: #{inception_d_forward.24} parent=23 // pred_check
        %p128 = pneg %p29
      $region26: #{inception_d_forward.24} parent=23 // pred_check_branch
        %130 = sbr.rel (%p128) target = $region28
      $region27: #{inception_d_forward.24} parent=23 // pred_region
        %p131 = scmp.lt.s32.totalorder %s9, 1
        %s132 = scalar_select %p131, %s9, 1
        %s133 = smul.addr %s132, 7
        %s134 = smul.addr %s133, 4
        %s135 = scalar_lea.vmem %s0, %s134
      $region28: #{inception_d_forward.24} parent=23 // pred_fallthru
        _
    $region24: #{inception_d_forward.24} parent=5 // pred_fallthru
      _
    %p136 = scmp.le.s32.totalorder 1, %s9
    %p137 = scmp.lt.s32.totalorder %s9, 3
    %p138 = pnand %p136, %p137
    %p139 = pneg %p138
    // Predicated region
    $region29: #{inception_d_forward.24} parent=5 // pred_check
      _
    $region30: #{inception_d_forward.24} parent=5 // pred_check_branch
      %141 = sbr.rel (%p138) target = $region32
    $region31: #{inception_d_forward.24} parent=5 // pred_region
      %s142 = ssub.s32 %s9, 1
      %p143 = scmp.lt.s32.totalorder %s14, 1
      %s144 = scalar_select %p143, %s14, 1
      %s145 = smul.addr %s144, 7
      %s146 = smul.addr %s145, 4
      %s147 = scalar_lea.vmem %s0, %s146
      %p148 = pneg %p35
      %p149 = pneg %p32
      %p150 = pneg %p56
      %p151 = pneg %p53
      %p152 = pneg %p77
      %p153 = pneg %p74
      %p154 = pneg %p103
      %p155 = pneg %p100
      %p156 = scmp.lt.s32.totalorder %s14, 1
      %s157 = scalar_select %p156, %s14, 1
      %s158 = smul.addr %s157, 7
      %s159 = smul.addr %s158, 4
      %s160 = scalar_lea.vmem %s3, %s159
      %p161 = scmp.lt.s32.totalorder %s14, 1
      %s162 = scalar_select %p161, %s14, 1
      %s163 = smul.addr %s162, 7
      %s164 = smul.addr %s163, 4
      %s165 = scalar_lea.vmem %s0, %s164
      %p166 = scmp.lt.s32.totalorder %s14, 1
      %s167 = scalar_select %p166, %s14, 1
      %s168 = smul.addr %s167, 7
      %s169 = smul.addr %s168, 4
      %s170 = scalar_lea.vmem %s3, %s169
      %v171 = vld [vmem:[%s165] sm:$0xf]
      %v172 = vld [vmem:[%s165 + $0x4] sm:$0xf]
      %v173 = vld [vmem:[%s165 + $0x8] sm:$0xf]
      %v174 = vld [vmem:[%s165 + $0xc] sm:$0xf]
      %v175 = vld [vmem:[%s165 + $0x10] sm:$0xf]
      %v176 = vld [vmem:[%s165 + $0x14] sm:$0xf]
      %v177 = vld [vmem:[%s165 + $0x18] sm:$0x1]
      %v178 = vunpack.c.l.bf16 %v171
      %v179 = vunpack.c.l.bf16 %v172
      %v180 = vunpack.c.l.bf16 %v173
      %v181 = vunpack.c.l.bf16 %v174
      %v182 = vunpack.c.l.bf16 %v175
      %v183 = vunpack.c.l.bf16 %v176
      %v184 = vunpack.c.l.bf16 %v177
      %v185 = vld [vmem:[%s1] sm:$0x1]
      %v187 = vperm.slane %v185, 0
      %v189 = vmul.f32 %v178, %v187
      %v190 = vmul.f32 %v179, %v187
      %v191 = vmul.f32 %v180, %v187
      %v192 = vmul.f32 %v181, %v187
      %v193 = vmul.f32 %v182, %v187
      %v194 = vmul.f32 %v183, %v187
      %v195 = vmul.f32 %v184, %v187
      %v196 = vld [vmem:[%s2] sm:$0x1]
      %v198 = vperm.slane %v196, 0
      %v200 = vadd.f32 %v189, %v198
      %v201 = vadd.f32 %v190, %v198
      %v202 = vadd.f32 %v191, %v198
      %v203 = vadd.f32 %v192, %v198
      %v204 = vadd.f32 %v193, %v198
      %v205 = vadd.f32 %v194, %v198
      %v206 = vadd.f32 %v195, %v198
      %v207 = vmax.f32 %v200, 0.0
      %v208 = vmax.f32 %v201, 0.0
      %v209 = vmax.f32 %v202, 0.0
      %v210 = vmax.f32 %v203, 0.0
      %v211 = vmax.f32 %v204, 0.0
      %v212 = vmax.f32 %v205, 0.0
      %v213 = vmax.f32 %v206, 0.0
      %v214 = vpack.c.bf16 %v207, %v207
      %v215 = vpack.c.bf16 %v208, %v208
      %v216 = vpack.c.bf16 %v209, %v209
      %v217 = vpack.c.bf16 %v210, %v210
      %v218 = vpack.c.bf16 %v211, %v211
      %v219 = vpack.c.bf16 %v212, %v212
      %v220 = vpack.c.bf16 %v213, %v213
      %vm221 = vcmask 388096
      %222 = vst.msk [vmem:[%s170] sm:$0xf] %vm221, %v214
      %223 = vst.msk [vmem:[%s170 + $0x4] sm:$0xf] %vm221, %v215
      %224 = vst.msk [vmem:[%s170 + $0x8] sm:$0xf] %vm221, %v216
      %225 = vst.msk [vmem:[%s170 + $0xc] sm:$0xf] %vm221, %v217
      %226 = vst.msk [vmem:[%s170 + $0x10] sm:$0xf] %vm221, %v218
      %227 = vst.msk [vmem:[%s170 + $0x14] sm:$0xf] %vm221, %v219
      %vm228 = vcmask 385024
      %vm229 = vsmask.f32 256
      %vm230 = vmand %vm228, %vm229
      %v231 = vld [vmem:[%s170 + $0x18] sm:$0x1]
      %v232 = vsel %vm230, %v220, %v231
      %233 = vst [vmem:[%s170 + $0x18] sm:$0x1] %v232
      %p234 = scmp.lt.s32.totalorder %s14, 1
      %s235 = scalar_select %p234, %s14, 1
      %s236 = smul.addr %s235, 7
      %s237 = smul.addr %s236, 4
      %s238 = scalar_lea.vmem %s3, %s237
      // Predicated region
      $region33: #{inception_d_forward.24} parent=31 // pred_check
        %p239 = pneg %p100
      $region34: #{inception_d_forward.24} parent=31 // pred_check_branch
        %241 = sbr.rel (%p239) target = $region36
      $region35: #{inception_d_forward.24} parent=31 // pred_region
        _
      $region36: #{inception_d_forward.24} parent=31 // pred_fallthru
        _
    $region32: #{inception_d_forward.24} parent=5 // pred_fallthru
      _
    %p242 = scmp.le.s32.totalorder 2, %s9
    // Predicated region
    $region37: #{inception_d_forward.24} parent=5 // pred_check
      %p243 = pneg %p242
    $region38: #{inception_d_forward.24} parent=5 // pred_check_branch
      %245 = sbr.rel (%p243) target = $region40
    $region39: #{inception_d_forward.24} parent=5 // pred_region
      %s246 = ssub.s32 %s9, 2
      // Predicated region
      $region41: #{inception_d_forward.24} parent=39 // pred_check
        %p247 = pneg %p106
      $region42: #{inception_d_forward.24} parent=39 // pred_check_branch
        %249 = sbr.rel (%p247) target = $region44
      $region43: #{inception_d_forward.24} parent=39 // pred_region
        %p250 = scmp.lt.s32.totalorder %s15, 1
        %s251 = scalar_select %p250, %s15, 1
        %s252 = smul.addr %s251, 7
        %s253 = smul.addr %s252, 4
        %s254 = scalar_lea.vmem %s3, %s253
      $region44: #{inception_d_forward.24} parent=39 // pred_fallthru
        _
    $region40: #{inception_d_forward.24} parent=5 // pred_fallthru
      _
  $region6: #{inception_d_forward.24} parent=0 // loop_footer
    %s13 = sadd.s32 1, %s9
  $region7: #{inception_d_forward.24} parent=0 // loop_footer_branch
    %8 = sbr.rel target = $region3
  $region8: #{inception_d_forward.24} parent=0 // loop_exit
    _

// kernel: inception_d_forward.25
$region0: #{inception_d_forward.25}
  #allocation0 [shape = 'u32[]', space=smem, size = 0x4, offset = 0x4, fixed_abs, tag = 'smem constant byte address 0x4 - core index']
  #allocation1 [shape = 'u32[72,128]{1,0:T(1,128)}', space=vmem, size = 0x9000, scoped, tag = 'internal scratch']
  %s0 = inlined_call_operand.vmem [shape: f32[2,8,8,4], index: 0, kind: input, shape index: {}]
  %s1 = inlined_call_operand.vmem [shape: f32[2,8,8,4], index: 1, kind: input, shape index: {}]
  %s2 = inlined_call_operand.vmem [shape: f32[2,8,8,4], index: 2, kind: input, shape index: {}]
  %s3 = inlined_call_operand.vmem [shape: f32[2,8,8,4], index: 3, kind: input, shape index: {}]
  %s4 = inlined_call_operand.vmem [shape: f32[2,7,7,4], index: 4, kind: output, shape index: {}]
  %s5 = sld [smem:[#allocation0]]
  $region49: #{inception_d_forward.25} parent=0
    _
  %s7 = ssub.s32 1, %s5
  %s8 = scalar_select 0, %s7, %s5
  loop: start=0, step=1, limit=4
  $region2: #{inception_d_forward.25} parent=0 // loop_pre_header
    _
  $region3: #{inception_d_forward.25} parent=0 // loop_header
    %s10 = sphi 0, %s14
    %p11 = scmp.ge.s32.totalorder %s10, 4
    %s20 = sphi 0, %s22
    %s23 = sphi 0, %s20
    %s24 = sphi 0, %s23
    %s40 = sphi 0, %s24
    %s46 = sphi 0, %s48
    %s49 = sphi 0, %s46
    %s50 = sphi 0, %s49
    %s66 = sphi 0, %s50
    %s72 = sphi 0, %s74
    %s75 = sphi 0, %s72
    %s76 = sphi 0, %s75
    %s92 = sphi 0, %s76
    %s98 = sphi 0, %s100
    %s101 = sphi 0, %s98
    %s102 = sphi 0, %s101
    %s118 = sphi 0, %s102
    %s124 = sphi 0, %s126
    %s127 = sphi 0, %s124
    %s128 = sphi 0, %s127
    %s144 = sphi 0, %s128
  $region4: #{inception_d_forward.25} parent=0 // loop_header_branch
    %13 = sbr.rel (%p11) target = $region8
  $region5: #{inception_d_forward.25} parent=0 // loop_body
    %s15 = ssub.s32 %s10, 1
    %s16 = ssub.s32 %s10, 2
    %s17 = sadd.s32 %s10, 1
    %s18 = ssub.s32 %s10, %s17
    %p19 = scmp.eq.s32.totalorder %s18, 0
    %s21 = sadd.s32 %s20, 1
    %s22 = scalar_select %p19, %s20, %s21
    %p25 = pneg %p19
    %p26 = scmp.eq.s32.totalorder %s10, 1
    %p27 = por %p25, %p26
    %p28 = scmp.ne.s32.totalorder %s20, %s23
    %p29 = scmp.eq.s32.totalorder %s10, 0
    %p30 = por %p28, %p29
    %p31 = scmp.ne.s32.totalorder %s20, %s23
    %p32 = scmp.eq.s32.totalorder %s15, 1
    %p33 = por %p31, %p32
    %p34 = scmp.ne.s32.totalorder %s23, %s24
    %p35 = scmp.eq.s32.totalorder %s15, 0
    %p36 = por %p34, %p35
    %p37 = scmp.ne.s32.totalorder %s23, %s24
    %p38 = scmp.eq.s32.totalorder %s16, 1
    %p39 = por %p37, %p38
    %p41 = scmp.ne.s32.totalorder %s24, %s40
    %p42 = scmp.eq.s32.totalorder %s16, 0
    %p43 = por %p41, %p42
    %s44 = ssub.s32 %s10, %s17
    %p45 = scmp.eq.s32.totalorder %s44, 0
    %s47 = sadd.s32 %s46, 1
    %s48 = scalar_select %p45, %s46, %s47
    %p51 = pneg %p45
    %p52 = scmp.eq.s32.totalorder %s10, 1
    %p53 = por %p51, %p52
    %p54 = scmp.ne.s32.totalorder %s46, %s49
    %p55 = scmp.eq.s32.totalorder %s10, 0
    %p56 = por %p54, %p55
    %p57 = scmp.ne.s32.totalorder %s46, %s49
    %p58 = scmp.eq.s32.totalorder %s15, 1
    %p59 = por %p57, %p58
    %p60 = scmp.ne.s32.totalorder %s49, %s50
    %p61 = scmp.eq.s32.totalorder %s15, 0
    %p62 = por %p60, %p61
    %p63 = scmp.ne.s32.totalorder %s49, %s50
    %p64 = scmp.eq.s32.totalorder %s16, 1
    %p65 = por %p63, %p64
    %p67 = scmp.ne.s32.totalorder %s50, %s66
    %p68 = scmp.eq.s32.totalorder %s16, 0
    %p69 = por %p67, %p68
    %s70 = ssub.s32 %s10, %s17
    %p71 = scmp.eq.s32.totalorder %s70, 0
    %s73 = sadd.s32 %s72, 1
    %s74 = scalar_select %p71, %s72, %s73
    %p77 = pneg %p71
    %p78 = scmp.eq.s32.totalorder %s10, 1
    %p79 = por %p77, %p78
    %p80 = scmp.ne.s32.totalorder %s72, %s75
    %p81 = scmp.eq.s32.totalorder %s10, 0
    %p82 = por %p80, %p81
    %p83 = scmp.ne.s32.totalorder %s72, %s75
    %p84 = scmp.eq.s32.totalorder %s15, 1
    %p85 = por %p83, %p84
    %p86 = scmp.ne.s32.totalorder %s75, %s76
    %p87 = scmp.eq.s32.totalorder %s15, 0
    %p88 = por %p86, %p87
    %p89 = scmp.ne.s32.totalorder %s75, %s76
    %p90 = scmp.eq.s32.totalorder %s16, 1
    %p91 = por %p89, %p90
    %p93 = scmp.ne.s32.totalorder %s76, %s92
    %p94 = scmp.eq.s32.totalorder %s16, 0
    %p95 = por %p93, %p94
    %s96 = ssub.s32 %s10, %s17
    %p97 = scmp.eq.s32.totalorder %s96, 0
    %s99 = sadd.s32 %s98, 1
    %s100 = scalar_select %p97, %s98, %s99
    %p103 = pneg %p97
    %p104 = scmp.eq.s32.totalorder %s10, 1
    %p105 = por %p103, %p104
    %p106 = scmp.ne.s32.totalorder %s98, %s101
    %p107 = scmp.eq.s32.totalorder %s10, 0
    %p108 = por %p106, %p107
    %p109 = scmp.ne.s32.totalorder %s98, %s101
    %p110 = scmp.eq.s32.totalorder %s15, 1
    %p111 = por %p109, %p110
    %p112 = scmp.ne.s32.totalorder %s101, %s102
    %p113 = scmp.eq.s32.totalorder %s15, 0
    %p114 = por %p112, %p113
    %p115 = scmp.ne.s32.totalorder %s101, %s102
    %p116 = scmp.eq.s32.totalorder %s16, 1
    %p117 = por %p115, %p116
    %p119 = scmp.ne.s32.totalorder %s102, %s118
    %p120 = scmp.eq.s32.totalorder %s16, 0
    %p121 = por %p119, %p120
    %s122 = ssub.s32 %s10, %s17
    %p123 = scmp.eq.s32.totalorder %s122, 0
    %s125 = sadd.s32 %s124, 1
    %s126 = scalar_select %p123, %s124, %s125
    %p129 = pneg %p123
    %p130 = scmp.eq.s32.totalorder %s10, 1
    %p131 = por %p129, %p130
    %p132 = scmp.ne.s32.totalorder %s124, %s127
    %p133 = scmp.eq.s32.totalorder %s10, 0
    %p134 = por %p132, %p133
    %p135 = scmp.ne.s32.totalorder %s124, %s127
    %p136 = scmp.eq.s32.totalorder %s15, 1
    %p137 = por %p135, %p136
    %p138 = scmp.ne.s32.totalorder %s127, %s128
    %p139 = scmp.eq.s32.totalorder %s15, 0
    %p140 = por %p138, %p139
    %p141 = scmp.ne.s32.totalorder %s127, %s128
    %p142 = scmp.eq.s32.totalorder %s16, 1
    %p143 = por %p141, %p142
    %p145 = scmp.ne.s32.totalorder %s128, %s144
    %p146 = scmp.eq.s32.totalorder %s16, 0
    %p147 = por %p145, %p146
    %p148 = scmp.le.s32.totalorder 1, %s10
    %p149 = scmp.lt.s32.totalorder %s10, 3
    %p150 = pnand %p148, %p149
    %p151 = pneg %p150
    // Predicated region
    $region9: #{inception_d_forward.25} parent=5 // pred_check
      _
    $region10: #{inception_d_forward.25} parent=5 // pred_check_branch
      %153 = sbr.rel (%p150) target = $region12
    $region11: #{inception_d_forward.25} parent=5 // pred_region
      %s154 = ssub.s32 %s10, 1
    $region12: #{inception_d_forward.25} parent=5 // pred_fallthru
      _
    %p155 = scmp.lt.s32.totalorder %s10, 2
    // Predicated region
    $region13: #{inception_d_forward.25} parent=5 // pred_check
      %p156 = pneg %p155
    $region14: #{inception_d_forward.25} parent=5 // pred_check_branch
      %158 = sbr.rel (%p156) target = $region16
    $region15: #{inception_d_forward.25} parent=5 // pred_region
      // Predicated region
      $region17: #{inception_d_forward.25} parent=15 // pred_check
        %p159 = pneg %p30
      $region18: #{inception_d_forward.25} parent=15 // pred_check_branch
        %161 = sbr.rel (%p159) target = $region20
      $region19: #{inception_d_forward.25} parent=15 // pred_region
        %p162 = scmp.lt.s32.totalorder %s10, 1
        %s163 = scalar_select %p162, %s10, 1
        %s164 = smul.addr %s163, 8
        %s165 = smul.addr %s164, 8
        %s166 = scalar_lea.vmem %s0, %s165
      $region20: #{inception_d_forward.25} parent=15 // pred_fallthru
        _
      // Predicated region
      $region21: #{inception_d_forward.25} parent=15 // pred_check
        %p167 = pneg %p56
      $region22: #{inception_d_forward.25} parent=15 // pred_check_branch
        %169 = sbr.rel (%p167) target = $region24
      $region23: #{inception_d_forward.25} parent=15 // pred_region
        %p170 = scmp.lt.s32.totalorder %s10, 1
        %s171 = scalar_select %p170, %s10, 1
        %s172 = smul.addr %s171, 8
        %s173 = smul.addr %s172, 8
        %s174 = scalar_lea.vmem %s1, %s173
      $region24: #{inception_d_forward.25} parent=15 // pred_fallthru
        _
      // Predicated region
      $region25: #{inception_d_forward.25} parent=15 // pred_check
        %p175 = pneg %p82
      $region26: #{inception_d_forward.25} parent=15 // pred_check_branch
        %177 = sbr.rel (%p175) target = $region28
      $region27: #{inception_d_forward.25} parent=15 // pred_region
        %p178 = scmp.lt.s32.totalorder %s10, 1
        %s179 = scalar_select %p178, %s10, 1
        %s180 = smul.addr %s179, 8
        %s181 = smul.addr %s180, 8
        %s182 = scalar_lea.vmem %s2, %s181
      $region28: #{inception_d_forward.25} parent=15 // pred_fallthru
        _
      // Predicated region
      $region29: #{inception_d_forward.25} parent=15 // pred_check
        %p183 = pneg %p108
      $region30: #{inception_d_forward.25} parent=15 // pred_check_branch
        %185 = sbr.rel (%p183) target = $region32
      $region31: #{inception_d_forward.25} parent=15 // pred_region
        %p186 = scmp.lt.s32.totalorder %s10, 1
        %s187 = scalar_select %p186, %s10, 1
        %s188 = smul.addr %s187, 8
        %s189 = smul.addr %s188, 8
        %s190 = scalar_lea.vmem %s3, %s189
      $region32: #{inception_d_forward.25} parent=15 // pred_fallthru
        _
    $region16: #{inception_d_forward.25} parent=5 // pred_fallthru
      _
    %p191 = scmp.le.s32.totalorder 1, %s10
    %p192 = scmp.lt.s32.totalorder %s10, 3
    %p193 = pnand %p191, %p192
    %p194 = pneg %p193
    // Predicated region
    $region33: #{inception_d_forward.25} parent=5 // pred_check
      _
    $region34: #{inception_d_forward.25} parent=5 // pred_check_branch
      %196 = sbr.rel (%p193) target = $region36
    $region35: #{inception_d_forward.25} parent=5 // pred_region
      %s197 = ssub.s32 %s10, 1
      %p198 = scmp.lt.s32.totalorder %s15, 1
      %s199 = scalar_select %p198, %s15, 1
      %s200 = smul.addr %s199, 8
      %s201 = smul.addr %s200, 8
      %s202 = scalar_lea.vmem %s0, %s201
      %p203 = pneg %p36
      %p204 = pneg %p33
      %p205 = scmp.lt.s32.totalorder %s15, 1
      %s206 = scalar_select %p205, %s15, 1
      %s207 = smul.addr %s206, 8
      %s208 = smul.addr %s207, 8
      %s209 = scalar_lea.vmem %s1, %s208
      %p210 = pneg %p62
      %p211 = pneg %p59
      %p212 = scmp.lt.s32.totalorder %s15, 1
      %s213 = scalar_select %p212, %s15, 1
      %s214 = smul.addr %s213, 8
      %s215 = smul.addr %s214, 8
      %s216 = scalar_lea.vmem %s2, %s215
      %p217 = pneg %p88
      %p218 = pneg %p85
      %p219 = scmp.lt.s32.totalorder %s15, 1
      %s220 = scalar_select %p219, %s15, 1
      %s221 = smul.addr %s220, 8
      %s222 = smul.addr %s221, 8
      %s223 = scalar_lea.vmem %s3, %s222
      %p224 = pneg %p114
      %p225 = pneg %p111
      %p226 = pneg %p140
      %p227 = pneg %p137
      %p228 = scmp.lt.s32.totalorder %s15, 1
      %s229 = scalar_select %p228, %s15, 1
      %s230 = smul.addr %s229, 7
      %s231 = smul.addr %s230, 8
      %s232 = scalar_lea.vmem %s4, %s231
      %p233 = scmp.lt.s32.totalorder %s15, 1
      %s234 = scalar_select %p233, %s15, 1
      %s235 = smul.addr %s234, 8
      %s236 = smul.addr %s235, 8
      %s237 = scalar_lea.vmem %s0, %s236
      %p238 = scmp.lt.s32.totalorder %s15, 1
      %s239 = scalar_select %p238, %s15, 1
      %s240 = smul.addr %s239, 8
      %s241 = smul.addr %s240, 8
      %s242 = scalar_lea.vmem %s1, %s241
      %p243 = scmp.lt.s32.totalorder %s15, 1
      %s244 = scalar_select %p243, %s15, 1
      %s245 = smul.addr %s244, 8
      %s246 = smul.addr %s245, 8
      %s247 = scalar_lea.vmem %s2, %s246
      %p248 = scmp.lt.s32.totalorder %s15, 1
      %s249 = scalar_select %p248, %s15, 1
      %s250 = smul.addr %s249, 8
      %s251 = smul.addr %s250, 8
      %s252 = scalar_lea.vmem %s3, %s251
      %p253 = scmp.lt.s32.totalorder %s15, 1
      %s254 = scalar_select %p253, %s15, 1
      %s255 = smul.addr %s254, 7
      %s256 = smul.addr %s255, 8
      %s257 = scalar_lea.vmem %s4, %s256
      %v258 = vld [vmem:[%s237] sm:$0x7f]
      %v259 = vld [vmem:[%s237 + $0x8] sm:$0x7f]
      %v260 = vld [vmem:[%s237 + $0x10] sm:$0x7f]
      %v261 = vld [vmem:[%s237 + $0x18] sm:$0x7f]
      %v262 = vld [vmem:[%s237 + $0x20] sm:$0x7f]
      %v263 = vld [vmem:[%s237 + $0x28] sm:$0x7f]
      %v264 = vld [vmem:[%s237 + $0x30] sm:$0x7f]
      %v265 = vld [vmem:[%s237 + $0x1] sm:$0x7f]
      %v266 = vld [vmem:[%s237 + $0x9] sm:$0x7f]
      %v267 = vld [vmem:[%s237 + $0x11] sm:$0x7f]
      %v268 = vld [vmem:[%s237 + $0x19] sm:$0x7f]
      %v269 = vld [vmem:[%s237 + $0x21] sm:$0x7f]
      %v270 = vld [vmem:[%s237 + $0x29] sm:$0x7f]
      %v271 = vld [vmem:[%s237 + $0x31] sm:$0x7f]
      %v272 = vmax.f32 %v258, %v265
      %v273 = vmax.f32 %v259, %v266
      %v274 = vmax.f32 %v260, %v267
      %v275 = vmax.f32 %v261, %v268
      %v276 = vmax.f32 %v262, %v269
      %v277 = vmax.f32 %v263, %v270
      %v278 = vmax.f32 %v264, %v271
      %s279 = scalar_lea.vmem %s237, 8
      %v280 = vld [vmem:[%s279] sm:$0x7f]
      %v281 = vld [vmem:[%s279 + $0x8] sm:$0x7f]
      %v282 = vld [vmem:[%s279 + $0x10] sm:$0x7f]
      %v283 = vld [vmem:[%s279 + $0x18] sm:$0x7f]
      %v284 = vld [vmem:[%s279 + $0x20] sm:$0x7f]
      %v285 = vld [vmem:[%s279 + $0x28] sm:$0x7f]
      %v286 = vld [vmem:[%s279 + $0x30] sm:$0x7f]
      %v287 = vmax.f32 %v272, %v280
      %v288 = vmax.f32 %v273, %v281
      %v289 = vmax.f32 %v274, %v282
      %v290 = vmax.f32 %v275, %v283
      %v291 = vmax.f32 %v276, %v284
      %v292 = vmax.f32 %v277, %v285
      %v293 = vmax.f32 %v278, %v286
      %v294 = vld [vmem:[%s279 + $0x1] sm:$0x7f]
      %v295 = vld [vmem:[%s279 + $0x9] sm:$0x7f]
      %v296 = vld [vmem:[%s279 + $0x11] sm:$0x7f]
      %v297 = vld [vmem:[%s279 + $0x19] sm:$0x7f]
      %v298 = vld [vmem:[%s279 + $0x21] sm:$0x7f]
      %v299 = vld [vmem:[%s279 + $0x29] sm:$0x7f]
      %v300 = vld [vmem:[%s279 + $0x31] sm:$0x7f]
      %v301 = vmax.f32 %v287, %v294
      %v302 = vmax.f32 %v288, %v295
      %v303 = vmax.f32 %v289, %v296
      %v304 = vmax.f32 %v290, %v297
      %v305 = vmax.f32 %v291, %v298
      %v306 = vmax.f32 %v292, %v299
      %v307 = vmax.f32 %v293, %v300
      %v308 = vld [vmem:[%s242] sm:$0x7f]
      %v309 = vld [vmem:[%s242 + $0x8] sm:$0x7f]
      %v310 = vld [vmem:[%s242 + $0x10] sm:$0x7f]
      %v311 = vld [vmem:[%s242 + $0x18] sm:$0x7f]
      %v312 = vld [vmem:[%s242 + $0x20] sm:$0x7f]
      %v313 = vld [vmem:[%s242 + $0x28] sm:$0x7f]
      %v314 = vld [vmem:[%s242 + $0x30] sm:$0x7f]
      %v315 = vmax.f32 %v301, %v308
      %v316 = vmax.f32 %v302, %v309
      %v317 = vmax.f32 %v303, %v310
      %v318 = vmax.f32 %v304, %v311
      %v319 = vmax.f32 %v305, %v312
      %v320 = vmax.f32 %v306, %v313
      %v321 = vmax.f32 %v307, %v314
      %s322 = scalar_lea.vmem %s242, 8
      %v323 = vld [vmem:[%s322] sm:$0x7f]
      %v324 = vld [vmem:[%s322 + $0x8] sm:$0x7f]
      %v325 = vld [vmem:[%s322 + $0x10] sm:$0x7f]
      %v326 = vld [vmem:[%s322 + $0x18] sm:$0x7f]
      %v327 = vld [vmem:[%s322 + $0x20] sm:$0x7f]
      %v328 = vld [vmem:[%s322 + $0x28] sm:$0x7f]
      %v329 = vld [vmem:[%s322 + $0x30] sm:$0x7f]
      %v330 = vmax.f32 %v315, %v323
      %v331 = vmax.f32 %v316, %v324
      %v332 = vmax.f32 %v317, %v325
      %v333 = vmax.f32 %v318, %v326
      %v334 = vmax.f32 %v319, %v327
      %v335 = vmax.f32 %v320, %v328
      %v336 = vmax.f32 %v321, %v329
      %v337 = vld [vmem:[%s247] sm:$0x7f]
      %v338 = vld [vmem:[%s247 + $0x8] sm:$0x7f]
      %v339 = vld [vmem:[%s247 + $0x10] sm:$0x7f]
      %v340 = vld [vmem:[%s247 + $0x18] sm:$0x7f]
      %v341 = vld [vmem:[%s247 + $0x20] sm:$0x7f]
      %v342 = vld [vmem:[%s247 + $0x28] sm:$0x7f]
      %v343 = vld [vmem:[%s247 + $0x30] sm:$0x7f]
      %v344 = vmax.f32 %v330, %v337
      %v345 = vmax.f32 %v331, %v338
      %v346 = vmax.f32 %v332, %v339
      %v347 = vmax.f32 %v333, %v340
      %v348 = vmax.f32 %v334, %v341
      %v349 = vmax.f32 %v335, %v342
      %v350 = vmax.f32 %v336, %v343
      %v351 = vld [vmem:[%s247 + $0x1] sm:$0x7f]
      %v352 = vld [vmem:[%s247 + $0x9] sm:$0x7f]
      %v353 = vld [vmem:[%s247 + $0x11] sm:$0x7f]
      %v354 = vld [vmem:[%s247 + $0x19] sm:$0x7f]
      %v355 = vld [vmem:[%s247 + $0x21] sm:$0x7f]
      %v356 = vld [vmem:[%s247 + $0x29] sm:$0x7f]
      %v357 = vld [vmem:[%s247 + $0x31] sm:$0x7f]
      %v358 = vmax.f32 %v344, %v351
      %v359 = vmax.f32 %v345, %v352
      %v360 = vmax.f32 %v346, %v353
      %v361 = vmax.f32 %v347, %v354
      %v362 = vmax.f32 %v348, %v355
      %v363 = vmax.f32 %v349, %v356
      %v364 = vmax.f32 %v350, %v357
      %v365 = vld [vmem:[%s252] sm:$0x7f]
      %v366 = vld [vmem:[%s252 + $0x8] sm:$0x7f]
      %v367 = vld [vmem:[%s252 + $0x10] sm:$0x7f]
      %v368 = vld [vmem:[%s252 + $0x18] sm:$0x7f]
      %v369 = vld [vmem:[%s252 + $0x20] sm:$0x7f]
      %v370 = vld [vmem:[%s252 + $0x28] sm:$0x7f]
      %v371 = vld [vmem:[%s252 + $0x30] sm:$0x7f]
      %v372 = vmax.f32 %v358, %v365
      %v373 = vmax.f32 %v359, %v366
      %v374 = vmax.f32 %v360, %v367
      %v375 = vmax.f32 %v361, %v368
      %v376 = vmax.f32 %v362, %v369
      %v377 = vmax.f32 %v363, %v370
      %v378 = vmax.f32 %v364, %v371
      %vm379 = vcmask 30720
      %380 = vst.msk [vmem:[%s257] sm:$0x7f] %vm379, %v372
      %381 = vst.msk [vmem:[%s257 + $0x8] sm:$0x7f] %vm379, %v373
      %382 = vst.msk [vmem:[%s257 + $0x10] sm:$0x7f] %vm379, %v374
      %383 = vst.msk [vmem:[%s257 + $0x18] sm:$0x7f] %vm379, %v375
      %384 = vst.msk [vmem:[%s257 + $0x20] sm:$0x7f] %vm379, %v376
      %385 = vst.msk [vmem:[%s257 + $0x28] sm:$0x7f] %vm379, %v377
      %386 = vst.msk [vmem:[%s257 + $0x30] sm:$0x7f] %vm379, %v378
      %p387 = scmp.lt.s32.totalorder %s15, 1
      %s388 = scalar_select %p387, %s15, 1
      %s389 = smul.addr %s388, 7
      %s390 = smul.addr %s389, 8
      %s391 = scalar_lea.vmem %s4, %s390
      // Predicated region
      $region37: #{inception_d_forward.25} parent=35 // pred_check
        %p392 = pneg %p137
      $region38: #{inception_d_forward.25} parent=35 // pred_check_branch
        %394 = sbr.rel (%p392) target = $region40
      $region39: #{inception_d_forward.25} parent=35 // pred_region
        _
      $region40: #{inception_d_forward.25} parent=35 // pred_fallthru
        _
    $region36: #{inception_d_forward.25} parent=5 // pred_fallthru
      _
    %p395 = scmp.le.s32.totalorder 2, %s10
    // Predicated region
    $region41: #{inception_d_forward.25} parent=5 // pred_check
      %p396 = pneg %p395
    $region42: #{inception_d_forward.25} parent=5 // pred_check_branch
      %398 = sbr.rel (%p396) target = $region44
    $region43: #{inception_d_forward.25} parent=5 // pred_region
      %s399 = ssub.s32 %s10, 2
      // Predicated region
      $region45: #{inception_d_forward.25} parent=43 // pred_check
        %p400 = pneg %p143
      $region46: #{inception_d_forward.25} parent=43 // pred_check_branch
        %402 = sbr.rel (%p400) target = $region48
      $region47: #{inception_d_forward.25} parent=43 // pred_region
        %p403 = scmp.lt.s32.totalorder %s16, 1
        %s404 = scalar_select %p403, %s16, 1
        %s405 = smul.addr %s404, 7
        %s406 = smul.addr %s405, 8
        %s407 = scalar_lea.vmem %s4, %s406
      $region48: #{inception_d_forward.25} parent=43 // pred_fallthru
        _
    $region44: #{inception_d_forward.25} parent=5 // pred_fallthru
      _
  $region6: #{inception_d_forward.25} parent=0 // loop_footer
    %s14 = sadd.s32 1, %s10
  $region7: #{inception_d_forward.25} parent=0 // loop_footer_branch
    %9 = sbr.rel target = $region3
  $region8: #{inception_d_forward.25} parent=0 // loop_exit
    _

// kernel: inception_d_forward.19
$region0: #{inception_d_forward.19}
  #allocation0 [shape = 'u32[]', space=smem, size = 0x4, offset = 0x4, fixed_abs, tag = 'smem constant byte address 0x4 - core index']
  #allocation1 [shape = 'u32[72,128]{1,0:T(1,128)}', space=vmem, size = 0x9000, scoped, tag = 'internal scratch']
  #allocation2 [shape = 'f32[256,48]{1,0:T(8,128)}', space=vmem, size = 0x20000, scoped, tag = 'scratch operand']
  %s0 = inlined_call_operand.vmem [shape: bf16[2,352,48], index: 0, kind: input, shape index: {}]
  %s1 = inlined_call_operand.vmem [shape: bf16[7,48,48], index: 1, kind: input, shape index: {}]
  %s2 = inlined_call_operand.vmem [shape: bf16[2,256,48], index: 2, kind: output, shape index: {0}]
  %s3 = inlined_call_operand.vmem [shape: f32[8,48], index: 3, kind: output, shape index: {1}]
  %s4 = inlined_call_operand.vmem [shape: f32[8,48], index: 4, kind: output, shape index: {2}]
  %5 = xla_tuple %s2, %s3, %s4
  %s6 = sld [smem:[#allocation0]]
  $region61: #{inception_d_forward.19} parent=0
    _
  %s8 = ssub.s32 1, %s6
  %s9 = scalar_select 0, %s8, %s6
  loop: start=0, step=1, limit=4
  $region2: #{inception_d_forward.19} parent=0 // loop_pre_header
    _
  $region3: #{inception_d_forward.19} parent=0 // loop_header
    %s11 = sphi 0, %s15
    %p12 = scmp.ge.s32.totalorder %s11, 4
    %s18 = sphi 0, %s30
    %s19 = sphi 0, %s26
    %s20 = sphi 0, %s18
    %s21 = sphi 0, %s19
    %s22 = sphi 0, %s20
    %s23 = sphi 0, %s21
    %s37 = sphi 0, %s39
    %s40 = sphi 0, %s37
    %s41 = sphi 0, %s40
    %s57 = sphi 0, %s41
    %s61 = sphi 0, %s61
    %s63 = sphi 0, %s61
    %s64 = sphi 0, %s63
    %s78 = sphi 0, %s64
    %s88 = sphi 0, %s90
    %s91 = sphi 0, %s88
    %s92 = sphi 0, %s91
    %s108 = sphi 0, %s92
    %s114 = sphi 0, %s116
    %s117 = sphi 0, %s114
    %s118 = sphi 0, %s117
    %s134 = sphi 0, %s118
    %s140 = sphi 0, %s142
    %s143 = sphi 0, %s140
    %s144 = sphi 0, %s143
    %s160 = sphi 0, %s144
  $region4: #{inception_d_forward.19} parent=0 // loop_header_branch
    %14 = sbr.rel (%p12) target = $region8
  $region5: #{inception_d_forward.19} parent=0 // loop_body
    %s16 = ssub.s32 %s11, 1
    %s17 = ssub.s32 %s11, 2
    %s24 = sadd.s32 1, %s19
    %p25 = scmp.ge.s32.totalorder %s24, 2
    %s26 = scalar_select %p25, 0, %s24
    %s27 = sadd.s32 1, %s18
    %s28 = scalar_select %p25, %s27, %s18
    %p29 = scmp.ge.s32.totalorder %s28, 1
    %s30 = scalar_select %p29, 0, %s28
    %s31 = smul.u32 %s18, 2
    %s32 = sadd.s32 %s31, %s19
    %s33 = smul.u32 %s30, 2
    %s34 = sadd.s32 %s33, %s26
    %s35 = ssub.s32 %s32, %s34
    %p36 = scmp.eq.s32.totalorder %s35, 0
    %s38 = sadd.s32 %s37, 1
    %s39 = scalar_select %p36, %s37, %s38
    %p42 = pneg %p36
    %p43 = scmp.eq.s32.totalorder %s11, 1
    %p44 = por %p42, %p43
    %p45 = scmp.ne.s32.totalorder %s37, %s40
    %p46 = scmp.eq.s32.totalorder %s11, 0
    %p47 = por %p45, %p46
    %p48 = scmp.ne.s32.totalorder %s37, %s40
    %p49 = scmp.eq.s32.totalorder %s16, 1
    %p50 = por %p48, %p49
    %p51 = scmp.ne.s32.totalorder %s40, %s41
    %p52 = scmp.eq.s32.totalorder %s16, 0
    %p53 = por %p51, %p52
    %p54 = scmp.ne.s32.totalorder %s40, %s41
    %p55 = scmp.eq.s32.totalorder %s17, 1
    %p56 = por %p54, %p55
    %p58 = scmp.ne.s32.totalorder %s41, %s57
    %p59 = scmp.eq.s32.totalorder %s17, 0
    %p60 = por %p58, %p59
    %s62 = sadd.s32 %s61, 1
    %p65 = scmp.eq.s32.totalorder %s11, 1
    %p66 = scmp.ne.s32.totalorder %s61, %s63
    %p67 = scmp.eq.s32.totalorder %s11, 0
    %p68 = por %p66, %p67
    %p69 = scmp.ne.s32.totalorder %s61, %s63
    %p70 = scmp.eq.s32.totalorder %s16, 1
    %p71 = por %p69, %p70
    %p72 = scmp.ne.s32.totalorder %s63, %s64
    %p73 = scmp.eq.s32.totalorder %s16, 0
    %p74 = por %p72, %p73
    %p75 = scmp.ne.s32.totalorder %s63, %s64
    %p76 = scmp.eq.s32.totalorder %s17, 1
    %p77 = por %p75, %p76
    %p79 = scmp.ne.s32.totalorder %s64, %s78
    %p80 = scmp.eq.s32.totalorder %s17, 0
    %p81 = por %p79, %p80
    %s82 = smul.u32 %s18, 2
    %s83 = sadd.s32 %s82, %s19
    %s84 = smul.u32 %s30, 2
    %s85 = sadd.s32 %s84, %s26
    %s86 = ssub.s32 %s83, %s85
    %p87 = scmp.eq.s32.totalorder %s86, 0
    %s89 = sadd.s32 %s88, 1
    %s90 = scalar_select %p87, %s88, %s89
    %p93 = pneg %p87
    %p94 = scmp.eq.s32.totalorder %s11, 1
    %p95 = por %p93, %p94
    %p96 = scmp.ne.s32.totalorder %s88, %s91
    %p97 = scmp.eq.s32.totalorder %s11, 0
    %p98 = por %p96, %p97
    %p99 = scmp.ne.s32.totalorder %s88, %s91
    %p100 = scmp.eq.s32.totalorder %s16, 1
    %p101 = por %p99, %p100
    %p102 = scmp.ne.s32.totalorder %s91, %s92
    %p103 = scmp.eq.s32.totalorder %s16, 0
    %p104 = por %p102, %p103
    %p105 = scmp.ne.s32.totalorder %s91, %s92
    %p106 = scmp.eq.s32.totalorder %s17, 1
    %p107 = por %p105, %p106
    %p109 = scmp.ne.s32.totalorder %s92, %s108
    %p110 = scmp.eq.s32.totalorder %s17, 0
    %p111 = por %p109, %p110
    %s112 = ssub.s32 %s18, %s30
    %p113 = scmp.eq.s32.totalorder %s112, 0
    %s115 = sadd.s32 %s114, 1
    %s116 = scalar_select %p113, %s114, %s115
    %p119 = pneg %p113
    %p120 = scmp.eq.s32.totalorder %s11, 1
    %p121 = por %p119, %p120
    %p122 = scmp.ne.s32.totalorder %s114, %s117
    %p123 = scmp.eq.s32.totalorder %s11, 0
    %p124 = por %p122, %p123
    %p125 = scmp.ne.s32.totalorder %s114, %s117
    %p126 = scmp.eq.s32.totalorder %s16, 1
    %p127 = por %p125, %p126
    %p128 = scmp.ne.s32.totalorder %s117, %s118
    %p129 = scmp.eq.s32.totalorder %s16, 0
    %p130 = por %p128, %p129
    %p131 = scmp.ne.s32.totalorder %s117, %s118
    %p132 = scmp.eq.s32.totalorder %s17, 1
    %p133 = por %p131, %p132
    %p135 = scmp.ne.s32.totalorder %s118, %s134
    %p136 = scmp.eq.s32.totalorder %s17, 0
    %p137 = por %p135, %p136
    %s138 = ssub.s32 %s18, %s30
    %p139 = scmp.eq.s32.totalorder %s138, 0
    %s141 = sadd.s32 %s140, 1
    %s142 = scalar_select %p139, %s140, %s141
    %p145 = pneg %p139
    %p146 = scmp.eq.s32.totalorder %s11, 1
    %p147 = por %p145, %p146
    %p148 = scmp.ne.s32.totalorder %s140, %s143
    %p149 = scmp.eq.s32.totalorder %s11, 0
    %p150 = por %p148, %p149
    %p151 = scmp.ne.s32.totalorder %s140, %s143
    %p152 = scmp.eq.s32.totalorder %s16, 1
    %p153 = por %p151, %p152
    %p154 = scmp.ne.s32.totalorder %s143, %s144
    %p155 = scmp.eq.s32.totalorder %s16, 0
    %p156 = por %p154, %p155
    %p157 = scmp.ne.s32.totalorder %s143, %s144
    %p158 = scmp.eq.s32.totalorder %s17, 1
    %p159 = por %p157, %p158
    %p161 = scmp.ne.s32.totalorder %s144, %s160
    %p162 = scmp.eq.s32.totalorder %s17, 0
    %p163 = por %p161, %p162
    %p164 = scmp.le.s32.totalorder 1, %s11
    %p165 = scmp.lt.s32.totalorder %s11, 3
    %p166 = pnand %p164, %p165
    %p167 = pneg %p166
    // Predicated region
    $region9: #{inception_d_forward.19} parent=5 // pred_check
      _
    $region10: #{inception_d_forward.19} parent=5 // pred_check_branch
      %169 = sbr.rel (%p166) target = $region12
    $region11: #{inception_d_forward.19} parent=5 // pred_region
      %s170 = ssub.s32 %s11, 1
      // Predicated region
      $region13: #{inception_d_forward.19} parent=11 // pred_check
        %p171 = pneg %p74
      $region14: #{inception_d_forward.19} parent=11 // pred_check_branch
        %173 = sbr.rel (%p171) target = $region16
      $region15: #{inception_d_forward.19} parent=11 // pred_region
        _
      $region16: #{inception_d_forward.19} parent=11 // pred_fallthru
        _
    $region12: #{inception_d_forward.19} parent=5 // pred_fallthru
      _
    %p174 = scmp.lt.s32.totalorder %s11, 2
    // Predicated region
    $region17: #{inception_d_forward.19} parent=5 // pred_check
      %p175 = pneg %p174
    $region18: #{inception_d_forward.19} parent=5 // pred_check_branch
      %177 = sbr.rel (%p175) target = $region20
    $region19: #{inception_d_forward.19} parent=5 // pred_region
      // Predicated region
      $region21: #{inception_d_forward.19} parent=19 // pred_check
        %p178 = pneg %p47
      $region22: #{inception_d_forward.19} parent=19 // pred_check_branch
        %180 = sbr.rel (%p178) target = $region24
      $region23: #{inception_d_forward.19} parent=19 // pred_region
        %s181 = smul.u32 %s18, 2
        %s182 = sadd.s32 %s181, %s19
        %p183 = scmp.lt.s32.totalorder %s182, 1
        %s184 = scalar_select %p183, %s182, 1
        %s185 = smul.addr %s184, 44
        %s186 = smul.addr %s185, 4
        %s187 = scalar_lea.vmem %s0, %s186
        %s188 = smul.u32 %s18, 2
        %s189 = sadd.s32 %s188, %s19
      $region24: #{inception_d_forward.19} parent=19 // pred_fallthru
        _
    $region20: #{inception_d_forward.19} parent=5 // pred_fallthru
      _
    %p190 = scmp.le.s32.totalorder 1, %s11
    %p191 = scmp.lt.s32.totalorder %s11, 3
    %p192 = pnand %p190, %p191
    %p193 = pneg %p192
    // Predicated region
    $region25: #{inception_d_forward.19} parent=5 // pred_check
      _
    $region26: #{inception_d_forward.19} parent=5 // pred_check_branch
      %195 = sbr.rel (%p192) target = $region28
    $region27: #{inception_d_forward.19} parent=5 // pred_region
      %s196 = ssub.s32 %s11, 1
      %s197 = smul.u32 %s20, 2
      %s198 = sadd.s32 %s197, %s21
      %p199 = scmp.lt.s32.totalorder %s198, 1
      %s200 = scalar_select %p199, %s198, 1
      %s201 = smul.addr %s200, 44
      %s202 = smul.addr %s201, 4
      %s203 = scalar_lea.vmem %s0, %s202
      %p204 = pneg %p53
      %p205 = pneg %p50
      %p206 = pneg %p74
      %p207 = pneg %p71
      %p208 = pneg %p104
      %p209 = pneg %p101
      %s210 = smul.u32 %s20, 2
      %s211 = sadd.s32 %s210, %s21
      %p212 = scmp.lt.s32.totalorder %s211, 1
      %s213 = scalar_select %p212, %s211, 1
      %s214 = smul.addr %s213, 32
      %s215 = smul.addr %s214, 4
      %s216 = scalar_lea.vmem %s2, %s215
      %p217 = pneg %p130
      %p218 = pneg %p127
      %p219 = scmp.lt.s32.totalorder %s20, 0
      %s220 = scalar_select %p219, %s20, 0
      %s221 = smul.addr %s220, 8
      %s222 = scalar_lea.vmem %s3, %s221
      %p223 = pneg %p156
      %p224 = pneg %p153
      %p225 = scmp.lt.s32.totalorder %s20, 0
      %s226 = scalar_select %p225, %s20, 0
      %s227 = smul.addr %s226, 8
      %s228 = scalar_lea.vmem %s4, %s227
      %s229 = smul.u32 %s20, 2
      %s230 = sadd.s32 %s229, %s21
      %p231 = scmp.lt.s32.totalorder %s230, 1
      %s232 = scalar_select %p231, %s230, 1
      %s233 = smul.addr %s232, 44
      %s234 = smul.addr %s233, 4
      %s235 = scalar_lea.vmem %s0, %s234
      %s236 = smul.u32 %s20, 2
      %s237 = sadd.s32 %s236, %s21
      %s238 = smul.u32 %s20, 2
      %s239 = sadd.s32 %s238, %s21
      %p240 = scmp.lt.s32.totalorder %s239, 1
      %s241 = scalar_select %p240, %s239, 1
      %s242 = smul.addr %s241, 32
      %s243 = smul.addr %s242, 4
      %s244 = scalar_lea.vmem %s2, %s243
      %s245 = smul.u32 %s20, 2
      %s246 = sadd.s32 %s245, %s21
      %p247 = scmp.lt.s32.totalorder %s20, 0
      %s248 = scalar_select %p247, %s20, 0
      %s249 = smul.addr %s248, 8
      %s250 = scalar_lea.vmem %s3, %s249
      %p251 = scmp.lt.s32.totalorder %s20, 0
      %s252 = scalar_select %p251, %s20, 0
      %s253 = smul.addr %s252, 8
      %s254 = scalar_lea.vmem %s4, %s253
      %p256 = scmp.eq.s32.totalorder %s21, 0
      // Predicated region
      $region29: #{inception_d_forward.19} parent=27 // pred_check
        %p257 = pneg %p256
      $region30: #{inception_d_forward.19} parent=27 // pred_check_branch
        %259 = sbr.rel (%p257) target = $region32
      $region31: #{inception_d_forward.19} parent=27 // pred_region
        %vm260 = vcmask 392192
        %261 = vst.msk [vmem:[%s250] sm:$0xff] %vm260, 0.0
        %262 = vst.msk [vmem:[%s254] sm:$0xff] %vm260, 0.0
      $region32: #{inception_d_forward.19} parent=27 // pred_fallthru
        _
      %v263 = vld [vmem:[%s235] sm:$0xf]
      %v264 = vld [vmem:[%s235 + $0x4] sm:$0xf]
      %v265 = vld [vmem:[%s235 + $0x8] sm:$0xf]
      %v266 = vld [vmem:[%s235 + $0xc] sm:$0xf]
      %v267 = vld [vmem:[%s235 + $0x10] sm:$0xf]
      %v268 = vld [vmem:[%s235 + $0x14] sm:$0xf]
      %v269 = vld [vmem:[%s235 + $0x18] sm:$0xf]
      %v270 = vld [vmem:[%s235 + $0x1c] sm:$0xf]
      %v271 = vld [vmem:[%s235 + $0x20] sm:$0xf]
      %v272 = vld [vmem:[%s235 + $0x24] sm:$0xf]
      %v273 = vld [vmem:[%s235 + $0x28] sm:$0xf]
      %v274 = vld [vmem:[%s235 + $0x2c] sm:$0xf]
      %v275 = vld [vmem:[%s235 + $0x30] sm:$0xf]
      %v276 = vld [vmem:[%s235 + $0x34] sm:$0xf]
      %v277 = vld [vmem:[%s235 + $0x38] sm:$0xf]
      %v278 = vld [vmem:[%s235 + $0x3c] sm:$0xf]
      %v279 = vld [vmem:[%s235 + $0x40] sm:$0xf]
      %v280 = vld [vmem:[%s235 + $0x44] sm:$0xf]
      %v281 = vld [vmem:[%s235 + $0x48] sm:$0xf]
      %v282 = vld [vmem:[%s235 + $0x4c] sm:$0xf]
      %v283 = vld [vmem:[%s235 + $0x50] sm:$0xf]
      %v284 = vld [vmem:[%s235 + $0x54] sm:$0xf]
      %v285 = vld [vmem:[%s235 + $0x58] sm:$0xf]
      %v286 = vld [vmem:[%s235 + $0x5c] sm:$0xf]
      %v287 = vld [vmem:[%s235 + $0x60] sm:$0xf]
      %v288 = vld [vmem:[%s235 + $0x64] sm:$0xf]
      %v289 = vld [vmem:[%s235 + $0x68] sm:$0xf]
      %v290 = vld [vmem:[%s235 + $0x6c] sm:$0xf]
      %v291 = vld [vmem:[%s235 + $0x70] sm:$0xf]
      %v292 = vld [vmem:[%s235 + $0x74] sm:$0xf]
      %v293 = vld [vmem:[%s235 + $0x78] sm:$0xf]
      %v294 = vld [vmem:[%s235 + $0x7c] sm:$0xf]
      %v295 = vld [vmem:[%s1] sm:$0xf]
      %v296 = vld [vmem:[%s1 + $0x4] sm:$0xf]
      %v297 = vld [vmem:[%s1 + $0x8] sm:$0xf]
      %v298 = vld [vmem:[%s1 + $0xc] sm:$0xf]
      %v299 = vld [vmem:[%s1 + $0x10] sm:$0xf]
      %v300 = vld [vmem:[%s1 + $0x14] sm:$0xf]
      %v333 = vunpack.c.l.b16 %v263
      %v334 = vunpack.c.l.b16 %v264
      %v335 = vunpack.c.l.b16 %v265
      %v336 = vunpack.c.l.b16 %v266
      %v337 = vunpack.c.l.b16 %v267
      %v338 = vunpack.c.l.b16 %v268
      %v339 = vunpack.c.l.b16 %v269
      %v340 = vunpack.c.l.b16 %v270
      %v341 = vunpack.c.l.b16 %v271
      %v342 = vunpack.c.l.b16 %v272
      %v343 = vunpack.c.l.b16 %v273
      %v344 = vunpack.c.l.b16 %v274
      %v345 = vunpack.c.l.b16 %v275
      %v346 = vunpack.c.l.b16 %v276
      %v347 = vunpack.c.l.b16 %v277
      %v348 = vunpack.c.l.b16 %v278
      %v349 = vunpack.c.l.b16 %v279
      %v350 = vunpack.c.l.b16 %v280
      %v351 = vunpack.c.l.b16 %v281
      %v352 = vunpack.c.l.b16 %v282
      %v353 = vunpack.c.l.b16 %v283
      %v354 = vunpack.c.l.b16 %v284
      %v355 = vunpack.c.l.b16 %v285
      %v356 = vunpack.c.l.b16 %v286
      %v357 = vunpack.c.l.b16 %v287
      %v358 = vunpack.c.l.b16 %v288
      %v359 = vunpack.c.l.b16 %v289
      %v360 = vunpack.c.l.b16 %v290
      %v361 = vunpack.c.l.b16 %v291
      %v362 = vunpack.c.l.b16 %v292
      %v363 = vunpack.c.l.b16 %v293
      %v364 = vunpack.c.l.b16 %v294
      %v365 = vpack.c.b16 %v334, %v333
      %v366 = vpack.c.b16 %v336, %v335
      %v367 = vpack.c.b16 %v338, %v337
      %v368 = vpack.c.b16 %v340, %v339
      %v369 = vpack.c.b16 %v342, %v341
      %v370 = vpack.c.b16 %v344, %v343
      %v371 = vpack.c.b16 %v346, %v345
      %v372 = vpack.c.b16 %v348, %v347
      %v373 = vpack.c.b16 %v350, %v349
      %v374 = vpack.c.b16 %v352, %v351
      %v375 = vpack.c.b16 %v354, %v353
      %v376 = vpack.c.b16 %v356, %v355
      %v377 = vpack.c.b16 %v358, %v357
      %v378 = vpack.c.b16 %v360, %v359
      %v379 = vpack.c.b16 %v362, %v361
      %v380 = vpack.c.b16 %v364, %v363
      %v387 = vunpack.c.l.b16 %v295
      %v388 = vunpack.c.l.b16 %v296
      %v389 = vunpack.c.l.b16 %v297
      %v390 = vunpack.c.l.b16 %v298
      %v391 = vunpack.c.l.b16 %v299
      %v392 = vunpack.c.l.b16 %v300
      %v393 = vpack.c.b16 %v388, %v387
      %v394 = vpack.c.b16 %v390, %v389
      %v395 = vpack.c.b16 %v392, %v391
      %vm399 = vcmask 392192
      %v401 = vsel %vm399, %v365, 0
      %v404 = vsel %vm399, %v366, 0
      %v407 = vsel %vm399, %v367, 0
      %v410 = vsel %vm399, %v368, 0
      %v413 = vsel %vm399, %v369, 0
      %v416 = vsel %vm399, %v370, 0
      %v419 = vsel %vm399, %v371, 0
      %v422 = vsel %vm399, %v372, 0
      %v425 = vsel %vm399, %v373, 0
      %v428 = vsel %vm399, %v374, 0
      %v431 = vsel %vm399, %v375, 0
      %v434 = vsel %vm399, %v376, 0
      %v437 = vsel %vm399, %v377, 0
      %v440 = vsel %vm399, %v378, 0
      %v443 = vsel %vm399, %v379, 0
      %v446 = vsel %vm399, %v380, 0
      %448 = vmatpush.bf16.msra.mxu0 0
      %449 = vmatpush.bf16.msra.mxu0 0
      %450 = vmatpush.bf16.msra.mxu0 0
      %451 = vmatpush.bf16.msra.mxu0 0
      %452 = vmatpush.bf16.msra.mxu0 0
      %453 = vmatpush.bf16.msra.mxu0 %v395
      %454 = vmatpush.bf16.msra.mxu0 %v394
      %455 = vmatpush.bf16.msra.mxu0 %v393
      %456 = vmatmul.bf16.gmra.mxu0 %v401
      %v457 = vpop.f32.mrf.mxu0
      %v458 = vadd.f32 0.0, %v457
      %v459 = vpop.f32.mrf.mxu0
      %v460 = vadd.f32 0.0, %v459
      %461 = vmatmul.bf16.gmra.mxu0 %v404
      %v462 = vpop.f32.mrf.mxu0
      %v463 = vadd.f32 0.0, %v462
      %v464 = vpop.f32.mrf.mxu0
      %v465 = vadd.f32 0.0, %v464
      %466 = vmatmul.bf16.gmra.mxu0 %v407
      %v467 = vpop.f32.mrf.mxu0
      %v468 = vadd.f32 0.0, %v467
      %v469 = vpop.f32.mrf.mxu0
      %v470 = vadd.f32 0.0, %v469
      %471 = vmatmul.bf16.gmra.mxu0 %v410
      %v472 = vpop.f32.mrf.mxu0
      %v473 = vadd.f32 0.0, %v472
      %v474 = vpop.f32.mrf.mxu0
      %v475 = vadd.f32 0.0, %v474
      %476 = vmatmul.bf16.gmra.mxu0 %v413
      %v477 = vpop.f32.mrf.mxu0
      %v478 = vadd.f32 0.0, %v477
      %v479 = vpop.f32.mrf.mxu0
      %v480 = vadd.f32 0.0, %v479
      %481 = vmatmul.bf16.gmra.mxu0 %v416
      %v482 = vpop.f32.mrf.mxu0
      %v483 = vadd.f32 0.0, %v482
      %v484 = vpop.f32.mrf.mxu0
      %v485 = vadd.f32 0.0, %v484
      %486 = vmatmul.bf16.gmra.mxu0 %v419
      %v487 = vpop.f32.mrf.mxu0
      %v488 = vadd.f32 0.0, %v487
      %v489 = vpop.f32.mrf.mxu0
      %v490 = vadd.f32 0.0, %v489
      %491 = vmatmul.bf16.gmra.mxu0 %v422
      %v492 = vpop.f32.mrf.mxu0
      %v493 = vadd.f32 0.0, %v492
      %v494 = vpop.f32.mrf.mxu0
      %v495 = vadd.f32 0.0, %v494
      %496 = vmatmul.bf16.gmra.mxu0 %v425
      %v497 = vpop.f32.mrf.mxu0
      %v498 = vadd.f32 0.0, %v497
      %v499 = vpop.f32.mrf.mxu0
      %v500 = vadd.f32 0.0, %v499
      %501 = vmatmul.bf16.gmra.mxu0 %v428
      %v502 = vpop.f32.mrf.mxu0
      %v503 = vadd.f32 0.0, %v502
      %v504 = vpop.f32.mrf.mxu0
      %v505 = vadd.f32 0.0, %v504
      %506 = vmatmul.bf16.gmra.mxu0 %v431
      %v507 = vpop.f32.mrf.mxu0
      %v508 = vadd.f32 0.0, %v507
      %v509 = vpop.f32.mrf.mxu0
      %v510 = vadd.f32 0.0, %v509
      %511 = vmatmul.bf16.gmra.mxu0 %v434
      %v512 = vpop.f32.mrf.mxu0
      %v513 = vadd.f32 0.0, %v512
      %v514 = vpop.f32.mrf.mxu0
      %v515 = vadd.f32 0.0, %v514
      %516 = vmatmul.bf16.gmra.mxu0 %v437
      %v517 = vpop.f32.mrf.mxu0
      %v518 = vadd.f32 0.0, %v517
      %v519 = vpop.f32.mrf.mxu0
      %v520 = vadd.f32 0.0, %v519
      %521 = vmatmul.bf16.gmra.mxu0 %v440
      %v522 = vpop.f32.mrf.mxu0
      %v523 = vadd.f32 0.0, %v522
      %v524 = vpop.f32.mrf.mxu0
      %v525 = vadd.f32 0.0, %v524
      %526 = vmatmul.bf16.gmra.mxu0 %v443
      %v527 = vpop.f32.mrf.mxu0
      %v528 = vadd.f32 0.0, %v527
      %v529 = vpop.f32.mrf.mxu0
      %v530 = vadd.f32 0.0, %v529
      %531 = vmatmul.bf16.gmra.mxu0 %v446
      %v532 = vpop.f32.mrf.mxu0
      %v533 = vadd.f32 0.0, %v532
      %v534 = vpop.f32.mrf.mxu0
      %v535 = vadd.f32 0.0, %v534
      %536 = vdwg.mxu0
      %537 = vst.msk [vmem:[#allocation2] sm:$0xff] %vm399, %v458
      %538 = vst.msk [vmem:[#allocation2 + $0x8] sm:$0xff] %vm399, %v460
      %539 = vst.msk [vmem:[#allocation2 + $0x10] sm:$0xff] %vm399, %v463
      %540 = vst.msk [vmem:[#allocation2 + $0x18] sm:$0xff] %vm399, %v465
      %541 = vst.msk [vmem:[#allocation2 + $0x20] sm:$0xff] %vm399, %v468
      %542 = vst.msk [vmem:[#allocation2 + $0x28] sm:$0xff] %vm399, %v470
      %543 = vst.msk [vmem:[#allocation2 + $0x30] sm:$0xff] %vm399, %v473
      %544 = vst.msk [vmem:[#allocation2 + $0x38] sm:$0xff] %vm399, %v475
      %545 = vst.msk [vmem:[#allocation2 + $0x40] sm:$0xff] %vm399, %v478
      %546 = vst.msk [vmem:[#allocation2 + $0x48] sm:$0xff] %vm399, %v480
      %547 = vst.msk [vmem:[#allocation2 + $0x50] sm:$0xff] %vm399, %v483
      %548 = vst.msk [vmem:[#allocation2 + $0x58] sm:$0xff] %vm399, %v485
      %549 = vst.msk [vmem:[#allocation2 + $0x60] sm:$0xff] %vm399, %v488
      %550 = vst.msk [vmem:[#allocation2 + $0x68] sm:$0xff] %vm399, %v490
      %551 = vst.msk [vmem:[#allocation2 + $0x70] sm:$0xff] %vm399, %v493
      %552 = vst.msk [vmem:[#allocation2 + $0x78] sm:$0xff] %vm399, %v495
      %553 = vst.msk [vmem:[#allocation2 + $0x80] sm:$0xff] %vm399, %v498
      %554 = vst.msk [vmem:[#allocation2 + $0x88] sm:$0xff] %vm399, %v500
      %555 = vst.msk [vmem:[#allocation2 + $0x90] sm:$0xff] %vm399, %v503
      %556 = vst.msk [vmem:[#allocation2 + $0x98] sm:$0xff] %vm399, %v505
      %557 = vst.msk [vmem:[#allocation2 + $0xa0] sm:$0xff] %vm399, %v508
      %558 = vst.msk [vmem:[#allocation2 + $0xa8] sm:$0xff] %vm399, %v510
      %559 = vst.msk [vmem:[#allocation2 + $0xb0] sm:$0xff] %vm399, %v513
      %560 = vst.msk [vmem:[#allocation2 + $0xb8] sm:$0xff] %vm399, %v515
      %561 = vst.msk [vmem:[#allocation2 + $0xc0] sm:$0xff] %vm399, %v518
      %562 = vst.msk [vmem:[#allocation2 + $0xc8] sm:$0xff] %vm399, %v520
      %563 = vst.msk [vmem:[#allocation2 + $0xd0] sm:$0xff] %vm399, %v523
      %564 = vst.msk [vmem:[#allocation2 + $0xd8] sm:$0xff] %vm399, %v525
      %565 = vst.msk [vmem:[#allocation2 + $0xe0] sm:$0xff] %vm399, %v528
      %566 = vst.msk [vmem:[#allocation2 + $0xe8] sm:$0xff] %vm399, %v530
      %567 = vst.msk [vmem:[#allocation2 + $0xf0] sm:$0xff] %vm399, %v533
      %568 = vst.msk [vmem:[#allocation2 + $0xf8] sm:$0xff] %vm399, %v535
      %v569 = vld [vmem:[%s235 + $0x8] sm:$0xf]
      %v570 = vld [vmem:[%s235 + $0xc] sm:$0xf]
      %v571 = vld [vmem:[%s235 + $0x10] sm:$0xf]
      %v572 = vld [vmem:[%s235 + $0x14] sm:$0xf]
      %v573 = vld [vmem:[%s235 + $0x18] sm:$0xf]
      %v574 = vld [vmem:[%s235 + $0x1c] sm:$0xf]
      %v575 = vld [vmem:[%s235 + $0x20] sm:$0xf]
      %v576 = vld [vmem:[%s235 + $0x24] sm:$0xf]
      %v577 = vld [vmem:[%s235 + $0x28] sm:$0xf]
      %v578 = vld [vmem:[%s235 + $0x2c] sm:$0xf]
      %v579 = vld [vmem:[%s235 + $0x30] sm:$0xf]
      %v580 = vld [vmem:[%s235 + $0x34] sm:$0xf]
      %v581 = vld [vmem:[%s235 + $0x38] sm:$0xf]
      %v582 = vld [vmem:[%s235 + $0x3c] sm:$0xf]
      %v583 = vld [vmem:[%s235 + $0x40] sm:$0xf]
      %v584 = vld [vmem:[%s235 + $0x44] sm:$0xf]
      %v585 = vld [vmem:[%s235 + $0x48] sm:$0xf]
      %v586 = vld [vmem:[%s235 + $0x4c] sm:$0xf]
      %v587 = vld [vmem:[%s235 + $0x50] sm:$0xf]
      %v588 = vld [vmem:[%s235 + $0x54] sm:$0xf]
      %v589 = vld [vmem:[%s235 + $0x58] sm:$0xf]
      %v590 = vld [vmem:[%s235 + $0x5c] sm:$0xf]
      %v591 = vld [vmem:[%s235 + $0x60] sm:$0xf]
      %v592 = vld [vmem:[%s235 + $0x64] sm:$0xf]
      %v593 = vld [vmem:[%s235 + $0x68] sm:$0xf]
      %v594 = vld [vmem:[%s235 + $0x6c] sm:$0xf]
      %v595 = vld [vmem:[%s235 + $0x70] sm:$0xf]
      %v596 = vld [vmem:[%s235 + $0x74] sm:$0xf]
      %v597 = vld [vmem:[%s235 + $0x78] sm:$0xf]
      %v598 = vld [vmem:[%s235 + $0x7c] sm:$0xf]
      %v599 = vld [vmem:[%s235 + $0x80] sm:$0xf]
      %v600 = vld [vmem:[%s235 + $0x84] sm:$0xf]
      %s601 = scalar_lea.vmem %s1, 24
      %v602 = vld [vmem:[%s601] sm:$0xf]
      %v603 = vld [vmem:[%s601 + $0x4] sm:$0xf]
      %v604 = vld [vmem:[%s601 + $0x8] sm:$0xf]
      %v605 = vld [vmem:[%s601 + $0xc] sm:$0xf]
      %v606 = vld [vmem:[%s601 + $0x10] sm:$0xf]
      %v607 = vld [vmem:[%s601 + $0x14] sm:$0xf]
      %v640 = vunpack.c.l.b16 %v569
      %v641 = vunpack.c.l.b16 %v570
      %v642 = vunpack.c.l.b16 %v571
      %v643 = vunpack.c.l.b16 %v572
      %v644 = vunpack.c.l.b16 %v573
      %v645 = vunpack.c.l.b16 %v574
      %v646 = vunpack.c.l.b16 %v575
      %v647 = vunpack.c.l.b16 %v576
      %v648 = vunpack.c.l.b16 %v577
      %v649 = vunpack.c.l.b16 %v578
      %v650 = vunpack.c.l.b16 %v579
      %v651 = vunpack.c.l.b16 %v580
      %v652 = vunpack.c.l.b16 %v581
      %v653 = vunpack.c.l.b16 %v582
      %v654 = vunpack.c.l.b16 %v583
      %v655 = vunpack.c.l.b16 %v584
      %v656 = vunpack.c.l.b16 %v585
      %v657 = vunpack.c.l.b16 %v586
      %v658 = vunpack.c.l.b16 %v587
      %v659 = vunpack.c.l.b16 %v588
      %v660 = vunpack.c.l.b16 %v589
      %v661 = vunpack.c.l.b16 %v590
      %v662 = vunpack.c.l.b16 %v591
      %v663 = vunpack.c.l.b16 %v592
      %v664 = vunpack.c.l.b16 %v593
      %v665 = vunpack.c.l.b16 %v594
      %v666 = vunpack.c.l.b16 %v595
      %v667 = vunpack.c.l.b16 %v596
      %v668 = vunpack.c.l.b16 %v597
      %v669 = vunpack.c.l.b16 %v598
      %v670 = vunpack.c.l.b16 %v599
      %v671 = vunpack.c.l.b16 %v600
      %v672 = vpack.c.b16 %v641, %v640
      %v673 = vpack.c.b16 %v643, %v642
      %v674 = vpack.c.b16 %v645, %v644
      %v675 = vpack.c.b16 %v647, %v646
      %v676 = vpack.c.b16 %v649, %v648
      %v677 = vpack.c.b16 %v651, %v650
      %v678 = vpack.c.b16 %v653, %v652
      %v679 = vpack.c.b16 %v655, %v654
      %v680 = vpack.c.b16 %v657, %v656
      %v681 = vpack.c.b16 %v659, %v658
      %v682 = vpack.c.b16 %v661, %v660
      %v683 = vpack.c.b16 %v663, %v662
      %v684 = vpack.c.b16 %v665, %v664
      %v685 = vpack.c.b16 %v667, %v666
      %v686 = vpack.c.b16 %v669, %v668
      %v687 = vpack.c.b16 %v671, %v670
      %v694 = vunpack.c.l.b16 %v602
      %v695 = vunpack.c.l.b16 %v603
      %v696 = vunpack.c.l.b16 %v604
      %v697 = vunpack.c.l.b16 %v605
      %v698 = vunpack.c.l.b16 %v606
      %v699 = vunpack.c.l.b16 %v607
      %v700 = vpack.c.b16 %v695, %v694
      %v701 = vpack.c.b16 %v697, %v696
      %v702 = vpack.c.b16 %v699, %v698
      %v707 = vsel %vm399, %v672, 0
      %v710 = vsel %vm399, %v673, 0
      %v713 = vsel %vm399, %v674, 0
      %v716 = vsel %vm399, %v675, 0
      %v719 = vsel %vm399, %v676, 0
      %v722 = vsel %vm399, %v677, 0
      %v725 = vsel %vm399, %v678, 0
      %v728 = vsel %vm399, %v679, 0
      %v731 = vsel %vm399, %v680, 0
      %v734 = vsel %vm399, %v681, 0
      %v737 = vsel %vm399, %v682, 0
      %v740 = vsel %vm399, %v683, 0
      %v743 = vsel %vm399, %v684, 0
      %v746 = vsel %vm399, %v685, 0
      %v749 = vsel %vm399, %v686, 0
      %v752 = vsel %vm399, %v687, 0
      %754 = vmatpush.bf16.msra.mxu0 0
      %755 = vmatpush.bf16.msra.mxu0 0
      %756 = vmatpush.bf16.msra.mxu0 0
      %757 = vmatpush.bf16.msra.mxu0 0
      %758 = vmatpush.bf16.msra.mxu0 0
      %759 = vmatpush.bf16.msra.mxu0 %v702
      %760 = vmatpush.bf16.msra.mxu0 %v701
      %761 = vmatpush.bf16.msra.mxu0 %v700
      %762 = vmatmul.bf16.gmra.mxu0 %v707
      %v763 = vpop.f32.mrf.mxu0
      %v764 = vadd.f32 0.0, %v763
      %v765 = vpop.f32.mrf.mxu0
      %v766 = vadd.f32 0.0, %v765
      %767 = vmatmul.bf16.gmra.mxu0 %v710
      %v768 = vpop.f32.mrf.mxu0
      %v769 = vadd.f32 0.0, %v768
      %v770 = vpop.f32.mrf.mxu0
      %v771 = vadd.f32 0.0, %v770
      %772 = vmatmul.bf16.gmra.mxu0 %v713
      %v773 = vpop.f32.mrf.mxu0
      %v774 = vadd.f32 0.0, %v773
      %v775 = vpop.f32.mrf.mxu0
      %v776 = vadd.f32 0.0, %v775
      %777 = vmatmul.bf16.gmra.mxu0 %v716
      %v778 = vpop.f32.mrf.mxu0
      %v779 = vadd.f32 0.0, %v778
      %v780 = vpop.f32.mrf.mxu0
      %v781 = vadd.f32 0.0, %v780
      %782 = vmatmul.bf16.gmra.mxu0 %v719
      %v783 = vpop.f32.mrf.mxu0
      %v784 = vadd.f32 0.0, %v783
      %v785 = vpop.f32.mrf.mxu0
      %v786 = vadd.f32 0.0, %v785
      %787 = vmatmul.bf16.gmra.mxu0 %v722
      %v788 = vpop.f32.mrf.mxu0
      %v789 = vadd.f32 0.0, %v788
      %v790 = vpop.f32.mrf.mxu0
      %v791 = vadd.f32 0.0, %v790
      %792 = vmatmul.bf16.gmra.mxu0 %v725
      %v793 = vpop.f32.mrf.mxu0
      %v794 = vadd.f32 0.0, %v793
      %v795 = vpop.f32.mrf.mxu0
      %v796 = vadd.f32 0.0, %v795
      %797 = vmatmul.bf16.gmra.mxu0 %v728
      %v798 = vpop.f32.mrf.mxu0
      %v799 = vadd.f32 0.0, %v798
      %v800 = vpop.f32.mrf.mxu0
      %v801 = vadd.f32 0.0, %v800
      %802 = vmatmul.bf16.gmra.mxu0 %v731
      %v803 = vpop.f32.mrf.mxu0
      %v804 = vadd.f32 0.0, %v803
      %v805 = vpop.f32.mrf.mxu0
      %v806 = vadd.f32 0.0, %v805
      %807 = vmatmul.bf16.gmra.mxu0 %v734
      %v808 = vpop.f32.mrf.mxu0
      %v809 = vadd.f32 0.0, %v808
      %v810 = vpop.f32.mrf.mxu0
      %v811 = vadd.f32 0.0, %v810
      %812 = vmatmul.bf16.gmra.mxu0 %v737
      %v813 = vpop.f32.mrf.mxu0
      %v814 = vadd.f32 0.0, %v813
      %v815 = vpop.f32.mrf.mxu0
      %v816 = vadd.f32 0.0, %v815
      %817 = vmatmul.bf16.gmra.mxu0 %v740
      %v818 = vpop.f32.mrf.mxu0
      %v819 = vadd.f32 0.0, %v818
      %v820 = vpop.f32.mrf.mxu0
      %v821 = vadd.f32 0.0, %v820
      %822 = vmatmul.bf16.gmra.mxu0 %v743
      %v823 = vpop.f32.mrf.mxu0
      %v824 = vadd.f32 0.0, %v823
      %v825 = vpop.f32.mrf.mxu0
      %v826 = vadd.f32 0.0, %v825
      %827 = vmatmul.bf16.gmra.mxu0 %v746
      %v828 = vpop.f32.mrf.mxu0
      %v829 = vadd.f32 0.0, %v828
      %v830 = vpop.f32.mrf.mxu0
      %v831 = vadd.f32 0.0, %v830
      %832 = vmatmul.bf16.gmra.mxu0 %v749
      %v833 = vpop.f32.mrf.mxu0
      %v834 = vadd.f32 0.0, %v833
      %v835 = vpop.f32.mrf.mxu0
      %v836 = vadd.f32 0.0, %v835
      %837 = vmatmul.bf16.gmra.mxu0 %v752
      %v838 = vpop.f32.mrf.mxu0
      %v839 = vadd.f32 0.0, %v838
      %v840 = vpop.f32.mrf.mxu0
      %v841 = vadd.f32 0.0, %v840
      %842 = vdwg.mxu0
      %v843 = vld [vmem:[#allocation2] sm:$0xff]
      %v844 = vld [vmem:[#allocation2 + $0x8] sm:$0xff]
      %v845 = vld [vmem:[#allocation2 + $0x10] sm:$0xff]
      %v846 = vld [vmem:[#allocation2 + $0x18] sm:$0xff]
      %v847 = vld [vmem:[#allocation2 + $0x20] sm:$0xff]
      %v848 = vld [vmem:[#allocation2 + $0x28] sm:$0xff]
      %v849 = vld [vmem:[#allocation2 + $0x30] sm:$0xff]
      %v850 = vld [vmem:[#allocation2 + $0x38] sm:$0xff]
      %v851 = vld [vmem:[#allocation2 + $0x40] sm:$0xff]
      %v852 = vld [vmem:[#allocation2 + $0x48] sm:$0xff]
      %v853 = vld [vmem:[#allocation2 + $0x50] sm:$0xff]
      %v854 = vld [vmem:[#allocation2 + $0x58] sm:$0xff]
      %v855 = vld [vmem:[#allocation2 + $0x60] sm:$0xff]
      %v856 = vld [vmem:[#allocation2 + $0x68] sm:$0xff]
      %v857 = vld [vmem:[#allocation2 + $0x70] sm:$0xff]
      %v858 = vld [vmem:[#allocation2 + $0x78] sm:$0xff]
      %v859 = vld [vmem:[#allocation2 + $0x80] sm:$0xff]
      %v860 = vld [vmem:[#allocation2 + $0x88] sm:$0xff]
      %v861 = vld [vmem:[#allocation2 + $0x90] sm:$0xff]
      %v862 = vld [vmem:[#allocation2 + $0x98] sm:$0xff]
      %v863 = vld [vmem:[#allocation2 + $0xa0] sm:$0xff]
      %v864 = vld [vmem:[#allocation2 + $0xa8] sm:$0xff]
      %v865 = vld [vmem:[#allocation2 + $0xb0] sm:$0xff]
      %v866 = vld [vmem:[#allocation2 + $0xb8] sm:$0xff]
      %v867 = vld [vmem:[#allocation2 + $0xc0] sm:$0xff]
      %v868 = vld [vmem:[#allocation2 + $0xc8] sm:$0xff]
      %v869 = vld [vmem:[#allocation2 + $0xd0] sm:$0xff]
      %v870 = vld [vmem:[#allocation2 + $0xd8] sm:$0xff]
      %v871 = vld [vmem:[#allocation2 + $0xe0] sm:$0xff]
      %v872 = vld [vmem:[#allocation2 + $0xe8] sm:$0xff]
      %v873 = vld [vmem:[#allocation2 + $0xf0] sm:$0xff]
      %v874 = vld [vmem:[#allocation2 + $0xf8] sm:$0xff]
      %v875 = vadd.f32 %v843, %v764
      %v876 = vadd.f32 %v844, %v766
      %v877 = vadd.f32 %v845, %v769
      %v878 = vadd.f32 %v846, %v771
      %v879 = vadd.f32 %v847, %v774
      %v880 = vadd.f32 %v848, %v776
      %v881 = vadd.f32 %v849, %v779
      %v882 = vadd.f32 %v850, %v781
      %v883 = vadd.f32 %v851, %v784
      %v884 = vadd.f32 %v852, %v786
      %v885 = vadd.f32 %v853, %v789
      %v886 = vadd.f32 %v854, %v791
      %v887 = vadd.f32 %v855, %v794
      %v888 = vadd.f32 %v856, %v796
      %v889 = vadd.f32 %v857, %v799
      %v890 = vadd.f32 %v858, %v801
      %v891 = vadd.f32 %v859, %v804
      %v892 = vadd.f32 %v860, %v806
      %v893 = vadd.f32 %v861, %v809
      %v894 = vadd.f32 %v862, %v811
      %v895 = vadd.f32 %v863, %v814
      %v896 = vadd.f32 %v864, %v816
      %v897 = vadd.f32 %v865, %v819
      %v898 = vadd.f32 %v866, %v821
      %v899 = vadd.f32 %v867, %v824
      %v900 = vadd.f32 %v868, %v826
      %v901 = vadd.f32 %v869, %v829
      %v902 = vadd.f32 %v870, %v831
      %v903 = vadd.f32 %v871, %v834
      %v904 = vadd.f32 %v872, %v836
      %v905 = vadd.f32 %v873, %v839
      %v906 = vadd.f32 %v874, %v841
      %907 = vst.msk [vmem:[#allocation2] sm:$0xff] %vm399, %v875
      %908 = vst.msk [vmem:[#allocation2 + $0x8] sm:$0xff] %vm399, %v876
      %909 = vst.msk [vmem:[#allocation2 + $0x10] sm:$0xff] %vm399, %v877
      %910 = vst.msk [vmem:[#allocation2 + $0x18] sm:$0xff] %vm399, %v878
      %911 = vst.msk [vmem:[#allocation2 + $0x20] sm:$0xff] %vm399, %v879
      %912 = vst.msk [vmem:[#allocation2 + $0x28] sm:$0xff] %vm399, %v880
      %913 = vst.msk [vmem:[#allocation2 + $0x30] sm:$0xff] %vm399, %v881
      %914 = vst.msk [vmem:[#allocation2 + $0x38] sm:$0xff] %vm399, %v882
      %915 = vst.msk [vmem:[#allocation2 + $0x40] sm:$0xff] %vm399, %v883
      %916 = vst.msk [vmem:[#allocation2 + $0x48] sm:$0xff] %vm399, %v884
      %917 = vst.msk [vmem:[#allocation2 + $0x50] sm:$0xff] %vm399, %v885
      %918 = vst.msk [vmem:[#allocation2 + $0x58] sm:$0xff] %vm399, %v886
      %919 = vst.msk [vmem:[#allocation2 + $0x60] sm:$0xff] %vm399, %v887
      %920 = vst.msk [vmem:[#allocation2 + $0x68] sm:$0xff] %vm399, %v888
      %921 = vst.msk [vmem:[#allocation2 + $0x70] sm:$0xff] %vm399, %v889
      %922 = vst.msk [vmem:[#allocation2 + $0x78] sm:$0xff] %vm399, %v890
      %923 = vst.msk [vmem:[#allocation2 + $0x80] sm:$0xff] %vm399, %v891
      %924 = vst.msk [vmem:[#allocation2 + $0x88] sm:$0xff] %vm399, %v892
      %925 = vst.msk [vmem:[#allocation2 + $0x90] sm:$0xff] %vm399, %v893
      %926 = vst.msk [vmem:[#allocation2 + $0x98] sm:$0xff] %vm399, %v894
      %927 = vst.msk [vmem:[#allocation2 + $0xa0] sm:$0xff] %vm399, %v895
      %928 = vst.msk [vmem:[#allocation2 + $0xa8] sm:$0xff] %vm399, %v896
      %929 = vst.msk [vmem:[#allocation2 + $0xb0] sm:$0xff] %vm399, %v897
      %930 = vst.msk [vmem:[#allocation2 + $0xb8] sm:$0xff] %vm399, %v898
      %931 = vst.msk [vmem:[#allocation2 + $0xc0] sm:$0xff] %vm399, %v899
      %932 = vst.msk [vmem:[#allocation2 + $0xc8] sm:$0xff] %vm399, %v900
      %933 = vst.msk [vmem:[#allocation2 + $0xd0] sm:$0xff] %vm399, %v901
      %934 = vst.msk [vmem:[#allocation2 + $0xd8] sm:$0xff] %vm399, %v902
      %935 = vst.msk [vmem:[#allocation2 + $0xe0] sm:$0xff] %vm399, %v903
      %936 = vst.msk [vmem:[#allocation2 + $0xe8] sm:$0xff] %vm399, %v904
      %937 = vst.msk [vmem:[#allocation2 + $0xf0] sm:$0xff] %vm399, %v905
      %938 = vst.msk [vmem:[#allocation2 + $0xf8] sm:$0xff] %vm399, %v906
      %v939 = vld [vmem:[%s235 + $0x10] sm:$0xf]
      %v940 = vld [vmem:[%s235 + $0x14] sm:$0xf]
      %v941 = vld [vmem:[%s235 + $0x18] sm:$0xf]
      %v942 = vld [vmem:[%s235 + $0x1c] sm:$0xf]
      %v943 = vld [vmem:[%s235 + $0x20] sm:$0xf]
      %v944 = vld [vmem:[%s235 + $0x24] sm:$0xf]
      %v945 = vld [vmem:[%s235 + $0x28] sm:$0xf]
      %v946 = vld [vmem:[%s235 + $0x2c] sm:$0xf]
      %v947 = vld [vmem:[%s235 + $0x30] sm:$0xf]
      %v948 = vld [vmem:[%s235 + $0x34] sm:$0xf]
      %v949 = vld [vmem:[%s235 + $0x38] sm:$0xf]
      %v950 = vld [vmem:[%s235 + $0x3c] sm:$0xf]
      %v951 = vld [vmem:[%s235 + $0x40] sm:$0xf]
      %v952 = vld [vmem:[%s235 + $0x44] sm:$0xf]
      %v953 = vld [vmem:[%s235 + $0x48] sm:$0xf]
      %v954 = vld [vmem:[%s235 + $0x4c] sm:$0xf]
      %v955 = vld [vmem:[%s235 + $0x50] sm:$0xf]
      %v956 = vld [vmem:[%s235 + $0x54] sm:$0xf]
      %v957 = vld [vmem:[%s235 + $0x58] sm:$0xf]
      %v958 = vld [vmem:[%s235 + $0x5c] sm:$0xf]
      %v959 = vld [vmem:[%s235 + $0x60] sm:$0xf]
      %v960 = vld [vmem:[%s235 + $0x64] sm:$0xf]
      %v961 = vld [vmem:[%s235 + $0x68] sm:$0xf]
      %v962 = vld [vmem:[%s235 + $0x6c] sm:$0xf]
      %v963 = vld [vmem:[%s235 + $0x70] sm:$0xf]
      %v964 = vld [vmem:[%s235 + $0x74] sm:$0xf]
      %v965 = vld [vmem:[%s235 + $0x78] sm:$0xf]
      %v966 = vld [vmem:[%s235 + $0x7c] sm:$0xf]
      %v967 = vld [vmem:[%s235 + $0x80] sm:$0xf]
      %v968 = vld [vmem:[%s235 + $0x84] sm:$0xf]
      %v969 = vld [vmem:[%s235 + $0x88] sm:$0xf]
      %v970 = vld [vmem:[%s235 + $0x8c] sm:$0xf]
      %s971 = scalar_lea.vmem %s1, 48
      %v972 = vld [vmem:[%s971] sm:$0xf]
      %v973 = vld [vmem:[%s971 + $0x4] sm:$0xf]
      %v974 = vld [vmem:[%s971 + $0x8] sm:$0xf]
      %v975 = vld [vmem:[%s971 + $0xc] sm:$0xf]
      %v976 = vld [vmem:[%s971 + $0x10] sm:$0xf]
      %v977 = vld [vmem:[%s971 + $0x14] sm:$0xf]
      %v1010 = vunpack.c.l.b16 %v939
      %v1011 = vunpack.c.l.b16 %v940
      %v1012 = vunpack.c.l.b16 %v941
      %v1013 = vunpack.c.l.b16 %v942
      %v1014 = vunpack.c.l.b16 %v943
      %v1015 = vunpack.c.l.b16 %v944
      %v1016 = vunpack.c.l.b16 %v945
      %v1017 = vunpack.c.l.b16 %v946
      %v1018 = vunpack.c.l.b16 %v947
      %v1019 = vunpack.c.l.b16 %v948
      %v1020 = vunpack.c.l.b16 %v949
      %v1021 = vunpack.c.l.b16 %v950
      %v1022 = vunpack.c.l.b16 %v951
      %v1023 = vunpack.c.l.b16 %v952
      %v1024 = vunpack.c.l.b16 %v953
      %v1025 = vunpack.c.l.b16 %v954
      %v1026 = vunpack.c.l.b16 %v955
      %v1027 = vunpack.c.l.b16 %v956
      %v1028 = vunpack.c.l.b16 %v957
      %v1029 = vunpack.c.l.b16 %v958
      %v1030 = vunpack.c.l.b16 %v959
      %v1031 = vunpack.c.l.b16 %v960
      %v1032 = vunpack.c.l.b16 %v961
      %v1033 = vunpack.c.l.b16 %v962
      %v1034 = vunpack.c.l.b16 %v963
      %v1035 = vunpack.c.l.b16 %v964
      %v1036 = vunpack.c.l.b16 %v965
      %v1037 = vunpack.c.l.b16 %v966
      %v1038 = vunpack.c.l.b16 %v967
      %v1039 = vunpack.c.l.b16 %v968
      %v1040 = vunpack.c.l.b16 %v969
      %v1041 = vunpack.c.l.b16 %v970
      %v1042 = vpack.c.b16 %v1011, %v1010
      %v1043 = vpack.c.b16 %v1013, %v1012
      %v1044 = vpack.c.b16 %v1015, %v1014
      %v1045 = vpack.c.b16 %v1017, %v1016
      %v1046 = vpack.c.b16 %v1019, %v1018
      %v1047 = vpack.c.b16 %v1021, %v1020
      %v1048 = vpack.c.b16 %v1023, %v1022
      %v1049 = vpack.c.b16 %v1025, %v1024
      %v1050 = vpack.c.b16 %v1027, %v1026
      %v1051 = vpack.c.b16 %v1029, %v1028
      %v1052 = vpack.c.b16 %v1031, %v1030
      %v1053 = vpack.c.b16 %v1033, %v1032
      %v1054 = vpack.c.b16 %v1035, %v1034
      %v1055 = vpack.c.b16 %v1037, %v1036
      %v1056 = vpack.c.b16 %v1039, %v1038
      %v1057 = vpack.c.b16 %v1041, %v1040
      %v1064 = vunpack.c.l.b16 %v972
      %v1065 = vunpack.c.l.b16 %v973
      %v1066 = vunpack.c.l.b16 %v974
      %v1067 = vunpack.c.l.b16 %v975
      %v1068 = vunpack.c.l.b16 %v976
      %v1069 = vunpack.c.l.b16 %v977
      %v1070 = vpack.c.b16 %v1065, %v1064
      %v1071 = vpack.c.b16 %v1067, %v1066
      %v1072 = vpack.c.b16 %v1069, %v1068
      %v1077 = vsel %vm399, %v1042, 0
      %v1080 = vsel %vm399, %v1043, 0
      %v1083 = vsel %vm399, %v1044, 0
      %v1086 = vsel %vm399, %v1045, 0
      %v1089 = vsel %vm399, %v1046, 0
      %v1092 = vsel %vm399, %v1047, 0
      %v1095 = vsel %vm399, %v1048, 0
      %v1098 = vsel %vm399, %v1049, 0
      %v1101 = vsel %vm399, %v1050, 0
      %v1104 = vsel %vm399, %v1051, 0
      %v1107 = vsel %vm399, %v1052, 0
      %v1110 = vsel %vm399, %v1053, 0
      %v1113 = vsel %vm399, %v1054, 0
      %v1116 = vsel %vm399, %v1055, 0
      %v1119 = vsel %vm399, %v1056, 0
      %v1122 = vsel %vm399, %v1057, 0
      %1124 = vmatpush.bf16.msra.mxu0 0
      %1125 = vmatpush.bf16.msra.mxu0 0
      %1126 = vmatpush.bf16.msra.mxu0 0
      %1127 = vmatpush.bf16.msra.mxu0 0
      %1128 = vmatpush.bf16.msra.mxu0 0
      %1129 = vmatpush.bf16.msra.mxu0 %v1072
      %1130 = vmatpush.bf16.msra.mxu0 %v1071
      %1131 = vmatpush.bf16.msra.mxu0 %v1070
      %1132 = vmatmul.bf16.gmra.mxu0 %v1077
      %v1133 = vpop.f32.mrf.mxu0
      %v1134 = vadd.f32 0.0, %v1133
      %v1135 = vpop.f32.mrf.mxu0
      %v1136 = vadd.f32 0.0, %v1135
      %1137 = vmatmul.bf16.gmra.mxu0 %v1080
      %v1138 = vpop.f32.mrf.mxu0
      %v1139 = vadd.f32 0.0, %v1138
      %v1140 = vpop.f32.mrf.mxu0
      %v1141 = vadd.f32 0.0, %v1140
      %1142 = vmatmul.bf16.gmra.mxu0 %v1083
      %v1143 = vpop.f32.mrf.mxu0
      %v1144 = vadd.f32 0.0, %v1143
      %v1145 = vpop.f32.mrf.mxu0
      %v1146 = vadd.f32 0.0, %v1145
      %1147 = vmatmul.bf16.gmra.mxu0 %v1086
      %v1148 = vpop.f32.mrf.mxu0
      %v1149 = vadd.f32 0.0, %v1148
      %v1150 = vpop.f32.mrf.mxu0
      %v1151 = vadd.f32 0.0, %v1150
      %1152 = vmatmul.bf16.gmra.mxu0 %v1089
      %v1153 = vpop.f32.mrf.mxu0
      %v1154 = vadd.f32 0.0, %v1153
      %v1155 = vpop.f32.mrf.mxu0
      %v1156 = vadd.f32 0.0, %v1155
      %1157 = vmatmul.bf16.gmra.mxu0 %v1092
      %v1158 = vpop.f32.mrf.mxu0
      %v1159 = vadd.f32 0.0, %v1158
      %v1160 = vpop.f32.mrf.mxu0
      %v1161 = vadd.f32 0.0, %v1160
      %1162 = vmatmul.bf16.gmra.mxu0 %v1095
      %v1163 = vpop.f32.mrf.mxu0
      %v1164 = vadd.f32 0.0, %v1163
      %v1165 = vpop.f32.mrf.mxu0
      %v1166 = vadd.f32 0.0, %v1165
      %1167 = vmatmul.bf16.gmra.mxu0 %v1098
      %v1168 = vpop.f32.mrf.mxu0
      %v1169 = vadd.f32 0.0, %v1168
      %v1170 = vpop.f32.mrf.mxu0
      %v1171 = vadd.f32 0.0, %v1170
      %1172 = vmatmul.bf16.gmra.mxu0 %v1101
      %v1173 = vpop.f32.mrf.mxu0
      %v1174 = vadd.f32 0.0, %v1173
      %v1175 = vpop.f32.mrf.mxu0
      %v1176 = vadd.f32 0.0, %v1175
      %1177 = vmatmul.bf16.gmra.mxu0 %v1104
      %v1178 = vpop.f32.mrf.mxu0
      %v1179 = vadd.f32 0.0, %v1178
      %v1180 = vpop.f32.mrf.mxu0
      %v1181 = vadd.f32 0.0, %v1180
      %1182 = vmatmul.bf16.gmra.mxu0 %v1107
      %v1183 = vpop.f32.mrf.mxu0
      %v1184 = vadd.f32 0.0, %v1183
      %v1185 = vpop.f32.mrf.mxu0
      %v1186 = vadd.f32 0.0, %v1185
      %1187 = vmatmul.bf16.gmra.mxu0 %v1110
      %v1188 = vpop.f32.mrf.mxu0
      %v1189 = vadd.f32 0.0, %v1188
      %v1190 = vpop.f32.mrf.mxu0
      %v1191 = vadd.f32 0.0, %v1190
      %1192 = vmatmul.bf16.gmra.mxu0 %v1113
      %v1193 = vpop.f32.mrf.mxu0
      %v1194 = vadd.f32 0.0, %v1193
      %v1195 = vpop.f32.mrf.mxu0
      %v1196 = vadd.f32 0.0, %v1195
      %1197 = vmatmul.bf16.gmra.mxu0 %v1116
      %v1198 = vpop.f32.mrf.mxu0
      %v1199 = vadd.f32 0.0, %v1198
      %v1200 = vpop.f32.mrf.mxu0
      %v1201 = vadd.f32 0.0, %v1200
      %1202 = vmatmul.bf16.gmra.mxu0 %v1119
      %v1203 = vpop.f32.mrf.mxu0
      %v1204 = vadd.f32 0.0, %v1203
      %v1205 = vpop.f32.mrf.mxu0
      %v1206 = vadd.f32 0.0, %v1205
      %1207 = vmatmul.bf16.gmra.mxu0 %v1122
      %v1208 = vpop.f32.mrf.mxu0
      %v1209 = vadd.f32 0.0, %v1208
      %v1210 = vpop.f32.mrf.mxu0
      %v1211 = vadd.f32 0.0, %v1210
      %1212 = vdwg.mxu0
      %v1213 = vld [vmem:[#allocation2] sm:$0xff]
      %v1214 = vld [vmem:[#allocation2 + $0x8] sm:$0xff]
      %v1215 = vld [vmem:[#allocation2 + $0x10] sm:$0xff]
      %v1216 = vld [vmem:[#allocation2 + $0x18] sm:$0xff]
      %v1217 = vld [vmem:[#allocation2 + $0x20] sm:$0xff]
      %v1218 = vld [vmem:[#allocation2 + $0x28] sm:$0xff]
      %v1219 = vld [vmem:[#allocation2 + $0x30] sm:$0xff]
      %v1220 = vld [vmem:[#allocation2 + $0x38] sm:$0xff]
      %v1221 = vld [vmem:[#allocation2 + $0x40] sm:$0xff]
      %v1222 = vld [vmem:[#allocation2 + $0x48] sm:$0xff]
      %v1223 = vld [vmem:[#allocation2 + $0x50] sm:$0xff]
      %v1224 = vld [vmem:[#allocation2 + $0x58] sm:$0xff]
      %v1225 = vld [vmem:[#allocation2 + $0x60] sm:$0xff]
      %v1226 = vld [vmem:[#allocation2 + $0x68] sm:$0xff]
      %v1227 = vld [vmem:[#allocation2 + $0x70] sm:$0xff]
      %v1228 = vld [vmem:[#allocation2 + $0x78] sm:$0xff]
      %v1229 = vld [vmem:[#allocation2 + $0x80] sm:$0xff]
      %v1230 = vld [vmem:[#allocation2 + $0x88] sm:$0xff]
      %v1231 = vld [vmem:[#allocation2 + $0x90] sm:$0xff]
      %v1232 = vld [vmem:[#allocation2 + $0x98] sm:$0xff]
      %v1233 = vld [vmem:[#allocation2 + $0xa0] sm:$0xff]
      %v1234 = vld [vmem:[#allocation2 + $0xa8] sm:$0xff]
      %v1235 = vld [vmem:[#allocation2 + $0xb0] sm:$0xff]
      %v1236 = vld [vmem:[#allocation2 + $0xb8] sm:$0xff]
      %v1237 = vld [vmem:[#allocation2 + $0xc0] sm:$0xff]
      %v1238 = vld [vmem:[#allocation2 + $0xc8] sm:$0xff]
      %v1239 = vld [vmem:[#allocation2 + $0xd0] sm:$0xff]
      %v1240 = vld [vmem:[#allocation2 + $0xd8] sm:$0xff]
      %v1241 = vld [vmem:[#allocation2 + $0xe0] sm:$0xff]
      %v1242 = vld [vmem:[#allocation2 + $0xe8] sm:$0xff]
      %v1243 = vld [vmem:[#allocation2 + $0xf0] sm:$0xff]
      %v1244 = vld [vmem:[#allocation2 + $0xf8] sm:$0xff]
      %v1245 = vadd.f32 %v1213, %v1134
      %v1246 = vadd.f32 %v1214, %v1136
      %v1247 = vadd.f32 %v1215, %v1139
      %v1248 = vadd.f32 %v1216, %v1141
      %v1249 = vadd.f32 %v1217, %v1144
      %v1250 = vadd.f32 %v1218, %v1146
      %v1251 = vadd.f32 %v1219, %v1149
      %v1252 = vadd.f32 %v1220, %v1151
      %v1253 = vadd.f32 %v1221, %v1154
      %v1254 = vadd.f32 %v1222, %v1156
      %v1255 = vadd.f32 %v1223, %v1159
      %v1256 = vadd.f32 %v1224, %v1161
      %v1257 = vadd.f32 %v1225, %v1164
      %v1258 = vadd.f32 %v1226, %v1166
      %v1259 = vadd.f32 %v1227, %v1169
      %v1260 = vadd.f32 %v1228, %v1171
      %v1261 = vadd.f32 %v1229, %v1174
      %v1262 = vadd.f32 %v1230, %v1176
      %v1263 = vadd.f32 %v1231, %v1179
      %v1264 = vadd.f32 %v1232, %v1181
      %v1265 = vadd.f32 %v1233, %v1184
      %v1266 = vadd.f32 %v1234, %v1186
      %v1267 = vadd.f32 %v1235, %v1189
      %v1268 = vadd.f32 %v1236, %v1191
      %v1269 = vadd.f32 %v1237, %v1194
      %v1270 = vadd.f32 %v1238, %v1196
      %v1271 = vadd.f32 %v1239, %v1199
      %v1272 = vadd.f32 %v1240, %v1201
      %v1273 = vadd.f32 %v1241, %v1204
      %v1274 = vadd.f32 %v1242, %v1206
      %v1275 = vadd.f32 %v1243, %v1209
      %v1276 = vadd.f32 %v1244, %v1211
      %1277 = vst.msk [vmem:[#allocation2] sm:$0xff] %vm399, %v1245
      %1278 = vst.msk [vmem:[#allocation2 + $0x8] sm:$0xff] %vm399, %v1246
      %1279 = vst.msk [vmem:[#allocation2 + $0x10] sm:$0xff] %vm399, %v1247
      %1280 = vst.msk [vmem:[#allocation2 + $0x18] sm:$0xff] %vm399, %v1248
      %1281 = vst.msk [vmem:[#allocation2 + $0x20] sm:$0xff] %vm399, %v1249
      %1282 = vst.msk [vmem:[#allocation2 + $0x28] sm:$0xff] %vm399, %v1250
      %1283 = vst.msk [vmem:[#allocation2 + $0x30] sm:$0xff] %vm399, %v1251
      %1284 = vst.msk [vmem:[#allocation2 + $0x38] sm:$0xff] %vm399, %v1252
      %1285 = vst.msk [vmem:[#allocation2 + $0x40] sm:$0xff] %vm399, %v1253
      %1286 = vst.msk [vmem:[#allocation2 + $0x48] sm:$0xff] %vm399, %v1254
      %1287 = vst.msk [vmem:[#allocation2 + $0x50] sm:$0xff] %vm399, %v1255
      %1288 = vst.msk [vmem:[#allocation2 + $0x58] sm:$0xff] %vm399, %v1256
      %1289 = vst.msk [vmem:[#allocation2 + $0x60] sm:$0xff] %vm399, %v1257
      %1290 = vst.msk [vmem:[#allocation2 + $0x68] sm:$0xff] %vm399, %v1258
      %1291 = vst.msk [vmem:[#allocation2 + $0x70] sm:$0xff] %vm399, %v1259
      %1292 = vst.msk [vmem:[#allocation2 + $0x78] sm:$0xff] %vm399, %v1260
      %1293 = vst.msk [vmem:[#allocation2 + $0x80] sm:$0xff] %vm399, %v1261
      %1294 = vst.msk [vmem:[#allocation2 + $0x88] sm:$0xff] %vm399, %v1262
      %1295 = vst.msk [vmem:[#allocation2 + $0x90] sm:$0xff] %vm399, %v1263
      %1296 = vst.msk [vmem:[#allocation2 + $0x98] sm:$0xff] %vm399, %v1264
      %1297 = vst.msk [vmem:[#allocation2 + $0xa0] sm:$0xff] %vm399, %v1265
      %1298 = vst.msk [vmem:[#allocation2 + $0xa8] sm:$0xff] %vm399, %v1266
      %1299 = vst.msk [vmem:[#allocation2 + $0xb0] sm:$0xff] %vm399, %v1267
      %1300 = vst.msk [vmem:[#allocation2 + $0xb8] sm:$0xff] %vm399, %v1268
      %1301 = vst.msk [vmem:[#allocation2 + $0xc0] sm:$0xff] %vm399, %v1269
      %1302 = vst.msk [vmem:[#allocation2 + $0xc8] sm:$0xff] %vm399, %v1270
      %1303 = vst.msk [vmem:[#allocation2 + $0xd0] sm:$0xff] %vm399, %v1271
      %1304 = vst.msk [vmem:[#allocation2 + $0xd8] sm:$0xff] %vm399, %v1272
      %1305 = vst.msk [vmem:[#allocation2 + $0xe0] sm:$0xff] %vm399, %v1273
      %1306 = vst.msk [vmem:[#allocation2 + $0xe8] sm:$0xff] %vm399, %v1274
      %1307 = vst.msk [vmem:[#allocation2 + $0xf0] sm:$0xff] %vm399, %v1275
      %1308 = vst.msk [vmem:[#allocation2 + $0xf8] sm:$0xff] %vm399, %v1276
      %v1309 = vld [vmem:[%s235 + $0x18] sm:$0xf]
      %v1310 = vld [vmem:[%s235 + $0x1c] sm:$0xf]
      %v1311 = vld [vmem:[%s235 + $0x20] sm:$0xf]
      %v1312 = vld [vmem:[%s235 + $0x24] sm:$0xf]
      %v1313 = vld [vmem:[%s235 + $0x28] sm:$0xf]
      %v1314 = vld [vmem:[%s235 + $0x2c] sm:$0xf]
      %v1315 = vld [vmem:[%s235 + $0x30] sm:$0xf]
      %v1316 = vld [vmem:[%s235 + $0x34] sm:$0xf]
      %v1317 = vld [vmem:[%s235 + $0x38] sm:$0xf]
      %v1318 = vld [vmem:[%s235 + $0x3c] sm:$0xf]
      %v1319 = vld [vmem:[%s235 + $0x40] sm:$0xf]
      %v1320 = vld [vmem:[%s235 + $0x44] sm:$0xf]
      %v1321 = vld [vmem:[%s235 + $0x48] sm:$0xf]
      %v1322 = vld [vmem:[%s235 + $0x4c] sm:$0xf]
      %v1323 = vld [vmem:[%s235 + $0x50] sm:$0xf]
      %v1324 = vld [vmem:[%s235 + $0x54] sm:$0xf]
      %v1325 = vld [vmem:[%s235 + $0x58] sm:$0xf]
      %v1326 = vld [vmem:[%s235 + $0x5c] sm:$0xf]
      %v1327 = vld [vmem:[%s235 + $0x60] sm:$0xf]
      %v1328 = vld [vmem:[%s235 + $0x64] sm:$0xf]
      %v1329 = vld [vmem:[%s235 + $0x68] sm:$0xf]
      %v1330 = vld [vmem:[%s235 + $0x6c] sm:$0xf]
      %v1331 = vld [vmem:[%s235 + $0x70] sm:$0xf]
      %v1332 = vld [vmem:[%s235 + $0x74] sm:$0xf]
      %v1333 = vld [vmem:[%s235 + $0x78] sm:$0xf]
      %v1334 = vld [vmem:[%s235 + $0x7c] sm:$0xf]
      %v1335 = vld [vmem:[%s235 + $0x80] sm:$0xf]
      %v1336 = vld [vmem:[%s235 + $0x84] sm:$0xf]
      %v1337 = vld [vmem:[%s235 + $0x88] sm:$0xf]
      %v1338 = vld [vmem:[%s235 + $0x8c] sm:$0xf]
      %v1339 = vld [vmem:[%s235 + $0x90] sm:$0xf]
      %v1340 = vld [vmem:[%s235 + $0x94] sm:$0xf]
      %s1341 = scalar_lea.vmem %s1, 72
      %v1342 = vld [vmem:[%s1341] sm:$0xf]
      %v1343 = vld [vmem:[%s1341 + $0x4] sm:$0xf]
      %v1344 = vld [vmem:[%s1341 + $0x8] sm:$0xf]
      %v1345 = vld [vmem:[%s1341 + $0xc] sm:$0xf]
      %v1346 = vld [vmem:[%s1341 + $0x10] sm:$0xf]
      %v1347 = vld [vmem:[%s1341 + $0x14] sm:$0xf]
      %v1380 = vunpack.c.l.b16 %v1309
      %v1381 = vunpack.c.l.b16 %v1310
      %v1382 = vunpack.c.l.b16 %v1311
      %v1383 = vunpack.c.l.b16 %v1312
      %v1384 = vunpack.c.l.b16 %v1313
      %v1385 = vunpack.c.l.b16 %v1314
      %v1386 = vunpack.c.l.b16 %v1315
      %v1387 = vunpack.c.l.b16 %v1316
      %v1388 = vunpack.c.l.b16 %v1317
      %v1389 = vunpack.c.l.b16 %v1318
      %v1390 = vunpack.c.l.b16 %v1319
      %v1391 = vunpack.c.l.b16 %v1320
      %v1392 = vunpack.c.l.b16 %v1321
      %v1393 = vunpack.c.l.b16 %v1322
      %v1394 = vunpack.c.l.b16 %v1323
      %v1395 = vunpack.c.l.b16 %v1324
      %v1396 = vunpack.c.l.b16 %v1325
      %v1397 = vunpack.c.l.b16 %v1326
      %v1398 = vunpack.c.l.b16 %v1327
      %v1399 = vunpack.c.l.b16 %v1328
      %v1400 = vunpack.c.l.b16 %v1329
      %v1401 = vunpack.c.l.b16 %v1330
      %v1402 = vunpack.c.l.b16 %v1331
      %v1403 = vunpack.c.l.b16 %v1332
      %v1404 = vunpack.c.l.b16 %v1333
      %v1405 = vunpack.c.l.b16 %v1334
      %v1406 = vunpack.c.l.b16 %v1335
      %v1407 = vunpack.c.l.b16 %v1336
      %v1408 = vunpack.c.l.b16 %v1337
      %v1409 = vunpack.c.l.b16 %v1338
      %v1410 = vunpack.c.l.b16 %v1339
      %v1411 = vunpack.c.l.b16 %v1340
      %v1412 = vpack.c.b16 %v1381, %v1380
      %v1413 = vpack.c.b16 %v1383, %v1382
      %v1414 = vpack.c.b16 %v1385, %v1384
      %v1415 = vpack.c.b16 %v1387, %v1386
      %v1416 = vpack.c.b16 %v1389, %v1388
      %v1417 = vpack.c.b16 %v1391, %v1390
      %v1418 = vpack.c.b16 %v1393, %v1392
      %v1419 = vpack.c.b16 %v1395, %v1394
      %v1420 = vpack.c.b16 %v1397, %v1396
      %v1421 = vpack.c.b16 %v1399, %v1398
      %v1422 = vpack.c.b16 %v1401, %v1400
      %v1423 = vpack.c.b16 %v1403, %v1402
      %v1424 = vpack.c.b16 %v1405, %v1404
      %v1425 = vpack.c.b16 %v1407, %v1406
      %v1426 = vpack.c.b16 %v1409, %v1408
      %v1427 = vpack.c.b16 %v1411, %v1410
      %v1434 = vunpack.c.l.b16 %v1342
      %v1435 = vunpack.c.l.b16 %v1343
      %v1436 = vunpack.c.l.b16 %v1344
      %v1437 = vunpack.c.l.b16 %v1345
      %v1438 = vunpack.c.l.b16 %v1346
      %v1439 = vunpack.c.l.b16 %v1347
      %v1440 = vpack.c.b16 %v1435, %v1434
      %v1441 = vpack.c.b16 %v1437, %v1436
      %v1442 = vpack.c.b16 %v1439, %v1438
      %v1447 = vsel %vm399, %v1412, 0
      %v1450 = vsel %vm399, %v1413, 0
      %v1453 = vsel %vm399, %v1414, 0
      %v1456 = vsel %vm399, %v1415, 0
      %v1459 = vsel %vm399, %v1416, 0
      %v1462 = vsel %vm399, %v1417, 0
      %v1465 = vsel %vm399, %v1418, 0
      %v1468 = vsel %vm399, %v1419, 0
      %v1471 = vsel %vm399, %v1420, 0
      %v1474 = vsel %vm399, %v1421, 0
      %v1477 = vsel %vm399, %v1422, 0
      %v1480 = vsel %vm399, %v1423, 0
      %v1483 = vsel %vm399, %v1424, 0
      %v1486 = vsel %vm399, %v1425, 0
      %v1489 = vsel %vm399, %v1426, 0
      %v1492 = vsel %vm399, %v1427, 0
      %1494 = vmatpush.bf16.msra.mxu0 0
      %1495 = vmatpush.bf16.msra.mxu0 0
      %1496 = vmatpush.bf16.msra.mxu0 0
      %1497 = vmatpush.bf16.msra.mxu0 0
      %1498 = vmatpush.bf16.msra.mxu0 0
      %1499 = vmatpush.bf16.msra.mxu0 %v1442
      %1500 = vmatpush.bf16.msra.mxu0 %v1441
      %1501 = vmatpush.bf16.msra.mxu0 %v1440
      %1502 = vmatmul.bf16.gmra.mxu0 %v1447
      %v1503 = vpop.f32.mrf.mxu0
      %v1504 = vadd.f32 0.0, %v1503
      %v1505 = vpop.f32.mrf.mxu0
      %v1506 = vadd.f32 0.0, %v1505
      %1507 = vmatmul.bf16.gmra.mxu0 %v1450
      %v1508 = vpop.f32.mrf.mxu0
      %v1509 = vadd.f32 0.0, %v1508
      %v1510 = vpop.f32.mrf.mxu0
      %v1511 = vadd.f32 0.0, %v1510
      %1512 = vmatmul.bf16.gmra.mxu0 %v1453
      %v1513 = vpop.f32.mrf.mxu0
      %v1514 = vadd.f32 0.0, %v1513
      %v1515 = vpop.f32.mrf.mxu0
      %v1516 = vadd.f32 0.0, %v1515
      %1517 = vmatmul.bf16.gmra.mxu0 %v1456
      %v1518 = vpop.f32.mrf.mxu0
      %v1519 = vadd.f32 0.0, %v1518
      %v1520 = vpop.f32.mrf.mxu0
      %v1521 = vadd.f32 0.0, %v1520
      %1522 = vmatmul.bf16.gmra.mxu0 %v1459
      %v1523 = vpop.f32.mrf.mxu0
      %v1524 = vadd.f32 0.0, %v1523
      %v1525 = vpop.f32.mrf.mxu0
      %v1526 = vadd.f32 0.0, %v1525
      %1527 = vmatmul.bf16.gmra.mxu0 %v1462
      %v1528 = vpop.f32.mrf.mxu0
      %v1529 = vadd.f32 0.0, %v1528
      %v1530 = vpop.f32.mrf.mxu0
      %v1531 = vadd.f32 0.0, %v1530
      %1532 = vmatmul.bf16.gmra.mxu0 %v1465
      %v1533 = vpop.f32.mrf.mxu0
      %v1534 = vadd.f32 0.0, %v1533
      %v1535 = vpop.f32.mrf.mxu0
      %v1536 = vadd.f32 0.0, %v1535
      %1537 = vmatmul.bf16.gmra.mxu0 %v1468
      %v1538 = vpop.f32.mrf.mxu0
      %v1539 = vadd.f32 0.0, %v1538
      %v1540 = vpop.f32.mrf.mxu0
      %v1541 = vadd.f32 0.0, %v1540
      %1542 = vmatmul.bf16.gmra.mxu0 %v1471
      %v1543 = vpop.f32.mrf.mxu0
      %v1544 = vadd.f32 0.0, %v1543
      %v1545 = vpop.f32.mrf.mxu0
      %v1546 = vadd.f32 0.0, %v1545
      %1547 = vmatmul.bf16.gmra.mxu0 %v1474
      %v1548 = vpop.f32.mrf.mxu0
      %v1549 = vadd.f32 0.0, %v1548
      %v1550 = vpop.f32.mrf.mxu0
      %v1551 = vadd.f32 0.0, %v1550
      %1552 = vmatmul.bf16.gmra.mxu0 %v1477
      %v1553 = vpop.f32.mrf.mxu0
      %v1554 = vadd.f32 0.0, %v1553
      %v1555 = vpop.f32.mrf.mxu0
      %v1556 = vadd.f32 0.0, %v1555
      %1557 = vmatmul.bf16.gmra.mxu0 %v1480
      %v1558 = vpop.f32.mrf.mxu0
      %v1559 = vadd.f32 0.0, %v1558
      %v1560 = vpop.f32.mrf.mxu0
      %v1561 = vadd.f32 0.0, %v1560
      %1562 = vmatmul.bf16.gmra.mxu0 %v1483
      %v1563 = vpop.f32.mrf.mxu0
      %v1564 = vadd.f32 0.0, %v1563
      %v1565 = vpop.f32.mrf.mxu0
      %v1566 = vadd.f32 0.0, %v1565
      %1567 = vmatmul.bf16.gmra.mxu0 %v1486
      %v1568 = vpop.f32.mrf.mxu0
      %v1569 = vadd.f32 0.0, %v1568
      %v1570 = vpop.f32.mrf.mxu0
      %v1571 = vadd.f32 0.0, %v1570
      %1572 = vmatmul.bf16.gmra.mxu0 %v1489
      %v1573 = vpop.f32.mrf.mxu0
      %v1574 = vadd.f32 0.0, %v1573
      %v1575 = vpop.f32.mrf.mxu0
      %v1576 = vadd.f32 0.0, %v1575
      %1577 = vmatmul.bf16.gmra.mxu0 %v1492
      %v1578 = vpop.f32.mrf.mxu0
      %v1579 = vadd.f32 0.0, %v1578
      %v1580 = vpop.f32.mrf.mxu0
      %v1581 = vadd.f32 0.0, %v1580
      %1582 = vdwg.mxu0
      %v1583 = vld [vmem:[#allocation2] sm:$0xff]
      %v1584 = vld [vmem:[#allocation2 + $0x8] sm:$0xff]
      %v1585 = vld [vmem:[#allocation2 + $0x10] sm:$0xff]
      %v1586 = vld [vmem:[#allocation2 + $0x18] sm:$0xff]
      %v1587 = vld [vmem:[#allocation2 + $0x20] sm:$0xff]
      %v1588 = vld [vmem:[#allocation2 + $0x28] sm:$0xff]
      %v1589 = vld [vmem:[#allocation2 + $0x30] sm:$0xff]
      %v1590 = vld [vmem:[#allocation2 + $0x38] sm:$0xff]
      %v1591 = vld [vmem:[#allocation2 + $0x40] sm:$0xff]
      %v1592 = vld [vmem:[#allocation2 + $0x48] sm:$0xff]
      %v1593 = vld [vmem:[#allocation2 + $0x50] sm:$0xff]
      %v1594 = vld [vmem:[#allocation2 + $0x58] sm:$0xff]
      %v1595 = vld [vmem:[#allocation2 + $0x60] sm:$0xff]
      %v1596 = vld [vmem:[#allocation2 + $0x68] sm:$0xff]
      %v1597 = vld [vmem:[#allocation2 + $0x70] sm:$0xff]
      %v1598 = vld [vmem:[#allocation2 + $0x78] sm:$0xff]
      %v1599 = vld [vmem:[#allocation2 + $0x80] sm:$0xff]
      %v1600 = vld [vmem:[#allocation2 + $0x88] sm:$0xff]
      %v1601 = vld [vmem:[#allocation2 + $0x90] sm:$0xff]
      %v1602 = vld [vmem:[#allocation2 + $0x98] sm:$0xff]
      %v1603 = vld [vmem:[#allocation2 + $0xa0] sm:$0xff]
      %v1604 = vld [vmem:[#allocation2 + $0xa8] sm:$0xff]
      %v1605 = vld [vmem:[#allocation2 + $0xb0] sm:$0xff]
      %v1606 = vld [vmem:[#allocation2 + $0xb8] sm:$0xff]
      %v1607 = vld [vmem:[#allocation2 + $0xc0] sm:$0xff]
      %v1608 = vld [vmem:[#allocation2 + $0xc8] sm:$0xff]
      %v1609 = vld [vmem:[#allocation2 + $0xd0] sm:$0xff]
      %v1610 = vld [vmem:[#allocation2 + $0xd8] sm:$0xff]
      %v1611 = vld [vmem:[#allocation2 + $0xe0] sm:$0xff]
      %v1612 = vld [vmem:[#allocation2 + $0xe8] sm:$0xff]
      %v1613 = vld [vmem:[#allocation2 + $0xf0] sm:$0xff]
      %v1614 = vld [vmem:[#allocation2 + $0xf8] sm:$0xff]
      %v1615 = vadd.f32 %v1583, %v1504
      %v1616 = vadd.f32 %v1584, %v1506
      %v1617 = vadd.f32 %v1585, %v1509
      %v1618 = vadd.f32 %v1586, %v1511
      %v1619 = vadd.f32 %v1587, %v1514
      %v1620 = vadd.f32 %v1588, %v1516
      %v1621 = vadd.f32 %v1589, %v1519
      %v1622 = vadd.f32 %v1590, %v1521
      %v1623 = vadd.f32 %v1591, %v1524
      %v1624 = vadd.f32 %v1592, %v1526
      %v1625 = vadd.f32 %v1593, %v1529
      %v1626 = vadd.f32 %v1594, %v1531
      %v1627 = vadd.f32 %v1595, %v1534
      %v1628 = vadd.f32 %v1596, %v1536
      %v1629 = vadd.f32 %v1597, %v1539
      %v1630 = vadd.f32 %v1598, %v1541
      %v1631 = vadd.f32 %v1599, %v1544
      %v1632 = vadd.f32 %v1600, %v1546
      %v1633 = vadd.f32 %v1601, %v1549
      %v1634 = vadd.f32 %v1602, %v1551
      %v1635 = vadd.f32 %v1603, %v1554
      %v1636 = vadd.f32 %v1604, %v1556
      %v1637 = vadd.f32 %v1605, %v1559
      %v1638 = vadd.f32 %v1606, %v1561
      %v1639 = vadd.f32 %v1607, %v1564
      %v1640 = vadd.f32 %v1608, %v1566
      %v1641 = vadd.f32 %v1609, %v1569
      %v1642 = vadd.f32 %v1610, %v1571
      %v1643 = vadd.f32 %v1611, %v1574
      %v1644 = vadd.f32 %v1612, %v1576
      %v1645 = vadd.f32 %v1613, %v1579
      %v1646 = vadd.f32 %v1614, %v1581
      %1647 = vst.msk [vmem:[#allocation2] sm:$0xff] %vm399, %v1615
      %1648 = vst.msk [vmem:[#allocation2 + $0x8] sm:$0xff] %vm399, %v1616
      %1649 = vst.msk [vmem:[#allocation2 + $0x10] sm:$0xff] %vm399, %v1617
      %1650 = vst.msk [vmem:[#allocation2 + $0x18] sm:$0xff] %vm399, %v1618
      %1651 = vst.msk [vmem:[#allocation2 + $0x20] sm:$0xff] %vm399, %v1619
      %1652 = vst.msk [vmem:[#allocation2 + $0x28] sm:$0xff] %vm399, %v1620
      %1653 = vst.msk [vmem:[#allocation2 + $0x30] sm:$0xff] %vm399, %v1621
      %1654 = vst.msk [vmem:[#allocation2 + $0x38] sm:$0xff] %vm399, %v1622
      %1655 = vst.msk [vmem:[#allocation2 + $0x40] sm:$0xff] %vm399, %v1623
      %1656 = vst.msk [vmem:[#allocation2 + $0x48] sm:$0xff] %vm399, %v1624
      %1657 = vst.msk [vmem:[#allocation2 + $0x50] sm:$0xff] %vm399, %v1625
      %1658 = vst.msk [vmem:[#allocation2 + $0x58] sm:$0xff] %vm399, %v1626
      %1659 = vst.msk [vmem:[#allocation2 + $0x60] sm:$0xff] %vm399, %v1627
      %1660 = vst.msk [vmem:[#allocation2 + $0x68] sm:$0xff] %vm399, %v1628
      %1661 = vst.msk [vmem:[#allocation2 + $0x70] sm:$0xff] %vm399, %v1629
      %1662 = vst.msk [vmem:[#allocation2 + $0x78] sm:$0xff] %vm399, %v1630
      %1663 = vst.msk [vmem:[#allocation2 + $0x80] sm:$0xff] %vm399, %v1631
      %1664 = vst.msk [vmem:[#allocation2 + $0x88] sm:$0xff] %vm399, %v1632
      %1665 = vst.msk [vmem:[#allocation2 + $0x90] sm:$0xff] %vm399, %v1633
      %1666 = vst.msk [vmem:[#allocation2 + $0x98] sm:$0xff] %vm399, %v1634
      %1667 = vst.msk [vmem:[#allocation2 + $0xa0] sm:$0xff] %vm399, %v1635
      %1668 = vst.msk [vmem:[#allocation2 + $0xa8] sm:$0xff] %vm399, %v1636
      %1669 = vst.msk [vmem:[#allocation2 + $0xb0] sm:$0xff] %vm399, %v1637
      %1670 = vst.msk [vmem:[#allocation2 + $0xb8] sm:$0xff] %vm399, %v1638
      %1671 = vst.msk [vmem:[#allocation2 + $0xc0] sm:$0xff] %vm399, %v1639
      %1672 = vst.msk [vmem:[#allocation2 + $0xc8] sm:$0xff] %vm399, %v1640
      %1673 = vst.msk [vmem:[#allocation2 + $0xd0] sm:$0xff] %vm399, %v1641
      %1674 = vst.msk [vmem:[#allocation2 + $0xd8] sm:$0xff] %vm399, %v1642
      %1675 = vst.msk [vmem:[#allocation2 + $0xe0] sm:$0xff] %vm399, %v1643
      %1676 = vst.msk [vmem:[#allocation2 + $0xe8] sm:$0xff] %vm399, %v1644
      %1677 = vst.msk [vmem:[#allocation2 + $0xf0] sm:$0xff] %vm399, %v1645
      %1678 = vst.msk [vmem:[#allocation2 + $0xf8] sm:$0xff] %vm399, %v1646
      %v1679 = vld [vmem:[%s235 + $0x20] sm:$0xf]
      %v1680 = vld [vmem:[%s235 + $0x24] sm:$0xf]
      %v1681 = vld [vmem:[%s235 + $0x28] sm:$0xf]
      %v1682 = vld [vmem:[%s235 + $0x2c] sm:$0xf]
      %v1683 = vld [vmem:[%s235 + $0x30] sm:$0xf]
      %v1684 = vld [vmem:[%s235 + $0x34] sm:$0xf]
      %v1685 = vld [vmem:[%s235 + $0x38] sm:$0xf]
      %v1686 = vld [vmem:[%s235 + $0x3c] sm:$0xf]
      %v1687 = vld [vmem:[%s235 + $0x40] sm:$0xf]
      %v1688 = vld [vmem:[%s235 + $0x44] sm:$0xf]
      %v1689 = vld [vmem:[%s235 + $0x48] sm:$0xf]
      %v1690 = vld [vmem:[%s235 + $0x4c] sm:$0xf]
      %v1691 = vld [vmem:[%s235 + $0x50] sm:$0xf]
      %v1692 = vld [vmem:[%s235 + $0x54] sm:$0xf]
      %v1693 = vld [vmem:[%s235 + $0x58] sm:$0xf]
      %v1694 = vld [vmem:[%s235 + $0x5c] sm:$0xf]
      %v1695 = vld [vmem:[%s235 + $0x60] sm:$0xf]
      %v1696 = vld [vmem:[%s235 + $0x64] sm:$0xf]
      %v1697 = vld [vmem:[%s235 + $0x68] sm:$0xf]
      %v1698 = vld [vmem:[%s235 + $0x6c] sm:$0xf]
      %v1699 = vld [vmem:[%s235 + $0x70] sm:$0xf]
      %v1700 = vld [vmem:[%s235 + $0x74] sm:$0xf]
      %v1701 = vld [vmem:[%s235 + $0x78] sm:$0xf]
      %v1702 = vld [vmem:[%s235 + $0x7c] sm:$0xf]
      %v1703 = vld [vmem:[%s235 + $0x80] sm:$0xf]
      %v1704 = vld [vmem:[%s235 + $0x84] sm:$0xf]
      %v1705 = vld [vmem:[%s235 + $0x88] sm:$0xf]
      %v1706 = vld [vmem:[%s235 + $0x8c] sm:$0xf]
      %v1707 = vld [vmem:[%s235 + $0x90] sm:$0xf]
      %v1708 = vld [vmem:[%s235 + $0x94] sm:$0xf]
      %v1709 = vld [vmem:[%s235 + $0x98] sm:$0xf]
      %v1710 = vld [vmem:[%s235 + $0x9c] sm:$0xf]
      %s1711 = scalar_lea.vmem %s1, 96
      %v1712 = vld [vmem:[%s1711] sm:$0xf]
      %v1713 = vld [vmem:[%s1711 + $0x4] sm:$0xf]
      %v1714 = vld [vmem:[%s1711 + $0x8] sm:$0xf]
      %v1715 = vld [vmem:[%s1711 + $0xc] sm:$0xf]
      %v1716 = vld [vmem:[%s1711 + $0x10] sm:$0xf]
      %v1717 = vld [vmem:[%s1711 + $0x14] sm:$0xf]
      %v1750 = vunpack.c.l.b16 %v1679
      %v1751 = vunpack.c.l.b16 %v1680
      %v1752 = vunpack.c.l.b16 %v1681
      %v1753 = vunpack.c.l.b16 %v1682
      %v1754 = vunpack.c.l.b16 %v1683
      %v1755 = vunpack.c.l.b16 %v1684
      %v1756 = vunpack.c.l.b16 %v1685
      %v1757 = vunpack.c.l.b16 %v1686
      %v1758 = vunpack.c.l.b16 %v1687
      %v1759 = vunpack.c.l.b16 %v1688
      %v1760 = vunpack.c.l.b16 %v1689
      %v1761 = vunpack.c.l.b16 %v1690
      %v1762 = vunpack.c.l.b16 %v1691
      %v1763 = vunpack.c.l.b16 %v1692
      %v1764 = vunpack.c.l.b16 %v1693
      %v1765 = vunpack.c.l.b16 %v1694
      %v1766 = vunpack.c.l.b16 %v1695
      %v1767 = vunpack.c.l.b16 %v1696
      %v1768 = vunpack.c.l.b16 %v1697
      %v1769 = vunpack.c.l.b16 %v1698
      %v1770 = vunpack.c.l.b16 %v1699
      %v1771 = vunpack.c.l.b16 %v1700
      %v1772 = vunpack.c.l.b16 %v1701
      %v1773 = vunpack.c.l.b16 %v1702
      %v1774 = vunpack.c.l.b16 %v1703
      %v1775 = vunpack.c.l.b16 %v1704
      %v1776 = vunpack.c.l.b16 %v1705
      %v1777 = vunpack.c.l.b16 %v1706
      %v1778 = vunpack.c.l.b16 %v1707
      %v1779 = vunpack.c.l.b16 %v1708
      %v1780 = vunpack.c.l.b16 %v1709
      %v1781 = vunpack.c.l.b16 %v1710
      %v1782 = vpack.c.b16 %v1751, %v1750
      %v1783 = vpack.c.b16 %v1753, %v1752
      %v1784 = vpack.c.b16 %v1755, %v1754
      %v1785 = vpack.c.b16 %v1757, %v1756
      %v1786 = vpack.c.b16 %v1759, %v1758
      %v1787 = vpack.c.b16 %v1761, %v1760
      %v1788 = vpack.c.b16 %v1763, %v1762
      %v1789 = vpack.c.b16 %v1765, %v1764
      %v1790 = vpack.c.b16 %v1767, %v1766
      %v1791 = vpack.c.b16 %v1769, %v1768
      %v1792 = vpack.c.b16 %v1771, %v1770
      %v1793 = vpack.c.b16 %v1773, %v1772
      %v1794 = vpack.c.b16 %v1775, %v1774
      %v1795 = vpack.c.b16 %v1777, %v1776
      %v1796 = vpack.c.b16 %v1779, %v1778
      %v1797 = vpack.c.b16 %v1781, %v1780
      %v1804 = vunpack.c.l.b16 %v1712
      %v1805 = vunpack.c.l.b16 %v1713
      %v1806 = vunpack.c.l.b16 %v1714
      %v1807 = vunpack.c.l.b16 %v1715
      %v1808 = vunpack.c.l.b16 %v1716
      %v1809 = vunpack.c.l.b16 %v1717
      %v1810 = vpack.c.b16 %v1805, %v1804
      %v1811 = vpack.c.b16 %v1807, %v1806
      %v1812 = vpack.c.b16 %v1809, %v1808
      %v1817 = vsel %vm399, %v1782, 0
      %v1820 = vsel %vm399, %v1783, 0
      %v1823 = vsel %vm399, %v1784, 0
      %v1826 = vsel %vm399, %v1785, 0
      %v1829 = vsel %vm399, %v1786, 0
      %v1832 = vsel %vm399, %v1787, 0
      %v1835 = vsel %vm399, %v1788, 0
      %v1838 = vsel %vm399, %v1789, 0
      %v1841 = vsel %vm399, %v1790, 0
      %v1844 = vsel %vm399, %v1791, 0
      %v1847 = vsel %vm399, %v1792, 0
      %v1850 = vsel %vm399, %v1793, 0
      %v1853 = vsel %vm399, %v1794, 0
      %v1856 = vsel %vm399, %v1795, 0
      %v1859 = vsel %vm399, %v1796, 0
      %v1862 = vsel %vm399, %v1797, 0
      %1864 = vmatpush.bf16.msra.mxu0 0
      %1865 = vmatpush.bf16.msra.mxu0 0
      %1866 = vmatpush.bf16.msra.mxu0 0
      %1867 = vmatpush.bf16.msra.mxu0 0
      %1868 = vmatpush.bf16.msra.mxu0 0
      %1869 = vmatpush.bf16.msra.mxu0 %v1812
      %1870 = vmatpush.bf16.msra.mxu0 %v1811
      %1871 = vmatpush.bf16.msra.mxu0 %v1810
      %1872 = vmatmul.bf16.gmra.mxu0 %v1817
      %v1873 = vpop.f32.mrf.mxu0
      %v1874 = vadd.f32 0.0, %v1873
      %v1875 = vpop.f32.mrf.mxu0
      %v1876 = vadd.f32 0.0, %v1875
      %1877 = vmatmul.bf16.gmra.mxu0 %v1820
      %v1878 = vpop.f32.mrf.mxu0
      %v1879 = vadd.f32 0.0, %v1878
      %v1880 = vpop.f32.mrf.mxu0
      %v1881 = vadd.f32 0.0, %v1880
      %1882 = vmatmul.bf16.gmra.mxu0 %v1823
      %v1883 = vpop.f32.mrf.mxu0
      %v1884 = vadd.f32 0.0, %v1883
      %v1885 = vpop.f32.mrf.mxu0
      %v1886 = vadd.f32 0.0, %v1885
      %1887 = vmatmul.bf16.gmra.mxu0 %v1826
      %v1888 = vpop.f32.mrf.mxu0
      %v1889 = vadd.f32 0.0, %v1888
      %v1890 = vpop.f32.mrf.mxu0
      %v1891 = vadd.f32 0.0, %v1890
      %1892 = vmatmul.bf16.gmra.mxu0 %v1829
      %v1893 = vpop.f32.mrf.mxu0
      %v1894 = vadd.f32 0.0, %v1893
      %v1895 = vpop.f32.mrf.mxu0
      %v1896 = vadd.f32 0.0, %v1895
      %1897 = vmatmul.bf16.gmra.mxu0 %v1832
      %v1898 = vpop.f32.mrf.mxu0
      %v1899 = vadd.f32 0.0, %v1898
      %v1900 = vpop.f32.mrf.mxu0
      %v1901 = vadd.f32 0.0, %v1900
      %1902 = vmatmul.bf16.gmra.mxu0 %v1835
      %v1903 = vpop.f32.mrf.mxu0
      %v1904 = vadd.f32 0.0, %v1903
      %v1905 = vpop.f32.mrf.mxu0
      %v1906 = vadd.f32 0.0, %v1905
      %1907 = vmatmul.bf16.gmra.mxu0 %v1838
      %v1908 = vpop.f32.mrf.mxu0
      %v1909 = vadd.f32 0.0, %v1908
      %v1910 = vpop.f32.mrf.mxu0
      %v1911 = vadd.f32 0.0, %v1910
      %1912 = vmatmul.bf16.gmra.mxu0 %v1841
      %v1913 = vpop.f32.mrf.mxu0
      %v1914 = vadd.f32 0.0, %v1913
      %v1915 = vpop.f32.mrf.mxu0
      %v1916 = vadd.f32 0.0, %v1915
      %1917 = vmatmul.bf16.gmra.mxu0 %v1844
      %v1918 = vpop.f32.mrf.mxu0
      %v1919 = vadd.f32 0.0, %v1918
      %v1920 = vpop.f32.mrf.mxu0
      %v1921 = vadd.f32 0.0, %v1920
      %1922 = vmatmul.bf16.gmra.mxu0 %v1847
      %v1923 = vpop.f32.mrf.mxu0
      %v1924 = vadd.f32 0.0, %v1923
      %v1925 = vpop.f32.mrf.mxu0
      %v1926 = vadd.f32 0.0, %v1925
      %1927 = vmatmul.bf16.gmra.mxu0 %v1850
      %v1928 = vpop.f32.mrf.mxu0
      %v1929 = vadd.f32 0.0, %v1928
      %v1930 = vpop.f32.mrf.mxu0
      %v1931 = vadd.f32 0.0, %v1930
      %1932 = vmatmul.bf16.gmra.mxu0 %v1853
      %v1933 = vpop.f32.mrf.mxu0
      %v1934 = vadd.f32 0.0, %v1933
      %v1935 = vpop.f32.mrf.mxu0
      %v1936 = vadd.f32 0.0, %v1935
      %1937 = vmatmul.bf16.gmra.mxu0 %v1856
      %v1938 = vpop.f32.mrf.mxu0
      %v1939 = vadd.f32 0.0, %v1938
      %v1940 = vpop.f32.mrf.mxu0
      %v1941 = vadd.f32 0.0, %v1940
      %1942 = vmatmul.bf16.gmra.mxu0 %v1859
      %v1943 = vpop.f32.mrf.mxu0
      %v1944 = vadd.f32 0.0, %v1943
      %v1945 = vpop.f32.mrf.mxu0
      %v1946 = vadd.f32 0.0, %v1945
      %1947 = vmatmul.bf16.gmra.mxu0 %v1862
      %v1948 = vpop.f32.mrf.mxu0
      %v1949 = vadd.f32 0.0, %v1948
      %v1950 = vpop.f32.mrf.mxu0
      %v1951 = vadd.f32 0.0, %v1950
      %1952 = vdwg.mxu0
      %v1953 = vld [vmem:[#allocation2] sm:$0xff]
      %v1954 = vld [vmem:[#allocation2 + $0x8] sm:$0xff]
      %v1955 = vld [vmem:[#allocation2 + $0x10] sm:$0xff]
      %v1956 = vld [vmem:[#allocation2 + $0x18] sm:$0xff]
      %v1957 = vld [vmem:[#allocation2 + $0x20] sm:$0xff]
      %v1958 = vld [vmem:[#allocation2 + $0x28] sm:$0xff]
      %v1959 = vld [vmem:[#allocation2 + $0x30] sm:$0xff]
      %v1960 = vld [vmem:[#allocation2 + $0x38] sm:$0xff]
      %v1961 = vld [vmem:[#allocation2 + $0x40] sm:$0xff]
      %v1962 = vld [vmem:[#allocation2 + $0x48] sm:$0xff]
      %v1963 = vld [vmem:[#allocation2 + $0x50] sm:$0xff]
      %v1964 = vld [vmem:[#allocation2 + $0x58] sm:$0xff]
      %v1965 = vld [vmem:[#allocation2 + $0x60] sm:$0xff]
      %v1966 = vld [vmem:[#allocation2 + $0x68] sm:$0xff]
      %v1967 = vld [vmem:[#allocation2 + $0x70] sm:$0xff]
      %v1968 = vld [vmem:[#allocation2 + $0x78] sm:$0xff]
      %v1969 = vld [vmem:[#allocation2 + $0x80] sm:$0xff]
      %v1970 = vld [vmem:[#allocation2 + $0x88] sm:$0xff]
      %v1971 = vld [vmem:[#allocation2 + $0x90] sm:$0xff]
      %v1972 = vld [vmem:[#allocation2 + $0x98] sm:$0xff]
      %v1973 = vld [vmem:[#allocation2 + $0xa0] sm:$0xff]
      %v1974 = vld [vmem:[#allocation2 + $0xa8] sm:$0xff]
      %v1975 = vld [vmem:[#allocation2 + $0xb0] sm:$0xff]
      %v1976 = vld [vmem:[#allocation2 + $0xb8] sm:$0xff]
      %v1977 = vld [vmem:[#allocation2 + $0xc0] sm:$0xff]
      %v1978 = vld [vmem:[#allocation2 + $0xc8] sm:$0xff]
      %v1979 = vld [vmem:[#allocation2 + $0xd0] sm:$0xff]
      %v1980 = vld [vmem:[#allocation2 + $0xd8] sm:$0xff]
      %v1981 = vld [vmem:[#allocation2 + $0xe0] sm:$0xff]
      %v1982 = vld [vmem:[#allocation2 + $0xe8] sm:$0xff]
      %v1983 = vld [vmem:[#allocation2 + $0xf0] sm:$0xff]
      %v1984 = vld [vmem:[#allocation2 + $0xf8] sm:$0xff]
      %v1985 = vadd.f32 %v1953, %v1874
      %v1986 = vadd.f32 %v1954, %v1876
      %v1987 = vadd.f32 %v1955, %v1879
      %v1988 = vadd.f32 %v1956, %v1881
      %v1989 = vadd.f32 %v1957, %v1884
      %v1990 = vadd.f32 %v1958, %v1886
      %v1991 = vadd.f32 %v1959, %v1889
      %v1992 = vadd.f32 %v1960, %v1891
      %v1993 = vadd.f32 %v1961, %v1894
      %v1994 = vadd.f32 %v1962, %v1896
      %v1995 = vadd.f32 %v1963, %v1899
      %v1996 = vadd.f32 %v1964, %v1901
      %v1997 = vadd.f32 %v1965, %v1904
      %v1998 = vadd.f32 %v1966, %v1906
      %v1999 = vadd.f32 %v1967, %v1909
      %v2000 = vadd.f32 %v1968, %v1911
      %v2001 = vadd.f32 %v1969, %v1914
      %v2002 = vadd.f32 %v1970, %v1916
      %v2003 = vadd.f32 %v1971, %v1919
      %v2004 = vadd.f32 %v1972, %v1921
      %v2005 = vadd.f32 %v1973, %v1924
      %v2006 = vadd.f32 %v1974, %v1926
      %v2007 = vadd.f32 %v1975, %v1929
      %v2008 = vadd.f32 %v1976, %v1931
      %v2009 = vadd.f32 %v1977, %v1934
      %v2010 = vadd.f32 %v1978, %v1936
      %v2011 = vadd.f32 %v1979, %v1939
      %v2012 = vadd.f32 %v1980, %v1941
      %v2013 = vadd.f32 %v1981, %v1944
      %v2014 = vadd.f32 %v1982, %v1946
      %v2015 = vadd.f32 %v1983, %v1949
      %v2016 = vadd.f32 %v1984, %v1951
      %2017 = vst.msk [vmem:[#allocation2] sm:$0xff] %vm399, %v1985
      %2018 = vst.msk [vmem:[#allocation2 + $0x8] sm:$0xff] %vm399, %v1986
      %2019 = vst.msk [vmem:[#allocation2 + $0x10] sm:$0xff] %vm399, %v1987
      %2020 = vst.msk [vmem:[#allocation2 + $0x18] sm:$0xff] %vm399, %v1988
      %2021 = vst.msk [vmem:[#allocation2 + $0x20] sm:$0xff] %vm399, %v1989
      %2022 = vst.msk [vmem:[#allocation2 + $0x28] sm:$0xff] %vm399, %v1990
      %2023 = vst.msk [vmem:[#allocation2 + $0x30] sm:$0xff] %vm399, %v1991
      %2024 = vst.msk [vmem:[#allocation2 + $0x38] sm:$0xff] %vm399, %v1992
      %2025 = vst.msk [vmem:[#allocation2 + $0x40] sm:$0xff] %vm399, %v1993
      %2026 = vst.msk [vmem:[#allocation2 + $0x48] sm:$0xff] %vm399, %v1994
      %2027 = vst.msk [vmem:[#allocation2 + $0x50] sm:$0xff] %vm399, %v1995
      %2028 = vst.msk [vmem:[#allocation2 + $0x58] sm:$0xff] %vm399, %v1996
      %2029 = vst.msk [vmem:[#allocation2 + $0x60] sm:$0xff] %vm399, %v1997
      %2030 = vst.msk [vmem:[#allocation2 + $0x68] sm:$0xff] %vm399, %v1998
      %2031 = vst.msk [vmem:[#allocation2 + $0x70] sm:$0xff] %vm399, %v1999
      %2032 = vst.msk [vmem:[#allocation2 + $0x78] sm:$0xff] %vm399, %v2000
      %2033 = vst.msk [vmem:[#allocation2 + $0x80] sm:$0xff] %vm399, %v2001
      %2034 = vst.msk [vmem:[#allocation2 + $0x88] sm:$0xff] %vm399, %v2002
      %2035 = vst.msk [vmem:[#allocation2 + $0x90] sm:$0xff] %vm399, %v2003
      %2036 = vst.msk [vmem:[#allocation2 + $0x98] sm:$0xff] %vm399, %v2004
      %2037 = vst.msk [vmem:[#allocation2 + $0xa0] sm:$0xff] %vm399, %v2005
      %2038 = vst.msk [vmem:[#allocation2 + $0xa8] sm:$0xff] %vm399, %v2006
      %2039 = vst.msk [vmem:[#allocation2 + $0xb0] sm:$0xff] %vm399, %v2007
      %2040 = vst.msk [vmem:[#allocation2 + $0xb8] sm:$0xff] %vm399, %v2008
      %2041 = vst.msk [vmem:[#allocation2 + $0xc0] sm:$0xff] %vm399, %v2009
      %2042 = vst.msk [vmem:[#allocation2 + $0xc8] sm:$0xff] %vm399, %v2010
      %2043 = vst.msk [vmem:[#allocation2 + $0xd0] sm:$0xff] %vm399, %v2011
      %2044 = vst.msk [vmem:[#allocation2 + $0xd8] sm:$0xff] %vm399, %v2012
      %2045 = vst.msk [vmem:[#allocation2 + $0xe0] sm:$0xff] %vm399, %v2013
      %2046 = vst.msk [vmem:[#allocation2 + $0xe8] sm:$0xff] %vm399, %v2014
      %2047 = vst.msk [vmem:[#allocation2 + $0xf0] sm:$0xff] %vm399, %v2015
      %2048 = vst.msk [vmem:[#allocation2 + $0xf8] sm:$0xff] %vm399, %v2016
      %v2049 = vld [vmem:[%s235 + $0x28] sm:$0xf]
      %v2050 = vld [vmem:[%s235 + $0x2c] sm:$0xf]
      %v2051 = vld [vmem:[%s235 + $0x30] sm:$0xf]
      %v2052 = vld [vmem:[%s235 + $0x34] sm:$0xf]
      %v2053 = vld [vmem:[%s235 + $0x38] sm:$0xf]
      %v2054 = vld [vmem:[%s235 + $0x3c] sm:$0xf]
      %v2055 = vld [vmem:[%s235 + $0x40] sm:$0xf]
      %v2056 = vld [vmem:[%s235 + $0x44] sm:$0xf]
      %v2057 = vld [vmem:[%s235 + $0x48] sm:$0xf]
      %v2058 = vld [vmem:[%s235 + $0x4c] sm:$0xf]
      %v2059 = vld [vmem:[%s235 + $0x50] sm:$0xf]
      %v2060 = vld [vmem:[%s235 + $0x54] sm:$0xf]
      %v2061 = vld [vmem:[%s235 + $0x58] sm:$0xf]
      %v2062 = vld [vmem:[%s235 + $0x5c] sm:$0xf]
      %v2063 = vld [vmem:[%s235 + $0x60] sm:$0xf]
      %v2064 = vld [vmem:[%s235 + $0x64] sm:$0xf]
      %v2065 = vld [vmem:[%s235 + $0x68] sm:$0xf]
      %v2066 = vld [vmem:[%s235 + $0x6c] sm:$0xf]
      %v2067 = vld [vmem:[%s235 + $0x70] sm:$0xf]
      %v2068 = vld [vmem:[%s235 + $0x74] sm:$0xf]
      %v2069 = vld [vmem:[%s235 + $0x78] sm:$0xf]
      %v2070 = vld [vmem:[%s235 + $0x7c] sm:$0xf]
      %v2071 = vld [vmem:[%s235 + $0x80] sm:$0xf]
      %v2072 = vld [vmem:[%s235 + $0x84] sm:$0xf]
      %v2073 = vld [vmem:[%s235 + $0x88] sm:$0xf]
      %v2074 = vld [vmem:[%s235 + $0x8c] sm:$0xf]
      %v2075 = vld [vmem:[%s235 + $0x90] sm:$0xf]
      %v2076 = vld [vmem:[%s235 + $0x94] sm:$0xf]
      %v2077 = vld [vmem:[%s235 + $0x98] sm:$0xf]
      %v2078 = vld [vmem:[%s235 + $0x9c] sm:$0xf]
      %v2079 = vld [vmem:[%s235 + $0xa0] sm:$0xf]
      %v2080 = vld [vmem:[%s235 + $0xa4] sm:$0xf]
      %s2081 = scalar_lea.vmem %s1, 120
      %v2082 = vld [vmem:[%s2081] sm:$0xf]
      %v2083 = vld [vmem:[%s2081 + $0x4] sm:$0xf]
      %v2084 = vld [vmem:[%s2081 + $0x8] sm:$0xf]
      %v2085 = vld [vmem:[%s2081 + $0xc] sm:$0xf]
      %v2086 = vld [vmem:[%s2081 + $0x10] sm:$0xf]
      %v2087 = vld [vmem:[%s2081 + $0x14] sm:$0xf]
      %v2120 = vunpack.c.l.b16 %v2049
      %v2121 = vunpack.c.l.b16 %v2050
      %v2122 = vunpack.c.l.b16 %v2051
      %v2123 = vunpack.c.l.b16 %v2052
      %v2124 = vunpack.c.l.b16 %v2053
      %v2125 = vunpack.c.l.b16 %v2054
      %v2126 = vunpack.c.l.b16 %v2055
      %v2127 = vunpack.c.l.b16 %v2056
      %v2128 = vunpack.c.l.b16 %v2057
      %v2129 = vunpack.c.l.b16 %v2058
      %v2130 = vunpack.c.l.b16 %v2059
      %v2131 = vunpack.c.l.b16 %v2060
      %v2132 = vunpack.c.l.b16 %v2061
      %v2133 = vunpack.c.l.b16 %v2062
      %v2134 = vunpack.c.l.b16 %v2063
      %v2135 = vunpack.c.l.b16 %v2064
      %v2136 = vunpack.c.l.b16 %v2065
      %v2137 = vunpack.c.l.b16 %v2066
      %v2138 = vunpack.c.l.b16 %v2067
      %v2139 = vunpack.c.l.b16 %v2068
      %v2140 = vunpack.c.l.b16 %v2069
      %v2141 = vunpack.c.l.b16 %v2070
      %v2142 = vunpack.c.l.b16 %v2071
      %v2143 = vunpack.c.l.b16 %v2072
      %v2144 = vunpack.c.l.b16 %v2073
      %v2145 = vunpack.c.l.b16 %v2074
      %v2146 = vunpack.c.l.b16 %v2075
      %v2147 = vunpack.c.l.b16 %v2076
      %v2148 = vunpack.c.l.b16 %v2077
      %v2149 = vunpack.c.l.b16 %v2078
      %v2150 = vunpack.c.l.b16 %v2079
      %v2151 = vunpack.c.l.b16 %v2080
      %v2152 = vpack.c.b16 %v2121, %v2120
      %v2153 = vpack.c.b16 %v2123, %v2122
      %v2154 = vpack.c.b16 %v2125, %v2124
      %v2155 = vpack.c.b16 %v2127, %v2126
      %v2156 = vpack.c.b16 %v2129, %v2128
      %v2157 = vpack.c.b16 %v2131, %v2130
      %v2158 = vpack.c.b16 %v2133, %v2132
      %v2159 = vpack.c.b16 %v2135, %v2134
      %v2160 = vpack.c.b16 %v2137, %v2136
      %v2161 = vpack.c.b16 %v2139, %v2138
      %v2162 = vpack.c.b16 %v2141, %v2140
      %v2163 = vpack.c.b16 %v2143, %v2142
      %v2164 = vpack.c.b16 %v2145, %v2144
      %v2165 = vpack.c.b16 %v2147, %v2146
      %v2166 = vpack.c.b16 %v2149, %v2148
      %v2167 = vpack.c.b16 %v2151, %v2150
      %v2174 = vunpack.c.l.b16 %v2082
      %v2175 = vunpack.c.l.b16 %v2083
      %v2176 = vunpack.c.l.b16 %v2084
      %v2177 = vunpack.c.l.b16 %v2085
      %v2178 = vunpack.c.l.b16 %v2086
      %v2179 = vunpack.c.l.b16 %v2087
      %v2180 = vpack.c.b16 %v2175, %v2174
      %v2181 = vpack.c.b16 %v2177, %v2176
      %v2182 = vpack.c.b16 %v2179, %v2178
      %v2187 = vsel %vm399, %v2152, 0
      %v2190 = vsel %vm399, %v2153, 0
      %v2193 = vsel %vm399, %v2154, 0
      %v2196 = vsel %vm399, %v2155, 0
      %v2199 = vsel %vm399, %v2156, 0
      %v2202 = vsel %vm399, %v2157, 0
      %v2205 = vsel %vm399, %v2158, 0
      %v2208 = vsel %vm399, %v2159, 0
      %v2211 = vsel %vm399, %v2160, 0
      %v2214 = vsel %vm399, %v2161, 0
      %v2217 = vsel %vm399, %v2162, 0
      %v2220 = vsel %vm399, %v2163, 0
      %v2223 = vsel %vm399, %v2164, 0
      %v2226 = vsel %vm399, %v2165, 0
      %v2229 = vsel %vm399, %v2166, 0
      %v2232 = vsel %vm399, %v2167, 0
      %2234 = vmatpush.bf16.msra.mxu0 0
      %2235 = vmatpush.bf16.msra.mxu0 0
      %2236 = vmatpush.bf16.msra.mxu0 0
      %2237 = vmatpush.bf16.msra.mxu0 0
      %2238 = vmatpush.bf16.msra.mxu0 0
      %2239 = vmatpush.bf16.msra.mxu0 %v2182
      %2240 = vmatpush.bf16.msra.mxu0 %v2181
      %2241 = vmatpush.bf16.msra.mxu0 %v2180
      %2242 = vmatmul.bf16.gmra.mxu0 %v2187
      %v2243 = vpop.f32.mrf.mxu0
      %v2244 = vadd.f32 0.0, %v2243
      %v2245 = vpop.f32.mrf.mxu0
      %v2246 = vadd.f32 0.0, %v2245
      %2247 = vmatmul.bf16.gmra.mxu0 %v2190
      %v2248 = vpop.f32.mrf.mxu0
      %v2249 = vadd.f32 0.0, %v2248
      %v2250 = vpop.f32.mrf.mxu0
      %v2251 = vadd.f32 0.0, %v2250
      %2252 = vmatmul.bf16.gmra.mxu0 %v2193
      %v2253 = vpop.f32.mrf.mxu0
      %v2254 = vadd.f32 0.0, %v2253
      %v2255 = vpop.f32.mrf.mxu0
      %v2256 = vadd.f32 0.0, %v2255
      %2257 = vmatmul.bf16.gmra.mxu0 %v2196
      %v2258 = vpop.f32.mrf.mxu0
      %v2259 = vadd.f32 0.0, %v2258
      %v2260 = vpop.f32.mrf.mxu0
      %v2261 = vadd.f32 0.0, %v2260
      %2262 = vmatmul.bf16.gmra.mxu0 %v2199
      %v2263 = vpop.f32.mrf.mxu0
      %v2264 = vadd.f32 0.0, %v2263
      %v2265 = vpop.f32.mrf.mxu0
      %v2266 = vadd.f32 0.0, %v2265
      %2267 = vmatmul.bf16.gmra.mxu0 %v2202
      %v2268 = vpop.f32.mrf.mxu0
      %v2269 = vadd.f32 0.0, %v2268
      %v2270 = vpop.f32.mrf.mxu0
      %v2271 = vadd.f32 0.0, %v2270
      %2272 = vmatmul.bf16.gmra.mxu0 %v2205
      %v2273 = vpop.f32.mrf.mxu0
      %v2274 = vadd.f32 0.0, %v2273
      %v2275 = vpop.f32.mrf.mxu0
      %v2276 = vadd.f32 0.0, %v2275
      %2277 = vmatmul.bf16.gmra.mxu0 %v2208
      %v2278 = vpop.f32.mrf.mxu0
      %v2279 = vadd.f32 0.0, %v2278
      %v2280 = vpop.f32.mrf.mxu0
      %v2281 = vadd.f32 0.0, %v2280
      %2282 = vmatmul.bf16.gmra.mxu0 %v2211
      %v2283 = vpop.f32.mrf.mxu0
      %v2284 = vadd.f32 0.0, %v2283
      %v2285 = vpop.f32.mrf.mxu0
      %v2286 = vadd.f32 0.0, %v2285
      %2287 = vmatmul.bf16.gmra.mxu0 %v2214
      %v2288 = vpop.f32.mrf.mxu0
      %v2289 = vadd.f32 0.0, %v2288
      %v2290 = vpop.f32.mrf.mxu0
      %v2291 = vadd.f32 0.0, %v2290
      %2292 = vmatmul.bf16.gmra.mxu0 %v2217
      %v2293 = vpop.f32.mrf.mxu0
      %v2294 = vadd.f32 0.0, %v2293
      %v2295 = vpop.f32.mrf.mxu0
      %v2296 = vadd.f32 0.0, %v2295
      %2297 = vmatmul.bf16.gmra.mxu0 %v2220
      %v2298 = vpop.f32.mrf.mxu0
      %v2299 = vadd.f32 0.0, %v2298
      %v2300 = vpop.f32.mrf.mxu0
      %v2301 = vadd.f32 0.0, %v2300
      %2302 = vmatmul.bf16.gmra.mxu0 %v2223
      %v2303 = vpop.f32.mrf.mxu0
      %v2304 = vadd.f32 0.0, %v2303
      %v2305 = vpop.f32.mrf.mxu0
      %v2306 = vadd.f32 0.0, %v2305
      %2307 = vmatmul.bf16.gmra.mxu0 %v2226
      %v2308 = vpop.f32.mrf.mxu0
      %v2309 = vadd.f32 0.0, %v2308
      %v2310 = vpop.f32.mrf.mxu0
      %v2311 = vadd.f32 0.0, %v2310
      %2312 = vmatmul.bf16.gmra.mxu0 %v2229
      %v2313 = vpop.f32.mrf.mxu0
      %v2314 = vadd.f32 0.0, %v2313
      %v2315 = vpop.f32.mrf.mxu0
      %v2316 = vadd.f32 0.0, %v2315
      %2317 = vmatmul.bf16.gmra.mxu0 %v2232
      %v2318 = vpop.f32.mrf.mxu0
      %v2319 = vadd.f32 0.0, %v2318
      %v2320 = vpop.f32.mrf.mxu0
      %v2321 = vadd.f32 0.0, %v2320
      %2322 = vdwg.mxu0
      %v2323 = vld [vmem:[#allocation2] sm:$0xff]
      %v2324 = vld [vmem:[#allocation2 + $0x8] sm:$0xff]
      %v2325 = vld [vmem:[#allocation2 + $0x10] sm:$0xff]
      %v2326 = vld [vmem:[#allocation2 + $0x18] sm:$0xff]
      %v2327 = vld [vmem:[#allocation2 + $0x20] sm:$0xff]
      %v2328 = vld [vmem:[#allocation2 + $0x28] sm:$0xff]
      %v2329 = vld [vmem:[#allocation2 + $0x30] sm:$0xff]
      %v2330 = vld [vmem:[#allocation2 + $0x38] sm:$0xff]
      %v2331 = vld [vmem:[#allocation2 + $0x40] sm:$0xff]
      %v2332 = vld [vmem:[#allocation2 + $0x48] sm:$0xff]
      %v2333 = vld [vmem:[#allocation2 + $0x50] sm:$0xff]
      %v2334 = vld [vmem:[#allocation2 + $0x58] sm:$0xff]
      %v2335 = vld [vmem:[#allocation2 + $0x60] sm:$0xff]
      %v2336 = vld [vmem:[#allocation2 + $0x68] sm:$0xff]
      %v2337 = vld [vmem:[#allocation2 + $0x70] sm:$0xff]
      %v2338 = vld [vmem:[#allocation2 + $0x78] sm:$0xff]
      %v2339 = vld [vmem:[#allocation2 + $0x80] sm:$0xff]
      %v2340 = vld [vmem:[#allocation2 + $0x88] sm:$0xff]
      %v2341 = vld [vmem:[#allocation2 + $0x90] sm:$0xff]
      %v2342 = vld [vmem:[#allocation2 + $0x98] sm:$0xff]
      %v2343 = vld [vmem:[#allocation2 + $0xa0] sm:$0xff]
      %v2344 = vld [vmem:[#allocation2 + $0xa8] sm:$0xff]
      %v2345 = vld [vmem:[#allocation2 + $0xb0] sm:$0xff]
      %v2346 = vld [vmem:[#allocation2 + $0xb8] sm:$0xff]
      %v2347 = vld [vmem:[#allocation2 + $0xc0] sm:$0xff]
      %v2348 = vld [vmem:[#allocation2 + $0xc8] sm:$0xff]
      %v2349 = vld [vmem:[#allocation2 + $0xd0] sm:$0xff]
      %v2350 = vld [vmem:[#allocation2 + $0xd8] sm:$0xff]
      %v2351 = vld [vmem:[#allocation2 + $0xe0] sm:$0xff]
      %v2352 = vld [vmem:[#allocation2 + $0xe8] sm:$0xff]
      %v2353 = vld [vmem:[#allocation2 + $0xf0] sm:$0xff]
      %v2354 = vld [vmem:[#allocation2 + $0xf8] sm:$0xff]
      %v2355 = vadd.f32 %v2323, %v2244
      %v2356 = vadd.f32 %v2324, %v2246
      %v2357 = vadd.f32 %v2325, %v2249
      %v2358 = vadd.f32 %v2326, %v2251
      %v2359 = vadd.f32 %v2327, %v2254
      %v2360 = vadd.f32 %v2328, %v2256
      %v2361 = vadd.f32 %v2329, %v2259
      %v2362 = vadd.f32 %v2330, %v2261
      %v2363 = vadd.f32 %v2331, %v2264
      %v2364 = vadd.f32 %v2332, %v2266
      %v2365 = vadd.f32 %v2333, %v2269
      %v2366 = vadd.f32 %v2334, %v2271
      %v2367 = vadd.f32 %v2335, %v2274
      %v2368 = vadd.f32 %v2336, %v2276
      %v2369 = vadd.f32 %v2337, %v2279
      %v2370 = vadd.f32 %v2338, %v2281
      %v2371 = vadd.f32 %v2339, %v2284
      %v2372 = vadd.f32 %v2340, %v2286
      %v2373 = vadd.f32 %v2341, %v2289
      %v2374 = vadd.f32 %v2342, %v2291
      %v2375 = vadd.f32 %v2343, %v2294
      %v2376 = vadd.f32 %v2344, %v2296
      %v2377 = vadd.f32 %v2345, %v2299
      %v2378 = vadd.f32 %v2346, %v2301
      %v2379 = vadd.f32 %v2347, %v2304
      %v2380 = vadd.f32 %v2348, %v2306
      %v2381 = vadd.f32 %v2349, %v2309
      %v2382 = vadd.f32 %v2350, %v2311
      %v2383 = vadd.f32 %v2351, %v2314
      %v2384 = vadd.f32 %v2352, %v2316
      %v2385 = vadd.f32 %v2353, %v2319
      %v2386 = vadd.f32 %v2354, %v2321
      %2387 = vst.msk [vmem:[#allocation2] sm:$0xff] %vm399, %v2355
      %2388 = vst.msk [vmem:[#allocation2 + $0x8] sm:$0xff] %vm399, %v2356
      %2389 = vst.msk [vmem:[#allocation2 + $0x10] sm:$0xff] %vm399, %v2357
      %2390 = vst.msk [vmem:[#allocation2 + $0x18] sm:$0xff] %vm399, %v2358
      %2391 = vst.msk [vmem:[#allocation2 + $0x20] sm:$0xff] %vm399, %v2359
      %2392 = vst.msk [vmem:[#allocation2 + $0x28] sm:$0xff] %vm399, %v2360
      %2393 = vst.msk [vmem:[#allocation2 + $0x30] sm:$0xff] %vm399, %v2361
      %2394 = vst.msk [vmem:[#allocation2 + $0x38] sm:$0xff] %vm399, %v2362
      %2395 = vst.msk [vmem:[#allocation2 + $0x40] sm:$0xff] %vm399, %v2363
      %2396 = vst.msk [vmem:[#allocation2 + $0x48] sm:$0xff] %vm399, %v2364
      %2397 = vst.msk [vmem:[#allocation2 + $0x50] sm:$0xff] %vm399, %v2365
      %2398 = vst.msk [vmem:[#allocation2 + $0x58] sm:$0xff] %vm399, %v2366
      %2399 = vst.msk [vmem:[#allocation2 + $0x60] sm:$0xff] %vm399, %v2367
      %2400 = vst.msk [vmem:[#allocation2 + $0x68] sm:$0xff] %vm399, %v2368
      %2401 = vst.msk [vmem:[#allocation2 + $0x70] sm:$0xff] %vm399, %v2369
      %2402 = vst.msk [vmem:[#allocation2 + $0x78] sm:$0xff] %vm399, %v2370
      %2403 = vst.msk [vmem:[#allocation2 + $0x80] sm:$0xff] %vm399, %v2371
      %2404 = vst.msk [vmem:[#allocation2 + $0x88] sm:$0xff] %vm399, %v2372
      %2405 = vst.msk [vmem:[#allocation2 + $0x90] sm:$0xff] %vm399, %v2373
      %2406 = vst.msk [vmem:[#allocation2 + $0x98] sm:$0xff] %vm399, %v2374
      %2407 = vst.msk [vmem:[#allocation2 + $0xa0] sm:$0xff] %vm399, %v2375
      %2408 = vst.msk [vmem:[#allocation2 + $0xa8] sm:$0xff] %vm399, %v2376
      %2409 = vst.msk [vmem:[#allocation2 + $0xb0] sm:$0xff] %vm399, %v2377
      %2410 = vst.msk [vmem:[#allocation2 + $0xb8] sm:$0xff] %vm399, %v2378
      %2411 = vst.msk [vmem:[#allocation2 + $0xc0] sm:$0xff] %vm399, %v2379
      %2412 = vst.msk [vmem:[#allocation2 + $0xc8] sm:$0xff] %vm399, %v2380
      %2413 = vst.msk [vmem:[#allocation2 + $0xd0] sm:$0xff] %vm399, %v2381
      %2414 = vst.msk [vmem:[#allocation2 + $0xd8] sm:$0xff] %vm399, %v2382
      %2415 = vst.msk [vmem:[#allocation2 + $0xe0] sm:$0xff] %vm399, %v2383
      %2416 = vst.msk [vmem:[#allocation2 + $0xe8] sm:$0xff] %vm399, %v2384
      %2417 = vst.msk [vmem:[#allocation2 + $0xf0] sm:$0xff] %vm399, %v2385
      %2418 = vst.msk [vmem:[#allocation2 + $0xf8] sm:$0xff] %vm399, %v2386
      %v2419 = vld [vmem:[%s235 + $0x30] sm:$0xf]
      %v2420 = vld [vmem:[%s235 + $0x34] sm:$0xf]
      %v2421 = vld [vmem:[%s235 + $0x38] sm:$0xf]
      %v2422 = vld [vmem:[%s235 + $0x3c] sm:$0xf]
      %v2423 = vld [vmem:[%s235 + $0x40] sm:$0xf]
      %v2424 = vld [vmem:[%s235 + $0x44] sm:$0xf]
      %v2425 = vld [vmem:[%s235 + $0x48] sm:$0xf]
      %v2426 = vld [vmem:[%s235 + $0x4c] sm:$0xf]
      %v2427 = vld [vmem:[%s235 + $0x50] sm:$0xf]
      %v2428 = vld [vmem:[%s235 + $0x54] sm:$0xf]
      %v2429 = vld [vmem:[%s235 + $0x58] sm:$0xf]
      %v2430 = vld [vmem:[%s235 + $0x5c] sm:$0xf]
      %v2431 = vld [vmem:[%s235 + $0x60] sm:$0xf]
      %v2432 = vld [vmem:[%s235 + $0x64] sm:$0xf]
      %v2433 = vld [vmem:[%s235 + $0x68] sm:$0xf]
      %v2434 = vld [vmem:[%s235 + $0x6c] sm:$0xf]
      %v2435 = vld [vmem:[%s235 + $0x70] sm:$0xf]
      %v2436 = vld [vmem:[%s235 + $0x74] sm:$0xf]
      %v2437 = vld [vmem:[%s235 + $0x78] sm:$0xf]
      %v2438 = vld [vmem:[%s235 + $0x7c] sm:$0xf]
      %v2439 = vld [vmem:[%s235 + $0x80] sm:$0xf]
      %v2440 = vld [vmem:[%s235 + $0x84] sm:$0xf]
      %v2441 = vld [vmem:[%s235 + $0x88] sm:$0xf]
      %v2442 = vld [vmem:[%s235 + $0x8c] sm:$0xf]
      %v2443 = vld [vmem:[%s235 + $0x90] sm:$0xf]
      %v2444 = vld [vmem:[%s235 + $0x94] sm:$0xf]
      %v2445 = vld [vmem:[%s235 + $0x98] sm:$0xf]
      %v2446 = vld [vmem:[%s235 + $0x9c] sm:$0xf]
      %v2447 = vld [vmem:[%s235 + $0xa0] sm:$0xf]
      %v2448 = vld [vmem:[%s235 + $0xa4] sm:$0xf]
      %v2449 = vld [vmem:[%s235 + $0xa8] sm:$0xf]
      %v2450 = vld [vmem:[%s235 + $0xac] sm:$0xf]
      %s2451 = scalar_lea.vmem %s1, 144
      %v2452 = vld [vmem:[%s2451] sm:$0xf]
      %v2453 = vld [vmem:[%s2451 + $0x4] sm:$0xf]
      %v2454 = vld [vmem:[%s2451 + $0x8] sm:$0xf]
      %v2455 = vld [vmem:[%s2451 + $0xc] sm:$0xf]
      %v2456 = vld [vmem:[%s2451 + $0x10] sm:$0xf]
      %v2457 = vld [vmem:[%s2451 + $0x14] sm:$0xf]
      %v2490 = vunpack.c.l.b16 %v2419
      %v2491 = vunpack.c.l.b16 %v2420
      %v2492 = vunpack.c.l.b16 %v2421
      %v2493 = vunpack.c.l.b16 %v2422
      %v2494 = vunpack.c.l.b16 %v2423
      %v2495 = vunpack.c.l.b16 %v2424
      %v2496 = vunpack.c.l.b16 %v2425
      %v2497 = vunpack.c.l.b16 %v2426
      %v2498 = vunpack.c.l.b16 %v2427
      %v2499 = vunpack.c.l.b16 %v2428
      %v2500 = vunpack.c.l.b16 %v2429
      %v2501 = vunpack.c.l.b16 %v2430
      %v2502 = vunpack.c.l.b16 %v2431
      %v2503 = vunpack.c.l.b16 %v2432
      %v2504 = vunpack.c.l.b16 %v2433
      %v2505 = vunpack.c.l.b16 %v2434
      %v2506 = vunpack.c.l.b16 %v2435
      %v2507 = vunpack.c.l.b16 %v2436
      %v2508 = vunpack.c.l.b16 %v2437
      %v2509 = vunpack.c.l.b16 %v2438
      %v2510 = vunpack.c.l.b16 %v2439
      %v2511 = vunpack.c.l.b16 %v2440
      %v2512 = vunpack.c.l.b16 %v2441
      %v2513 = vunpack.c.l.b16 %v2442
      %v2514 = vunpack.c.l.b16 %v2443
      %v2515 = vunpack.c.l.b16 %v2444
      %v2516 = vunpack.c.l.b16 %v2445
      %v2517 = vunpack.c.l.b16 %v2446
      %v2518 = vunpack.c.l.b16 %v2447
      %v2519 = vunpack.c.l.b16 %v2448
      %v2520 = vunpack.c.l.b16 %v2449
      %v2521 = vunpack.c.l.b16 %v2450
      %v2522 = vpack.c.b16 %v2491, %v2490
      %v2523 = vpack.c.b16 %v2493, %v2492
      %v2524 = vpack.c.b16 %v2495, %v2494
      %v2525 = vpack.c.b16 %v2497, %v2496
      %v2526 = vpack.c.b16 %v2499, %v2498
      %v2527 = vpack.c.b16 %v2501, %v2500
      %v2528 = vpack.c.b16 %v2503, %v2502
      %v2529 = vpack.c.b16 %v2505, %v2504
      %v2530 = vpack.c.b16 %v2507, %v2506
      %v2531 = vpack.c.b16 %v2509, %v2508
      %v2532 = vpack.c.b16 %v2511, %v2510
      %v2533 = vpack.c.b16 %v2513, %v2512
      %v2534 = vpack.c.b16 %v2515, %v2514
      %v2535 = vpack.c.b16 %v2517, %v2516
      %v2536 = vpack.c.b16 %v2519, %v2518
      %v2537 = vpack.c.b16 %v2521, %v2520
      %v2544 = vunpack.c.l.b16 %v2452
      %v2545 = vunpack.c.l.b16 %v2453
      %v2546 = vunpack.c.l.b16 %v2454
      %v2547 = vunpack.c.l.b16 %v2455
      %v2548 = vunpack.c.l.b16 %v2456
      %v2549 = vunpack.c.l.b16 %v2457
      %v2550 = vpack.c.b16 %v2545, %v2544
      %v2551 = vpack.c.b16 %v2547, %v2546
      %v2552 = vpack.c.b16 %v2549, %v2548
      %v2557 = vsel %vm399, %v2522, 0
      %v2560 = vsel %vm399, %v2523, 0
      %v2563 = vsel %vm399, %v2524, 0
      %v2566 = vsel %vm399, %v2525, 0
      %v2569 = vsel %vm399, %v2526, 0
      %v2572 = vsel %vm399, %v2527, 0
      %v2575 = vsel %vm399, %v2528, 0
      %v2578 = vsel %vm399, %v2529, 0
      %v2581 = vsel %vm399, %v2530, 0
      %v2584 = vsel %vm399, %v2531, 0
      %v2587 = vsel %vm399, %v2532, 0
      %v2590 = vsel %vm399, %v2533, 0
      %v2593 = vsel %vm399, %v2534, 0
      %v2596 = vsel %vm399, %v2535, 0
      %v2599 = vsel %vm399, %v2536, 0
      %v2602 = vsel %vm399, %v2537, 0
      %2604 = vmatpush.bf16.msra.mxu0 0
      %2605 = vmatpush.bf16.msra.mxu0 0
      %2606 = vmatpush.bf16.msra.mxu0 0
      %2607 = vmatpush.bf16.msra.mxu0 0
      %2608 = vmatpush.bf16.msra.mxu0 0
      %2609 = vmatpush.bf16.msra.mxu0 %v2552
      %2610 = vmatpush.bf16.msra.mxu0 %v2551
      %2611 = vmatpush.bf16.msra.mxu0 %v2550
      %2612 = vmatmul.bf16.gmra.mxu0 %v2557
      %v2613 = vpop.f32.mrf.mxu0
      %v2614 = vadd.f32 0.0, %v2613
      %v2615 = vpop.f32.mrf.mxu0
      %v2616 = vadd.f32 0.0, %v2615
      %2617 = vmatmul.bf16.gmra.mxu0 %v2560
      %v2618 = vpop.f32.mrf.mxu0
      %v2619 = vadd.f32 0.0, %v2618
      %v2620 = vpop.f32.mrf.mxu0
      %v2621 = vadd.f32 0.0, %v2620
      %2622 = vmatmul.bf16.gmra.mxu0 %v2563
      %v2623 = vpop.f32.mrf.mxu0
      %v2624 = vadd.f32 0.0, %v2623
      %v2625 = vpop.f32.mrf.mxu0
      %v2626 = vadd.f32 0.0, %v2625
      %2627 = vmatmul.bf16.gmra.mxu0 %v2566
      %v2628 = vpop.f32.mrf.mxu0
      %v2629 = vadd.f32 0.0, %v2628
      %v2630 = vpop.f32.mrf.mxu0
      %v2631 = vadd.f32 0.0, %v2630
      %2632 = vmatmul.bf16.gmra.mxu0 %v2569
      %v2633 = vpop.f32.mrf.mxu0
      %v2634 = vadd.f32 0.0, %v2633
      %v2635 = vpop.f32.mrf.mxu0
      %v2636 = vadd.f32 0.0, %v2635
      %2637 = vmatmul.bf16.gmra.mxu0 %v2572
      %v2638 = vpop.f32.mrf.mxu0
      %v2639 = vadd.f32 0.0, %v2638
      %v2640 = vpop.f32.mrf.mxu0
      %v2641 = vadd.f32 0.0, %v2640
      %2642 = vmatmul.bf16.gmra.mxu0 %v2575
      %v2643 = vpop.f32.mrf.mxu0
      %v2644 = vadd.f32 0.0, %v2643
      %v2645 = vpop.f32.mrf.mxu0
      %v2646 = vadd.f32 0.0, %v2645
      %2647 = vmatmul.bf16.gmra.mxu0 %v2578
      %v2648 = vpop.f32.mrf.mxu0
      %v2649 = vadd.f32 0.0, %v2648
      %v2650 = vpop.f32.mrf.mxu0
      %v2651 = vadd.f32 0.0, %v2650
      %2652 = vmatmul.bf16.gmra.mxu0 %v2581
      %v2653 = vpop.f32.mrf.mxu0
      %v2654 = vadd.f32 0.0, %v2653
      %v2655 = vpop.f32.mrf.mxu0
      %v2656 = vadd.f32 0.0, %v2655
      %2657 = vmatmul.bf16.gmra.mxu0 %v2584
      %v2658 = vpop.f32.mrf.mxu0
      %v2659 = vadd.f32 0.0, %v2658
      %v2660 = vpop.f32.mrf.mxu0
      %v2661 = vadd.f32 0.0, %v2660
      %2662 = vmatmul.bf16.gmra.mxu0 %v2587
      %v2663 = vpop.f32.mrf.mxu0
      %v2664 = vadd.f32 0.0, %v2663
      %v2665 = vpop.f32.mrf.mxu0
      %v2666 = vadd.f32 0.0, %v2665
      %2667 = vmatmul.bf16.gmra.mxu0 %v2590
      %v2668 = vpop.f32.mrf.mxu0
      %v2669 = vadd.f32 0.0, %v2668
      %v2670 = vpop.f32.mrf.mxu0
      %v2671 = vadd.f32 0.0, %v2670
      %2672 = vmatmul.bf16.gmra.mxu0 %v2593
      %v2673 = vpop.f32.mrf.mxu0
      %v2674 = vadd.f32 0.0, %v2673
      %v2675 = vpop.f32.mrf.mxu0
      %v2676 = vadd.f32 0.0, %v2675
      %2677 = vmatmul.bf16.gmra.mxu0 %v2596
      %v2678 = vpop.f32.mrf.mxu0
      %v2679 = vadd.f32 0.0, %v2678
      %v2680 = vpop.f32.mrf.mxu0
      %v2681 = vadd.f32 0.0, %v2680
      %2682 = vmatmul.bf16.gmra.mxu0 %v2599
      %v2683 = vpop.f32.mrf.mxu0
      %v2684 = vadd.f32 0.0, %v2683
      %v2685 = vpop.f32.mrf.mxu0
      %v2686 = vadd.f32 0.0, %v2685
      %2687 = vmatmul.bf16.gmra.mxu0 %v2602
      %v2688 = vpop.f32.mrf.mxu0
      %v2689 = vadd.f32 0.0, %v2688
      %v2690 = vpop.f32.mrf.mxu0
      %v2691 = vadd.f32 0.0, %v2690
      %2692 = vdwg.mxu0
      %v2693 = vld [vmem:[#allocation2] sm:$0xff]
      %v2694 = vld [vmem:[#allocation2 + $0x8] sm:$0xff]
      %v2695 = vld [vmem:[#allocation2 + $0x10] sm:$0xff]
      %v2696 = vld [vmem:[#allocation2 + $0x18] sm:$0xff]
      %v2697 = vld [vmem:[#allocation2 + $0x20] sm:$0xff]
      %v2698 = vld [vmem:[#allocation2 + $0x28] sm:$0xff]
      %v2699 = vld [vmem:[#allocation2 + $0x30] sm:$0xff]
      %v2700 = vld [vmem:[#allocation2 + $0x38] sm:$0xff]
      %v2701 = vld [vmem:[#allocation2 + $0x40] sm:$0xff]
      %v2702 = vld [vmem:[#allocation2 + $0x48] sm:$0xff]
      %v2703 = vld [vmem:[#allocation2 + $0x50] sm:$0xff]
      %v2704 = vld [vmem:[#allocation2 + $0x58] sm:$0xff]
      %v2705 = vld [vmem:[#allocation2 + $0x60] sm:$0xff]
      %v2706 = vld [vmem:[#allocation2 + $0x68] sm:$0xff]
      %v2707 = vld [vmem:[#allocation2 + $0x70] sm:$0xff]
      %v2708 = vld [vmem:[#allocation2 + $0x78] sm:$0xff]
      %v2709 = vld [vmem:[#allocation2 + $0x80] sm:$0xff]
      %v2710 = vld [vmem:[#allocation2 + $0x88] sm:$0xff]
      %v2711 = vld [vmem:[#allocation2 + $0x90] sm:$0xff]
      %v2712 = vld [vmem:[#allocation2 + $0x98] sm:$0xff]
      %v2713 = vld [vmem:[#allocation2 + $0xa0] sm:$0xff]
      %v2714 = vld [vmem:[#allocation2 + $0xa8] sm:$0xff]
      %v2715 = vld [vmem:[#allocation2 + $0xb0] sm:$0xff]
      %v2716 = vld [vmem:[#allocation2 + $0xb8] sm:$0xff]
      %v2717 = vld [vmem:[#allocation2 + $0xc0] sm:$0xff]
      %v2718 = vld [vmem:[#allocation2 + $0xc8] sm:$0xff]
      %v2719 = vld [vmem:[#allocation2 + $0xd0] sm:$0xff]
      %v2720 = vld [vmem:[#allocation2 + $0xd8] sm:$0xff]
      %v2721 = vld [vmem:[#allocation2 + $0xe0] sm:$0xff]
      %v2722 = vld [vmem:[#allocation2 + $0xe8] sm:$0xff]
      %v2723 = vld [vmem:[#allocation2 + $0xf0] sm:$0xff]
      %v2724 = vld [vmem:[#allocation2 + $0xf8] sm:$0xff]
      %v2725 = vadd.f32 %v2693, %v2614
      %v2726 = vadd.f32 %v2694, %v2616
      %v2727 = vadd.f32 %v2695, %v2619
      %v2728 = vadd.f32 %v2696, %v2621
      %v2729 = vadd.f32 %v2697, %v2624
      %v2730 = vadd.f32 %v2698, %v2626
      %v2731 = vadd.f32 %v2699, %v2629
      %v2732 = vadd.f32 %v2700, %v2631
      %v2733 = vadd.f32 %v2701, %v2634
      %v2734 = vadd.f32 %v2702, %v2636
      %v2735 = vadd.f32 %v2703, %v2639
      %v2736 = vadd.f32 %v2704, %v2641
      %v2737 = vadd.f32 %v2705, %v2644
      %v2738 = vadd.f32 %v2706, %v2646
      %v2739 = vadd.f32 %v2707, %v2649
      %v2740 = vadd.f32 %v2708, %v2651
      %v2741 = vadd.f32 %v2709, %v2654
      %v2742 = vadd.f32 %v2710, %v2656
      %v2743 = vadd.f32 %v2711, %v2659
      %v2744 = vadd.f32 %v2712, %v2661
      %v2745 = vadd.f32 %v2713, %v2664
      %v2746 = vadd.f32 %v2714, %v2666
      %v2747 = vadd.f32 %v2715, %v2669
      %v2748 = vadd.f32 %v2716, %v2671
      %v2749 = vadd.f32 %v2717, %v2674
      %v2750 = vadd.f32 %v2718, %v2676
      %v2751 = vadd.f32 %v2719, %v2679
      %v2752 = vadd.f32 %v2720, %v2681
      %v2753 = vadd.f32 %v2721, %v2684
      %v2754 = vadd.f32 %v2722, %v2686
      %v2755 = vadd.f32 %v2723, %v2689
      %v2756 = vadd.f32 %v2724, %v2691
      %2757 = vst.msk [vmem:[#allocation2] sm:$0xff] %vm399, %v2725
      %2758 = vst.msk [vmem:[#allocation2 + $0x8] sm:$0xff] %vm399, %v2726
      %2759 = vst.msk [vmem:[#allocation2 + $0x10] sm:$0xff] %vm399, %v2727
      %2760 = vst.msk [vmem:[#allocation2 + $0x18] sm:$0xff] %vm399, %v2728
      %2761 = vst.msk [vmem:[#allocation2 + $0x20] sm:$0xff] %vm399, %v2729
      %2762 = vst.msk [vmem:[#allocation2 + $0x28] sm:$0xff] %vm399, %v2730
      %2763 = vst.msk [vmem:[#allocation2 + $0x30] sm:$0xff] %vm399, %v2731
      %2764 = vst.msk [vmem:[#allocation2 + $0x38] sm:$0xff] %vm399, %v2732
      %2765 = vst.msk [vmem:[#allocation2 + $0x40] sm:$0xff] %vm399, %v2733
      %2766 = vst.msk [vmem:[#allocation2 + $0x48] sm:$0xff] %vm399, %v2734
      %2767 = vst.msk [vmem:[#allocation2 + $0x50] sm:$0xff] %vm399, %v2735
      %2768 = vst.msk [vmem:[#allocation2 + $0x58] sm:$0xff] %vm399, %v2736
      %2769 = vst.msk [vmem:[#allocation2 + $0x60] sm:$0xff] %vm399, %v2737
      %2770 = vst.msk [vmem:[#allocation2 + $0x68] sm:$0xff] %vm399, %v2738
      %2771 = vst.msk [vmem:[#allocation2 + $0x70] sm:$0xff] %vm399, %v2739
      %2772 = vst.msk [vmem:[#allocation2 + $0x78] sm:$0xff] %vm399, %v2740
      %2773 = vst.msk [vmem:[#allocation2 + $0x80] sm:$0xff] %vm399, %v2741
      %2774 = vst.msk [vmem:[#allocation2 + $0x88] sm:$0xff] %vm399, %v2742
      %2775 = vst.msk [vmem:[#allocation2 + $0x90] sm:$0xff] %vm399, %v2743
      %2776 = vst.msk [vmem:[#allocation2 + $0x98] sm:$0xff] %vm399, %v2744
      %2777 = vst.msk [vmem:[#allocation2 + $0xa0] sm:$0xff] %vm399, %v2745
      %2778 = vst.msk [vmem:[#allocation2 + $0xa8] sm:$0xff] %vm399, %v2746
      %2779 = vst.msk [vmem:[#allocation2 + $0xb0] sm:$0xff] %vm399, %v2747
      %2780 = vst.msk [vmem:[#allocation2 + $0xb8] sm:$0xff] %vm399, %v2748
      %2781 = vst.msk [vmem:[#allocation2 + $0xc0] sm:$0xff] %vm399, %v2749
      %2782 = vst.msk [vmem:[#allocation2 + $0xc8] sm:$0xff] %vm399, %v2750
      %2783 = vst.msk [vmem:[#allocation2 + $0xd0] sm:$0xff] %vm399, %v2751
      %2784 = vst.msk [vmem:[#allocation2 + $0xd8] sm:$0xff] %vm399, %v2752
      %2785 = vst.msk [vmem:[#allocation2 + $0xe0] sm:$0xff] %vm399, %v2753
      %2786 = vst.msk [vmem:[#allocation2 + $0xe8] sm:$0xff] %vm399, %v2754
      %2787 = vst.msk [vmem:[#allocation2 + $0xf0] sm:$0xff] %vm399, %v2755
      %2788 = vst.msk [vmem:[#allocation2 + $0xf8] sm:$0xff] %vm399, %v2756
      %v2789 = vld [vmem:[#allocation2] sm:$0xff]
      %v2790 = vld [vmem:[#allocation2 + $0x8] sm:$0xff]
      %v2791 = vld [vmem:[#allocation2 + $0x10] sm:$0xff]
      %v2792 = vld [vmem:[#allocation2 + $0x18] sm:$0xff]
      %v2793 = vld [vmem:[#allocation2 + $0x20] sm:$0xff]
      %v2794 = vld [vmem:[#allocation2 + $0x28] sm:$0xff]
      %v2795 = vld [vmem:[#allocation2 + $0x30] sm:$0xff]
      %v2796 = vld [vmem:[#allocation2 + $0x38] sm:$0xff]
      %v2797 = vld [vmem:[#allocation2 + $0x40] sm:$0xff]
      %v2798 = vld [vmem:[#allocation2 + $0x48] sm:$0xff]
      %v2799 = vld [vmem:[#allocation2 + $0x50] sm:$0xff]
      %v2800 = vld [vmem:[#allocation2 + $0x58] sm:$0xff]
      %v2801 = vld [vmem:[#allocation2 + $0x60] sm:$0xff]
      %v2802 = vld [vmem:[#allocation2 + $0x68] sm:$0xff]
      %v2803 = vld [vmem:[#allocation2 + $0x70] sm:$0xff]
      %v2804 = vld [vmem:[#allocation2 + $0x78] sm:$0xff]
      %v2805 = vld [vmem:[#allocation2 + $0x80] sm:$0xff]
      %v2806 = vld [vmem:[#allocation2 + $0x88] sm:$0xff]
      %v2807 = vld [vmem:[#allocation2 + $0x90] sm:$0xff]
      %v2808 = vld [vmem:[#allocation2 + $0x98] sm:$0xff]
      %v2809 = vld [vmem:[#allocation2 + $0xa0] sm:$0xff]
      %v2810 = vld [vmem:[#allocation2 + $0xa8] sm:$0xff]
      %v2811 = vld [vmem:[#allocation2 + $0xb0] sm:$0xff]
      %v2812 = vld [vmem:[#allocation2 + $0xb8] sm:$0xff]
      %v2813 = vld [vmem:[#allocation2 + $0xc0] sm:$0xff]
      %v2814 = vld [vmem:[#allocation2 + $0xc8] sm:$0xff]
      %v2815 = vld [vmem:[#allocation2 + $0xd0] sm:$0xff]
      %v2816 = vld [vmem:[#allocation2 + $0xd8] sm:$0xff]
      %v2817 = vld [vmem:[#allocation2 + $0xe0] sm:$0xff]
      %v2818 = vld [vmem:[#allocation2 + $0xe8] sm:$0xff]
      %v2819 = vld [vmem:[#allocation2 + $0xf0] sm:$0xff]
      %v2820 = vld [vmem:[#allocation2 + $0xf8] sm:$0xff]
      %v2821 = vpack.c.bf16 %v2789, %v2789
      %v2822 = vpack.c.bf16 %v2790, %v2790
      %v2823 = vpack.c.bf16 %v2791, %v2791
      %v2824 = vpack.c.bf16 %v2792, %v2792
      %v2825 = vpack.c.bf16 %v2793, %v2793
      %v2826 = vpack.c.bf16 %v2794, %v2794
      %v2827 = vpack.c.bf16 %v2795, %v2795
      %v2828 = vpack.c.bf16 %v2796, %v2796
      %v2829 = vpack.c.bf16 %v2797, %v2797
      %v2830 = vpack.c.bf16 %v2798, %v2798
      %v2831 = vpack.c.bf16 %v2799, %v2799
      %v2832 = vpack.c.bf16 %v2800, %v2800
      %v2833 = vpack.c.bf16 %v2801, %v2801
      %v2834 = vpack.c.bf16 %v2802, %v2802
      %v2835 = vpack.c.bf16 %v2803, %v2803
      %v2836 = vpack.c.bf16 %v2804, %v2804
      %v2837 = vpack.c.bf16 %v2805, %v2805
      %v2838 = vpack.c.bf16 %v2806, %v2806
      %v2839 = vpack.c.bf16 %v2807, %v2807
      %v2840 = vpack.c.bf16 %v2808, %v2808
      %v2841 = vpack.c.bf16 %v2809, %v2809
      %v2842 = vpack.c.bf16 %v2810, %v2810
      %v2843 = vpack.c.bf16 %v2811, %v2811
      %v2844 = vpack.c.bf16 %v2812, %v2812
      %v2845 = vpack.c.bf16 %v2813, %v2813
      %v2846 = vpack.c.bf16 %v2814, %v2814
      %v2847 = vpack.c.bf16 %v2815, %v2815
      %v2848 = vpack.c.bf16 %v2816, %v2816
      %v2849 = vpack.c.bf16 %v2817, %v2817
      %v2850 = vpack.c.bf16 %v2818, %v2818
      %v2851 = vpack.c.bf16 %v2819, %v2819
      %v2852 = vpack.c.bf16 %v2820, %v2820
      %vm2853 = vcmask 388096
      %2854 = vst.msk [vmem:[%s244] sm:$0xf] %vm2853, %v2821
      %2855 = vst.msk [vmem:[%s244 + $0x4] sm:$0xf] %vm2853, %v2822
      %2856 = vst.msk [vmem:[%s244 + $0x8] sm:$0xf] %vm2853, %v2823
      %2857 = vst.msk [vmem:[%s244 + $0xc] sm:$0xf] %vm2853, %v2824
      %2858 = vst.msk [vmem:[%s244 + $0x10] sm:$0xf] %vm2853, %v2825
      %2859 = vst.msk [vmem:[%s244 + $0x14] sm:$0xf] %vm2853, %v2826
      %2860 = vst.msk [vmem:[%s244 + $0x18] sm:$0xf] %vm2853, %v2827
      %2861 = vst.msk [vmem:[%s244 + $0x1c] sm:$0xf] %vm2853, %v2828
      %2862 = vst.msk [vmem:[%s244 + $0x20] sm:$0xf] %vm2853, %v2829
      %2863 = vst.msk [vmem:[%s244 + $0x24] sm:$0xf] %vm2853, %v2830
      %2864 = vst.msk [vmem:[%s244 + $0x28] sm:$0xf] %vm2853, %v2831
      %2865 = vst.msk [vmem:[%s244 + $0x2c] sm:$0xf] %vm2853, %v2832
      %2866 = vst.msk [vmem:[%s244 + $0x30] sm:$0xf] %vm2853, %v2833
      %2867 = vst.msk [vmem:[%s244 + $0x34] sm:$0xf] %vm2853, %v2834
      %2868 = vst.msk [vmem:[%s244 + $0x38] sm:$0xf] %vm2853, %v2835
      %2869 = vst.msk [vmem:[%s244 + $0x3c] sm:$0xf] %vm2853, %v2836
      %2870 = vst.msk [vmem:[%s244 + $0x40] sm:$0xf] %vm2853, %v2837
      %2871 = vst.msk [vmem:[%s244 + $0x44] sm:$0xf] %vm2853, %v2838
      %2872 = vst.msk [vmem:[%s244 + $0x48] sm:$0xf] %vm2853, %v2839
      %2873 = vst.msk [vmem:[%s244 + $0x4c] sm:$0xf] %vm2853, %v2840
      %2874 = vst.msk [vmem:[%s244 + $0x50] sm:$0xf] %vm2853, %v2841
      %2875 = vst.msk [vmem:[%s244 + $0x54] sm:$0xf] %vm2853, %v2842
      %2876 = vst.msk [vmem:[%s244 + $0x58] sm:$0xf] %vm2853, %v2843
      %2877 = vst.msk [vmem:[%s244 + $0x5c] sm:$0xf] %vm2853, %v2844
      %2878 = vst.msk [vmem:[%s244 + $0x60] sm:$0xf] %vm2853, %v2845
      %2879 = vst.msk [vmem:[%s244 + $0x64] sm:$0xf] %vm2853, %v2846
      %2880 = vst.msk [vmem:[%s244 + $0x68] sm:$0xf] %vm2853, %v2847
      %2881 = vst.msk [vmem:[%s244 + $0x6c] sm:$0xf] %vm2853, %v2848
      %2882 = vst.msk [vmem:[%s244 + $0x70] sm:$0xf] %vm2853, %v2849
      %2883 = vst.msk [vmem:[%s244 + $0x74] sm:$0xf] %vm2853, %v2850
      %2884 = vst.msk [vmem:[%s244 + $0x78] sm:$0xf] %vm2853, %v2851
      %2885 = vst.msk [vmem:[%s244 + $0x7c] sm:$0xf] %vm2853, %v2852
      %v2886 = vld [vmem:[%s250] sm:$0xff]
      %v2887 = vsel %vm399, %v2789, 0.0
      %v2888 = vsel %vm399, %v2790, 0.0
      %v2889 = vadd.f32 %v2887, %v2888
      %v2890 = vsel %vm399, %v2791, 0.0
      %v2891 = vadd.f32 %v2889, %v2890
      %v2892 = vsel %vm399, %v2792, 0.0
      %v2893 = vadd.f32 %v2891, %v2892
      %v2894 = vsel %vm399, %v2793, 0.0
      %v2895 = vadd.f32 %v2893, %v2894
      %v2896 = vsel %vm399, %v2794, 0.0
      %v2897 = vadd.f32 %v2895, %v2896
      %v2898 = vsel %vm399, %v2795, 0.0
      %v2899 = vadd.f32 %v2897, %v2898
      %v2900 = vsel %vm399, %v2796, 0.0
      %v2901 = vadd.f32 %v2899, %v2900
      %v2902 = vsel %vm399, %v2797, 0.0
      %v2903 = vadd.f32 %v2901, %v2902
      %v2904 = vsel %vm399, %v2798, 0.0
      %v2905 = vadd.f32 %v2903, %v2904
      %v2906 = vsel %vm399, %v2799, 0.0
      %v2907 = vadd.f32 %v2905, %v2906
      %v2908 = vsel %vm399, %v2800, 0.0
      %v2909 = vadd.f32 %v2907, %v2908
      %v2910 = vsel %vm399, %v2801, 0.0
      %v2911 = vadd.f32 %v2909, %v2910
      %v2912 = vsel %vm399, %v2802, 0.0
      %v2913 = vadd.f32 %v2911, %v2912
      %v2914 = vsel %vm399, %v2803, 0.0
      %v2915 = vadd.f32 %v2913, %v2914
      %v2916 = vsel %vm399, %v2804, 0.0
      %v2917 = vadd.f32 %v2915, %v2916
      %v2918 = vsel %vm399, %v2805, 0.0
      %v2919 = vadd.f32 %v2917, %v2918
      %v2920 = vsel %vm399, %v2806, 0.0
      %v2921 = vadd.f32 %v2919, %v2920
      %v2922 = vsel %vm399, %v2807, 0.0
      %v2923 = vadd.f32 %v2921, %v2922
      %v2924 = vsel %vm399, %v2808, 0.0
      %v2925 = vadd.f32 %v2923, %v2924
      %v2926 = vsel %vm399, %v2809, 0.0
      %v2927 = vadd.f32 %v2925, %v2926
      %v2928 = vsel %vm399, %v2810, 0.0
      %v2929 = vadd.f32 %v2927, %v2928
      %v2930 = vsel %vm399, %v2811, 0.0
      %v2931 = vadd.f32 %v2929, %v2930
      %v2932 = vsel %vm399, %v2812, 0.0
      %v2933 = vadd.f32 %v2931, %v2932
      %v2934 = vsel %vm399, %v2813, 0.0
      %v2935 = vadd.f32 %v2933, %v2934
      %v2936 = vsel %vm399, %v2814, 0.0
      %v2937 = vadd.f32 %v2935, %v2936
      %v2938 = vsel %vm399, %v2815, 0.0
      %v2939 = vadd.f32 %v2937, %v2938
      %v2940 = vsel %vm399, %v2816, 0.0
      %v2941 = vadd.f32 %v2939, %v2940
      %v2942 = vsel %vm399, %v2817, 0.0
      %v2943 = vadd.f32 %v2941, %v2942
      %v2944 = vsel %vm399, %v2818, 0.0
      %v2945 = vadd.f32 %v2943, %v2944
      %v2946 = vsel %vm399, %v2819, 0.0
      %v2947 = vadd.f32 %v2945, %v2946
      %v2948 = vsel %vm399, %v2820, 0.0
      %v2949 = vadd.f32 %v2947, %v2948
      %v2950 = vrot.slane %v2949, 4
      %v2951 = vadd.f32 %v2949, %v2950
      %v2952 = vrot.slane %v2951, 2
      %v2953 = vadd.f32 %v2951, %v2952
      %v2954 = vrot.slane %v2953, 1
      %v2955 = vadd.f32 %v2953, %v2954
      %v2956 = vadd.f32 %v2886, %v2955
      %2957 = vst.msk [vmem:[%s250] sm:$0xff] %vm399, %v2956
      %v2958 = vld [vmem:[%s254] sm:$0xff]
      %v2959 = vmul.f32 %v2789, %v2789
      %v2960 = vmul.f32 %v2790, %v2790
      %v2961 = vmul.f32 %v2791, %v2791
      %v2962 = vmul.f32 %v2792, %v2792
      %v2963 = vmul.f32 %v2793, %v2793
      %v2964 = vmul.f32 %v2794, %v2794
      %v2965 = vmul.f32 %v2795, %v2795
      %v2966 = vmul.f32 %v2796, %v2796
      %v2967 = vmul.f32 %v2797, %v2797
      %v2968 = vmul.f32 %v2798, %v2798
      %v2969 = vmul.f32 %v2799, %v2799
      %v2970 = vmul.f32 %v2800, %v2800
      %v2971 = vmul.f32 %v2801, %v2801
      %v2972 = vmul.f32 %v2802, %v2802
      %v2973 = vmul.f32 %v2803, %v2803
      %v2974 = vmul.f32 %v2804, %v2804
      %v2975 = vmul.f32 %v2805, %v2805
      %v2976 = vmul.f32 %v2806, %v2806
      %v2977 = vmul.f32 %v2807, %v2807
      %v2978 = vmul.f32 %v2808, %v2808
      %v2979 = vmul.f32 %v2809, %v2809
      %v2980 = vmul.f32 %v2810, %v2810
      %v2981 = vmul.f32 %v2811, %v2811
      %v2982 = vmul.f32 %v2812, %v2812
      %v2983 = vmul.f32 %v2813, %v2813
      %v2984 = vmul.f32 %v2814, %v2814
      %v2985 = vmul.f32 %v2815, %v2815
      %v2986 = vmul.f32 %v2816, %v2816
      %v2987 = vmul.f32 %v2817, %v2817
      %v2988 = vmul.f32 %v2818, %v2818
      %v2989 = vmul.f32 %v2819, %v2819
      %v2990 = vmul.f32 %v2820, %v2820
      %v2991 = vsel %vm399, %v2959, 0.0
      %v2992 = vsel %vm399, %v2960, 0.0
      %v2993 = vadd.f32 %v2991, %v2992
      %v2994 = vsel %vm399, %v2961, 0.0
      %v2995 = vadd.f32 %v2993, %v2994
      %v2996 = vsel %vm399, %v2962, 0.0
      %v2997 = vadd.f32 %v2995, %v2996
      %v2998 = vsel %vm399, %v2963, 0.0
      %v2999 = vadd.f32 %v2997, %v2998
      %v3000 = vsel %vm399, %v2964, 0.0
      %v3001 = vadd.f32 %v2999, %v3000
      %v3002 = vsel %vm399, %v2965, 0.0
      %v3003 = vadd.f32 %v3001, %v3002
      %v3004 = vsel %vm399, %v2966, 0.0
      %v3005 = vadd.f32 %v3003, %v3004
      %v3006 = vsel %vm399, %v2967, 0.0
      %v3007 = vadd.f32 %v3005, %v3006
      %v3008 = vsel %vm399, %v2968, 0.0
      %v3009 = vadd.f32 %v3007, %v3008
      %v3010 = vsel %vm399, %v2969, 0.0
      %v3011 = vadd.f32 %v3009, %v3010
      %v3012 = vsel %vm399, %v2970, 0.0
      %v3013 = vadd.f32 %v3011, %v3012
      %v3014 = vsel %vm399, %v2971, 0.0
      %v3015 = vadd.f32 %v3013, %v3014
      %v3016 = vsel %vm399, %v2972, 0.0
      %v3017 = vadd.f32 %v3015, %v3016
      %v3018 = vsel %vm399, %v2973, 0.0
      %v3019 = vadd.f32 %v3017, %v3018
      %v3020 = vsel %vm399, %v2974, 0.0
      %v3021 = vadd.f32 %v3019, %v3020
      %v3022 = vsel %vm399, %v2975, 0.0
      %v3023 = vadd.f32 %v3021, %v3022
      %v3024 = vsel %vm399, %v2976, 0.0
      %v3025 = vadd.f32 %v3023, %v3024
      %v3026 = vsel %vm399, %v2977, 0.0
      %v3027 = vadd.f32 %v3025, %v3026
      %v3028 = vsel %vm399, %v2978, 0.0
      %v3029 = vadd.f32 %v3027, %v3028
      %v3030 = vsel %vm399, %v2979, 0.0
      %v3031 = vadd.f32 %v3029, %v3030
      %v3032 = vsel %vm399, %v2980, 0.0
      %v3033 = vadd.f32 %v3031, %v3032
      %v3034 = vsel %vm399, %v2981, 0.0
      %v3035 = vadd.f32 %v3033, %v3034
      %v3036 = vsel %vm399, %v2982, 0.0
      %v3037 = vadd.f32 %v3035, %v3036
      %v3038 = vsel %vm399, %v2983, 0.0
      %v3039 = vadd.f32 %v3037, %v3038
      %v3040 = vsel %vm399, %v2984, 0.0
      %v3041 = vadd.f32 %v3039, %v3040
      %v3042 = vsel %vm399, %v2985, 0.0
      %v3043 = vadd.f32 %v3041, %v3042
      %v3044 = vsel %vm399, %v2986, 0.0
      %v3045 = vadd.f32 %v3043, %v3044
      %v3046 = vsel %vm399, %v2987, 0.0
      %v3047 = vadd.f32 %v3045, %v3046
      %v3048 = vsel %vm399, %v2988, 0.0
      %v3049 = vadd.f32 %v3047, %v3048
      %v3050 = vsel %vm399, %v2989, 0.0
      %v3051 = vadd.f32 %v3049, %v3050
      %v3052 = vsel %vm399, %v2990, 0.0
      %v3053 = vadd.f32 %v3051, %v3052
      %v3054 = vrot.slane %v3053, 4
      %v3055 = vadd.f32 %v3053, %v3054
      %v3056 = vrot.slane %v3055, 2
      %v3057 = vadd.f32 %v3055, %v3056
      %v3058 = vrot.slane %v3057, 1
      %v3059 = vadd.f32 %v3057, %v3058
      %v3060 = vadd.f32 %v2958, %v3059
      %3061 = vst.msk [vmem:[%s254] sm:$0xff] %vm399, %v3060
      %s3062 = smul.u32 %s20, 2
      %s3063 = sadd.s32 %s3062, %s21
      %p3064 = scmp.lt.s32.totalorder %s3063, 1
      %s3065 = scalar_select %p3064, %s3063, 1
      %s3066 = smul.addr %s3065, 32
      %s3067 = smul.addr %s3066, 4
      %s3068 = scalar_lea.vmem %s2, %s3067
      %p3069 = scmp.lt.s32.totalorder %s20, 0
      %s3070 = scalar_select %p3069, %s20, 0
      %s3071 = smul.addr %s3070, 8
      %s3072 = scalar_lea.vmem %s3, %s3071
      %p3073 = scmp.lt.s32.totalorder %s20, 0
      %s3074 = scalar_select %p3073, %s20, 0
      %s3075 = smul.addr %s3074, 8
      %s3076 = scalar_lea.vmem %s4, %s3075
      // Predicated region
      $region33: #{inception_d_forward.19} parent=27 // pred_check
        %p3077 = pneg %p101
      $region34: #{inception_d_forward.19} parent=27 // pred_check_branch
        %3079 = sbr.rel (%p3077) target = $region36
      $region35: #{inception_d_forward.19} parent=27 // pred_region
        %s3080 = smul.u32 %s20, 2
        %s3081 = sadd.s32 %s3080, %s21
      $region36: #{inception_d_forward.19} parent=27 // pred_fallthru
        _
      // Predicated region
      $region37: #{inception_d_forward.19} parent=27 // pred_check
        %p3082 = pneg %p127
      $region38: #{inception_d_forward.19} parent=27 // pred_check_branch
        %3084 = sbr.rel (%p3082) target = $region40
      $region39: #{inception_d_forward.19} parent=27 // pred_region
        _
      $region40: #{inception_d_forward.19} parent=27 // pred_fallthru
        _
      // Predicated region
      $region41: #{inception_d_forward.19} parent=27 // pred_check
        %p3085 = pneg %p153
      $region42: #{inception_d_forward.19} parent=27 // pred_check_branch
        %3087 = sbr.rel (%p3085) target = $region44
      $region43: #{inception_d_forward.19} parent=27 // pred_region
        _
      $region44: #{inception_d_forward.19} parent=27 // pred_fallthru
        _
      // Predicated region
      $region45: #{inception_d_forward.19} parent=27 // pred_check
        %p3088 = pneg %p127
      $region46: #{inception_d_forward.19} parent=27 // pred_check_branch
        %3090 = sbr.rel (%p3088) target = $region48
      $region47: #{inception_d_forward.19} parent=27 // pred_region
        %p3091 = scmp.lt.s32.totalorder %s20, 0
        %s3092 = scalar_select %p3091, %s20, 0
        %s3093 = smul.addr %s3092, 8
        %s3094 = scalar_lea.vmem %s3, %s3093
      $region48: #{inception_d_forward.19} parent=27 // pred_fallthru
        _
      // Predicated region
      $region49: #{inception_d_forward.19} parent=27 // pred_check
        %p3095 = pneg %p153
      $region50: #{inception_d_forward.19} parent=27 // pred_check_branch
        %3097 = sbr.rel (%p3095) target = $region52
      $region51: #{inception_d_forward.19} parent=27 // pred_region
        %p3098 = scmp.lt.s32.totalorder %s20, 0
        %s3099 = scalar_select %p3098, %s20, 0
        %s3100 = smul.addr %s3099, 8
        %s3101 = scalar_lea.vmem %s4, %s3100
      $region52: #{inception_d_forward.19} parent=27 // pred_fallthru
        _
    $region28: #{inception_d_forward.19} parent=5 // pred_fallthru
      _
    %p3102 = scmp.le.s32.totalorder 2, %s11
    // Predicated region
    $region53: #{inception_d_forward.19} parent=5 // pred_check
      %p3103 = pneg %p3102
    $region54: #{inception_d_forward.19} parent=5 // pred_check_branch
      %3105 = sbr.rel (%p3103) target = $region56
    $region55: #{inception_d_forward.19} parent=5 // pred_region
      %s3106 = ssub.s32 %s11, 2
      // Predicated region
      $region57: #{inception_d_forward.19} parent=55 // pred_check
        %p3107 = pneg %p107
      $region58: #{inception_d_forward.19} parent=55 // pred_check_branch
        %3109 = sbr.rel (%p3107) target = $region60
      $region59: #{inception_d_forward.19} parent=55 // pred_region
        %s3110 = smul.u32 %s22, 2
        %s3111 = sadd.s32 %s3110, %s23
        %p3112 = scmp.lt.s32.totalorder %s3111, 1
        %s3113 = scalar_select %p3112, %s3111, 1
        %s3114 = smul.addr %s3113, 32
        %s3115 = smul.addr %s3114, 4
        %s3116 = scalar_lea.vmem %s2, %s3115
      $region60: #{inception_d_forward.19} parent=55 // pred_fallthru
        _
    $region56: #{inception_d_forward.19} parent=5 // pred_fallthru
      _
  $region6: #{inception_d_forward.19} parent=0 // loop_footer
    %s15 = sadd.s32 1, %s11
  $region7: #{inception_d_forward.19} parent=0 // loop_footer_branch
    %10 = sbr.rel target = $region3
  $region8: #{inception_d_forward.19} parent=0 // loop_exit
    _

</llo_original>
